<compile_context>
chip_gen: v7x
topology: tpu7x:2x2x1
jax: 0.10.0
libtpu: 0.0.40
codegen_flags: <defaults>
</compile_context>

<pallas_src>
import numpy as np
import jax
import jax.numpy as jnp
from jax.experimental import pallas as pl
from jax.experimental.pallas import tpu as pltpu

EPS = 1e-5


def _round_up(x, m):
    return ((x + m - 1) // m) * m


def _pitch(w):
    # padded row pitch: 1 left border + w + right pad, rounded to 8 sublanes
    return _round_up(w + 2, 8)


_VMEM_LIMIT = None


def _compiler_params():
    """Generation-aware VMEM budget (~40 MiB on v7x, ~80 MiB on v5e/v6e)."""
    global _VMEM_LIMIT
    if _VMEM_LIMIT is None:
        limit = 40 * 1024 * 1024
        try:
            cap = int(getattr(pltpu.get_tpu_info(), "vmem_capacity_bytes", 0) or 0)
            if cap > 0:
                limit = min((cap * 5) // 8, 100 * 1024 * 1024)
        except Exception:
            pass
        _VMEM_LIMIT = limit
    return pltpu.CompilerParams(
        dimension_semantics=("arbitrary",),
        vmem_limit_bytes=_VMEM_LIMIT,
    )


# ---------------------------------------------------------------------------
# layout helpers (plain JAX / numpy glue)
# ---------------------------------------------------------------------------
def to_padded_flat(x_nchw):
    n, c, h, w = x_nchw.shape
    pi = _pitch(w)
    x = jnp.transpose(x_nchw, (0, 2, 3, 1))                       # NHWC
    x = jnp.pad(x, ((0, 0), (1, 1), (1, pi - w - 1), (0, 0)))     # zero border
    return x.reshape(n * (h + 2) * pi, c)


def valid_mask(n, h, w):
    pi = _pitch(w)
    m = np.zeros((n, h + 2, pi, 1), np.float32)
    m[:, 1:h + 1, 1:w + 1, :] = 1.0
    return jnp.asarray(m.reshape(n * (h + 2) * pi, 1))


def avgpool2x2_flat(t, n, h, w):
    """AvgPool2d(2,2) + re-padding on the bf16 transition output (wrapper-side
    reshape-mean).  Also returns the (2, c) sum / sum-of-squares statistics of
    the pooled bf16 values so later layers never recompute them."""
    c = t.shape[1]
    pi, ho, wo = _pitch(w), h // 2, w // 2
    po = _pitch(wo)
    v = t.reshape(n, h + 2, pi, c)[:, 1:h + 1, 1:w + 1, :].astype(jnp.float32)
    pooled = v.reshape(n, ho, 2, wo, 2, c).mean(axis=(2, 4)).astype(jnp.bfloat16)
    pf = pooled.astype(jnp.float32)
    stats = jnp.stack([jnp.sum(pf, axis=(0, 1, 2)),
                       jnp.sum(pf * pf, axis=(0, 1, 2))], axis=0)   # (2, c)
    out = jnp.zeros((n, ho + 2, po, c), jnp.bfloat16)
    out = out.at[:, 1:ho + 1, 1:wo + 1, :].set(pooled)
    return out.reshape(n * (ho + 2) * po, c), stats


def bn_affine(stats, gamma, beta, cnt):
    """Fold cached per-channel (sum, sum_sq) + this layer's gamma/beta into a
    single scale/shift pair (tiny plain-JAX op; var clamped to >= 0)."""
    mean = stats[0:1, :] / float(cnt)
    var = jnp.maximum(stats[1:2, :] / float(cnt) - mean * mean, 0.0)
    scale = gamma * jax.lax.rsqrt(var + EPS)
    shift = beta - mean * scale
    return scale, shift


# ---------------------------------------------------------------------------
# Pallas kernels
# ---------------------------------------------------------------------------
def conv3x3_layer(xs, scale, shift, mask, w_flat, n, h, w, cout, pre_bn_relu):
    """Fused (BN -> ReLU ->)? 3x3 conv (stride 1, pad 1, no bias).

    xs     : list of (r, c_g) bf16 (or f32 for the stem) channel groups,
             padding rows exactly zero.
    w_flat : (c_total, 9*cout) weights; column block k holds the tap for
             offset (dh, dw) with k = 3*(dh+1) + (dw+1).
    Returns (new_group_bf16 (r, cout), stats_f32 (2, cout)).
    """
    G = len(xs)
    pitch = _pitch(w)
    r = n * (h + 2) * pitch
    m_pad = pitch + 8                    # multiple of 8, >= max |row shift|
    rs = r + 2 * m_pad
    cgs = [int(x.shape[1]) for x in xs]
    ctot = sum(cgs)
    nw = 9 * cout
    offs = [dh * pitch + dw for dh in (-1, 0, 1) for dw in (-1, 0, 1)]

    def kernel(*refs):
        p = 0
        x_refs = refs[p:p + G]; p += G
        if pre_bn_relu:
            sc_ref = refs[p]; p += 1
            sh_ref = refs[p]; p += 1
        m_ref = refs[p]; p += 1
        w_ref = refs[p]; p += 1
        o_ref = refs[p]; p += 1
        st_ref = refs[p]; p += 1
        if pre_bn_relu:
            ypack = refs[p]; p += 1
        zpad = refs[p]

        mv = m_ref[...]                                          # (r, 1) f32

        if pre_bn_relu:
            scv = sc_ref[...]
            shv = sh_ref[...]
            off_c = 0
            # Stage every group (BN -> ReLU -> mask) into ONE packed scratch.
            for g in range(G):
                cg = cgs[g]
                xv = x_refs[g][...].astype(jnp.float32)
                yv = jnp.maximum(
                    xv * scv[:, off_c:off_c + cg] + shv[:, off_c:off_c + cg],
                    0.0) * mv
                ypack[:, off_c:off_c + cg] = yv
                off_c += cg
            # single wide-K MXU matmul: (r, c_total) @ (c_total, 9*cout)
            yb = ypack[...].astype(jnp.bfloat16)
            z = jnp.dot(yb, w_ref[...], preferred_element_type=jnp.float32)
        else:
            # stem: cin == 1 -> K=1, use a VPU broadcast multiply instead
            z = x_refs[0][...] * w_ref[...]                      # (r, 9*cout)

        # row-padded copy of Z so the 9 shifted reads stay in-bounds; only the
        # border rows are zeroed, the body is written once.
        zpad[0:m_pad, :] = jnp.zeros((m_pad, nw), jnp.float32)
        zpad[m_pad + r:rs, :] = jnp.zeros((m_pad, nw), jnp.float32)
        zpad[m_pad:m_pad + r, :] = z

        # out[p] = sum_k Z[p + off_k, block k]  (9 narrow shifted adds)
        acc = None
        for k, off in enumerate(offs):
            part = zpad[pl.ds(m_pad + off, r), pl.ds(k * cout, cout)]
            acc = part if acc is None else acc + part
        outv = acc * mv                  # keep padding rows exactly zero

        ob = outv.astype(jnp.bfloat16)
        o_ref[...] = ob
        # per-group BN statistics, computed once on the stored (bf16) values
        of = ob.astype(jnp.float32)
        st_ref[...] = jnp.concatenate(
            [jnp.sum(of, axis=0, keepdims=True),
             jnp.sum(of * of, axis=0, keepdims=True)], axis=0)

    in_specs = [pl.BlockSpec((r, cg), lambda i: (0, 0)) for cg in cgs]
    operands = list(xs)
    if pre_bn_relu:
        in_specs += [pl.BlockSpec((1, ctot), lambda i: (0, 0)),
                     pl.BlockSpec((1, ctot), lambda i: (0, 0))]
        operands += [scale, shift]
    in_specs += [pl.BlockSpec((r, 1), lambda i: (0, 0)),
                 pl.BlockSpec((ctot, nw), lambda i: (0, 0))]
    operands += [mask, w_flat]

    scratch = []
    if pre_bn_relu:
        scratch.append(pltpu.VMEM((r, ctot), jnp.float32))   # packed activations
    scratch.append(pltpu.VMEM((rs, nw), jnp.float32))        # row-padded Z

    return pl.pallas_call(
        kernel,
        out_shape=(jax.ShapeDtypeStruct((r, cout), jnp.bfloat16),
                   jax.ShapeDtypeStruct((2, cout), jnp.float32)),
        grid=(1,),
        in_specs=in_specs,
        out_specs=(pl.BlockSpec((r, cout), lambda i: (0, 0)),
                   pl.BlockSpec((2, cout), lambda i: (0, 0))),
        scratch_shapes=scratch,
        compiler_params=_compiler_params(),
    )(*operands)


def transition_layer(xs, scale, shift, mask, wmat, n, h, w, cout):
    """Fused BN -> ReLU -> 1x1 conv (single wide-K matmul), bf16 output.
    The 2x2 average pool runs on this bf16 output in the wrapper."""
    G = len(xs)
    pitch = _pitch(w)
    r = n * (h + 2) * pitch
    cgs = [int(x.shape[1]) for x in xs]
    ctot = sum(cgs)

    def kernel(*refs):
        p = 0
        x_refs = refs[p:p + G]; p += G
        sc_ref = refs[p]; p += 1
        sh_ref = refs[p]; p += 1
        m_ref = refs[p]; p += 1
        w_ref = refs[p]; p += 1
        o_ref = refs[p]; p += 1
        ypack = refs[p]

        mv = m_ref[...]
        scv = sc_ref[...]
        shv = sh_ref[...]
        off_c = 0
        for g in range(G):
            cg = cgs[g]
            xv = x_refs[g][...].astype(jnp.float32)
            yv = jnp.maximum(
                xv * scv[:, off_c:off_c + cg] + shv[:, off_c:off_c + cg],
                0.0) * mv
            ypack[:, off_c:off_c + cg] = yv
            off_c += cg
        yb = ypack[...].astype(jnp.bfloat16)
        z = jnp.dot(yb, w_ref[...], preferred_element_type=jnp.float32)
        o_ref[...] = z.astype(jnp.bfloat16)   # 1x1 conv keeps padding rows 0

    in_specs = ([pl.BlockSpec((r, cg), lambda i: (0, 0)) for cg in cgs]
                + [pl.BlockSpec((1, ctot), lambda i: (0, 0)),
                   pl.BlockSpec((1, ctot), lambda i: (0, 0)),
                   pl.BlockSpec((r, 1), lambda i: (0, 0)),
                   pl.BlockSpec((ctot, cout), lambda i: (0, 0))])
    return pl.pallas_call(
        kernel,
        out_shape=jax.ShapeDtypeStruct((r, cout), jnp.bfloat16),
        grid=(1,),
        in_specs=in_specs,
        out_specs=pl.BlockSpec((r, cout), lambda i: (0, 0)),
        scratch_shapes=[pltpu.VMEM((r, ctot), jnp.float32)],
        compiler_params=_compiler_params(),
    )(*(list(xs) + [scale, shift, mask, wmat]))


def head_layer(groups, scale, shift, mask, cw, cb, n, h, w, nc):
    """Fused BN -> ReLU -> global average pool -> Linear (f32 output)."""
    G = len(groups)
    pitch = _pitch(w)
    rpi = (h + 2) * pitch                   # rows per image (multiple of 8)
    cgs = [int(g.shape[1]) for g in groups]
    ctot = sum(cgs)
    inv_hw = 1.0 / float(h * w)

    # free wrapper-side reshapes so the kernel sees per-image row blocks
    xs3 = [g.reshape(n, rpi, cg) for g, cg in zip(groups, cgs)]
    m3 = mask.reshape(n, rpi, 1)
    sc3 = scale.reshape(1, 1, ctot)
    sh3 = shift.reshape(1, 1, ctot)

    def kernel(*refs):
        p = 0
        x_refs = refs[p:p + G]; p += G
        sc_ref = refs[p]; p += 1
        sh_ref = refs[p]; p += 1
        m_ref = refs[p]; p += 1
        cw_ref = refs[p]; p += 1
        cb_ref = refs[p]; p += 1
        o_ref = refs[p]

        mv = m_ref[...]                                       # (n, rpi, 1)
        acc = jnp.zeros((n, nc), jnp.float32) + cb_ref[...]
        off = 0
        for g in range(G):
            cg = cgs[g]
            xv = x_refs[g][...].astype(jnp.float32)           # (n, rpi, cg)
            y = jnp.maximum(
                xv * sc_ref[:, :, off:off + cg] + sh_ref[:, :, off:off + cg],
                0.0) * mv
            pooled = jnp.sum(y, axis=1) * inv_hw              # (n, cg)
            acc = acc + jnp.dot(pooled, cw_ref[off:off + cg, :],
                                preferred_element_type=jnp.float32)
            off += cg
        o_ref[...] = acc

    in_specs = ([pl.BlockSpec((n, rpi, cg), lambda i: (0, 0, 0)) for cg in cgs]
                + [pl.BlockSpec((1, 1, ctot), lambda i: (0, 0, 0)),
                   pl.BlockSpec((1, 1, ctot), lambda i: (0, 0, 0)),
                   pl.BlockSpec((n, rpi, 1), lambda i: (0, 0, 0)),
                   pl.BlockSpec((ctot, nc), lambda i: (0, 0)),
                   pl.BlockSpec((1, nc), lambda i: (0, 0))])
    return pl.pallas_call(
        kernel,
        out_shape=jax.ShapeDtypeStruct((n, nc), jnp.float32),
        grid=(1,),
        in_specs=in_specs,
        out_specs=pl.BlockSpec((n, nc), lambda i: (0, 0)),
        compiler_params=_compiler_params(),
    )(*(xs3 + [sc3, sh3, m3, cw, cb]))


# ---------------------------------------------------------------------------
# parameters (deterministic, kaiming-normal fan_out as in the PyTorch __init__)
# ---------------------------------------------------------------------------
def init_params(key, cfg):
    growth = cfg["num_init_features"] // 2
    params = {}
    keys = iter(jax.random.split(key, 64))

    def kaiming(k, shape, fan_out):
        return jax.random.normal(k, shape, jnp.float32) * np.sqrt(2.0 / fan_out)

    c = cfg["num_init_features"]
    params["conv0"] = kaiming(next(keys), (9, cfg["in_channels"], c), c * 9)

    num_features = c
    nb = len(cfg["block_config"])
    for bi, nl in enumerate(cfg["block_config"]):
        for li in range(nl):
            cin = num_features + li * growth
            params[f"b{bi}l{li}"] = {
                "g": jnp.ones((1, cin), jnp.float32),
                "b": jnp.zeros((1, cin), jnp.float32),
                "w": kaiming(next(keys), (9, cin, growth), growth * 9),
            }
        num_features += nl * growth
        if bi < nb - 1:
            cout = int(num_features * cfg["compression"])
            params[f"t{bi}"] = {
                "g": jnp.ones((1, num_features), jnp.float32),
                "b": jnp.zeros((1, num_features), jnp.float32),
                "w": kaiming(next(keys), (num_features, cout), cout),
            }
            num_features = cout
    params["head"] = {
        "g": jnp.ones((1, num_features), jnp.float32),
        "b": jnp.zeros((1, num_features), jnp.float32),
        "cw": jax.random.normal(next(keys), (num_features, cfg["num_classes"]),
                                jnp.float32) / np.sqrt(num_features),
        "cb": jnp.zeros((1, cfg["num_classes"]), jnp.float32),
    }
    return params


# ---------------------------------------------------------------------------
# forward passes
# ---------------------------------------------------------------------------
def densenet_forward_pallas(x_nchw, params, cfg):
    n, c0, h, w = x_nchw.shape
    growth = cfg["num_init_features"] // 2
    nb = len(cfg["block_config"])
    cf = cfg["num_init_features"]

    mask = valid_mask(n, h, w)
    x0 = to_padded_flat(x_nchw)
    w0 = jnp.transpose(params["conv0"], (1, 0, 2)).reshape(c0, 9 * cf)
    feat0, stats = conv3x3_layer([x0], None, None, mask, w0, n, h, w, cf,
                                 pre_bn_relu=False)

    # channel groups (bf16) + cached (sum, sum_sq) stats; no concatenation of
    # the growing feature map anywhere.
    groups, widths = [feat0], [cf]

    for bi, nl in enumerate(cfg["block_config"]):
        for li in range(nl):
            p = params[f"b{bi}l{li}"]
            cin = sum(widths)
            scale, shift = bn_affine(stats, p["g"], p["b"], n * h * w)
            wf = jnp.transpose(p["w"], (1, 0, 2)).reshape(cin, 9 * growth)
            wf = wf.astype(jnp.bfloat16)
            newg, newst = conv3x3_layer(groups, scale, shift, mask, wf,
                                        n, h, w, growth, pre_bn_relu=True)
            groups.append(newg)
            widths.append(growth)
            stats = jnp.concatenate([stats, newst], axis=1)
        if bi < nb - 1:
            p = params[f"t{bi}"]
            cin = sum(widths)
            cout = int(cin * cfg["compression"])
            scale, shift = bn_affine(stats, p["g"], p["b"], n * h * w)
            t = transition_layer(groups, scale, shift, mask,
                                 p["w"].astype(jnp.bfloat16), n, h, w, cout)
            t, stats = avgpool2x2_flat(t, n, h, w)
            h, w = h // 2, w // 2
            mask = valid_mask(n, h, w)
            groups, widths = [t], [cout]

    p = params["head"]
    scale, shift = bn_affine(stats, p["g"], p["b"], n * h * w)
    return head_layer(groups, scale, shift, mask, p["cw"], p["cb"],
                      n, h, w, cfg["num_classes"])


def densenet_forward_ref(x_nchw, params, cfg):
    """Pure-JAX reference (NHWC, f32) for numerical checking."""
    hi = jax.lax.Precision.HIGHEST
    growth = cfg["num_init_features"] // 2
    nb = len(cfg["block_config"])

    def conv3(x, w9):
        cin, cout = w9.shape[1], w9.shape[2]
        wk = w9.reshape(3, 3, cin, cout)
        return jax.lax.conv_general_dilated(
            x, wk, (1, 1), "SAME",
            dimension_numbers=("NHWC", "HWIO", "NHWC"), precision=hi)

    def bn_relu(x, g, b):
        mean = jnp.mean(x, axis=(0, 1, 2), keepdims=True)
        var = jnp.mean(x * x, axis=(0, 1, 2), keepdims=True) - mean * mean
        y = (x - mean) * jax.lax.rsqrt(var + EPS) * g.reshape(1, 1, 1, -1) \
            + b.reshape(1, 1, 1, -1)
        return jnp.maximum(y, 0.0)

    x = jnp.transpose(x_nchw, (0, 2, 3, 1))
    x = conv3(x, params["conv0"])
    for bi, nl in enumerate(cfg["block_config"]):
        for li in range(nl):
            p = params[f"b{bi}l{li}"]
            new = conv3(bn_relu(x, p["g"], p["b"]), p["w"])
            x = jnp.concatenate([x, new], axis=-1)
        if bi < nb - 1:
            p = params[f"t{bi}"]
            y = bn_relu(x, p["g"], p["b"])
            z = jnp.einsum("nhwc,cd->nhwd", y, p["w"], precision=hi)
            nn_, hh, ww, cc = z.shape
            x = z.reshape(nn_, hh // 2, 2, ww // 2, 2, cc).mean(axis=(2, 4))
    p = params["head"]
    y = bn_relu(x, p["g"], p["b"])
    pooled = jnp.mean(y, axis=(1, 2))
    return jnp.dot(pooled, p["cw"], precision=hi) + p["cb"].reshape(1, -1)


# ---------------------------------------------------------------------------
if __name__ == "__main__":
    cfg = dict(
        in_channels=1,
        num_init_features=24,      # growth_rate = 12
        block_config=(2, 2, 2),    # reduced from (12,12,12) for a small test
        compression=1,
        num_classes=10,
    )
    key = jax.random.PRNGKey(0)
    kx, kp = jax.random.split(key)
    x = jax.random.normal(kx, (2, cfg["in_channels"], 16, 16), jnp.float32)
    params = init_params(kp, cfg)

    out = densenet_forward_pallas(x, params, cfg)
    out = jax.block_until_ready(out)

    ref = densenet_forward_ref(x, params, cfg)
    err = float(jnp.max(jnp.abs(out - ref)))
    mref = float(jnp.max(jnp.abs(ref)))
    assert out.shape == (2, cfg["num_classes"])
    assert np.isfinite(np.asarray(out)).all()
    # bf16 MXU operands + bf16 inter-layer storage: compare against the f32
    # reference with a mixed absolute/relative bound.
    tol = 5e-2 * mref + 2.5e-1
    assert err < tol, f"mismatch vs reference: {err} (max|ref|={mref})"
    print("KERNEL_OK")
</pallas_src>

<mosaic_0001>
module attributes {stable_mosaic.version = 11 : i64} {
  func.func @kernel(%arg0: i32, %arg1: memref<864x1xf32, #tpu.memory_space<vmem>>, %arg2: memref<864x1xf32, #tpu.memory_space<vmem>>, %arg3: memref<1x216xf32, #tpu.memory_space<vmem>>, %arg4: memref<864x24xbf16, #tpu.memory_space<vmem>>, %arg5: memref<2x24xf32, #tpu.memory_space<vmem>>, %arg6: memref<928x216xf32, #tpu.memory_space<vmem>>) attributes {dimension_semantics = [#tpu.dimension_semantics<arbitrary>], iteration_bounds = array<i64: 1>, scalar_prefetch = 0 : i64, scratch_operands = 1 : i64, tpu.core_type = #tpu.core_type<tc>, window_params = [{pipeline_mode = #tpu.pipeline_mode<synchronous>, transform_indices = @transform_0, window_bounds = array<i64: 864, 1>}, {pipeline_mode = #tpu.pipeline_mode<synchronous>, transform_indices = @transform_1, window_bounds = array<i64: 864, 1>}, {pipeline_mode = #tpu.pipeline_mode<synchronous>, transform_indices = @transform_2, window_bounds = array<i64: 1, 216>}, {pipeline_mode = #tpu.pipeline_mode<synchronous>, transform_indices = @transform_3, window_bounds = array<i64: 864, 24>}, {pipeline_mode = #tpu.pipeline_mode<synchronous>, transform_indices = @transform_4, window_bounds = array<i64: 2, 24>}]} {
    %c0 = arith.constant 0 : index
    %c0_0 = arith.constant 0 : index
    %0 = vector.load %arg2[%c0, %c0_0] : memref<864x1xf32, #tpu.memory_space<vmem>>, vector<864x1xf32>
    %c0_1 = arith.constant 0 : index
    %c0_2 = arith.constant 0 : index
    %1 = vector.load %arg1[%c0_1, %c0_2] : memref<864x1xf32, #tpu.memory_space<vmem>>, vector<864x1xf32>
    %c0_3 = arith.constant 0 : index
    %c0_4 = arith.constant 0 : index
    %2 = vector.load %arg3[%c0_3, %c0_4] : memref<1x216xf32, #tpu.memory_space<vmem>>, vector<1x216xf32>
    %3 = vector.broadcast %1 : vector<864x1xf32> to vector<864x216xf32>
    %4 = vector.broadcast %2 : vector<1x216xf32> to vector<864x216xf32>
    %5 = arith.mulf %3, %4 : vector<864x216xf32>
    %cst = arith.constant 0.000000e+00 : f32
    %6 = vector.broadcast %cst : f32 to vector<32x216xf32>
    %c0_5 = arith.constant 0 : index
    %c0_6 = arith.constant 0 : index
    %7 = vector.load %arg6[%c0_5, %c0_6] : memref<928x216xf32, #tpu.memory_space<vmem>>, vector<32x216xf32>
    tpu.vector_store %arg6[%c0_5, %c0_6], %6 {strides = array<i32>} : memref<928x216xf32, #tpu.memory_space<vmem>>, vector<32x216xf32>,
    %cst_7 = arith.constant 0.000000e+00 : f32
    %8 = vector.broadcast %cst_7 : f32 to vector<32x216xf32>
    %c896 = arith.constant 896 : index
    %c0_8 = arith.constant 0 : index
    %9 = vector.load %arg6[%c896, %c0_8] : memref<928x216xf32, #tpu.memory_space<vmem>>, vector<32x216xf32>
    tpu.vector_store %arg6[%c896, %c0_8], %8 {strides = array<i32>} : memref<928x216xf32, #tpu.memory_space<vmem>>, vector<32x216xf32>,
    %c32 = arith.constant 32 : index
    %c0_9 = arith.constant 0 : index
    %10 = vector.load %arg6[%c32, %c0_9] : memref<928x216xf32, #tpu.memory_space<vmem>>, vector<864x216xf32>
    tpu.vector_store %arg6[%c32, %c0_9], %5 {strides = array<i32>} : memref<928x216xf32, #tpu.memory_space<vmem>>, vector<864x216xf32>,
    %c7 = arith.constant 7 : index
    %c0_10 = arith.constant 0 : index
    %11 = vector.load %arg6[%c7, %c0_10] : memref<928x216xf32, #tpu.memory_space<vmem>>, vector<864x24xf32>
    %c8 = arith.constant 8 : index
    %c24 = arith.constant 24 : index
    %12 = vector.load %arg6[%c8, %c24] : memref<928x216xf32, #tpu.memory_space<vmem>>, vector<864x24xf32>
    %13 = arith.addf %11, %12 : vector<864x24xf32>
    %c9 = arith.constant 9 : index
    %c48 = arith.constant 48 : index
    %14 = vector.load %arg6[%c9, %c48] : memref<928x216xf32, #tpu.memory_space<vmem>>, vector<864x24xf32>
    %15 = arith.addf %13, %14 : vector<864x24xf32>
    %c31 = arith.constant 31 : index
    %c72 = arith.constant 72 : index
    %16 = vector.load %arg6[%c31, %c72] : memref<928x216xf32, #tpu.memory_space<vmem>>, vector<864x24xf32>
    %17 = arith.addf %15, %16 : vector<864x24xf32>
    %c32_11 = arith.constant 32 : index
    %c96 = arith.constant 96 : index
    %18 = vector.load %arg6[%c32_11, %c96] : memref<928x216xf32, #tpu.memory_space<vmem>>, vector<864x24xf32>
    %19 = arith.addf %17, %18 : vector<864x24xf32>
    %c33 = arith.constant 33 : index
    %c120 = arith.constant 120 : index
    %20 = vector.load %arg6[%c33, %c120] : memref<928x216xf32, #tpu.memory_space<vmem>>, vector<864x24xf32>
    %21 = arith.addf %19, %20 : vector<864x24xf32>
    %c55 = arith.constant 55 : index
    %c144 = arith.constant 144 : index
    %22 = vector.load %arg6[%c55, %c144] : memref<928x216xf32, #tpu.memory_space<vmem>>, vector<864x24xf32>
    %23 = arith.addf %21, %22 : vector<864x24xf32>
    %c56 = arith.constant 56 : index
    %c168 = arith.constant 168 : index
    %24 = vector.load %arg6[%c56, %c168] : memref<928x216xf32, #tpu.memory_space<vmem>>, vector<864x24xf32>
    %25 = arith.addf %23, %24 : vector<864x24xf32>
    %c57 = arith.constant 57 : index
    %c192 = arith.constant 192 : index
    %26 = vector.load %arg6[%c57, %c192] : memref<928x216xf32, #tpu.memory_space<vmem>>, vector<864x24xf32>
    %27 = arith.addf %25, %26 : vector<864x24xf32>
    %28 = vector.broadcast %0 : vector<864x1xf32> to vector<864x24xf32>
    %29 = arith.mulf %27, %28 : vector<864x24xf32>
    %30 = arith.truncf %29 : vector<864x24xf32> to vector<864x24xbf16>
    %c0_12 = arith.constant 0 : index
    %c0_13 = arith.constant 0 : index
    %31 = vector.load %arg4[%c0_12, %c0_13] : memref<864x24xbf16, #tpu.memory_space<vmem>>, vector<864x24xbf16>
    tpu.vector_store %arg4[%c0_12, %c0_13], %30 {strides = array<i32>} : memref<864x24xbf16, #tpu.memory_space<vmem>>, vector<864x24xbf16>,
    %32 = arith.extf %30 : vector<864x24xbf16> to vector<864x24xf32>
    %cst_14 = arith.constant dense<0.000000e+00> : vector<24xf32>
    %33 = vector.multi_reduction <add>, %32, %cst_14 [0] : vector<864x24xf32> to vector<24xf32>
    %34 = vector.shape_cast %33 : vector<24xf32> to vector<1x24xf32>
    %35 = arith.mulf %32, %32 : vector<864x24xf32>
    %cst_15 = arith.constant dense<0.000000e+00> : vector<24xf32>
    %36 = vector.multi_reduction <add>, %35, %cst_15 [0] : vector<864x24xf32> to vector<24xf32>
    %37 = vector.shape_cast %36 : vector<24xf32> to vector<1x24xf32>
    %38 = tpu.concatenate %34, %37 in 0 : vector<1x24xf32>, vector<1x24xf32> -> vector<2x24xf32>
    %c0_16 = arith.constant 0 : index
    %c0_17 = arith.constant 0 : index
    %39 = vector.load %arg5[%c0_16, %c0_17] : memref<2x24xf32, #tpu.memory_space<vmem>>, vector<2x24xf32>
    tpu.vector_store %arg5[%c0_16, %c0_17], %38 {strides = array<i32>} : memref<2x24xf32, #tpu.memory_space<vmem>>, vector<2x24xf32>,
    return
  }
  func.func @transform_0(%arg0: i32) -> (i32, i32) {
    %c0_i32 = arith.constant 0 : i32
    %c0_i32_0 = arith.constant 0 : i32
    %c0_i32_1 = arith.constant 0 : i32
    return %c0_i32, %c0_i32_0 : i32, i32
  }
  func.func @transform_1(%arg0: i32) -> (i32, i32) {
    %c0_i32 = arith.constant 0 : i32
    %c0_i32_0 = arith.constant 0 : i32
    %c0_i32_1 = arith.constant 0 : i32
    return %c0_i32, %c0_i32_0 : i32, i32
  }
  func.func @transform_2(%arg0: i32) -> (i32, i32) {
    %c0_i32 = arith.constant 0 : i32
    %c0_i32_0 = arith.constant 0 : i32
    %c0_i32_1 = arith.constant 0 : i32
    return %c0_i32, %c0_i32_0 : i32, i32
  }
  func.func @transform_3(%arg0: i32) -> (i32, i32) {
    %c0_i32 = arith.constant 0 : i32
    %c0_i32_0 = arith.constant 0 : i32
    %c0_i32_1 = arith.constant 0 : i32
    return %c0_i32, %c0_i32_0 : i32, i32
  }
  func.func @transform_4(%arg0: i32) -> (i32, i32) {
    %c0_i32 = arith.constant 0 : i32
    %c0_i32_0 = arith.constant 0 : i32
    %c0_i32_1 = arith.constant 0 : i32
    return %c0_i32, %c0_i32_0 : i32, i32
  }
}

</mosaic_0001>

<llo_original>
// kernel: tpu_custom_call.1
$region0: #{tpu_custom_call.1}
  #allocation0 [shape = 'u32[]', space=smem, size = 0x4, offset = 0x4, fixed_abs, tag = 'smem constant byte address 0x4 - core index']
  #allocation1 [shape = 'u32[144,128]{1,0:T(1,128)}', space=vmem, size = 0x12000, scoped, tag = 'internal scratch']
  #allocation2 [shape = 'f32[928,216]{1,0:T(8,128)}', space=vmem, size = 0xe8000, scoped, tag = 'scratch operand']
  %s0 = inlined_call_operand.vmem [shape: f32[864,1], index: 0, kind: input, shape index: {}]
  %s1 = inlined_call_operand.vmem [shape: f32[864,1], index: 1, kind: input, shape index: {}]
  %s2 = inlined_call_operand.vmem [shape: f32[1,216], index: 2, kind: input, shape index: {}]
  %s3 = inlined_call_operand.vmem [shape: bf16[864,24], index: 3, kind: output, shape index: {0}]
  %s4 = inlined_call_operand.hbm [shape: f32[2,24], index: 4, kind: output, shape index: {1}]
  %5 = xla_tuple %s3, %s4
  %s6 = sld [smem:[#allocation0]]
  $region30: #{tpu_custom_call.1} parent=0
    _
  %s8 = ssub.s32 1, %s6
  %s9 = scalar_select 0, %s8, %s6
  $region1: #{tpu_custom_call.1} parent=0
    #allocation3 [shape = 'u8[1024]{0}', space=vmem, size = 0x400, scoped, tag = 'output window, operand 1, single buffered']
    #allocation4 [shape = 's32[1]{0}', space=sflag, size = 0x4, scoped, tag = 'scoped memory for tpu_custom_call.1']
    %10 = vsyncpa [#allocation4], 0
    // Predicated region
    $region2: #{tpu_custom_call.1} parent=1 // pred_check
      _
    $region3: #{tpu_custom_call.1} parent=1 // pred_check_branch
      %12 = sbr.rel (0) target = $region5
    $region4: #{tpu_custom_call.1} parent=1 // pred_region
      _
    $region5: #{tpu_custom_call.1} parent=1 // pred_fallthru
      _
    // Predicated region
    $region6: #{tpu_custom_call.1} parent=1 // pred_check
      _
    $region7: #{tpu_custom_call.1} parent=1 // pred_check_branch
      %14 = sbr.rel (0) target = $region9
    $region8: #{tpu_custom_call.1} parent=1 // pred_region
      _
    $region9: #{tpu_custom_call.1} parent=1 // pred_fallthru
      _
    // Predicated region
    $region10: #{tpu_custom_call.1} parent=1 // pred_check
      _
    $region11: #{tpu_custom_call.1} parent=1 // pred_check_branch
      %16 = sbr.rel (0) target = $region13
    $region12: #{tpu_custom_call.1} parent=1 // pred_region
      _
    $region13: #{tpu_custom_call.1} parent=1 // pred_fallthru
      _
    %v17 = vld [vmem:[%s1] sm:$0xff]
    %v18 = vld [vmem:[%s1 + $0x8] sm:$0xff]
    %v19 = vld [vmem:[%s1 + $0x10] sm:$0xff]
    %v20 = vld [vmem:[%s1 + $0x18] sm:$0xff]
    %v21 = vld [vmem:[%s1 + $0x20] sm:$0xff]
    %v22 = vld [vmem:[%s1 + $0x28] sm:$0xff]
    %v23 = vld [vmem:[%s1 + $0x30] sm:$0xff]
    %v24 = vld [vmem:[%s1 + $0x38] sm:$0xff]
    %v25 = vld [vmem:[%s1 + $0x40] sm:$0xff]
    %v26 = vld [vmem:[%s1 + $0x48] sm:$0xff]
    %v27 = vld [vmem:[%s1 + $0x50] sm:$0xff]
    %v28 = vld [vmem:[%s1 + $0x58] sm:$0xff]
    %v29 = vld [vmem:[%s1 + $0x60] sm:$0xff]
    %v30 = vld [vmem:[%s1 + $0x68] sm:$0xff]
    %v31 = vld [vmem:[%s1 + $0x70] sm:$0xff]
    %v32 = vld [vmem:[%s1 + $0x78] sm:$0xff]
    %v33 = vld [vmem:[%s1 + $0x80] sm:$0xff]
    %v34 = vld [vmem:[%s1 + $0x88] sm:$0xff]
    %v35 = vld [vmem:[%s1 + $0x90] sm:$0xff]
    %v36 = vld [vmem:[%s1 + $0x98] sm:$0xff]
    %v37 = vld [vmem:[%s1 + $0xa0] sm:$0xff]
    %v38 = vld [vmem:[%s1 + $0xa8] sm:$0xff]
    %v39 = vld [vmem:[%s1 + $0xb0] sm:$0xff]
    %v40 = vld [vmem:[%s1 + $0xb8] sm:$0xff]
    %v41 = vld [vmem:[%s1 + $0xc0] sm:$0xff]
    %v42 = vld [vmem:[%s1 + $0xc8] sm:$0xff]
    %v43 = vld [vmem:[%s1 + $0xd0] sm:$0xff]
    %v44 = vld [vmem:[%s1 + $0xd8] sm:$0xff]
    %v45 = vld [vmem:[%s1 + $0xe0] sm:$0xff]
    %v46 = vld [vmem:[%s1 + $0xe8] sm:$0xff]
    %v47 = vld [vmem:[%s1 + $0xf0] sm:$0xff]
    %v48 = vld [vmem:[%s1 + $0xf8] sm:$0xff]
    %v49 = vld [vmem:[%s1 + $0x100] sm:$0xff]
    %v50 = vld [vmem:[%s1 + $0x108] sm:$0xff]
    %v51 = vld [vmem:[%s1 + $0x110] sm:$0xff]
    %v52 = vld [vmem:[%s1 + $0x118] sm:$0xff]
    %v53 = vld [vmem:[%s1 + $0x120] sm:$0xff]
    %v54 = vld [vmem:[%s1 + $0x128] sm:$0xff]
    %v55 = vld [vmem:[%s1 + $0x130] sm:$0xff]
    %v56 = vld [vmem:[%s1 + $0x138] sm:$0xff]
    %v57 = vld [vmem:[%s1 + $0x140] sm:$0xff]
    %v58 = vld [vmem:[%s1 + $0x148] sm:$0xff]
    %v59 = vld [vmem:[%s1 + $0x150] sm:$0xff]
    %v60 = vld [vmem:[%s1 + $0x158] sm:$0xff]
    %v61 = vld [vmem:[%s1 + $0x160] sm:$0xff]
    %v62 = vld [vmem:[%s1 + $0x168] sm:$0xff]
    %v63 = vld [vmem:[%s1 + $0x170] sm:$0xff]
    %v64 = vld [vmem:[%s1 + $0x178] sm:$0xff]
    %v65 = vld [vmem:[%s1 + $0x180] sm:$0xff]
    %v66 = vld [vmem:[%s1 + $0x188] sm:$0xff]
    %v67 = vld [vmem:[%s1 + $0x190] sm:$0xff]
    %v68 = vld [vmem:[%s1 + $0x198] sm:$0xff]
    %v69 = vld [vmem:[%s1 + $0x1a0] sm:$0xff]
    %v70 = vld [vmem:[%s1 + $0x1a8] sm:$0xff]
    %v71 = vld [vmem:[%s1 + $0x1b0] sm:$0xff]
    %v72 = vld [vmem:[%s1 + $0x1b8] sm:$0xff]
    %v73 = vld [vmem:[%s1 + $0x1c0] sm:$0xff]
    %v74 = vld [vmem:[%s1 + $0x1c8] sm:$0xff]
    %v75 = vld [vmem:[%s1 + $0x1d0] sm:$0xff]
    %v76 = vld [vmem:[%s1 + $0x1d8] sm:$0xff]
    %v77 = vld [vmem:[%s1 + $0x1e0] sm:$0xff]
    %v78 = vld [vmem:[%s1 + $0x1e8] sm:$0xff]
    %v79 = vld [vmem:[%s1 + $0x1f0] sm:$0xff]
    %v80 = vld [vmem:[%s1 + $0x1f8] sm:$0xff]
    %v81 = vld [vmem:[%s1 + $0x200] sm:$0xff]
    %v82 = vld [vmem:[%s1 + $0x208] sm:$0xff]
    %v83 = vld [vmem:[%s1 + $0x210] sm:$0xff]
    %v84 = vld [vmem:[%s1 + $0x218] sm:$0xff]
    %v85 = vld [vmem:[%s1 + $0x220] sm:$0xff]
    %v86 = vld [vmem:[%s1 + $0x228] sm:$0xff]
    %v87 = vld [vmem:[%s1 + $0x230] sm:$0xff]
    %v88 = vld [vmem:[%s1 + $0x238] sm:$0xff]
    %v89 = vld [vmem:[%s1 + $0x240] sm:$0xff]
    %v90 = vld [vmem:[%s1 + $0x248] sm:$0xff]
    %v91 = vld [vmem:[%s1 + $0x250] sm:$0xff]
    %v92 = vld [vmem:[%s1 + $0x258] sm:$0xff]
    %v93 = vld [vmem:[%s1 + $0x260] sm:$0xff]
    %v94 = vld [vmem:[%s1 + $0x268] sm:$0xff]
    %v95 = vld [vmem:[%s1 + $0x270] sm:$0xff]
    %v96 = vld [vmem:[%s1 + $0x278] sm:$0xff]
    %v97 = vld [vmem:[%s1 + $0x280] sm:$0xff]
    %v98 = vld [vmem:[%s1 + $0x288] sm:$0xff]
    %v99 = vld [vmem:[%s1 + $0x290] sm:$0xff]
    %v100 = vld [vmem:[%s1 + $0x298] sm:$0xff]
    %v101 = vld [vmem:[%s1 + $0x2a0] sm:$0xff]
    %v102 = vld [vmem:[%s1 + $0x2a8] sm:$0xff]
    %v103 = vld [vmem:[%s1 + $0x2b0] sm:$0xff]
    %v104 = vld [vmem:[%s1 + $0x2b8] sm:$0xff]
    %v105 = vld [vmem:[%s1 + $0x2c0] sm:$0xff]
    %v106 = vld [vmem:[%s1 + $0x2c8] sm:$0xff]
    %v107 = vld [vmem:[%s1 + $0x2d0] sm:$0xff]
    %v108 = vld [vmem:[%s1 + $0x2d8] sm:$0xff]
    %v109 = vld [vmem:[%s1 + $0x2e0] sm:$0xff]
    %v110 = vld [vmem:[%s1 + $0x2e8] sm:$0xff]
    %v111 = vld [vmem:[%s1 + $0x2f0] sm:$0xff]
    %v112 = vld [vmem:[%s1 + $0x2f8] sm:$0xff]
    %v113 = vld [vmem:[%s1 + $0x300] sm:$0xff]
    %v114 = vld [vmem:[%s1 + $0x308] sm:$0xff]
    %v115 = vld [vmem:[%s1 + $0x310] sm:$0xff]
    %v116 = vld [vmem:[%s1 + $0x318] sm:$0xff]
    %v117 = vld [vmem:[%s1 + $0x320] sm:$0xff]
    %v118 = vld [vmem:[%s1 + $0x328] sm:$0xff]
    %v119 = vld [vmem:[%s1 + $0x330] sm:$0xff]
    %v120 = vld [vmem:[%s1 + $0x338] sm:$0xff]
    %v121 = vld [vmem:[%s1 + $0x340] sm:$0xff]
    %v122 = vld [vmem:[%s1 + $0x348] sm:$0xff]
    %v123 = vld [vmem:[%s1 + $0x350] sm:$0xff]
    %v124 = vld [vmem:[%s1 + $0x358] sm:$0xff]
    %v125 = vld [vmem:[%s0] sm:$0xff]
    %v126 = vld [vmem:[%s0 + $0x8] sm:$0xff]
    %v127 = vld [vmem:[%s0 + $0x10] sm:$0xff]
    %v128 = vld [vmem:[%s0 + $0x18] sm:$0xff]
    %v129 = vld [vmem:[%s0 + $0x20] sm:$0xff]
    %v130 = vld [vmem:[%s0 + $0x28] sm:$0xff]
    %v131 = vld [vmem:[%s0 + $0x30] sm:$0xff]
    %v132 = vld [vmem:[%s0 + $0x38] sm:$0xff]
    %v133 = vld [vmem:[%s0 + $0x40] sm:$0xff]
    %v134 = vld [vmem:[%s0 + $0x48] sm:$0xff]
    %v135 = vld [vmem:[%s0 + $0x50] sm:$0xff]
    %v136 = vld [vmem:[%s0 + $0x58] sm:$0xff]
    %v137 = vld [vmem:[%s0 + $0x60] sm:$0xff]
    %v138 = vld [vmem:[%s0 + $0x68] sm:$0xff]
    %v139 = vld [vmem:[%s0 + $0x70] sm:$0xff]
    %v140 = vld [vmem:[%s0 + $0x78] sm:$0xff]
    %v141 = vld [vmem:[%s0 + $0x80] sm:$0xff]
    %v142 = vld [vmem:[%s0 + $0x88] sm:$0xff]
    %v143 = vld [vmem:[%s0 + $0x90] sm:$0xff]
    %v144 = vld [vmem:[%s0 + $0x98] sm:$0xff]
    %v145 = vld [vmem:[%s0 + $0xa0] sm:$0xff]
    %v146 = vld [vmem:[%s0 + $0xa8] sm:$0xff]
    %v147 = vld [vmem:[%s0 + $0xb0] sm:$0xff]
    %v148 = vld [vmem:[%s0 + $0xb8] sm:$0xff]
    %v149 = vld [vmem:[%s0 + $0xc0] sm:$0xff]
    %v150 = vld [vmem:[%s0 + $0xc8] sm:$0xff]
    %v151 = vld [vmem:[%s0 + $0xd0] sm:$0xff]
    %v152 = vld [vmem:[%s0 + $0xd8] sm:$0xff]
    %v153 = vld [vmem:[%s0 + $0xe0] sm:$0xff]
    %v154 = vld [vmem:[%s0 + $0xe8] sm:$0xff]
    %v155 = vld [vmem:[%s0 + $0xf0] sm:$0xff]
    %v156 = vld [vmem:[%s0 + $0xf8] sm:$0xff]
    %v157 = vld [vmem:[%s0 + $0x100] sm:$0xff]
    %v158 = vld [vmem:[%s0 + $0x108] sm:$0xff]
    %v159 = vld [vmem:[%s0 + $0x110] sm:$0xff]
    %v160 = vld [vmem:[%s0 + $0x118] sm:$0xff]
    %v161 = vld [vmem:[%s0 + $0x120] sm:$0xff]
    %v162 = vld [vmem:[%s0 + $0x128] sm:$0xff]
    %v163 = vld [vmem:[%s0 + $0x130] sm:$0xff]
    %v164 = vld [vmem:[%s0 + $0x138] sm:$0xff]
    %v165 = vld [vmem:[%s0 + $0x140] sm:$0xff]
    %v166 = vld [vmem:[%s0 + $0x148] sm:$0xff]
    %v167 = vld [vmem:[%s0 + $0x150] sm:$0xff]
    %v168 = vld [vmem:[%s0 + $0x158] sm:$0xff]
    %v169 = vld [vmem:[%s0 + $0x160] sm:$0xff]
    %v170 = vld [vmem:[%s0 + $0x168] sm:$0xff]
    %v171 = vld [vmem:[%s0 + $0x170] sm:$0xff]
    %v172 = vld [vmem:[%s0 + $0x178] sm:$0xff]
    %v173 = vld [vmem:[%s0 + $0x180] sm:$0xff]
    %v174 = vld [vmem:[%s0 + $0x188] sm:$0xff]
    %v175 = vld [vmem:[%s0 + $0x190] sm:$0xff]
    %v176 = vld [vmem:[%s0 + $0x198] sm:$0xff]
    %v177 = vld [vmem:[%s0 + $0x1a0] sm:$0xff]
    %v178 = vld [vmem:[%s0 + $0x1a8] sm:$0xff]
    %v179 = vld [vmem:[%s0 + $0x1b0] sm:$0xff]
    %v180 = vld [vmem:[%s0 + $0x1b8] sm:$0xff]
    %v181 = vld [vmem:[%s0 + $0x1c0] sm:$0xff]
    %v182 = vld [vmem:[%s0 + $0x1c8] sm:$0xff]
    %v183 = vld [vmem:[%s0 + $0x1d0] sm:$0xff]
    %v184 = vld [vmem:[%s0 + $0x1d8] sm:$0xff]
    %v185 = vld [vmem:[%s0 + $0x1e0] sm:$0xff]
    %v186 = vld [vmem:[%s0 + $0x1e8] sm:$0xff]
    %v187 = vld [vmem:[%s0 + $0x1f0] sm:$0xff]
    %v188 = vld [vmem:[%s0 + $0x1f8] sm:$0xff]
    %v189 = vld [vmem:[%s0 + $0x200] sm:$0xff]
    %v190 = vld [vmem:[%s0 + $0x208] sm:$0xff]
    %v191 = vld [vmem:[%s0 + $0x210] sm:$0xff]
    %v192 = vld [vmem:[%s0 + $0x218] sm:$0xff]
    %v193 = vld [vmem:[%s0 + $0x220] sm:$0xff]
    %v194 = vld [vmem:[%s0 + $0x228] sm:$0xff]
    %v195 = vld [vmem:[%s0 + $0x230] sm:$0xff]
    %v196 = vld [vmem:[%s0 + $0x238] sm:$0xff]
    %v197 = vld [vmem:[%s0 + $0x240] sm:$0xff]
    %v198 = vld [vmem:[%s0 + $0x248] sm:$0xff]
    %v199 = vld [vmem:[%s0 + $0x250] sm:$0xff]
    %v200 = vld [vmem:[%s0 + $0x258] sm:$0xff]
    %v201 = vld [vmem:[%s0 + $0x260] sm:$0xff]
    %v202 = vld [vmem:[%s0 + $0x268] sm:$0xff]
    %v203 = vld [vmem:[%s0 + $0x270] sm:$0xff]
    %v204 = vld [vmem:[%s0 + $0x278] sm:$0xff]
    %v205 = vld [vmem:[%s0 + $0x280] sm:$0xff]
    %v206 = vld [vmem:[%s0 + $0x288] sm:$0xff]
    %v207 = vld [vmem:[%s0 + $0x290] sm:$0xff]
    %v208 = vld [vmem:[%s0 + $0x298] sm:$0xff]
    %v209 = vld [vmem:[%s0 + $0x2a0] sm:$0xff]
    %v210 = vld [vmem:[%s0 + $0x2a8] sm:$0xff]
    %v211 = vld [vmem:[%s0 + $0x2b0] sm:$0xff]
    %v212 = vld [vmem:[%s0 + $0x2b8] sm:$0xff]
    %v213 = vld [vmem:[%s0 + $0x2c0] sm:$0xff]
    %v214 = vld [vmem:[%s0 + $0x2c8] sm:$0xff]
    %v215 = vld [vmem:[%s0 + $0x2d0] sm:$0xff]
    %v216 = vld [vmem:[%s0 + $0x2d8] sm:$0xff]
    %v217 = vld [vmem:[%s0 + $0x2e0] sm:$0xff]
    %v218 = vld [vmem:[%s0 + $0x2e8] sm:$0xff]
    %v219 = vld [vmem:[%s0 + $0x2f0] sm:$0xff]
    %v220 = vld [vmem:[%s0 + $0x2f8] sm:$0xff]
    %v221 = vld [vmem:[%s0 + $0x300] sm:$0xff]
    %v222 = vld [vmem:[%s0 + $0x308] sm:$0xff]
    %v223 = vld [vmem:[%s0 + $0x310] sm:$0xff]
    %v224 = vld [vmem:[%s0 + $0x318] sm:$0xff]
    %v225 = vld [vmem:[%s0 + $0x320] sm:$0xff]
    %v226 = vld [vmem:[%s0 + $0x328] sm:$0xff]
    %v227 = vld [vmem:[%s0 + $0x330] sm:$0xff]
    %v228 = vld [vmem:[%s0 + $0x338] sm:$0xff]
    %v229 = vld [vmem:[%s0 + $0x340] sm:$0xff]
    %v230 = vld [vmem:[%s0 + $0x348] sm:$0xff]
    %v231 = vld [vmem:[%s0 + $0x350] sm:$0xff]
    %v232 = vld [vmem:[%s0 + $0x358] sm:$0xff]
    %v233 = vld [vmem:[%s2] sm:$0x3]
    %235 = vset.pattern.permute.xlu0 0
    %236 = vperm.xlu0 %235, %v125
    %v237 = vpop.permute.xlu0 %236
    %240 = vset.pattern.permute.xlu0 0
    %241 = vperm.xlu0 %240, %v126
    %v242 = vpop.permute.xlu0 %241
    %245 = vset.pattern.permute.xlu0 0
    %246 = vperm.xlu0 %245, %v127
    %v247 = vpop.permute.xlu0 %246
    %250 = vset.pattern.permute.xlu0 0
    %251 = vperm.xlu0 %250, %v128
    %v252 = vpop.permute.xlu0 %251
    %255 = vset.pattern.permute.xlu0 0
    %256 = vperm.xlu0 %255, %v129
    %v257 = vpop.permute.xlu0 %256
    %260 = vset.pattern.permute.xlu0 0
    %261 = vperm.xlu0 %260, %v130
    %v262 = vpop.permute.xlu0 %261
    %265 = vset.pattern.permute.xlu0 0
    %266 = vperm.xlu0 %265, %v131
    %v267 = vpop.permute.xlu0 %266
    %270 = vset.pattern.permute.xlu0 0
    %271 = vperm.xlu0 %270, %v132
    %v272 = vpop.permute.xlu0 %271
    %275 = vset.pattern.permute.xlu0 0
    %276 = vperm.xlu0 %275, %v133
    %v277 = vpop.permute.xlu0 %276
    %280 = vset.pattern.permute.xlu0 0
    %281 = vperm.xlu0 %280, %v134
    %v282 = vpop.permute.xlu0 %281
    %285 = vset.pattern.permute.xlu0 0
    %286 = vperm.xlu0 %285, %v135
    %v287 = vpop.permute.xlu0 %286
    %290 = vset.pattern.permute.xlu0 0
    %291 = vperm.xlu0 %290, %v136
    %v292 = vpop.permute.xlu0 %291
    %295 = vset.pattern.permute.xlu0 0
    %296 = vperm.xlu0 %295, %v137
    %v297 = vpop.permute.xlu0 %296
    %300 = vset.pattern.permute.xlu0 0
    %301 = vperm.xlu0 %300, %v138
    %v302 = vpop.permute.xlu0 %301
    %305 = vset.pattern.permute.xlu0 0
    %306 = vperm.xlu0 %305, %v139
    %v307 = vpop.permute.xlu0 %306
    %310 = vset.pattern.permute.xlu0 0
    %311 = vperm.xlu0 %310, %v140
    %v312 = vpop.permute.xlu0 %311
    %315 = vset.pattern.permute.xlu0 0
    %316 = vperm.xlu0 %315, %v141
    %v317 = vpop.permute.xlu0 %316
    %320 = vset.pattern.permute.xlu0 0
    %321 = vperm.xlu0 %320, %v142
    %v322 = vpop.permute.xlu0 %321
    %325 = vset.pattern.permute.xlu0 0
    %326 = vperm.xlu0 %325, %v143
    %v327 = vpop.permute.xlu0 %326
    %330 = vset.pattern.permute.xlu0 0
    %331 = vperm.xlu0 %330, %v144
    %v332 = vpop.permute.xlu0 %331
    %335 = vset.pattern.permute.xlu0 0
    %336 = vperm.xlu0 %335, %v145
    %v337 = vpop.permute.xlu0 %336
    %340 = vset.pattern.permute.xlu0 0
    %341 = vperm.xlu0 %340, %v146
    %v342 = vpop.permute.xlu0 %341
    %345 = vset.pattern.permute.xlu0 0
    %346 = vperm.xlu0 %345, %v147
    %v347 = vpop.permute.xlu0 %346
    %350 = vset.pattern.permute.xlu0 0
    %351 = vperm.xlu0 %350, %v148
    %v352 = vpop.permute.xlu0 %351
    %355 = vset.pattern.permute.xlu0 0
    %356 = vperm.xlu0 %355, %v149
    %v357 = vpop.permute.xlu0 %356
    %360 = vset.pattern.permute.xlu0 0
    %361 = vperm.xlu0 %360, %v150
    %v362 = vpop.permute.xlu0 %361
    %365 = vset.pattern.permute.xlu0 0
    %366 = vperm.xlu0 %365, %v151
    %v367 = vpop.permute.xlu0 %366
    %370 = vset.pattern.permute.xlu0 0
    %371 = vperm.xlu0 %370, %v152
    %v372 = vpop.permute.xlu0 %371
    %375 = vset.pattern.permute.xlu0 0
    %376 = vperm.xlu0 %375, %v153
    %v377 = vpop.permute.xlu0 %376
    %380 = vset.pattern.permute.xlu0 0
    %381 = vperm.xlu0 %380, %v154
    %v382 = vpop.permute.xlu0 %381
    %385 = vset.pattern.permute.xlu0 0
    %386 = vperm.xlu0 %385, %v155
    %v387 = vpop.permute.xlu0 %386
    %390 = vset.pattern.permute.xlu0 0
    %391 = vperm.xlu0 %390, %v156
    %v392 = vpop.permute.xlu0 %391
    %395 = vset.pattern.permute.xlu0 0
    %396 = vperm.xlu0 %395, %v157
    %v397 = vpop.permute.xlu0 %396
    %400 = vset.pattern.permute.xlu0 0
    %401 = vperm.xlu0 %400, %v158
    %v402 = vpop.permute.xlu0 %401
    %405 = vset.pattern.permute.xlu0 0
    %406 = vperm.xlu0 %405, %v159
    %v407 = vpop.permute.xlu0 %406
    %410 = vset.pattern.permute.xlu0 0
    %411 = vperm.xlu0 %410, %v160
    %v412 = vpop.permute.xlu0 %411
    %415 = vset.pattern.permute.xlu0 0
    %416 = vperm.xlu0 %415, %v161
    %v417 = vpop.permute.xlu0 %416
    %420 = vset.pattern.permute.xlu0 0
    %421 = vperm.xlu0 %420, %v162
    %v422 = vpop.permute.xlu0 %421
    %425 = vset.pattern.permute.xlu0 0
    %426 = vperm.xlu0 %425, %v163
    %v427 = vpop.permute.xlu0 %426
    %430 = vset.pattern.permute.xlu0 0
    %431 = vperm.xlu0 %430, %v164
    %v432 = vpop.permute.xlu0 %431
    %435 = vset.pattern.permute.xlu0 0
    %436 = vperm.xlu0 %435, %v165
    %v437 = vpop.permute.xlu0 %436
    %440 = vset.pattern.permute.xlu0 0
    %441 = vperm.xlu0 %440, %v166
    %v442 = vpop.permute.xlu0 %441
    %445 = vset.pattern.permute.xlu0 0
    %446 = vperm.xlu0 %445, %v167
    %v447 = vpop.permute.xlu0 %446
    %450 = vset.pattern.permute.xlu0 0
    %451 = vperm.xlu0 %450, %v168
    %v452 = vpop.permute.xlu0 %451
    %455 = vset.pattern.permute.xlu0 0
    %456 = vperm.xlu0 %455, %v169
    %v457 = vpop.permute.xlu0 %456
    %460 = vset.pattern.permute.xlu0 0
    %461 = vperm.xlu0 %460, %v170
    %v462 = vpop.permute.xlu0 %461
    %465 = vset.pattern.permute.xlu0 0
    %466 = vperm.xlu0 %465, %v171
    %v467 = vpop.permute.xlu0 %466
    %470 = vset.pattern.permute.xlu0 0
    %471 = vperm.xlu0 %470, %v172
    %v472 = vpop.permute.xlu0 %471
    %475 = vset.pattern.permute.xlu0 0
    %476 = vperm.xlu0 %475, %v173
    %v477 = vpop.permute.xlu0 %476
    %480 = vset.pattern.permute.xlu0 0
    %481 = vperm.xlu0 %480, %v174
    %v482 = vpop.permute.xlu0 %481
    %485 = vset.pattern.permute.xlu0 0
    %486 = vperm.xlu0 %485, %v175
    %v487 = vpop.permute.xlu0 %486
    %490 = vset.pattern.permute.xlu0 0
    %491 = vperm.xlu0 %490, %v176
    %v492 = vpop.permute.xlu0 %491
    %495 = vset.pattern.permute.xlu0 0
    %496 = vperm.xlu0 %495, %v177
    %v497 = vpop.permute.xlu0 %496
    %500 = vset.pattern.permute.xlu0 0
    %501 = vperm.xlu0 %500, %v178
    %v502 = vpop.permute.xlu0 %501
    %505 = vset.pattern.permute.xlu0 0
    %506 = vperm.xlu0 %505, %v179
    %v507 = vpop.permute.xlu0 %506
    %510 = vset.pattern.permute.xlu0 0
    %511 = vperm.xlu0 %510, %v180
    %v512 = vpop.permute.xlu0 %511
    %515 = vset.pattern.permute.xlu0 0
    %516 = vperm.xlu0 %515, %v181
    %v517 = vpop.permute.xlu0 %516
    %520 = vset.pattern.permute.xlu0 0
    %521 = vperm.xlu0 %520, %v182
    %v522 = vpop.permute.xlu0 %521
    %525 = vset.pattern.permute.xlu0 0
    %526 = vperm.xlu0 %525, %v183
    %v527 = vpop.permute.xlu0 %526
    %530 = vset.pattern.permute.xlu0 0
    %531 = vperm.xlu0 %530, %v184
    %v532 = vpop.permute.xlu0 %531
    %535 = vset.pattern.permute.xlu0 0
    %536 = vperm.xlu0 %535, %v185
    %v537 = vpop.permute.xlu0 %536
    %540 = vset.pattern.permute.xlu0 0
    %541 = vperm.xlu0 %540, %v186
    %v542 = vpop.permute.xlu0 %541
    %545 = vset.pattern.permute.xlu0 0
    %546 = vperm.xlu0 %545, %v187
    %v547 = vpop.permute.xlu0 %546
    %550 = vset.pattern.permute.xlu0 0
    %551 = vperm.xlu0 %550, %v188
    %v552 = vpop.permute.xlu0 %551
    %555 = vset.pattern.permute.xlu0 0
    %556 = vperm.xlu0 %555, %v189
    %v557 = vpop.permute.xlu0 %556
    %560 = vset.pattern.permute.xlu0 0
    %561 = vperm.xlu0 %560, %v190
    %v562 = vpop.permute.xlu0 %561
    %565 = vset.pattern.permute.xlu0 0
    %566 = vperm.xlu0 %565, %v191
    %v567 = vpop.permute.xlu0 %566
    %570 = vset.pattern.permute.xlu0 0
    %571 = vperm.xlu0 %570, %v192
    %v572 = vpop.permute.xlu0 %571
    %575 = vset.pattern.permute.xlu0 0
    %576 = vperm.xlu0 %575, %v193
    %v577 = vpop.permute.xlu0 %576
    %580 = vset.pattern.permute.xlu0 0
    %581 = vperm.xlu0 %580, %v194
    %v582 = vpop.permute.xlu0 %581
    %585 = vset.pattern.permute.xlu0 0
    %586 = vperm.xlu0 %585, %v195
    %v587 = vpop.permute.xlu0 %586
    %590 = vset.pattern.permute.xlu0 0
    %591 = vperm.xlu0 %590, %v196
    %v592 = vpop.permute.xlu0 %591
    %595 = vset.pattern.permute.xlu0 0
    %596 = vperm.xlu0 %595, %v197
    %v597 = vpop.permute.xlu0 %596
    %600 = vset.pattern.permute.xlu0 0
    %601 = vperm.xlu0 %600, %v198
    %v602 = vpop.permute.xlu0 %601
    %605 = vset.pattern.permute.xlu0 0
    %606 = vperm.xlu0 %605, %v199
    %v607 = vpop.permute.xlu0 %606
    %610 = vset.pattern.permute.xlu0 0
    %611 = vperm.xlu0 %610, %v200
    %v612 = vpop.permute.xlu0 %611
    %615 = vset.pattern.permute.xlu0 0
    %616 = vperm.xlu0 %615, %v201
    %v617 = vpop.permute.xlu0 %616
    %620 = vset.pattern.permute.xlu0 0
    %621 = vperm.xlu0 %620, %v202
    %v622 = vpop.permute.xlu0 %621
    %625 = vset.pattern.permute.xlu0 0
    %626 = vperm.xlu0 %625, %v203
    %v627 = vpop.permute.xlu0 %626
    %630 = vset.pattern.permute.xlu0 0
    %631 = vperm.xlu0 %630, %v204
    %v632 = vpop.permute.xlu0 %631
    %635 = vset.pattern.permute.xlu0 0
    %636 = vperm.xlu0 %635, %v205
    %v637 = vpop.permute.xlu0 %636
    %640 = vset.pattern.permute.xlu0 0
    %641 = vperm.xlu0 %640, %v206
    %v642 = vpop.permute.xlu0 %641
    %645 = vset.pattern.permute.xlu0 0
    %646 = vperm.xlu0 %645, %v207
    %v647 = vpop.permute.xlu0 %646
    %650 = vset.pattern.permute.xlu0 0
    %651 = vperm.xlu0 %650, %v208
    %v652 = vpop.permute.xlu0 %651
    %655 = vset.pattern.permute.xlu0 0
    %656 = vperm.xlu0 %655, %v209
    %v657 = vpop.permute.xlu0 %656
    %660 = vset.pattern.permute.xlu0 0
    %661 = vperm.xlu0 %660, %v210
    %v662 = vpop.permute.xlu0 %661
    %665 = vset.pattern.permute.xlu0 0
    %666 = vperm.xlu0 %665, %v211
    %v667 = vpop.permute.xlu0 %666
    %670 = vset.pattern.permute.xlu0 0
    %671 = vperm.xlu0 %670, %v212
    %v672 = vpop.permute.xlu0 %671
    %675 = vset.pattern.permute.xlu0 0
    %676 = vperm.xlu0 %675, %v213
    %v677 = vpop.permute.xlu0 %676
    %680 = vset.pattern.permute.xlu0 0
    %681 = vperm.xlu0 %680, %v214
    %v682 = vpop.permute.xlu0 %681
    %685 = vset.pattern.permute.xlu0 0
    %686 = vperm.xlu0 %685, %v215
    %v687 = vpop.permute.xlu0 %686
    %690 = vset.pattern.permute.xlu0 0
    %691 = vperm.xlu0 %690, %v216
    %v692 = vpop.permute.xlu0 %691
    %695 = vset.pattern.permute.xlu0 0
    %696 = vperm.xlu0 %695, %v217
    %v697 = vpop.permute.xlu0 %696
    %700 = vset.pattern.permute.xlu0 0
    %701 = vperm.xlu0 %700, %v218
    %v702 = vpop.permute.xlu0 %701
    %705 = vset.pattern.permute.xlu0 0
    %706 = vperm.xlu0 %705, %v219
    %v707 = vpop.permute.xlu0 %706
    %710 = vset.pattern.permute.xlu0 0
    %711 = vperm.xlu0 %710, %v220
    %v712 = vpop.permute.xlu0 %711
    %715 = vset.pattern.permute.xlu0 0
    %716 = vperm.xlu0 %715, %v221
    %v717 = vpop.permute.xlu0 %716
    %720 = vset.pattern.permute.xlu0 0
    %721 = vperm.xlu0 %720, %v222
    %v722 = vpop.permute.xlu0 %721
    %725 = vset.pattern.permute.xlu0 0
    %726 = vperm.xlu0 %725, %v223
    %v727 = vpop.permute.xlu0 %726
    %730 = vset.pattern.permute.xlu0 0
    %731 = vperm.xlu0 %730, %v224
    %v732 = vpop.permute.xlu0 %731
    %735 = vset.pattern.permute.xlu0 0
    %736 = vperm.xlu0 %735, %v225
    %v737 = vpop.permute.xlu0 %736
    %740 = vset.pattern.permute.xlu0 0
    %741 = vperm.xlu0 %740, %v226
    %v742 = vpop.permute.xlu0 %741
    %745 = vset.pattern.permute.xlu0 0
    %746 = vperm.xlu0 %745, %v227
    %v747 = vpop.permute.xlu0 %746
    %750 = vset.pattern.permute.xlu0 0
    %751 = vperm.xlu0 %750, %v228
    %v752 = vpop.permute.xlu0 %751
    %755 = vset.pattern.permute.xlu0 0
    %756 = vperm.xlu0 %755, %v229
    %v757 = vpop.permute.xlu0 %756
    %760 = vset.pattern.permute.xlu0 0
    %761 = vperm.xlu0 %760, %v230
    %v762 = vpop.permute.xlu0 %761
    %765 = vset.pattern.permute.xlu0 0
    %766 = vperm.xlu0 %765, %v231
    %v767 = vpop.permute.xlu0 %766
    %770 = vset.pattern.permute.xlu0 0
    %771 = vperm.xlu0 %770, %v232
    %v772 = vpop.permute.xlu0 %771
    %v775 = vlaneseq
    %v776 = vshrl.u32 %v775, 7
    %v777 = vsub.s32 0, %v776
    %v778 = vrot.slane %v233, %v777
    %v779 = vlaneseq
    %v780 = vshrl.u32 %v779, 7
    %v781 = vsub.s32 1, %v780
    %v782 = vrot.slane %v233, %v781
    %v785 = vmul.f32 %v237, %v778
    %v786 = vmul.f32 %v237, %v782
    %v787 = vmul.f32 %v242, %v778
    %v788 = vmul.f32 %v242, %v782
    %v789 = vmul.f32 %v247, %v778
    %v790 = vmul.f32 %v247, %v782
    %v791 = vmul.f32 %v252, %v778
    %v792 = vmul.f32 %v252, %v782
    %v793 = vmul.f32 %v257, %v778
    %v794 = vmul.f32 %v257, %v782
    %v795 = vmul.f32 %v262, %v778
    %v796 = vmul.f32 %v262, %v782
    %v797 = vmul.f32 %v267, %v778
    %v798 = vmul.f32 %v267, %v782
    %v799 = vmul.f32 %v272, %v778
    %v800 = vmul.f32 %v272, %v782
    %v801 = vmul.f32 %v277, %v778
    %v802 = vmul.f32 %v277, %v782
    %v803 = vmul.f32 %v282, %v778
    %v804 = vmul.f32 %v282, %v782
    %v805 = vmul.f32 %v287, %v778
    %v806 = vmul.f32 %v287, %v782
    %v807 = vmul.f32 %v292, %v778
    %v808 = vmul.f32 %v292, %v782
    %v809 = vmul.f32 %v297, %v778
    %v810 = vmul.f32 %v297, %v782
    %v811 = vmul.f32 %v302, %v778
    %v812 = vmul.f32 %v302, %v782
    %v813 = vmul.f32 %v307, %v778
    %v814 = vmul.f32 %v307, %v782
    %v815 = vmul.f32 %v312, %v778
    %v816 = vmul.f32 %v312, %v782
    %v817 = vmul.f32 %v317, %v778
    %v818 = vmul.f32 %v317, %v782
    %v819 = vmul.f32 %v322, %v778
    %v820 = vmul.f32 %v322, %v782
    %v821 = vmul.f32 %v327, %v778
    %v822 = vmul.f32 %v327, %v782
    %v823 = vmul.f32 %v332, %v778
    %v824 = vmul.f32 %v332, %v782
    %v825 = vmul.f32 %v337, %v778
    %v826 = vmul.f32 %v337, %v782
    %v827 = vmul.f32 %v342, %v778
    %v828 = vmul.f32 %v342, %v782
    %v829 = vmul.f32 %v347, %v778
    %v830 = vmul.f32 %v347, %v782
    %v831 = vmul.f32 %v352, %v778
    %v832 = vmul.f32 %v352, %v782
    %v833 = vmul.f32 %v357, %v778
    %v834 = vmul.f32 %v357, %v782
    %v835 = vmul.f32 %v362, %v778
    %v836 = vmul.f32 %v362, %v782
    %v837 = vmul.f32 %v367, %v778
    %v838 = vmul.f32 %v367, %v782
    %v839 = vmul.f32 %v372, %v778
    %v840 = vmul.f32 %v372, %v782
    %v841 = vmul.f32 %v377, %v778
    %v842 = vmul.f32 %v377, %v782
    %v843 = vmul.f32 %v382, %v778
    %v844 = vmul.f32 %v382, %v782
    %v845 = vmul.f32 %v387, %v778
    %v846 = vmul.f32 %v387, %v782
    %v847 = vmul.f32 %v392, %v778
    %v848 = vmul.f32 %v392, %v782
    %v849 = vmul.f32 %v397, %v778
    %v850 = vmul.f32 %v397, %v782
    %v851 = vmul.f32 %v402, %v778
    %v852 = vmul.f32 %v402, %v782
    %v853 = vmul.f32 %v407, %v778
    %v854 = vmul.f32 %v407, %v782
    %v855 = vmul.f32 %v412, %v778
    %v856 = vmul.f32 %v412, %v782
    %v857 = vmul.f32 %v417, %v778
    %v858 = vmul.f32 %v417, %v782
    %v859 = vmul.f32 %v422, %v778
    %v860 = vmul.f32 %v422, %v782
    %v861 = vmul.f32 %v427, %v778
    %v862 = vmul.f32 %v427, %v782
    %v863 = vmul.f32 %v432, %v778
    %v864 = vmul.f32 %v432, %v782
    %v865 = vmul.f32 %v437, %v778
    %v866 = vmul.f32 %v437, %v782
    %v867 = vmul.f32 %v442, %v778
    %v868 = vmul.f32 %v442, %v782
    %v869 = vmul.f32 %v447, %v778
    %v870 = vmul.f32 %v447, %v782
    %v871 = vmul.f32 %v452, %v778
    %v872 = vmul.f32 %v452, %v782
    %v873 = vmul.f32 %v457, %v778
    %v874 = vmul.f32 %v457, %v782
    %v875 = vmul.f32 %v462, %v778
    %v876 = vmul.f32 %v462, %v782
    %v877 = vmul.f32 %v467, %v778
    %v878 = vmul.f32 %v467, %v782
    %v879 = vmul.f32 %v472, %v778
    %v880 = vmul.f32 %v472, %v782
    %v881 = vmul.f32 %v477, %v778
    %v882 = vmul.f32 %v477, %v782
    %v883 = vmul.f32 %v482, %v778
    %v884 = vmul.f32 %v482, %v782
    %v885 = vmul.f32 %v487, %v778
    %v886 = vmul.f32 %v487, %v782
    %v887 = vmul.f32 %v492, %v778
    %v888 = vmul.f32 %v492, %v782
    %v889 = vmul.f32 %v497, %v778
    %v890 = vmul.f32 %v497, %v782
    %v891 = vmul.f32 %v502, %v778
    %v892 = vmul.f32 %v502, %v782
    %v893 = vmul.f32 %v507, %v778
    %v894 = vmul.f32 %v507, %v782
    %v895 = vmul.f32 %v512, %v778
    %v896 = vmul.f32 %v512, %v782
    %v897 = vmul.f32 %v517, %v778
    %v898 = vmul.f32 %v517, %v782
    %v899 = vmul.f32 %v522, %v778
    %v900 = vmul.f32 %v522, %v782
    %v901 = vmul.f32 %v527, %v778
    %v902 = vmul.f32 %v527, %v782
    %v903 = vmul.f32 %v532, %v778
    %v904 = vmul.f32 %v532, %v782
    %v905 = vmul.f32 %v537, %v778
    %v906 = vmul.f32 %v537, %v782
    %v907 = vmul.f32 %v542, %v778
    %v908 = vmul.f32 %v542, %v782
    %v909 = vmul.f32 %v547, %v778
    %v910 = vmul.f32 %v547, %v782
    %v911 = vmul.f32 %v552, %v778
    %v912 = vmul.f32 %v552, %v782
    %v913 = vmul.f32 %v557, %v778
    %v914 = vmul.f32 %v557, %v782
    %v915 = vmul.f32 %v562, %v778
    %v916 = vmul.f32 %v562, %v782
    %v917 = vmul.f32 %v567, %v778
    %v918 = vmul.f32 %v567, %v782
    %v919 = vmul.f32 %v572, %v778
    %v920 = vmul.f32 %v572, %v782
    %v921 = vmul.f32 %v577, %v778
    %v922 = vmul.f32 %v577, %v782
    %v923 = vmul.f32 %v582, %v778
    %v924 = vmul.f32 %v582, %v782
    %v925 = vmul.f32 %v587, %v778
    %v926 = vmul.f32 %v587, %v782
    %v927 = vmul.f32 %v592, %v778
    %v928 = vmul.f32 %v592, %v782
    %v929 = vmul.f32 %v597, %v778
    %v930 = vmul.f32 %v597, %v782
    %v931 = vmul.f32 %v602, %v778
    %v932 = vmul.f32 %v602, %v782
    %v933 = vmul.f32 %v607, %v778
    %v934 = vmul.f32 %v607, %v782
    %v935 = vmul.f32 %v612, %v778
    %v936 = vmul.f32 %v612, %v782
    %v937 = vmul.f32 %v617, %v778
    %v938 = vmul.f32 %v617, %v782
    %v939 = vmul.f32 %v622, %v778
    %v940 = vmul.f32 %v622, %v782
    %v941 = vmul.f32 %v627, %v778
    %v942 = vmul.f32 %v627, %v782
    %v943 = vmul.f32 %v632, %v778
    %v944 = vmul.f32 %v632, %v782
    %v945 = vmul.f32 %v637, %v778
    %v946 = vmul.f32 %v637, %v782
    %v947 = vmul.f32 %v642, %v778
    %v948 = vmul.f32 %v642, %v782
    %v949 = vmul.f32 %v647, %v778
    %v950 = vmul.f32 %v647, %v782
    %v951 = vmul.f32 %v652, %v778
    %v952 = vmul.f32 %v652, %v782
    %v953 = vmul.f32 %v657, %v778
    %v954 = vmul.f32 %v657, %v782
    %v955 = vmul.f32 %v662, %v778
    %v956 = vmul.f32 %v662, %v782
    %v957 = vmul.f32 %v667, %v778
    %v958 = vmul.f32 %v667, %v782
    %v959 = vmul.f32 %v672, %v778
    %v960 = vmul.f32 %v672, %v782
    %v961 = vmul.f32 %v677, %v778
    %v962 = vmul.f32 %v677, %v782
    %v963 = vmul.f32 %v682, %v778
    %v964 = vmul.f32 %v682, %v782
    %v965 = vmul.f32 %v687, %v778
    %v966 = vmul.f32 %v687, %v782
    %v967 = vmul.f32 %v692, %v778
    %v968 = vmul.f32 %v692, %v782
    %v969 = vmul.f32 %v697, %v778
    %v970 = vmul.f32 %v697, %v782
    %v971 = vmul.f32 %v702, %v778
    %v972 = vmul.f32 %v702, %v782
    %v973 = vmul.f32 %v707, %v778
    %v974 = vmul.f32 %v707, %v782
    %v975 = vmul.f32 %v712, %v778
    %v976 = vmul.f32 %v712, %v782
    %v977 = vmul.f32 %v717, %v778
    %v978 = vmul.f32 %v717, %v782
    %v979 = vmul.f32 %v722, %v778
    %v980 = vmul.f32 %v722, %v782
    %v981 = vmul.f32 %v727, %v778
    %v982 = vmul.f32 %v727, %v782
    %v983 = vmul.f32 %v732, %v778
    %v984 = vmul.f32 %v732, %v782
    %v985 = vmul.f32 %v737, %v778
    %v986 = vmul.f32 %v737, %v782
    %v987 = vmul.f32 %v742, %v778
    %v988 = vmul.f32 %v742, %v782
    %v989 = vmul.f32 %v747, %v778
    %v990 = vmul.f32 %v747, %v782
    %v991 = vmul.f32 %v752, %v778
    %v992 = vmul.f32 %v752, %v782
    %v993 = vmul.f32 %v757, %v778
    %v994 = vmul.f32 %v757, %v782
    %v995 = vmul.f32 %v762, %v778
    %v996 = vmul.f32 %v762, %v782
    %v997 = vmul.f32 %v767, %v778
    %v998 = vmul.f32 %v767, %v782
    %v999 = vmul.f32 %v772, %v778
    %v1000 = vmul.f32 %v772, %v782
    %1001 = vst [vmem:[#allocation2] sm:$0xff] 0.0
    %vm1002 = vcmask 719872
    %1003 = vst.msk [vmem:[#allocation2 + $0x8] sm:$0xff] %vm1002, 0.0
    %1004 = vst [vmem:[#allocation2 + $0x10] sm:$0xff] 0.0
    %1005 = vst.msk [vmem:[#allocation2 + $0x18] sm:$0xff] %vm1002, 0.0
    %1006 = vst [vmem:[#allocation2 + $0x20] sm:$0xff] 0.0
    %1007 = vst.msk [vmem:[#allocation2 + $0x28] sm:$0xff] %vm1002, 0.0
    %1008 = vst [vmem:[#allocation2 + $0x30] sm:$0xff] 0.0
    %1009 = vst.msk [vmem:[#allocation2 + $0x38] sm:$0xff] %vm1002, 0.0
    %1010 = vst [vmem:[#allocation2 + $0x700] sm:$0xff] 0.0
    %1011 = vst.msk [vmem:[#allocation2 + $0x708] sm:$0xff] %vm1002, 0.0
    %1012 = vst [vmem:[#allocation2 + $0x710] sm:$0xff] 0.0
    %1013 = vst.msk [vmem:[#allocation2 + $0x718] sm:$0xff] %vm1002, 0.0
    %1014 = vst [vmem:[#allocation2 + $0x720] sm:$0xff] 0.0
    %1015 = vst.msk [vmem:[#allocation2 + $0x728] sm:$0xff] %vm1002, 0.0
    %1016 = vst [vmem:[#allocation2 + $0x730] sm:$0xff] 0.0
    %1017 = vst.msk [vmem:[#allocation2 + $0x738] sm:$0xff] %vm1002, 0.0
    %1018 = vst [vmem:[#allocation2 + $0x40] sm:$0xff] %v785
    %1019 = vst.msk [vmem:[#allocation2 + $0x48] sm:$0xff] %vm1002, %v786
    %1020 = vst [vmem:[#allocation2 + $0x50] sm:$0xff] %v787
    %1021 = vst.msk [vmem:[#allocation2 + $0x58] sm:$0xff] %vm1002, %v788
    %1022 = vst [vmem:[#allocation2 + $0x60] sm:$0xff] %v789
    %1023 = vst.msk [vmem:[#allocation2 + $0x68] sm:$0xff] %vm1002, %v790
    %1024 = vst [vmem:[#allocation2 + $0x70] sm:$0xff] %v791
    %1025 = vst.msk [vmem:[#allocation2 + $0x78] sm:$0xff] %vm1002, %v792
    %1026 = vst [vmem:[#allocation2 + $0x80] sm:$0xff] %v793
    %1027 = vst.msk [vmem:[#allocation2 + $0x88] sm:$0xff] %vm1002, %v794
    %1028 = vst [vmem:[#allocation2 + $0x90] sm:$0xff] %v795
    %1029 = vst.msk [vmem:[#allocation2 + $0x98] sm:$0xff] %vm1002, %v796
    %1030 = vst [vmem:[#allocation2 + $0xa0] sm:$0xff] %v797
    %1031 = vst.msk [vmem:[#allocation2 + $0xa8] sm:$0xff] %vm1002, %v798
    %1032 = vst [vmem:[#allocation2 + $0xb0] sm:$0xff] %v799
    %1033 = vst.msk [vmem:[#allocation2 + $0xb8] sm:$0xff] %vm1002, %v800
    %1034 = vst [vmem:[#allocation2 + $0xc0] sm:$0xff] %v801
    %1035 = vst.msk [vmem:[#allocation2 + $0xc8] sm:$0xff] %vm1002, %v802
    %1036 = vst [vmem:[#allocation2 + $0xd0] sm:$0xff] %v803
    %1037 = vst.msk [vmem:[#allocation2 + $0xd8] sm:$0xff] %vm1002, %v804
    %1038 = vst [vmem:[#allocation2 + $0xe0] sm:$0xff] %v805
    %1039 = vst.msk [vmem:[#allocation2 + $0xe8] sm:$0xff] %vm1002, %v806
    %1040 = vst [vmem:[#allocation2 + $0xf0] sm:$0xff] %v807
    %1041 = vst.msk [vmem:[#allocation2 + $0xf8] sm:$0xff] %vm1002, %v808
    %1042 = vst [vmem:[#allocation2 + $0x100] sm:$0xff] %v809
    %1043 = vst.msk [vmem:[#allocation2 + $0x108] sm:$0xff] %vm1002, %v810
    %1044 = vst [vmem:[#allocation2 + $0x110] sm:$0xff] %v811
    %1045 = vst.msk [vmem:[#allocation2 + $0x118] sm:$0xff] %vm1002, %v812
    %1046 = vst [vmem:[#allocation2 + $0x120] sm:$0xff] %v813
    %1047 = vst.msk [vmem:[#allocation2 + $0x128] sm:$0xff] %vm1002, %v814
    %1048 = vst [vmem:[#allocation2 + $0x130] sm:$0xff] %v815
    %1049 = vst.msk [vmem:[#allocation2 + $0x138] sm:$0xff] %vm1002, %v816
    %1050 = vst [vmem:[#allocation2 + $0x140] sm:$0xff] %v817
    %1051 = vst.msk [vmem:[#allocation2 + $0x148] sm:$0xff] %vm1002, %v818
    %1052 = vst [vmem:[#allocation2 + $0x150] sm:$0xff] %v819
    %1053 = vst.msk [vmem:[#allocation2 + $0x158] sm:$0xff] %vm1002, %v820
    %1054 = vst [vmem:[#allocation2 + $0x160] sm:$0xff] %v821
    %1055 = vst.msk [vmem:[#allocation2 + $0x168] sm:$0xff] %vm1002, %v822
    %1056 = vst [vmem:[#allocation2 + $0x170] sm:$0xff] %v823
    %1057 = vst.msk [vmem:[#allocation2 + $0x178] sm:$0xff] %vm1002, %v824
    %1058 = vst [vmem:[#allocation2 + $0x180] sm:$0xff] %v825
    %1059 = vst.msk [vmem:[#allocation2 + $0x188] sm:$0xff] %vm1002, %v826
    %1060 = vst [vmem:[#allocation2 + $0x190] sm:$0xff] %v827
    %1061 = vst.msk [vmem:[#allocation2 + $0x198] sm:$0xff] %vm1002, %v828
    %1062 = vst [vmem:[#allocation2 + $0x1a0] sm:$0xff] %v829
    %1063 = vst.msk [vmem:[#allocation2 + $0x1a8] sm:$0xff] %vm1002, %v830
    %1064 = vst [vmem:[#allocation2 + $0x1b0] sm:$0xff] %v831
    %1065 = vst.msk [vmem:[#allocation2 + $0x1b8] sm:$0xff] %vm1002, %v832
    %1066 = vst [vmem:[#allocation2 + $0x1c0] sm:$0xff] %v833
    %1067 = vst.msk [vmem:[#allocation2 + $0x1c8] sm:$0xff] %vm1002, %v834
    %1068 = vst [vmem:[#allocation2 + $0x1d0] sm:$0xff] %v835
    %1069 = vst.msk [vmem:[#allocation2 + $0x1d8] sm:$0xff] %vm1002, %v836
    %1070 = vst [vmem:[#allocation2 + $0x1e0] sm:$0xff] %v837
    %1071 = vst.msk [vmem:[#allocation2 + $0x1e8] sm:$0xff] %vm1002, %v838
    %1072 = vst [vmem:[#allocation2 + $0x1f0] sm:$0xff] %v839
    %1073 = vst.msk [vmem:[#allocation2 + $0x1f8] sm:$0xff] %vm1002, %v840
    %1074 = vst [vmem:[#allocation2 + $0x200] sm:$0xff] %v841
    %1075 = vst.msk [vmem:[#allocation2 + $0x208] sm:$0xff] %vm1002, %v842
    %1076 = vst [vmem:[#allocation2 + $0x210] sm:$0xff] %v843
    %1077 = vst.msk [vmem:[#allocation2 + $0x218] sm:$0xff] %vm1002, %v844
    %1078 = vst [vmem:[#allocation2 + $0x220] sm:$0xff] %v845
    %1079 = vst.msk [vmem:[#allocation2 + $0x228] sm:$0xff] %vm1002, %v846
    %1080 = vst [vmem:[#allocation2 + $0x230] sm:$0xff] %v847
    %1081 = vst.msk [vmem:[#allocation2 + $0x238] sm:$0xff] %vm1002, %v848
    %1082 = vst [vmem:[#allocation2 + $0x240] sm:$0xff] %v849
    %1083 = vst.msk [vmem:[#allocation2 + $0x248] sm:$0xff] %vm1002, %v850
    %1084 = vst [vmem:[#allocation2 + $0x250] sm:$0xff] %v851
    %1085 = vst.msk [vmem:[#allocation2 + $0x258] sm:$0xff] %vm1002, %v852
    %1086 = vst [vmem:[#allocation2 + $0x260] sm:$0xff] %v853
    %1087 = vst.msk [vmem:[#allocation2 + $0x268] sm:$0xff] %vm1002, %v854
    %1088 = vst [vmem:[#allocation2 + $0x270] sm:$0xff] %v855
    %1089 = vst.msk [vmem:[#allocation2 + $0x278] sm:$0xff] %vm1002, %v856
    %1090 = vst [vmem:[#allocation2 + $0x280] sm:$0xff] %v857
    %1091 = vst.msk [vmem:[#allocation2 + $0x288] sm:$0xff] %vm1002, %v858
    %1092 = vst [vmem:[#allocation2 + $0x290] sm:$0xff] %v859
    %1093 = vst.msk [vmem:[#allocation2 + $0x298] sm:$0xff] %vm1002, %v860
    %1094 = vst [vmem:[#allocation2 + $0x2a0] sm:$0xff] %v861
    %1095 = vst.msk [vmem:[#allocation2 + $0x2a8] sm:$0xff] %vm1002, %v862
    %1096 = vst [vmem:[#allocation2 + $0x2b0] sm:$0xff] %v863
    %1097 = vst.msk [vmem:[#allocation2 + $0x2b8] sm:$0xff] %vm1002, %v864
    %1098 = vst [vmem:[#allocation2 + $0x2c0] sm:$0xff] %v865
    %1099 = vst.msk [vmem:[#allocation2 + $0x2c8] sm:$0xff] %vm1002, %v866
    %1100 = vst [vmem:[#allocation2 + $0x2d0] sm:$0xff] %v867
    %1101 = vst.msk [vmem:[#allocation2 + $0x2d8] sm:$0xff] %vm1002, %v868
    %1102 = vst [vmem:[#allocation2 + $0x2e0] sm:$0xff] %v869
    %1103 = vst.msk [vmem:[#allocation2 + $0x2e8] sm:$0xff] %vm1002, %v870
    %1104 = vst [vmem:[#allocation2 + $0x2f0] sm:$0xff] %v871
    %1105 = vst.msk [vmem:[#allocation2 + $0x2f8] sm:$0xff] %vm1002, %v872
    %1106 = vst [vmem:[#allocation2 + $0x300] sm:$0xff] %v873
    %1107 = vst.msk [vmem:[#allocation2 + $0x308] sm:$0xff] %vm1002, %v874
    %1108 = vst [vmem:[#allocation2 + $0x310] sm:$0xff] %v875
    %1109 = vst.msk [vmem:[#allocation2 + $0x318] sm:$0xff] %vm1002, %v876
    %1110 = vst [vmem:[#allocation2 + $0x320] sm:$0xff] %v877
    %1111 = vst.msk [vmem:[#allocation2 + $0x328] sm:$0xff] %vm1002, %v878
    %1112 = vst [vmem:[#allocation2 + $0x330] sm:$0xff] %v879
    %1113 = vst.msk [vmem:[#allocation2 + $0x338] sm:$0xff] %vm1002, %v880
    %1114 = vst [vmem:[#allocation2 + $0x340] sm:$0xff] %v881
    %1115 = vst.msk [vmem:[#allocation2 + $0x348] sm:$0xff] %vm1002, %v882
    %1116 = vst [vmem:[#allocation2 + $0x350] sm:$0xff] %v883
    %1117 = vst.msk [vmem:[#allocation2 + $0x358] sm:$0xff] %vm1002, %v884
    %1118 = vst [vmem:[#allocation2 + $0x360] sm:$0xff] %v885
    %1119 = vst.msk [vmem:[#allocation2 + $0x368] sm:$0xff] %vm1002, %v886
    %1120 = vst [vmem:[#allocation2 + $0x370] sm:$0xff] %v887
    %1121 = vst.msk [vmem:[#allocation2 + $0x378] sm:$0xff] %vm1002, %v888
    %1122 = vst [vmem:[#allocation2 + $0x380] sm:$0xff] %v889
    %1123 = vst.msk [vmem:[#allocation2 + $0x388] sm:$0xff] %vm1002, %v890
    %1124 = vst [vmem:[#allocation2 + $0x390] sm:$0xff] %v891
    %1125 = vst.msk [vmem:[#allocation2 + $0x398] sm:$0xff] %vm1002, %v892
    %1126 = vst [vmem:[#allocation2 + $0x3a0] sm:$0xff] %v893
    %1127 = vst.msk [vmem:[#allocation2 + $0x3a8] sm:$0xff] %vm1002, %v894
    %1128 = vst [vmem:[#allocation2 + $0x3b0] sm:$0xff] %v895
    %1129 = vst.msk [vmem:[#allocation2 + $0x3b8] sm:$0xff] %vm1002, %v896
    %1130 = vst [vmem:[#allocation2 + $0x3c0] sm:$0xff] %v897
    %1131 = vst.msk [vmem:[#allocation2 + $0x3c8] sm:$0xff] %vm1002, %v898
    %1132 = vst [vmem:[#allocation2 + $0x3d0] sm:$0xff] %v899
    %1133 = vst.msk [vmem:[#allocation2 + $0x3d8] sm:$0xff] %vm1002, %v900
    %1134 = vst [vmem:[#allocation2 + $0x3e0] sm:$0xff] %v901
    %1135 = vst.msk [vmem:[#allocation2 + $0x3e8] sm:$0xff] %vm1002, %v902
    %1136 = vst [vmem:[#allocation2 + $0x3f0] sm:$0xff] %v903
    %1137 = vst.msk [vmem:[#allocation2 + $0x3f8] sm:$0xff] %vm1002, %v904
    %1138 = vst [vmem:[#allocation2 + $0x400] sm:$0xff] %v905
    %1139 = vst.msk [vmem:[#allocation2 + $0x408] sm:$0xff] %vm1002, %v906
    %1140 = vst [vmem:[#allocation2 + $0x410] sm:$0xff] %v907
    %1141 = vst.msk [vmem:[#allocation2 + $0x418] sm:$0xff] %vm1002, %v908
    %1142 = vst [vmem:[#allocation2 + $0x420] sm:$0xff] %v909
    %1143 = vst.msk [vmem:[#allocation2 + $0x428] sm:$0xff] %vm1002, %v910
    %1144 = vst [vmem:[#allocation2 + $0x430] sm:$0xff] %v911
    %1145 = vst.msk [vmem:[#allocation2 + $0x438] sm:$0xff] %vm1002, %v912
    %1146 = vst [vmem:[#allocation2 + $0x440] sm:$0xff] %v913
    %1147 = vst.msk [vmem:[#allocation2 + $0x448] sm:$0xff] %vm1002, %v914
    %1148 = vst [vmem:[#allocation2 + $0x450] sm:$0xff] %v915
    %1149 = vst.msk [vmem:[#allocation2 + $0x458] sm:$0xff] %vm1002, %v916
    %1150 = vst [vmem:[#allocation2 + $0x460] sm:$0xff] %v917
    %1151 = vst.msk [vmem:[#allocation2 + $0x468] sm:$0xff] %vm1002, %v918
    %1152 = vst [vmem:[#allocation2 + $0x470] sm:$0xff] %v919
    %1153 = vst.msk [vmem:[#allocation2 + $0x478] sm:$0xff] %vm1002, %v920
    %1154 = vst [vmem:[#allocation2 + $0x480] sm:$0xff] %v921
    %1155 = vst.msk [vmem:[#allocation2 + $0x488] sm:$0xff] %vm1002, %v922
    %1156 = vst [vmem:[#allocation2 + $0x490] sm:$0xff] %v923
    %1157 = vst.msk [vmem:[#allocation2 + $0x498] sm:$0xff] %vm1002, %v924
    %1158 = vst [vmem:[#allocation2 + $0x4a0] sm:$0xff] %v925
    %1159 = vst.msk [vmem:[#allocation2 + $0x4a8] sm:$0xff] %vm1002, %v926
    %1160 = vst [vmem:[#allocation2 + $0x4b0] sm:$0xff] %v927
    %1161 = vst.msk [vmem:[#allocation2 + $0x4b8] sm:$0xff] %vm1002, %v928
    %1162 = vst [vmem:[#allocation2 + $0x4c0] sm:$0xff] %v929
    %1163 = vst.msk [vmem:[#allocation2 + $0x4c8] sm:$0xff] %vm1002, %v930
    %1164 = vst [vmem:[#allocation2 + $0x4d0] sm:$0xff] %v931
    %1165 = vst.msk [vmem:[#allocation2 + $0x4d8] sm:$0xff] %vm1002, %v932
    %1166 = vst [vmem:[#allocation2 + $0x4e0] sm:$0xff] %v933
    %1167 = vst.msk [vmem:[#allocation2 + $0x4e8] sm:$0xff] %vm1002, %v934
    %1168 = vst [vmem:[#allocation2 + $0x4f0] sm:$0xff] %v935
    %1169 = vst.msk [vmem:[#allocation2 + $0x4f8] sm:$0xff] %vm1002, %v936
    %1170 = vst [vmem:[#allocation2 + $0x500] sm:$0xff] %v937
    %1171 = vst.msk [vmem:[#allocation2 + $0x508] sm:$0xff] %vm1002, %v938
    %1172 = vst [vmem:[#allocation2 + $0x510] sm:$0xff] %v939
    %1173 = vst.msk [vmem:[#allocation2 + $0x518] sm:$0xff] %vm1002, %v940
    %1174 = vst [vmem:[#allocation2 + $0x520] sm:$0xff] %v941
    %1175 = vst.msk [vmem:[#allocation2 + $0x528] sm:$0xff] %vm1002, %v942
    %1176 = vst [vmem:[#allocation2 + $0x530] sm:$0xff] %v943
    %1177 = vst.msk [vmem:[#allocation2 + $0x538] sm:$0xff] %vm1002, %v944
    %1178 = vst [vmem:[#allocation2 + $0x540] sm:$0xff] %v945
    %1179 = vst.msk [vmem:[#allocation2 + $0x548] sm:$0xff] %vm1002, %v946
    %1180 = vst [vmem:[#allocation2 + $0x550] sm:$0xff] %v947
    %1181 = vst.msk [vmem:[#allocation2 + $0x558] sm:$0xff] %vm1002, %v948
    %1182 = vst [vmem:[#allocation2 + $0x560] sm:$0xff] %v949
    %1183 = vst.msk [vmem:[#allocation2 + $0x568] sm:$0xff] %vm1002, %v950
    %1184 = vst [vmem:[#allocation2 + $0x570] sm:$0xff] %v951
    %1185 = vst.msk [vmem:[#allocation2 + $0x578] sm:$0xff] %vm1002, %v952
    %1186 = vst [vmem:[#allocation2 + $0x580] sm:$0xff] %v953
    %1187 = vst.msk [vmem:[#allocation2 + $0x588] sm:$0xff] %vm1002, %v954
    %1188 = vst [vmem:[#allocation2 + $0x590] sm:$0xff] %v955
    %1189 = vst.msk [vmem:[#allocation2 + $0x598] sm:$0xff] %vm1002, %v956
    %1190 = vst [vmem:[#allocation2 + $0x5a0] sm:$0xff] %v957
    %1191 = vst.msk [vmem:[#allocation2 + $0x5a8] sm:$0xff] %vm1002, %v958
    %1192 = vst [vmem:[#allocation2 + $0x5b0] sm:$0xff] %v959
    %1193 = vst.msk [vmem:[#allocation2 + $0x5b8] sm:$0xff] %vm1002, %v960
    %1194 = vst [vmem:[#allocation2 + $0x5c0] sm:$0xff] %v961
    %1195 = vst.msk [vmem:[#allocation2 + $0x5c8] sm:$0xff] %vm1002, %v962
    %1196 = vst [vmem:[#allocation2 + $0x5d0] sm:$0xff] %v963
    %1197 = vst.msk [vmem:[#allocation2 + $0x5d8] sm:$0xff] %vm1002, %v964
    %1198 = vst [vmem:[#allocation2 + $0x5e0] sm:$0xff] %v965
    %1199 = vst.msk [vmem:[#allocation2 + $0x5e8] sm:$0xff] %vm1002, %v966
    %1200 = vst [vmem:[#allocation2 + $0x5f0] sm:$0xff] %v967
    %1201 = vst.msk [vmem:[#allocation2 + $0x5f8] sm:$0xff] %vm1002, %v968
    %1202 = vst [vmem:[#allocation2 + $0x600] sm:$0xff] %v969
    %1203 = vst.msk [vmem:[#allocation2 + $0x608] sm:$0xff] %vm1002, %v970
    %1204 = vst [vmem:[#allocation2 + $0x610] sm:$0xff] %v971
    %1205 = vst.msk [vmem:[#allocation2 + $0x618] sm:$0xff] %vm1002, %v972
    %1206 = vst [vmem:[#allocation2 + $0x620] sm:$0xff] %v973
    %1207 = vst.msk [vmem:[#allocation2 + $0x628] sm:$0xff] %vm1002, %v974
    %1208 = vst [vmem:[#allocation2 + $0x630] sm:$0xff] %v975
    %1209 = vst.msk [vmem:[#allocation2 + $0x638] sm:$0xff] %vm1002, %v976
    %1210 = vst [vmem:[#allocation2 + $0x640] sm:$0xff] %v977
    %1211 = vst.msk [vmem:[#allocation2 + $0x648] sm:$0xff] %vm1002, %v978
    %1212 = vst [vmem:[#allocation2 + $0x650] sm:$0xff] %v979
    %1213 = vst.msk [vmem:[#allocation2 + $0x658] sm:$0xff] %vm1002, %v980
    %1214 = vst [vmem:[#allocation2 + $0x660] sm:$0xff] %v981
    %1215 = vst.msk [vmem:[#allocation2 + $0x668] sm:$0xff] %vm1002, %v982
    %1216 = vst [vmem:[#allocation2 + $0x670] sm:$0xff] %v983
    %1217 = vst.msk [vmem:[#allocation2 + $0x678] sm:$0xff] %vm1002, %v984
    %1218 = vst [vmem:[#allocation2 + $0x680] sm:$0xff] %v985
    %1219 = vst.msk [vmem:[#allocation2 + $0x688] sm:$0xff] %vm1002, %v986
    %1220 = vst [vmem:[#allocation2 + $0x690] sm:$0xff] %v987
    %1221 = vst.msk [vmem:[#allocation2 + $0x698] sm:$0xff] %vm1002, %v988
    %1222 = vst [vmem:[#allocation2 + $0x6a0] sm:$0xff] %v989
    %1223 = vst.msk [vmem:[#allocation2 + $0x6a8] sm:$0xff] %vm1002, %v990
    %1224 = vst [vmem:[#allocation2 + $0x6b0] sm:$0xff] %v991
    %1225 = vst.msk [vmem:[#allocation2 + $0x6b8] sm:$0xff] %vm1002, %v992
    %1226 = vst [vmem:[#allocation2 + $0x6c0] sm:$0xff] %v993
    %1227 = vst.msk [vmem:[#allocation2 + $0x6c8] sm:$0xff] %vm1002, %v994
    %1228 = vst [vmem:[#allocation2 + $0x6d0] sm:$0xff] %v995
    %1229 = vst.msk [vmem:[#allocation2 + $0x6d8] sm:$0xff] %vm1002, %v996
    %1230 = vst [vmem:[#allocation2 + $0x6e0] sm:$0xff] %v997
    %1231 = vst.msk [vmem:[#allocation2 + $0x6e8] sm:$0xff] %vm1002, %v998
    %1232 = vst [vmem:[#allocation2 + $0x6f0] sm:$0xff] %v999
    %1233 = vst.msk [vmem:[#allocation2 + $0x6f8] sm:$0xff] %vm1002, %v1000
    %v1234 = vld [vmem:[#allocation2] sm:$0x80]
    %v1235 = vld [vmem:[#allocation2 + $0x10] sm:$0xff]
    %v1236 = vld [vmem:[#allocation2 + $0x20] sm:$0xff]
    %v1237 = vld [vmem:[#allocation2 + $0x30] sm:$0xff]
    %v1238 = vld [vmem:[#allocation2 + $0x40] sm:$0xff]
    %v1239 = vld [vmem:[#allocation2 + $0x50] sm:$0xff]
    %v1240 = vld [vmem:[#allocation2 + $0x60] sm:$0xff]
    %v1241 = vld [vmem:[#allocation2 + $0x70] sm:$0xff]
    %v1242 = vld [vmem:[#allocation2 + $0x80] sm:$0xff]
    %v1243 = vld [vmem:[#allocation2 + $0x90] sm:$0xff]
    %v1244 = vld [vmem:[#allocation2 + $0xa0] sm:$0xff]
    %v1245 = vld [vmem:[#allocation2 + $0xb0] sm:$0xff]
    %v1246 = vld [vmem:[#allocation2 + $0xc0] sm:$0xff]
    %v1247 = vld [vmem:[#allocation2 + $0xd0] sm:$0xff]
    %v1248 = vld [vmem:[#allocation2 + $0xe0] sm:$0xff]
    %v1249 = vld [vmem:[#allocation2 + $0xf0] sm:$0xff]
    %v1250 = vld [vmem:[#allocation2 + $0x100] sm:$0xff]
    %v1251 = vld [vmem:[#allocation2 + $0x110] sm:$0xff]
    %v1252 = vld [vmem:[#allocation2 + $0x120] sm:$0xff]
    %v1253 = vld [vmem:[#allocation2 + $0x130] sm:$0xff]
    %v1254 = vld [vmem:[#allocation2 + $0x140] sm:$0xff]
    %v1255 = vld [vmem:[#allocation2 + $0x150] sm:$0xff]
    %v1256 = vld [vmem:[#allocation2 + $0x160] sm:$0xff]
    %v1257 = vld [vmem:[#allocation2 + $0x170] sm:$0xff]
    %v1258 = vld [vmem:[#allocation2 + $0x180] sm:$0xff]
    %v1259 = vld [vmem:[#allocation2 + $0x190] sm:$0xff]
    %v1260 = vld [vmem:[#allocation2 + $0x1a0] sm:$0xff]
    %v1261 = vld [vmem:[#allocation2 + $0x1b0] sm:$0xff]
    %v1262 = vld [vmem:[#allocation2 + $0x1c0] sm:$0xff]
    %v1263 = vld [vmem:[#allocation2 + $0x1d0] sm:$0xff]
    %v1264 = vld [vmem:[#allocation2 + $0x1e0] sm:$0xff]
    %v1265 = vld [vmem:[#allocation2 + $0x1f0] sm:$0xff]
    %v1266 = vld [vmem:[#allocation2 + $0x200] sm:$0xff]
    %v1267 = vld [vmem:[#allocation2 + $0x210] sm:$0xff]
    %v1268 = vld [vmem:[#allocation2 + $0x220] sm:$0xff]
    %v1269 = vld [vmem:[#allocation2 + $0x230] sm:$0xff]
    %v1270 = vld [vmem:[#allocation2 + $0x240] sm:$0xff]
    %v1271 = vld [vmem:[#allocation2 + $0x250] sm:$0xff]
    %v1272 = vld [vmem:[#allocation2 + $0x260] sm:$0xff]
    %v1273 = vld [vmem:[#allocation2 + $0x270] sm:$0xff]
    %v1274 = vld [vmem:[#allocation2 + $0x280] sm:$0xff]
    %v1275 = vld [vmem:[#allocation2 + $0x290] sm:$0xff]
    %v1276 = vld [vmem:[#allocation2 + $0x2a0] sm:$0xff]
    %v1277 = vld [vmem:[#allocation2 + $0x2b0] sm:$0xff]
    %v1278 = vld [vmem:[#allocation2 + $0x2c0] sm:$0xff]
    %v1279 = vld [vmem:[#allocation2 + $0x2d0] sm:$0xff]
    %v1280 = vld [vmem:[#allocation2 + $0x2e0] sm:$0xff]
    %v1281 = vld [vmem:[#allocation2 + $0x2f0] sm:$0xff]
    %v1282 = vld [vmem:[#allocation2 + $0x300] sm:$0xff]
    %v1283 = vld [vmem:[#allocation2 + $0x310] sm:$0xff]
    %v1284 = vld [vmem:[#allocation2 + $0x320] sm:$0xff]
    %v1285 = vld [vmem:[#allocation2 + $0x330] sm:$0xff]
    %v1286 = vld [vmem:[#allocation2 + $0x340] sm:$0xff]
    %v1287 = vld [vmem:[#allocation2 + $0x350] sm:$0xff]
    %v1288 = vld [vmem:[#allocation2 + $0x360] sm:$0xff]
    %v1289 = vld [vmem:[#allocation2 + $0x370] sm:$0xff]
    %v1290 = vld [vmem:[#allocation2 + $0x380] sm:$0xff]
    %v1291 = vld [vmem:[#allocation2 + $0x390] sm:$0xff]
    %v1292 = vld [vmem:[#allocation2 + $0x3a0] sm:$0xff]
    %v1293 = vld [vmem:[#allocation2 + $0x3b0] sm:$0xff]
    %v1294 = vld [vmem:[#allocation2 + $0x3c0] sm:$0xff]
    %v1295 = vld [vmem:[#allocation2 + $0x3d0] sm:$0xff]
    %v1296 = vld [vmem:[#allocation2 + $0x3e0] sm:$0xff]
    %v1297 = vld [vmem:[#allocation2 + $0x3f0] sm:$0xff]
    %v1298 = vld [vmem:[#allocation2 + $0x400] sm:$0xff]
    %v1299 = vld [vmem:[#allocation2 + $0x410] sm:$0xff]
    %v1300 = vld [vmem:[#allocation2 + $0x420] sm:$0xff]
    %v1301 = vld [vmem:[#allocation2 + $0x430] sm:$0xff]
    %v1302 = vld [vmem:[#allocation2 + $0x440] sm:$0xff]
    %v1303 = vld [vmem:[#allocation2 + $0x450] sm:$0xff]
    %v1304 = vld [vmem:[#allocation2 + $0x460] sm:$0xff]
    %v1305 = vld [vmem:[#allocation2 + $0x470] sm:$0xff]
    %v1306 = vld [vmem:[#allocation2 + $0x480] sm:$0xff]
    %v1307 = vld [vmem:[#allocation2 + $0x490] sm:$0xff]
    %v1308 = vld [vmem:[#allocation2 + $0x4a0] sm:$0xff]
    %v1309 = vld [vmem:[#allocation2 + $0x4b0] sm:$0xff]
    %v1310 = vld [vmem:[#allocation2 + $0x4c0] sm:$0xff]
    %v1311 = vld [vmem:[#allocation2 + $0x4d0] sm:$0xff]
    %v1312 = vld [vmem:[#allocation2 + $0x4e0] sm:$0xff]
    %v1313 = vld [vmem:[#allocation2 + $0x4f0] sm:$0xff]
    %v1314 = vld [vmem:[#allocation2 + $0x500] sm:$0xff]
    %v1315 = vld [vmem:[#allocation2 + $0x510] sm:$0xff]
    %v1316 = vld [vmem:[#allocation2 + $0x520] sm:$0xff]
    %v1317 = vld [vmem:[#allocation2 + $0x530] sm:$0xff]
    %v1318 = vld [vmem:[#allocation2 + $0x540] sm:$0xff]
    %v1319 = vld [vmem:[#allocation2 + $0x550] sm:$0xff]
    %v1320 = vld [vmem:[#allocation2 + $0x560] sm:$0xff]
    %v1321 = vld [vmem:[#allocation2 + $0x570] sm:$0xff]
    %v1322 = vld [vmem:[#allocation2 + $0x580] sm:$0xff]
    %v1323 = vld [vmem:[#allocation2 + $0x590] sm:$0xff]
    %v1324 = vld [vmem:[#allocation2 + $0x5a0] sm:$0xff]
    %v1325 = vld [vmem:[#allocation2 + $0x5b0] sm:$0xff]
    %v1326 = vld [vmem:[#allocation2 + $0x5c0] sm:$0xff]
    %v1327 = vld [vmem:[#allocation2 + $0x5d0] sm:$0xff]
    %v1328 = vld [vmem:[#allocation2 + $0x5e0] sm:$0xff]
    %v1329 = vld [vmem:[#allocation2 + $0x5f0] sm:$0xff]
    %v1330 = vld [vmem:[#allocation2 + $0x600] sm:$0xff]
    %v1331 = vld [vmem:[#allocation2 + $0x610] sm:$0xff]
    %v1332 = vld [vmem:[#allocation2 + $0x620] sm:$0xff]
    %v1333 = vld [vmem:[#allocation2 + $0x630] sm:$0xff]
    %v1334 = vld [vmem:[#allocation2 + $0x640] sm:$0xff]
    %v1335 = vld [vmem:[#allocation2 + $0x650] sm:$0xff]
    %v1336 = vld [vmem:[#allocation2 + $0x660] sm:$0xff]
    %v1337 = vld [vmem:[#allocation2 + $0x670] sm:$0xff]
    %v1338 = vld [vmem:[#allocation2 + $0x680] sm:$0xff]
    %v1339 = vld [vmem:[#allocation2 + $0x690] sm:$0xff]
    %v1340 = vld [vmem:[#allocation2 + $0x6a0] sm:$0xff]
    %v1341 = vld [vmem:[#allocation2 + $0x6b0] sm:$0xff]
    %v1342 = vld [vmem:[#allocation2 + $0x6c0] sm:$0x7f]
    %v1343 = vld [vmem:[#allocation2 + $0x6c0] sm:$0xff]
    %vm1452 = vcmask 1046528
    %v1453 = vrot.slane %v1235, 1
    %v1454 = vrot.slane %v1236, 1
    %v1455 = vsel %vm1452, %v1453, %v1454
    %v1456 = vrot.slane %v1237, 1
    %v1457 = vsel %vm1452, %v1454, %v1456
    %v1458 = vrot.slane %v1238, 1
    %v1459 = vsel %vm1452, %v1456, %v1458
    %v1460 = vrot.slane %v1239, 1
    %v1461 = vsel %vm1452, %v1458, %v1460
    %v1462 = vrot.slane %v1240, 1
    %v1463 = vsel %vm1452, %v1460, %v1462
    %v1464 = vrot.slane %v1241, 1
    %v1465 = vsel %vm1452, %v1462, %v1464
    %v1466 = vrot.slane %v1242, 1
    %v1467 = vsel %vm1452, %v1464, %v1466
    %v1468 = vrot.slane %v1243, 1
    %v1469 = vsel %vm1452, %v1466, %v1468
    %v1470 = vrot.slane %v1244, 1
    %v1471 = vsel %vm1452, %v1468, %v1470
    %v1472 = vrot.slane %v1245, 1
    %v1473 = vsel %vm1452, %v1470, %v1472
    %v1474 = vrot.slane %v1246, 1
    %v1475 = vsel %vm1452, %v1472, %v1474
    %v1476 = vrot.slane %v1247, 1
    %v1477 = vsel %vm1452, %v1474, %v1476
    %v1478 = vrot.slane %v1248, 1
    %v1479 = vsel %vm1452, %v1476, %v1478
    %v1480 = vrot.slane %v1249, 1
    %v1481 = vsel %vm1452, %v1478, %v1480
    %v1482 = vrot.slane %v1250, 1
    %v1483 = vsel %vm1452, %v1480, %v1482
    %v1484 = vrot.slane %v1251, 1
    %v1485 = vsel %vm1452, %v1482, %v1484
    %v1486 = vrot.slane %v1252, 1
    %v1487 = vsel %vm1452, %v1484, %v1486
    %v1488 = vrot.slane %v1253, 1
    %v1489 = vsel %vm1452, %v1486, %v1488
    %v1490 = vrot.slane %v1254, 1
    %v1491 = vsel %vm1452, %v1488, %v1490
    %v1492 = vrot.slane %v1255, 1
    %v1493 = vsel %vm1452, %v1490, %v1492
    %v1494 = vrot.slane %v1256, 1
    %v1495 = vsel %vm1452, %v1492, %v1494
    %v1496 = vrot.slane %v1257, 1
    %v1497 = vsel %vm1452, %v1494, %v1496
    %v1498 = vrot.slane %v1258, 1
    %v1499 = vsel %vm1452, %v1496, %v1498
    %v1500 = vrot.slane %v1259, 1
    %v1501 = vsel %vm1452, %v1498, %v1500
    %v1502 = vrot.slane %v1260, 1
    %v1503 = vsel %vm1452, %v1500, %v1502
    %v1504 = vrot.slane %v1261, 1
    %v1505 = vsel %vm1452, %v1502, %v1504
    %v1506 = vrot.slane %v1262, 1
    %v1507 = vsel %vm1452, %v1504, %v1506
    %v1508 = vrot.slane %v1263, 1
    %v1509 = vsel %vm1452, %v1506, %v1508
    %v1510 = vrot.slane %v1264, 1
    %v1511 = vsel %vm1452, %v1508, %v1510
    %v1512 = vrot.slane %v1265, 1
    %v1513 = vsel %vm1452, %v1510, %v1512
    %v1514 = vrot.slane %v1266, 1
    %v1515 = vsel %vm1452, %v1512, %v1514
    %v1516 = vrot.slane %v1267, 1
    %v1517 = vsel %vm1452, %v1514, %v1516
    %v1518 = vrot.slane %v1268, 1
    %v1519 = vsel %vm1452, %v1516, %v1518
    %v1520 = vrot.slane %v1269, 1
    %v1521 = vsel %vm1452, %v1518, %v1520
    %v1522 = vrot.slane %v1270, 1
    %v1523 = vsel %vm1452, %v1520, %v1522
    %v1524 = vrot.slane %v1271, 1
    %v1525 = vsel %vm1452, %v1522, %v1524
    %v1526 = vrot.slane %v1272, 1
    %v1527 = vsel %vm1452, %v1524, %v1526
    %v1528 = vrot.slane %v1273, 1
    %v1529 = vsel %vm1452, %v1526, %v1528
    %v1530 = vrot.slane %v1274, 1
    %v1531 = vsel %vm1452, %v1528, %v1530
    %v1532 = vrot.slane %v1275, 1
    %v1533 = vsel %vm1452, %v1530, %v1532
    %v1534 = vrot.slane %v1276, 1
    %v1535 = vsel %vm1452, %v1532, %v1534
    %v1536 = vrot.slane %v1277, 1
    %v1537 = vsel %vm1452, %v1534, %v1536
    %v1538 = vrot.slane %v1278, 1
    %v1539 = vsel %vm1452, %v1536, %v1538
    %v1540 = vrot.slane %v1279, 1
    %v1541 = vsel %vm1452, %v1538, %v1540
    %v1542 = vrot.slane %v1280, 1
    %v1543 = vsel %vm1452, %v1540, %v1542
    %v1544 = vrot.slane %v1281, 1
    %v1545 = vsel %vm1452, %v1542, %v1544
    %v1546 = vrot.slane %v1282, 1
    %v1547 = vsel %vm1452, %v1544, %v1546
    %v1548 = vrot.slane %v1283, 1
    %v1549 = vsel %vm1452, %v1546, %v1548
    %v1550 = vrot.slane %v1284, 1
    %v1551 = vsel %vm1452, %v1548, %v1550
    %v1552 = vrot.slane %v1285, 1
    %v1553 = vsel %vm1452, %v1550, %v1552
    %v1554 = vrot.slane %v1286, 1
    %v1555 = vsel %vm1452, %v1552, %v1554
    %v1556 = vrot.slane %v1287, 1
    %v1557 = vsel %vm1452, %v1554, %v1556
    %v1558 = vrot.slane %v1288, 1
    %v1559 = vsel %vm1452, %v1556, %v1558
    %v1560 = vrot.slane %v1289, 1
    %v1561 = vsel %vm1452, %v1558, %v1560
    %v1562 = vrot.slane %v1290, 1
    %v1563 = vsel %vm1452, %v1560, %v1562
    %v1564 = vrot.slane %v1291, 1
    %v1565 = vsel %vm1452, %v1562, %v1564
    %v1566 = vrot.slane %v1292, 1
    %v1567 = vsel %vm1452, %v1564, %v1566
    %v1568 = vrot.slane %v1293, 1
    %v1569 = vsel %vm1452, %v1566, %v1568
    %v1570 = vrot.slane %v1294, 1
    %v1571 = vsel %vm1452, %v1568, %v1570
    %v1572 = vrot.slane %v1295, 1
    %v1573 = vsel %vm1452, %v1570, %v1572
    %v1574 = vrot.slane %v1296, 1
    %v1575 = vsel %vm1452, %v1572, %v1574
    %v1576 = vrot.slane %v1297, 1
    %v1577 = vsel %vm1452, %v1574, %v1576
    %v1578 = vrot.slane %v1298, 1
    %v1579 = vsel %vm1452, %v1576, %v1578
    %v1580 = vrot.slane %v1299, 1
    %v1581 = vsel %vm1452, %v1578, %v1580
    %v1582 = vrot.slane %v1300, 1
    %v1583 = vsel %vm1452, %v1580, %v1582
    %v1584 = vrot.slane %v1301, 1
    %v1585 = vsel %vm1452, %v1582, %v1584
    %v1586 = vrot.slane %v1302, 1
    %v1587 = vsel %vm1452, %v1584, %v1586
    %v1588 = vrot.slane %v1303, 1
    %v1589 = vsel %vm1452, %v1586, %v1588
    %v1590 = vrot.slane %v1304, 1
    %v1591 = vsel %vm1452, %v1588, %v1590
    %v1592 = vrot.slane %v1305, 1
    %v1593 = vsel %vm1452, %v1590, %v1592
    %v1594 = vrot.slane %v1306, 1
    %v1595 = vsel %vm1452, %v1592, %v1594
    %v1596 = vrot.slane %v1307, 1
    %v1597 = vsel %vm1452, %v1594, %v1596
    %v1598 = vrot.slane %v1308, 1
    %v1599 = vsel %vm1452, %v1596, %v1598
    %v1600 = vrot.slane %v1309, 1
    %v1601 = vsel %vm1452, %v1598, %v1600
    %v1602 = vrot.slane %v1310, 1
    %v1603 = vsel %vm1452, %v1600, %v1602
    %v1604 = vrot.slane %v1311, 1
    %v1605 = vsel %vm1452, %v1602, %v1604
    %v1606 = vrot.slane %v1312, 1
    %v1607 = vsel %vm1452, %v1604, %v1606
    %v1608 = vrot.slane %v1313, 1
    %v1609 = vsel %vm1452, %v1606, %v1608
    %v1610 = vrot.slane %v1314, 1
    %v1611 = vsel %vm1452, %v1608, %v1610
    %v1612 = vrot.slane %v1315, 1
    %v1613 = vsel %vm1452, %v1610, %v1612
    %v1614 = vrot.slane %v1316, 1
    %v1615 = vsel %vm1452, %v1612, %v1614
    %v1616 = vrot.slane %v1317, 1
    %v1617 = vsel %vm1452, %v1614, %v1616
    %v1618 = vrot.slane %v1318, 1
    %v1619 = vsel %vm1452, %v1616, %v1618
    %v1620 = vrot.slane %v1319, 1
    %v1621 = vsel %vm1452, %v1618, %v1620
    %v1622 = vrot.slane %v1320, 1
    %v1623 = vsel %vm1452, %v1620, %v1622
    %v1624 = vrot.slane %v1321, 1
    %v1625 = vsel %vm1452, %v1622, %v1624
    %v1626 = vrot.slane %v1322, 1
    %v1627 = vsel %vm1452, %v1624, %v1626
    %v1628 = vrot.slane %v1323, 1
    %v1629 = vsel %vm1452, %v1626, %v1628
    %v1630 = vrot.slane %v1324, 1
    %v1631 = vsel %vm1452, %v1628, %v1630
    %v1632 = vrot.slane %v1325, 1
    %v1633 = vsel %vm1452, %v1630, %v1632
    %v1634 = vrot.slane %v1326, 1
    %v1635 = vsel %vm1452, %v1632, %v1634
    %v1636 = vrot.slane %v1327, 1
    %v1637 = vsel %vm1452, %v1634, %v1636
    %v1638 = vrot.slane %v1328, 1
    %v1639 = vsel %vm1452, %v1636, %v1638
    %v1640 = vrot.slane %v1329, 1
    %v1641 = vsel %vm1452, %v1638, %v1640
    %v1642 = vrot.slane %v1330, 1
    %v1643 = vsel %vm1452, %v1640, %v1642
    %v1644 = vrot.slane %v1331, 1
    %v1645 = vsel %vm1452, %v1642, %v1644
    %v1646 = vrot.slane %v1332, 1
    %v1647 = vsel %vm1452, %v1644, %v1646
    %v1648 = vrot.slane %v1333, 1
    %v1649 = vsel %vm1452, %v1646, %v1648
    %v1650 = vrot.slane %v1334, 1
    %v1651 = vsel %vm1452, %v1648, %v1650
    %v1652 = vrot.slane %v1335, 1
    %v1653 = vsel %vm1452, %v1650, %v1652
    %v1654 = vrot.slane %v1336, 1
    %v1655 = vsel %vm1452, %v1652, %v1654
    %v1656 = vrot.slane %v1337, 1
    %v1657 = vsel %vm1452, %v1654, %v1656
    %v1658 = vrot.slane %v1338, 1
    %v1659 = vsel %vm1452, %v1656, %v1658
    %v1660 = vrot.slane %v1339, 1
    %v1661 = vsel %vm1452, %v1658, %v1660
    %v1662 = vrot.slane %v1340, 1
    %v1663 = vsel %vm1452, %v1660, %v1662
    %v1664 = vrot.slane %v1341, 1
    %v1665 = vsel %vm1452, %v1662, %v1664
    %v1666 = vrot.slane %v1343, 1
    %v1667 = vsel %vm1452, %v1664, %v1666
    %1668 = vrot.lane.b32.xlu0 %v1453, 104
    %v1669 = vpop.permute.xlu0 %1668
    %1670 = vrot.lane.b32.xlu0 %v1455, 104
    %v1671 = vpop.permute.xlu0 %1670
    %1672 = vrot.lane.b32.xlu0 %v1457, 104
    %v1673 = vpop.permute.xlu0 %1672
    %1674 = vrot.lane.b32.xlu0 %v1459, 104
    %v1675 = vpop.permute.xlu0 %1674
    %1676 = vrot.lane.b32.xlu0 %v1461, 104
    %v1677 = vpop.permute.xlu0 %1676
    %1678 = vrot.lane.b32.xlu0 %v1463, 104
    %v1679 = vpop.permute.xlu0 %1678
    %1680 = vrot.lane.b32.xlu0 %v1465, 104
    %v1681 = vpop.permute.xlu0 %1680
    %1682 = vrot.lane.b32.xlu0 %v1467, 104
    %v1683 = vpop.permute.xlu0 %1682
    %1684 = vrot.lane.b32.xlu0 %v1469, 104
    %v1685 = vpop.permute.xlu0 %1684
    %1686 = vrot.lane.b32.xlu0 %v1471, 104
    %v1687 = vpop.permute.xlu0 %1686
    %1688 = vrot.lane.b32.xlu0 %v1473, 104
    %v1689 = vpop.permute.xlu0 %1688
    %1690 = vrot.lane.b32.xlu0 %v1475, 104
    %v1691 = vpop.permute.xlu0 %1690
    %1692 = vrot.lane.b32.xlu0 %v1477, 104
    %v1693 = vpop.permute.xlu0 %1692
    %1694 = vrot.lane.b32.xlu0 %v1479, 104
    %v1695 = vpop.permute.xlu0 %1694
    %1696 = vrot.lane.b32.xlu0 %v1481, 104
    %v1697 = vpop.permute.xlu0 %1696
    %1698 = vrot.lane.b32.xlu0 %v1483, 104
    %v1699 = vpop.permute.xlu0 %1698
    %1700 = vrot.lane.b32.xlu0 %v1485, 104
    %v1701 = vpop.permute.xlu0 %1700
    %1702 = vrot.lane.b32.xlu0 %v1487, 104
    %v1703 = vpop.permute.xlu0 %1702
    %1704 = vrot.lane.b32.xlu0 %v1489, 104
    %v1705 = vpop.permute.xlu0 %1704
    %1706 = vrot.lane.b32.xlu0 %v1491, 104
    %v1707 = vpop.permute.xlu0 %1706
    %1708 = vrot.lane.b32.xlu0 %v1493, 104
    %v1709 = vpop.permute.xlu0 %1708
    %1710 = vrot.lane.b32.xlu0 %v1495, 104
    %v1711 = vpop.permute.xlu0 %1710
    %1712 = vrot.lane.b32.xlu0 %v1497, 104
    %v1713 = vpop.permute.xlu0 %1712
    %1714 = vrot.lane.b32.xlu0 %v1499, 104
    %v1715 = vpop.permute.xlu0 %1714
    %1716 = vrot.lane.b32.xlu0 %v1501, 104
    %v1717 = vpop.permute.xlu0 %1716
    %1718 = vrot.lane.b32.xlu0 %v1503, 104
    %v1719 = vpop.permute.xlu0 %1718
    %1720 = vrot.lane.b32.xlu0 %v1505, 104
    %v1721 = vpop.permute.xlu0 %1720
    %1722 = vrot.lane.b32.xlu0 %v1507, 104
    %v1723 = vpop.permute.xlu0 %1722
    %1724 = vrot.lane.b32.xlu0 %v1509, 104
    %v1725 = vpop.permute.xlu0 %1724
    %1726 = vrot.lane.b32.xlu0 %v1511, 104
    %v1727 = vpop.permute.xlu0 %1726
    %1728 = vrot.lane.b32.xlu0 %v1513, 104
    %v1729 = vpop.permute.xlu0 %1728
    %1730 = vrot.lane.b32.xlu0 %v1515, 104
    %v1731 = vpop.permute.xlu0 %1730
    %1732 = vrot.lane.b32.xlu0 %v1517, 104
    %v1733 = vpop.permute.xlu0 %1732
    %1734 = vrot.lane.b32.xlu0 %v1519, 104
    %v1735 = vpop.permute.xlu0 %1734
    %1736 = vrot.lane.b32.xlu0 %v1521, 104
    %v1737 = vpop.permute.xlu0 %1736
    %1738 = vrot.lane.b32.xlu0 %v1523, 104
    %v1739 = vpop.permute.xlu0 %1738
    %1740 = vrot.lane.b32.xlu0 %v1525, 104
    %v1741 = vpop.permute.xlu0 %1740
    %1742 = vrot.lane.b32.xlu0 %v1527, 104
    %v1743 = vpop.permute.xlu0 %1742
    %1744 = vrot.lane.b32.xlu0 %v1529, 104
    %v1745 = vpop.permute.xlu0 %1744
    %1746 = vrot.lane.b32.xlu0 %v1531, 104
    %v1747 = vpop.permute.xlu0 %1746
    %1748 = vrot.lane.b32.xlu0 %v1533, 104
    %v1749 = vpop.permute.xlu0 %1748
    %1750 = vrot.lane.b32.xlu0 %v1535, 104
    %v1751 = vpop.permute.xlu0 %1750
    %1752 = vrot.lane.b32.xlu0 %v1537, 104
    %v1753 = vpop.permute.xlu0 %1752
    %1754 = vrot.lane.b32.xlu0 %v1539, 104
    %v1755 = vpop.permute.xlu0 %1754
    %1756 = vrot.lane.b32.xlu0 %v1541, 104
    %v1757 = vpop.permute.xlu0 %1756
    %1758 = vrot.lane.b32.xlu0 %v1543, 104
    %v1759 = vpop.permute.xlu0 %1758
    %1760 = vrot.lane.b32.xlu0 %v1545, 104
    %v1761 = vpop.permute.xlu0 %1760
    %1762 = vrot.lane.b32.xlu0 %v1547, 104
    %v1763 = vpop.permute.xlu0 %1762
    %1764 = vrot.lane.b32.xlu0 %v1549, 104
    %v1765 = vpop.permute.xlu0 %1764
    %1766 = vrot.lane.b32.xlu0 %v1551, 104
    %v1767 = vpop.permute.xlu0 %1766
    %1768 = vrot.lane.b32.xlu0 %v1553, 104
    %v1769 = vpop.permute.xlu0 %1768
    %1770 = vrot.lane.b32.xlu0 %v1555, 104
    %v1771 = vpop.permute.xlu0 %1770
    %1772 = vrot.lane.b32.xlu0 %v1557, 104
    %v1773 = vpop.permute.xlu0 %1772
    %1774 = vrot.lane.b32.xlu0 %v1559, 104
    %v1775 = vpop.permute.xlu0 %1774
    %1776 = vrot.lane.b32.xlu0 %v1561, 104
    %v1777 = vpop.permute.xlu0 %1776
    %1778 = vrot.lane.b32.xlu0 %v1563, 104
    %v1779 = vpop.permute.xlu0 %1778
    %1780 = vrot.lane.b32.xlu0 %v1565, 104
    %v1781 = vpop.permute.xlu0 %1780
    %1782 = vrot.lane.b32.xlu0 %v1567, 104
    %v1783 = vpop.permute.xlu0 %1782
    %1784 = vrot.lane.b32.xlu0 %v1569, 104
    %v1785 = vpop.permute.xlu0 %1784
    %1786 = vrot.lane.b32.xlu0 %v1571, 104
    %v1787 = vpop.permute.xlu0 %1786
    %1788 = vrot.lane.b32.xlu0 %v1573, 104
    %v1789 = vpop.permute.xlu0 %1788
    %1790 = vrot.lane.b32.xlu0 %v1575, 104
    %v1791 = vpop.permute.xlu0 %1790
    %1792 = vrot.lane.b32.xlu0 %v1577, 104
    %v1793 = vpop.permute.xlu0 %1792
    %1794 = vrot.lane.b32.xlu0 %v1579, 104
    %v1795 = vpop.permute.xlu0 %1794
    %1796 = vrot.lane.b32.xlu0 %v1581, 104
    %v1797 = vpop.permute.xlu0 %1796
    %1798 = vrot.lane.b32.xlu0 %v1583, 104
    %v1799 = vpop.permute.xlu0 %1798
    %1800 = vrot.lane.b32.xlu0 %v1585, 104
    %v1801 = vpop.permute.xlu0 %1800
    %1802 = vrot.lane.b32.xlu0 %v1587, 104
    %v1803 = vpop.permute.xlu0 %1802
    %1804 = vrot.lane.b32.xlu0 %v1589, 104
    %v1805 = vpop.permute.xlu0 %1804
    %1806 = vrot.lane.b32.xlu0 %v1591, 104
    %v1807 = vpop.permute.xlu0 %1806
    %1808 = vrot.lane.b32.xlu0 %v1593, 104
    %v1809 = vpop.permute.xlu0 %1808
    %1810 = vrot.lane.b32.xlu0 %v1595, 104
    %v1811 = vpop.permute.xlu0 %1810
    %1812 = vrot.lane.b32.xlu0 %v1597, 104
    %v1813 = vpop.permute.xlu0 %1812
    %1814 = vrot.lane.b32.xlu0 %v1599, 104
    %v1815 = vpop.permute.xlu0 %1814
    %1816 = vrot.lane.b32.xlu0 %v1601, 104
    %v1817 = vpop.permute.xlu0 %1816
    %1818 = vrot.lane.b32.xlu0 %v1603, 104
    %v1819 = vpop.permute.xlu0 %1818
    %1820 = vrot.lane.b32.xlu0 %v1605, 104
    %v1821 = vpop.permute.xlu0 %1820
    %1822 = vrot.lane.b32.xlu0 %v1607, 104
    %v1823 = vpop.permute.xlu0 %1822
    %1824 = vrot.lane.b32.xlu0 %v1609, 104
    %v1825 = vpop.permute.xlu0 %1824
    %1826 = vrot.lane.b32.xlu0 %v1611, 104
    %v1827 = vpop.permute.xlu0 %1826
    %1828 = vrot.lane.b32.xlu0 %v1613, 104
    %v1829 = vpop.permute.xlu0 %1828
    %1830 = vrot.lane.b32.xlu0 %v1615, 104
    %v1831 = vpop.permute.xlu0 %1830
    %1832 = vrot.lane.b32.xlu0 %v1617, 104
    %v1833 = vpop.permute.xlu0 %1832
    %1834 = vrot.lane.b32.xlu0 %v1619, 104
    %v1835 = vpop.permute.xlu0 %1834
    %1836 = vrot.lane.b32.xlu0 %v1621, 104
    %v1837 = vpop.permute.xlu0 %1836
    %1838 = vrot.lane.b32.xlu0 %v1623, 104
    %v1839 = vpop.permute.xlu0 %1838
    %1840 = vrot.lane.b32.xlu0 %v1625, 104
    %v1841 = vpop.permute.xlu0 %1840
    %1842 = vrot.lane.b32.xlu0 %v1627, 104
    %v1843 = vpop.permute.xlu0 %1842
    %1844 = vrot.lane.b32.xlu0 %v1629, 104
    %v1845 = vpop.permute.xlu0 %1844
    %1846 = vrot.lane.b32.xlu0 %v1631, 104
    %v1847 = vpop.permute.xlu0 %1846
    %1848 = vrot.lane.b32.xlu0 %v1633, 104
    %v1849 = vpop.permute.xlu0 %1848
    %1850 = vrot.lane.b32.xlu0 %v1635, 104
    %v1851 = vpop.permute.xlu0 %1850
    %1852 = vrot.lane.b32.xlu0 %v1637, 104
    %v1853 = vpop.permute.xlu0 %1852
    %1854 = vrot.lane.b32.xlu0 %v1639, 104
    %v1855 = vpop.permute.xlu0 %1854
    %1856 = vrot.lane.b32.xlu0 %v1641, 104
    %v1857 = vpop.permute.xlu0 %1856
    %1858 = vrot.lane.b32.xlu0 %v1643, 104
    %v1859 = vpop.permute.xlu0 %1858
    %1860 = vrot.lane.b32.xlu0 %v1645, 104
    %v1861 = vpop.permute.xlu0 %1860
    %1862 = vrot.lane.b32.xlu0 %v1647, 104
    %v1863 = vpop.permute.xlu0 %1862
    %1864 = vrot.lane.b32.xlu0 %v1649, 104
    %v1865 = vpop.permute.xlu0 %1864
    %1866 = vrot.lane.b32.xlu0 %v1651, 104
    %v1867 = vpop.permute.xlu0 %1866
    %1868 = vrot.lane.b32.xlu0 %v1653, 104
    %v1869 = vpop.permute.xlu0 %1868
    %1870 = vrot.lane.b32.xlu0 %v1655, 104
    %v1871 = vpop.permute.xlu0 %1870
    %1872 = vrot.lane.b32.xlu0 %v1657, 104
    %v1873 = vpop.permute.xlu0 %1872
    %1874 = vrot.lane.b32.xlu0 %v1659, 104
    %v1875 = vpop.permute.xlu0 %1874
    %1876 = vrot.lane.b32.xlu0 %v1661, 104
    %v1877 = vpop.permute.xlu0 %1876
    %1878 = vrot.lane.b32.xlu0 %v1663, 104
    %v1879 = vpop.permute.xlu0 %1878
    %1880 = vrot.lane.b32.xlu0 %v1665, 104
    %v1881 = vpop.permute.xlu0 %1880
    %1882 = vrot.lane.b32.xlu0 %v1667, 104
    %v1883 = vpop.permute.xlu0 %1882
    %1884 = vrot.lane.b32.xlu0 %v1666, 104
    %v1885 = vpop.permute.xlu0 %1884
    %v1995 = vadd.f32 %v1234, %v1669
    %v1996 = vadd.f32 %v1235, %v1671
    %v1997 = vadd.f32 %v1236, %v1673
    %v1998 = vadd.f32 %v1237, %v1675
    %v1999 = vadd.f32 %v1238, %v1677
    %v2000 = vadd.f32 %v1239, %v1679
    %v2001 = vadd.f32 %v1240, %v1681
    %v2002 = vadd.f32 %v1241, %v1683
    %v2003 = vadd.f32 %v1242, %v1685
    %v2004 = vadd.f32 %v1243, %v1687
    %v2005 = vadd.f32 %v1244, %v1689
    %v2006 = vadd.f32 %v1245, %v1691
    %v2007 = vadd.f32 %v1246, %v1693
    %v2008 = vadd.f32 %v1247, %v1695
    %v2009 = vadd.f32 %v1248, %v1697
    %v2010 = vadd.f32 %v1249, %v1699
    %v2011 = vadd.f32 %v1250, %v1701
    %v2012 = vadd.f32 %v1251, %v1703
    %v2013 = vadd.f32 %v1252, %v1705
    %v2014 = vadd.f32 %v1253, %v1707
    %v2015 = vadd.f32 %v1254, %v1709
    %v2016 = vadd.f32 %v1255, %v1711
    %v2017 = vadd.f32 %v1256, %v1713
    %v2018 = vadd.f32 %v1257, %v1715
    %v2019 = vadd.f32 %v1258, %v1717
    %v2020 = vadd.f32 %v1259, %v1719
    %v2021 = vadd.f32 %v1260, %v1721
    %v2022 = vadd.f32 %v1261, %v1723
    %v2023 = vadd.f32 %v1262, %v1725
    %v2024 = vadd.f32 %v1263, %v1727
    %v2025 = vadd.f32 %v1264, %v1729
    %v2026 = vadd.f32 %v1265, %v1731
    %v2027 = vadd.f32 %v1266, %v1733
    %v2028 = vadd.f32 %v1267, %v1735
    %v2029 = vadd.f32 %v1268, %v1737
    %v2030 = vadd.f32 %v1269, %v1739
    %v2031 = vadd.f32 %v1270, %v1741
    %v2032 = vadd.f32 %v1271, %v1743
    %v2033 = vadd.f32 %v1272, %v1745
    %v2034 = vadd.f32 %v1273, %v1747
    %v2035 = vadd.f32 %v1274, %v1749
    %v2036 = vadd.f32 %v1275, %v1751
    %v2037 = vadd.f32 %v1276, %v1753
    %v2038 = vadd.f32 %v1277, %v1755
    %v2039 = vadd.f32 %v1278, %v1757
    %v2040 = vadd.f32 %v1279, %v1759
    %v2041 = vadd.f32 %v1280, %v1761
    %v2042 = vadd.f32 %v1281, %v1763
    %v2043 = vadd.f32 %v1282, %v1765
    %v2044 = vadd.f32 %v1283, %v1767
    %v2045 = vadd.f32 %v1284, %v1769
    %v2046 = vadd.f32 %v1285, %v1771
    %v2047 = vadd.f32 %v1286, %v1773
    %v2048 = vadd.f32 %v1287, %v1775
    %v2049 = vadd.f32 %v1288, %v1777
    %v2050 = vadd.f32 %v1289, %v1779
    %v2051 = vadd.f32 %v1290, %v1781
    %v2052 = vadd.f32 %v1291, %v1783
    %v2053 = vadd.f32 %v1292, %v1785
    %v2054 = vadd.f32 %v1293, %v1787
    %v2055 = vadd.f32 %v1294, %v1789
    %v2056 = vadd.f32 %v1295, %v1791
    %v2057 = vadd.f32 %v1296, %v1793
    %v2058 = vadd.f32 %v1297, %v1795
    %v2059 = vadd.f32 %v1298, %v1797
    %v2060 = vadd.f32 %v1299, %v1799
    %v2061 = vadd.f32 %v1300, %v1801
    %v2062 = vadd.f32 %v1301, %v1803
    %v2063 = vadd.f32 %v1302, %v1805
    %v2064 = vadd.f32 %v1303, %v1807
    %v2065 = vadd.f32 %v1304, %v1809
    %v2066 = vadd.f32 %v1305, %v1811
    %v2067 = vadd.f32 %v1306, %v1813
    %v2068 = vadd.f32 %v1307, %v1815
    %v2069 = vadd.f32 %v1308, %v1817
    %v2070 = vadd.f32 %v1309, %v1819
    %v2071 = vadd.f32 %v1310, %v1821
    %v2072 = vadd.f32 %v1311, %v1823
    %v2073 = vadd.f32 %v1312, %v1825
    %v2074 = vadd.f32 %v1313, %v1827
    %v2075 = vadd.f32 %v1314, %v1829
    %v2076 = vadd.f32 %v1315, %v1831
    %v2077 = vadd.f32 %v1316, %v1833
    %v2078 = vadd.f32 %v1317, %v1835
    %v2079 = vadd.f32 %v1318, %v1837
    %v2080 = vadd.f32 %v1319, %v1839
    %v2081 = vadd.f32 %v1320, %v1841
    %v2082 = vadd.f32 %v1321, %v1843
    %v2083 = vadd.f32 %v1322, %v1845
    %v2084 = vadd.f32 %v1323, %v1847
    %v2085 = vadd.f32 %v1324, %v1849
    %v2086 = vadd.f32 %v1325, %v1851
    %v2087 = vadd.f32 %v1326, %v1853
    %v2088 = vadd.f32 %v1327, %v1855
    %v2089 = vadd.f32 %v1328, %v1857
    %v2090 = vadd.f32 %v1329, %v1859
    %v2091 = vadd.f32 %v1330, %v1861
    %v2092 = vadd.f32 %v1331, %v1863
    %v2093 = vadd.f32 %v1332, %v1865
    %v2094 = vadd.f32 %v1333, %v1867
    %v2095 = vadd.f32 %v1334, %v1869
    %v2096 = vadd.f32 %v1335, %v1871
    %v2097 = vadd.f32 %v1336, %v1873
    %v2098 = vadd.f32 %v1337, %v1875
    %v2099 = vadd.f32 %v1338, %v1877
    %v2100 = vadd.f32 %v1339, %v1879
    %v2101 = vadd.f32 %v1340, %v1881
    %v2102 = vadd.f32 %v1341, %v1883
    %v2103 = vadd.f32 %v1342, %v1885
    %v2104 = vld [vmem:[#allocation2 + $0x10] sm:$0xfe]
    %v2105 = vld [vmem:[#allocation2 + $0x6d0] sm:$0x1]
    %vm2108 = vcmask 1045504
    %v2109 = vrot.slane %v2104, 2
    %v2110 = vrot.slane %v1236, 2
    %v2111 = vsel %vm2108, %v2109, %v2110
    %v2112 = vrot.slane %v1237, 2
    %v2113 = vsel %vm2108, %v2110, %v2112
    %v2114 = vrot.slane %v1238, 2
    %v2115 = vsel %vm2108, %v2112, %v2114
    %v2116 = vrot.slane %v1239, 2
    %v2117 = vsel %vm2108, %v2114, %v2116
    %v2118 = vrot.slane %v1240, 2
    %v2119 = vsel %vm2108, %v2116, %v2118
    %v2120 = vrot.slane %v1241, 2
    %v2121 = vsel %vm2108, %v2118, %v2120
    %v2122 = vrot.slane %v1242, 2
    %v2123 = vsel %vm2108, %v2120, %v2122
    %v2124 = vrot.slane %v1243, 2
    %v2125 = vsel %vm2108, %v2122, %v2124
    %v2126 = vrot.slane %v1244, 2
    %v2127 = vsel %vm2108, %v2124, %v2126
    %v2128 = vrot.slane %v1245, 2
    %v2129 = vsel %vm2108, %v2126, %v2128
    %v2130 = vrot.slane %v1246, 2
    %v2131 = vsel %vm2108, %v2128, %v2130
    %v2132 = vrot.slane %v1247, 2
    %v2133 = vsel %vm2108, %v2130, %v2132
    %v2134 = vrot.slane %v1248, 2
    %v2135 = vsel %vm2108, %v2132, %v2134
    %v2136 = vrot.slane %v1249, 2
    %v2137 = vsel %vm2108, %v2134, %v2136
    %v2138 = vrot.slane %v1250, 2
    %v2139 = vsel %vm2108, %v2136, %v2138
    %v2140 = vrot.slane %v1251, 2
    %v2141 = vsel %vm2108, %v2138, %v2140
    %v2142 = vrot.slane %v1252, 2
    %v2143 = vsel %vm2108, %v2140, %v2142
    %v2144 = vrot.slane %v1253, 2
    %v2145 = vsel %vm2108, %v2142, %v2144
    %v2146 = vrot.slane %v1254, 2
    %v2147 = vsel %vm2108, %v2144, %v2146
    %v2148 = vrot.slane %v1255, 2
    %v2149 = vsel %vm2108, %v2146, %v2148
    %v2150 = vrot.slane %v1256, 2
    %v2151 = vsel %vm2108, %v2148, %v2150
    %v2152 = vrot.slane %v1257, 2
    %v2153 = vsel %vm2108, %v2150, %v2152
    %v2154 = vrot.slane %v1258, 2
    %v2155 = vsel %vm2108, %v2152, %v2154
    %v2156 = vrot.slane %v1259, 2
    %v2157 = vsel %vm2108, %v2154, %v2156
    %v2158 = vrot.slane %v1260, 2
    %v2159 = vsel %vm2108, %v2156, %v2158
    %v2160 = vrot.slane %v1261, 2
    %v2161 = vsel %vm2108, %v2158, %v2160
    %v2162 = vrot.slane %v1262, 2
    %v2163 = vsel %vm2108, %v2160, %v2162
    %v2164 = vrot.slane %v1263, 2
    %v2165 = vsel %vm2108, %v2162, %v2164
    %v2166 = vrot.slane %v1264, 2
    %v2167 = vsel %vm2108, %v2164, %v2166
    %v2168 = vrot.slane %v1265, 2
    %v2169 = vsel %vm2108, %v2166, %v2168
    %v2170 = vrot.slane %v1266, 2
    %v2171 = vsel %vm2108, %v2168, %v2170
    %v2172 = vrot.slane %v1267, 2
    %v2173 = vsel %vm2108, %v2170, %v2172
    %v2174 = vrot.slane %v1268, 2
    %v2175 = vsel %vm2108, %v2172, %v2174
    %v2176 = vrot.slane %v1269, 2
    %v2177 = vsel %vm2108, %v2174, %v2176
    %v2178 = vrot.slane %v1270, 2
    %v2179 = vsel %vm2108, %v2176, %v2178
    %v2180 = vrot.slane %v1271, 2
    %v2181 = vsel %vm2108, %v2178, %v2180
    %v2182 = vrot.slane %v1272, 2
    %v2183 = vsel %vm2108, %v2180, %v2182
    %v2184 = vrot.slane %v1273, 2
    %v2185 = vsel %vm2108, %v2182, %v2184
    %v2186 = vrot.slane %v1274, 2
    %v2187 = vsel %vm2108, %v2184, %v2186
    %v2188 = vrot.slane %v1275, 2
    %v2189 = vsel %vm2108, %v2186, %v2188
    %v2190 = vrot.slane %v1276, 2
    %v2191 = vsel %vm2108, %v2188, %v2190
    %v2192 = vrot.slane %v1277, 2
    %v2193 = vsel %vm2108, %v2190, %v2192
    %v2194 = vrot.slane %v1278, 2
    %v2195 = vsel %vm2108, %v2192, %v2194
    %v2196 = vrot.slane %v1279, 2
    %v2197 = vsel %vm2108, %v2194, %v2196
    %v2198 = vrot.slane %v1280, 2
    %v2199 = vsel %vm2108, %v2196, %v2198
    %v2200 = vrot.slane %v1281, 2
    %v2201 = vsel %vm2108, %v2198, %v2200
    %v2202 = vrot.slane %v1282, 2
    %v2203 = vsel %vm2108, %v2200, %v2202
    %v2204 = vrot.slane %v1283, 2
    %v2205 = vsel %vm2108, %v2202, %v2204
    %v2206 = vrot.slane %v1284, 2
    %v2207 = vsel %vm2108, %v2204, %v2206
    %v2208 = vrot.slane %v1285, 2
    %v2209 = vsel %vm2108, %v2206, %v2208
    %v2210 = vrot.slane %v1286, 2
    %v2211 = vsel %vm2108, %v2208, %v2210
    %v2212 = vrot.slane %v1287, 2
    %v2213 = vsel %vm2108, %v2210, %v2212
    %v2214 = vrot.slane %v1288, 2
    %v2215 = vsel %vm2108, %v2212, %v2214
    %v2216 = vrot.slane %v1289, 2
    %v2217 = vsel %vm2108, %v2214, %v2216
    %v2218 = vrot.slane %v1290, 2
    %v2219 = vsel %vm2108, %v2216, %v2218
    %v2220 = vrot.slane %v1291, 2
    %v2221 = vsel %vm2108, %v2218, %v2220
    %v2222 = vrot.slane %v1292, 2
    %v2223 = vsel %vm2108, %v2220, %v2222
    %v2224 = vrot.slane %v1293, 2
    %v2225 = vsel %vm2108, %v2222, %v2224
    %v2226 = vrot.slane %v1294, 2
    %v2227 = vsel %vm2108, %v2224, %v2226
    %v2228 = vrot.slane %v1295, 2
    %v2229 = vsel %vm2108, %v2226, %v2228
    %v2230 = vrot.slane %v1296, 2
    %v2231 = vsel %vm2108, %v2228, %v2230
    %v2232 = vrot.slane %v1297, 2
    %v2233 = vsel %vm2108, %v2230, %v2232
    %v2234 = vrot.slane %v1298, 2
    %v2235 = vsel %vm2108, %v2232, %v2234
    %v2236 = vrot.slane %v1299, 2
    %v2237 = vsel %vm2108, %v2234, %v2236
    %v2238 = vrot.slane %v1300, 2
    %v2239 = vsel %vm2108, %v2236, %v2238
    %v2240 = vrot.slane %v1301, 2
    %v2241 = vsel %vm2108, %v2238, %v2240
    %v2242 = vrot.slane %v1302, 2
    %v2243 = vsel %vm2108, %v2240, %v2242
    %v2244 = vrot.slane %v1303, 2
    %v2245 = vsel %vm2108, %v2242, %v2244
    %v2246 = vrot.slane %v1304, 2
    %v2247 = vsel %vm2108, %v2244, %v2246
    %v2248 = vrot.slane %v1305, 2
    %v2249 = vsel %vm2108, %v2246, %v2248
    %v2250 = vrot.slane %v1306, 2
    %v2251 = vsel %vm2108, %v2248, %v2250
    %v2252 = vrot.slane %v1307, 2
    %v2253 = vsel %vm2108, %v2250, %v2252
    %v2254 = vrot.slane %v1308, 2
    %v2255 = vsel %vm2108, %v2252, %v2254
    %v2256 = vrot.slane %v1309, 2
    %v2257 = vsel %vm2108, %v2254, %v2256
    %v2258 = vrot.slane %v1310, 2
    %v2259 = vsel %vm2108, %v2256, %v2258
    %v2260 = vrot.slane %v1311, 2
    %v2261 = vsel %vm2108, %v2258, %v2260
    %v2262 = vrot.slane %v1312, 2
    %v2263 = vsel %vm2108, %v2260, %v2262
    %v2264 = vrot.slane %v1313, 2
    %v2265 = vsel %vm2108, %v2262, %v2264
    %v2266 = vrot.slane %v1314, 2
    %v2267 = vsel %vm2108, %v2264, %v2266
    %v2268 = vrot.slane %v1315, 2
    %v2269 = vsel %vm2108, %v2266, %v2268
    %v2270 = vrot.slane %v1316, 2
    %v2271 = vsel %vm2108, %v2268, %v2270
    %v2272 = vrot.slane %v1317, 2
    %v2273 = vsel %vm2108, %v2270, %v2272
    %v2274 = vrot.slane %v1318, 2
    %v2275 = vsel %vm2108, %v2272, %v2274
    %v2276 = vrot.slane %v1319, 2
    %v2277 = vsel %vm2108, %v2274, %v2276
    %v2278 = vrot.slane %v1320, 2
    %v2279 = vsel %vm2108, %v2276, %v2278
    %v2280 = vrot.slane %v1321, 2
    %v2281 = vsel %vm2108, %v2278, %v2280
    %v2282 = vrot.slane %v1322, 2
    %v2283 = vsel %vm2108, %v2280, %v2282
    %v2284 = vrot.slane %v1323, 2
    %v2285 = vsel %vm2108, %v2282, %v2284
    %v2286 = vrot.slane %v1324, 2
    %v2287 = vsel %vm2108, %v2284, %v2286
    %v2288 = vrot.slane %v1325, 2
    %v2289 = vsel %vm2108, %v2286, %v2288
    %v2290 = vrot.slane %v1326, 2
    %v2291 = vsel %vm2108, %v2288, %v2290
    %v2292 = vrot.slane %v1327, 2
    %v2293 = vsel %vm2108, %v2290, %v2292
    %v2294 = vrot.slane %v1328, 2
    %v2295 = vsel %vm2108, %v2292, %v2294
    %v2296 = vrot.slane %v1329, 2
    %v2297 = vsel %vm2108, %v2294, %v2296
    %v2298 = vrot.slane %v1330, 2
    %v2299 = vsel %vm2108, %v2296, %v2298
    %v2300 = vrot.slane %v1331, 2
    %v2301 = vsel %vm2108, %v2298, %v2300
    %v2302 = vrot.slane %v1332, 2
    %v2303 = vsel %vm2108, %v2300, %v2302
    %v2304 = vrot.slane %v1333, 2
    %v2305 = vsel %vm2108, %v2302, %v2304
    %v2306 = vrot.slane %v1334, 2
    %v2307 = vsel %vm2108, %v2304, %v2306
    %v2308 = vrot.slane %v1335, 2
    %v2309 = vsel %vm2108, %v2306, %v2308
    %v2310 = vrot.slane %v1336, 2
    %v2311 = vsel %vm2108, %v2308, %v2310
    %v2312 = vrot.slane %v1337, 2
    %v2313 = vsel %vm2108, %v2310, %v2312
    %v2314 = vrot.slane %v1338, 2
    %v2315 = vsel %vm2108, %v2312, %v2314
    %v2316 = vrot.slane %v1339, 2
    %v2317 = vsel %vm2108, %v2314, %v2316
    %v2318 = vrot.slane %v1340, 2
    %v2319 = vsel %vm2108, %v2316, %v2318
    %v2320 = vrot.slane %v1341, 2
    %v2321 = vsel %vm2108, %v2318, %v2320
    %v2322 = vrot.slane %v1343, 2
    %v2323 = vsel %vm2108, %v2320, %v2322
    %v2324 = vrot.slane %v2105, 2
    %v2325 = vsel %vm2108, %v2322, %v2324
    %2326 = vrot.lane.b32.xlu0 %v2109, 80
    %v2327 = vpop.permute.xlu0 %2326
    %2328 = vrot.lane.b32.xlu0 %v2111, 80
    %v2329 = vpop.permute.xlu0 %2328
    %2330 = vrot.lane.b32.xlu0 %v2113, 80
    %v2331 = vpop.permute.xlu0 %2330
    %2332 = vrot.lane.b32.xlu0 %v2115, 80
    %v2333 = vpop.permute.xlu0 %2332
    %2334 = vrot.lane.b32.xlu0 %v2117, 80
    %v2335 = vpop.permute.xlu0 %2334
    %2336 = vrot.lane.b32.xlu0 %v2119, 80
    %v2337 = vpop.permute.xlu0 %2336
    %2338 = vrot.lane.b32.xlu0 %v2121, 80
    %v2339 = vpop.permute.xlu0 %2338
    %2340 = vrot.lane.b32.xlu0 %v2123, 80
    %v2341 = vpop.permute.xlu0 %2340
    %2342 = vrot.lane.b32.xlu0 %v2125, 80
    %v2343 = vpop.permute.xlu0 %2342
    %2344 = vrot.lane.b32.xlu0 %v2127, 80
    %v2345 = vpop.permute.xlu0 %2344
    %2346 = vrot.lane.b32.xlu0 %v2129, 80
    %v2347 = vpop.permute.xlu0 %2346
    %2348 = vrot.lane.b32.xlu0 %v2131, 80
    %v2349 = vpop.permute.xlu0 %2348
    %2350 = vrot.lane.b32.xlu0 %v2133, 80
    %v2351 = vpop.permute.xlu0 %2350
    %2352 = vrot.lane.b32.xlu0 %v2135, 80
    %v2353 = vpop.permute.xlu0 %2352
    %2354 = vrot.lane.b32.xlu0 %v2137, 80
    %v2355 = vpop.permute.xlu0 %2354
    %2356 = vrot.lane.b32.xlu0 %v2139, 80
    %v2357 = vpop.permute.xlu0 %2356
    %2358 = vrot.lane.b32.xlu0 %v2141, 80
    %v2359 = vpop.permute.xlu0 %2358
    %2360 = vrot.lane.b32.xlu0 %v2143, 80
    %v2361 = vpop.permute.xlu0 %2360
    %2362 = vrot.lane.b32.xlu0 %v2145, 80
    %v2363 = vpop.permute.xlu0 %2362
    %2364 = vrot.lane.b32.xlu0 %v2147, 80
    %v2365 = vpop.permute.xlu0 %2364
    %2366 = vrot.lane.b32.xlu0 %v2149, 80
    %v2367 = vpop.permute.xlu0 %2366
    %2368 = vrot.lane.b32.xlu0 %v2151, 80
    %v2369 = vpop.permute.xlu0 %2368
    %2370 = vrot.lane.b32.xlu0 %v2153, 80
    %v2371 = vpop.permute.xlu0 %2370
    %2372 = vrot.lane.b32.xlu0 %v2155, 80
    %v2373 = vpop.permute.xlu0 %2372
    %2374 = vrot.lane.b32.xlu0 %v2157, 80
    %v2375 = vpop.permute.xlu0 %2374
    %2376 = vrot.lane.b32.xlu0 %v2159, 80
    %v2377 = vpop.permute.xlu0 %2376
    %2378 = vrot.lane.b32.xlu0 %v2161, 80
    %v2379 = vpop.permute.xlu0 %2378
    %2380 = vrot.lane.b32.xlu0 %v2163, 80
    %v2381 = vpop.permute.xlu0 %2380
    %2382 = vrot.lane.b32.xlu0 %v2165, 80
    %v2383 = vpop.permute.xlu0 %2382
    %2384 = vrot.lane.b32.xlu0 %v2167, 80
    %v2385 = vpop.permute.xlu0 %2384
    %2386 = vrot.lane.b32.xlu0 %v2169, 80
    %v2387 = vpop.permute.xlu0 %2386
    %2388 = vrot.lane.b32.xlu0 %v2171, 80
    %v2389 = vpop.permute.xlu0 %2388
    %2390 = vrot.lane.b32.xlu0 %v2173, 80
    %v2391 = vpop.permute.xlu0 %2390
    %2392 = vrot.lane.b32.xlu0 %v2175, 80
    %v2393 = vpop.permute.xlu0 %2392
    %2394 = vrot.lane.b32.xlu0 %v2177, 80
    %v2395 = vpop.permute.xlu0 %2394
    %2396 = vrot.lane.b32.xlu0 %v2179, 80
    %v2397 = vpop.permute.xlu0 %2396
    %2398 = vrot.lane.b32.xlu0 %v2181, 80
    %v2399 = vpop.permute.xlu0 %2398
    %2400 = vrot.lane.b32.xlu0 %v2183, 80
    %v2401 = vpop.permute.xlu0 %2400
    %2402 = vrot.lane.b32.xlu0 %v2185, 80
    %v2403 = vpop.permute.xlu0 %2402
    %2404 = vrot.lane.b32.xlu0 %v2187, 80
    %v2405 = vpop.permute.xlu0 %2404
    %2406 = vrot.lane.b32.xlu0 %v2189, 80
    %v2407 = vpop.permute.xlu0 %2406
    %2408 = vrot.lane.b32.xlu0 %v2191, 80
    %v2409 = vpop.permute.xlu0 %2408
    %2410 = vrot.lane.b32.xlu0 %v2193, 80
    %v2411 = vpop.permute.xlu0 %2410
    %2412 = vrot.lane.b32.xlu0 %v2195, 80
    %v2413 = vpop.permute.xlu0 %2412
    %2414 = vrot.lane.b32.xlu0 %v2197, 80
    %v2415 = vpop.permute.xlu0 %2414
    %2416 = vrot.lane.b32.xlu0 %v2199, 80
    %v2417 = vpop.permute.xlu0 %2416
    %2418 = vrot.lane.b32.xlu0 %v2201, 80
    %v2419 = vpop.permute.xlu0 %2418
    %2420 = vrot.lane.b32.xlu0 %v2203, 80
    %v2421 = vpop.permute.xlu0 %2420
    %2422 = vrot.lane.b32.xlu0 %v2205, 80
    %v2423 = vpop.permute.xlu0 %2422
    %2424 = vrot.lane.b32.xlu0 %v2207, 80
    %v2425 = vpop.permute.xlu0 %2424
    %2426 = vrot.lane.b32.xlu0 %v2209, 80
    %v2427 = vpop.permute.xlu0 %2426
    %2428 = vrot.lane.b32.xlu0 %v2211, 80
    %v2429 = vpop.permute.xlu0 %2428
    %2430 = vrot.lane.b32.xlu0 %v2213, 80
    %v2431 = vpop.permute.xlu0 %2430
    %2432 = vrot.lane.b32.xlu0 %v2215, 80
    %v2433 = vpop.permute.xlu0 %2432
    %2434 = vrot.lane.b32.xlu0 %v2217, 80
    %v2435 = vpop.permute.xlu0 %2434
    %2436 = vrot.lane.b32.xlu0 %v2219, 80
    %v2437 = vpop.permute.xlu0 %2436
    %2438 = vrot.lane.b32.xlu0 %v2221, 80
    %v2439 = vpop.permute.xlu0 %2438
    %2440 = vrot.lane.b32.xlu0 %v2223, 80
    %v2441 = vpop.permute.xlu0 %2440
    %2442 = vrot.lane.b32.xlu0 %v2225, 80
    %v2443 = vpop.permute.xlu0 %2442
    %2444 = vrot.lane.b32.xlu0 %v2227, 80
    %v2445 = vpop.permute.xlu0 %2444
    %2446 = vrot.lane.b32.xlu0 %v2229, 80
    %v2447 = vpop.permute.xlu0 %2446
    %2448 = vrot.lane.b32.xlu0 %v2231, 80
    %v2449 = vpop.permute.xlu0 %2448
    %2450 = vrot.lane.b32.xlu0 %v2233, 80
    %v2451 = vpop.permute.xlu0 %2450
    %2452 = vrot.lane.b32.xlu0 %v2235, 80
    %v2453 = vpop.permute.xlu0 %2452
    %2454 = vrot.lane.b32.xlu0 %v2237, 80
    %v2455 = vpop.permute.xlu0 %2454
    %2456 = vrot.lane.b32.xlu0 %v2239, 80
    %v2457 = vpop.permute.xlu0 %2456
    %2458 = vrot.lane.b32.xlu0 %v2241, 80
    %v2459 = vpop.permute.xlu0 %2458
    %2460 = vrot.lane.b32.xlu0 %v2243, 80
    %v2461 = vpop.permute.xlu0 %2460
    %2462 = vrot.lane.b32.xlu0 %v2245, 80
    %v2463 = vpop.permute.xlu0 %2462
    %2464 = vrot.lane.b32.xlu0 %v2247, 80
    %v2465 = vpop.permute.xlu0 %2464
    %2466 = vrot.lane.b32.xlu0 %v2249, 80
    %v2467 = vpop.permute.xlu0 %2466
    %2468 = vrot.lane.b32.xlu0 %v2251, 80
    %v2469 = vpop.permute.xlu0 %2468
    %2470 = vrot.lane.b32.xlu0 %v2253, 80
    %v2471 = vpop.permute.xlu0 %2470
    %2472 = vrot.lane.b32.xlu0 %v2255, 80
    %v2473 = vpop.permute.xlu0 %2472
    %2474 = vrot.lane.b32.xlu0 %v2257, 80
    %v2475 = vpop.permute.xlu0 %2474
    %2476 = vrot.lane.b32.xlu0 %v2259, 80
    %v2477 = vpop.permute.xlu0 %2476
    %2478 = vrot.lane.b32.xlu0 %v2261, 80
    %v2479 = vpop.permute.xlu0 %2478
    %2480 = vrot.lane.b32.xlu0 %v2263, 80
    %v2481 = vpop.permute.xlu0 %2480
    %2482 = vrot.lane.b32.xlu0 %v2265, 80
    %v2483 = vpop.permute.xlu0 %2482
    %2484 = vrot.lane.b32.xlu0 %v2267, 80
    %v2485 = vpop.permute.xlu0 %2484
    %2486 = vrot.lane.b32.xlu0 %v2269, 80
    %v2487 = vpop.permute.xlu0 %2486
    %2488 = vrot.lane.b32.xlu0 %v2271, 80
    %v2489 = vpop.permute.xlu0 %2488
    %2490 = vrot.lane.b32.xlu0 %v2273, 80
    %v2491 = vpop.permute.xlu0 %2490
    %2492 = vrot.lane.b32.xlu0 %v2275, 80
    %v2493 = vpop.permute.xlu0 %2492
    %2494 = vrot.lane.b32.xlu0 %v2277, 80
    %v2495 = vpop.permute.xlu0 %2494
    %2496 = vrot.lane.b32.xlu0 %v2279, 80
    %v2497 = vpop.permute.xlu0 %2496
    %2498 = vrot.lane.b32.xlu0 %v2281, 80
    %v2499 = vpop.permute.xlu0 %2498
    %2500 = vrot.lane.b32.xlu0 %v2283, 80
    %v2501 = vpop.permute.xlu0 %2500
    %2502 = vrot.lane.b32.xlu0 %v2285, 80
    %v2503 = vpop.permute.xlu0 %2502
    %2504 = vrot.lane.b32.xlu0 %v2287, 80
    %v2505 = vpop.permute.xlu0 %2504
    %2506 = vrot.lane.b32.xlu0 %v2289, 80
    %v2507 = vpop.permute.xlu0 %2506
    %2508 = vrot.lane.b32.xlu0 %v2291, 80
    %v2509 = vpop.permute.xlu0 %2508
    %2510 = vrot.lane.b32.xlu0 %v2293, 80
    %v2511 = vpop.permute.xlu0 %2510
    %2512 = vrot.lane.b32.xlu0 %v2295, 80
    %v2513 = vpop.permute.xlu0 %2512
    %2514 = vrot.lane.b32.xlu0 %v2297, 80
    %v2515 = vpop.permute.xlu0 %2514
    %2516 = vrot.lane.b32.xlu0 %v2299, 80
    %v2517 = vpop.permute.xlu0 %2516
    %2518 = vrot.lane.b32.xlu0 %v2301, 80
    %v2519 = vpop.permute.xlu0 %2518
    %2520 = vrot.lane.b32.xlu0 %v2303, 80
    %v2521 = vpop.permute.xlu0 %2520
    %2522 = vrot.lane.b32.xlu0 %v2305, 80
    %v2523 = vpop.permute.xlu0 %2522
    %2524 = vrot.lane.b32.xlu0 %v2307, 80
    %v2525 = vpop.permute.xlu0 %2524
    %2526 = vrot.lane.b32.xlu0 %v2309, 80
    %v2527 = vpop.permute.xlu0 %2526
    %2528 = vrot.lane.b32.xlu0 %v2311, 80
    %v2529 = vpop.permute.xlu0 %2528
    %2530 = vrot.lane.b32.xlu0 %v2313, 80
    %v2531 = vpop.permute.xlu0 %2530
    %2532 = vrot.lane.b32.xlu0 %v2315, 80
    %v2533 = vpop.permute.xlu0 %2532
    %2534 = vrot.lane.b32.xlu0 %v2317, 80
    %v2535 = vpop.permute.xlu0 %2534
    %2536 = vrot.lane.b32.xlu0 %v2319, 80
    %v2537 = vpop.permute.xlu0 %2536
    %2538 = vrot.lane.b32.xlu0 %v2321, 80
    %v2539 = vpop.permute.xlu0 %2538
    %2540 = vrot.lane.b32.xlu0 %v2323, 80
    %v2541 = vpop.permute.xlu0 %2540
    %2542 = vrot.lane.b32.xlu0 %v2325, 80
    %v2543 = vpop.permute.xlu0 %2542
    %v2653 = vadd.f32 %v1995, %v2327
    %v2654 = vadd.f32 %v1996, %v2329
    %v2655 = vadd.f32 %v1997, %v2331
    %v2656 = vadd.f32 %v1998, %v2333
    %v2657 = vadd.f32 %v1999, %v2335
    %v2658 = vadd.f32 %v2000, %v2337
    %v2659 = vadd.f32 %v2001, %v2339
    %v2660 = vadd.f32 %v2002, %v2341
    %v2661 = vadd.f32 %v2003, %v2343
    %v2662 = vadd.f32 %v2004, %v2345
    %v2663 = vadd.f32 %v2005, %v2347
    %v2664 = vadd.f32 %v2006, %v2349
    %v2665 = vadd.f32 %v2007, %v2351
    %v2666 = vadd.f32 %v2008, %v2353
    %v2667 = vadd.f32 %v2009, %v2355
    %v2668 = vadd.f32 %v2010, %v2357
    %v2669 = vadd.f32 %v2011, %v2359
    %v2670 = vadd.f32 %v2012, %v2361
    %v2671 = vadd.f32 %v2013, %v2363
    %v2672 = vadd.f32 %v2014, %v2365
    %v2673 = vadd.f32 %v2015, %v2367
    %v2674 = vadd.f32 %v2016, %v2369
    %v2675 = vadd.f32 %v2017, %v2371
    %v2676 = vadd.f32 %v2018, %v2373
    %v2677 = vadd.f32 %v2019, %v2375
    %v2678 = vadd.f32 %v2020, %v2377
    %v2679 = vadd.f32 %v2021, %v2379
    %v2680 = vadd.f32 %v2022, %v2381
    %v2681 = vadd.f32 %v2023, %v2383
    %v2682 = vadd.f32 %v2024, %v2385
    %v2683 = vadd.f32 %v2025, %v2387
    %v2684 = vadd.f32 %v2026, %v2389
    %v2685 = vadd.f32 %v2027, %v2391
    %v2686 = vadd.f32 %v2028, %v2393
    %v2687 = vadd.f32 %v2029, %v2395
    %v2688 = vadd.f32 %v2030, %v2397
    %v2689 = vadd.f32 %v2031, %v2399
    %v2690 = vadd.f32 %v2032, %v2401
    %v2691 = vadd.f32 %v2033, %v2403
    %v2692 = vadd.f32 %v2034, %v2405
    %v2693 = vadd.f32 %v2035, %v2407
    %v2694 = vadd.f32 %v2036, %v2409
    %v2695 = vadd.f32 %v2037, %v2411
    %v2696 = vadd.f32 %v2038, %v2413
    %v2697 = vadd.f32 %v2039, %v2415
    %v2698 = vadd.f32 %v2040, %v2417
    %v2699 = vadd.f32 %v2041, %v2419
    %v2700 = vadd.f32 %v2042, %v2421
    %v2701 = vadd.f32 %v2043, %v2423
    %v2702 = vadd.f32 %v2044, %v2425
    %v2703 = vadd.f32 %v2045, %v2427
    %v2704 = vadd.f32 %v2046, %v2429
    %v2705 = vadd.f32 %v2047, %v2431
    %v2706 = vadd.f32 %v2048, %v2433
    %v2707 = vadd.f32 %v2049, %v2435
    %v2708 = vadd.f32 %v2050, %v2437
    %v2709 = vadd.f32 %v2051, %v2439
    %v2710 = vadd.f32 %v2052, %v2441
    %v2711 = vadd.f32 %v2053, %v2443
    %v2712 = vadd.f32 %v2054, %v2445
    %v2713 = vadd.f32 %v2055, %v2447
    %v2714 = vadd.f32 %v2056, %v2449
    %v2715 = vadd.f32 %v2057, %v2451
    %v2716 = vadd.f32 %v2058, %v2453
    %v2717 = vadd.f32 %v2059, %v2455
    %v2718 = vadd.f32 %v2060, %v2457
    %v2719 = vadd.f32 %v2061, %v2459
    %v2720 = vadd.f32 %v2062, %v2461
    %v2721 = vadd.f32 %v2063, %v2463
    %v2722 = vadd.f32 %v2064, %v2465
    %v2723 = vadd.f32 %v2065, %v2467
    %v2724 = vadd.f32 %v2066, %v2469
    %v2725 = vadd.f32 %v2067, %v2471
    %v2726 = vadd.f32 %v2068, %v2473
    %v2727 = vadd.f32 %v2069, %v2475
    %v2728 = vadd.f32 %v2070, %v2477
    %v2729 = vadd.f32 %v2071, %v2479
    %v2730 = vadd.f32 %v2072, %v2481
    %v2731 = vadd.f32 %v2073, %v2483
    %v2732 = vadd.f32 %v2074, %v2485
    %v2733 = vadd.f32 %v2075, %v2487
    %v2734 = vadd.f32 %v2076, %v2489
    %v2735 = vadd.f32 %v2077, %v2491
    %v2736 = vadd.f32 %v2078, %v2493
    %v2737 = vadd.f32 %v2079, %v2495
    %v2738 = vadd.f32 %v2080, %v2497
    %v2739 = vadd.f32 %v2081, %v2499
    %v2740 = vadd.f32 %v2082, %v2501
    %v2741 = vadd.f32 %v2083, %v2503
    %v2742 = vadd.f32 %v2084, %v2505
    %v2743 = vadd.f32 %v2085, %v2507
    %v2744 = vadd.f32 %v2086, %v2509
    %v2745 = vadd.f32 %v2087, %v2511
    %v2746 = vadd.f32 %v2088, %v2513
    %v2747 = vadd.f32 %v2089, %v2515
    %v2748 = vadd.f32 %v2090, %v2517
    %v2749 = vadd.f32 %v2091, %v2519
    %v2750 = vadd.f32 %v2092, %v2521
    %v2751 = vadd.f32 %v2093, %v2523
    %v2752 = vadd.f32 %v2094, %v2525
    %v2753 = vadd.f32 %v2095, %v2527
    %v2754 = vadd.f32 %v2096, %v2529
    %v2755 = vadd.f32 %v2097, %v2531
    %v2756 = vadd.f32 %v2098, %v2533
    %v2757 = vadd.f32 %v2099, %v2535
    %v2758 = vadd.f32 %v2100, %v2537
    %v2759 = vadd.f32 %v2101, %v2539
    %v2760 = vadd.f32 %v2102, %v2541
    %v2761 = vadd.f32 %v2103, %v2543
    %v2762 = vld [vmem:[#allocation2 + $0x30] sm:$0x80]
    %v2763 = vld [vmem:[#allocation2 + $0x6d0] sm:$0xff]
    %v2764 = vld [vmem:[#allocation2 + $0x6e0] sm:$0xff]
    %v2765 = vld [vmem:[#allocation2 + $0x6f0] sm:$0x7f]
    %2770 = vrot.lane.b32.xlu0 %v2762, 56
    %v2771 = vpop.permute.xlu0 %2770
    %2772 = vrot.lane.b32.xlu0 %v1238, 56
    %v2773 = vpop.permute.xlu0 %2772
    %2774 = vrot.lane.b32.xlu0 %v1239, 56
    %v2775 = vpop.permute.xlu0 %2774
    %2776 = vrot.lane.b32.xlu0 %v1240, 56
    %v2777 = vpop.permute.xlu0 %2776
    %2778 = vrot.lane.b32.xlu0 %v1241, 56
    %v2779 = vpop.permute.xlu0 %2778
    %2780 = vrot.lane.b32.xlu0 %v1242, 56
    %v2781 = vpop.permute.xlu0 %2780
    %2782 = vrot.lane.b32.xlu0 %v1243, 56
    %v2783 = vpop.permute.xlu0 %2782
    %2784 = vrot.lane.b32.xlu0 %v1244, 56
    %v2785 = vpop.permute.xlu0 %2784
    %2786 = vrot.lane.b32.xlu0 %v1245, 56
    %v2787 = vpop.permute.xlu0 %2786
    %2788 = vrot.lane.b32.xlu0 %v1246, 56
    %v2789 = vpop.permute.xlu0 %2788
    %2790 = vrot.lane.b32.xlu0 %v1247, 56
    %v2791 = vpop.permute.xlu0 %2790
    %2792 = vrot.lane.b32.xlu0 %v1248, 56
    %v2793 = vpop.permute.xlu0 %2792
    %2794 = vrot.lane.b32.xlu0 %v1249, 56
    %v2795 = vpop.permute.xlu0 %2794
    %2796 = vrot.lane.b32.xlu0 %v1250, 56
    %v2797 = vpop.permute.xlu0 %2796
    %2798 = vrot.lane.b32.xlu0 %v1251, 56
    %v2799 = vpop.permute.xlu0 %2798
    %2800 = vrot.lane.b32.xlu0 %v1252, 56
    %v2801 = vpop.permute.xlu0 %2800
    %2802 = vrot.lane.b32.xlu0 %v1253, 56
    %v2803 = vpop.permute.xlu0 %2802
    %2804 = vrot.lane.b32.xlu0 %v1254, 56
    %v2805 = vpop.permute.xlu0 %2804
    %2806 = vrot.lane.b32.xlu0 %v1255, 56
    %v2807 = vpop.permute.xlu0 %2806
    %2808 = vrot.lane.b32.xlu0 %v1256, 56
    %v2809 = vpop.permute.xlu0 %2808
    %2810 = vrot.lane.b32.xlu0 %v1257, 56
    %v2811 = vpop.permute.xlu0 %2810
    %2812 = vrot.lane.b32.xlu0 %v1258, 56
    %v2813 = vpop.permute.xlu0 %2812
    %2814 = vrot.lane.b32.xlu0 %v1259, 56
    %v2815 = vpop.permute.xlu0 %2814
    %2816 = vrot.lane.b32.xlu0 %v1260, 56
    %v2817 = vpop.permute.xlu0 %2816
    %2818 = vrot.lane.b32.xlu0 %v1261, 56
    %v2819 = vpop.permute.xlu0 %2818
    %2820 = vrot.lane.b32.xlu0 %v1262, 56
    %v2821 = vpop.permute.xlu0 %2820
    %2822 = vrot.lane.b32.xlu0 %v1263, 56
    %v2823 = vpop.permute.xlu0 %2822
    %2824 = vrot.lane.b32.xlu0 %v1264, 56
    %v2825 = vpop.permute.xlu0 %2824
    %2826 = vrot.lane.b32.xlu0 %v1265, 56
    %v2827 = vpop.permute.xlu0 %2826
    %2828 = vrot.lane.b32.xlu0 %v1266, 56
    %v2829 = vpop.permute.xlu0 %2828
    %2830 = vrot.lane.b32.xlu0 %v1267, 56
    %v2831 = vpop.permute.xlu0 %2830
    %2832 = vrot.lane.b32.xlu0 %v1268, 56
    %v2833 = vpop.permute.xlu0 %2832
    %2834 = vrot.lane.b32.xlu0 %v1269, 56
    %v2835 = vpop.permute.xlu0 %2834
    %2836 = vrot.lane.b32.xlu0 %v1270, 56
    %v2837 = vpop.permute.xlu0 %2836
    %2838 = vrot.lane.b32.xlu0 %v1271, 56
    %v2839 = vpop.permute.xlu0 %2838
    %2840 = vrot.lane.b32.xlu0 %v1272, 56
    %v2841 = vpop.permute.xlu0 %2840
    %2842 = vrot.lane.b32.xlu0 %v1273, 56
    %v2843 = vpop.permute.xlu0 %2842
    %2844 = vrot.lane.b32.xlu0 %v1274, 56
    %v2845 = vpop.permute.xlu0 %2844
    %2846 = vrot.lane.b32.xlu0 %v1275, 56
    %v2847 = vpop.permute.xlu0 %2846
    %2848 = vrot.lane.b32.xlu0 %v1276, 56
    %v2849 = vpop.permute.xlu0 %2848
    %2850 = vrot.lane.b32.xlu0 %v1277, 56
    %v2851 = vpop.permute.xlu0 %2850
    %2852 = vrot.lane.b32.xlu0 %v1278, 56
    %v2853 = vpop.permute.xlu0 %2852
    %2854 = vrot.lane.b32.xlu0 %v1279, 56
    %v2855 = vpop.permute.xlu0 %2854
    %2856 = vrot.lane.b32.xlu0 %v1280, 56
    %v2857 = vpop.permute.xlu0 %2856
    %2858 = vrot.lane.b32.xlu0 %v1281, 56
    %v2859 = vpop.permute.xlu0 %2858
    %2860 = vrot.lane.b32.xlu0 %v1282, 56
    %v2861 = vpop.permute.xlu0 %2860
    %2862 = vrot.lane.b32.xlu0 %v1283, 56
    %v2863 = vpop.permute.xlu0 %2862
    %2864 = vrot.lane.b32.xlu0 %v1284, 56
    %v2865 = vpop.permute.xlu0 %2864
    %2866 = vrot.lane.b32.xlu0 %v1285, 56
    %v2867 = vpop.permute.xlu0 %2866
    %2868 = vrot.lane.b32.xlu0 %v1286, 56
    %v2869 = vpop.permute.xlu0 %2868
    %2870 = vrot.lane.b32.xlu0 %v1287, 56
    %v2871 = vpop.permute.xlu0 %2870
    %2872 = vrot.lane.b32.xlu0 %v1288, 56
    %v2873 = vpop.permute.xlu0 %2872
    %2874 = vrot.lane.b32.xlu0 %v1289, 56
    %v2875 = vpop.permute.xlu0 %2874
    %2876 = vrot.lane.b32.xlu0 %v1290, 56
    %v2877 = vpop.permute.xlu0 %2876
    %2878 = vrot.lane.b32.xlu0 %v1291, 56
    %v2879 = vpop.permute.xlu0 %2878
    %2880 = vrot.lane.b32.xlu0 %v1292, 56
    %v2881 = vpop.permute.xlu0 %2880
    %2882 = vrot.lane.b32.xlu0 %v1293, 56
    %v2883 = vpop.permute.xlu0 %2882
    %2884 = vrot.lane.b32.xlu0 %v1294, 56
    %v2885 = vpop.permute.xlu0 %2884
    %2886 = vrot.lane.b32.xlu0 %v1295, 56
    %v2887 = vpop.permute.xlu0 %2886
    %2888 = vrot.lane.b32.xlu0 %v1296, 56
    %v2889 = vpop.permute.xlu0 %2888
    %2890 = vrot.lane.b32.xlu0 %v1297, 56
    %v2891 = vpop.permute.xlu0 %2890
    %2892 = vrot.lane.b32.xlu0 %v1298, 56
    %v2893 = vpop.permute.xlu0 %2892
    %2894 = vrot.lane.b32.xlu0 %v1299, 56
    %v2895 = vpop.permute.xlu0 %2894
    %2896 = vrot.lane.b32.xlu0 %v1300, 56
    %v2897 = vpop.permute.xlu0 %2896
    %2898 = vrot.lane.b32.xlu0 %v1301, 56
    %v2899 = vpop.permute.xlu0 %2898
    %2900 = vrot.lane.b32.xlu0 %v1302, 56
    %v2901 = vpop.permute.xlu0 %2900
    %2902 = vrot.lane.b32.xlu0 %v1303, 56
    %v2903 = vpop.permute.xlu0 %2902
    %2904 = vrot.lane.b32.xlu0 %v1304, 56
    %v2905 = vpop.permute.xlu0 %2904
    %2906 = vrot.lane.b32.xlu0 %v1305, 56
    %v2907 = vpop.permute.xlu0 %2906
    %2908 = vrot.lane.b32.xlu0 %v1306, 56
    %v2909 = vpop.permute.xlu0 %2908
    %2910 = vrot.lane.b32.xlu0 %v1307, 56
    %v2911 = vpop.permute.xlu0 %2910
    %2912 = vrot.lane.b32.xlu0 %v1308, 56
    %v2913 = vpop.permute.xlu0 %2912
    %2914 = vrot.lane.b32.xlu0 %v1309, 56
    %v2915 = vpop.permute.xlu0 %2914
    %2916 = vrot.lane.b32.xlu0 %v1310, 56
    %v2917 = vpop.permute.xlu0 %2916
    %2918 = vrot.lane.b32.xlu0 %v1311, 56
    %v2919 = vpop.permute.xlu0 %2918
    %2920 = vrot.lane.b32.xlu0 %v1312, 56
    %v2921 = vpop.permute.xlu0 %2920
    %2922 = vrot.lane.b32.xlu0 %v1313, 56
    %v2923 = vpop.permute.xlu0 %2922
    %2924 = vrot.lane.b32.xlu0 %v1314, 56
    %v2925 = vpop.permute.xlu0 %2924
    %2926 = vrot.lane.b32.xlu0 %v1315, 56
    %v2927 = vpop.permute.xlu0 %2926
    %2928 = vrot.lane.b32.xlu0 %v1316, 56
    %v2929 = vpop.permute.xlu0 %2928
    %2930 = vrot.lane.b32.xlu0 %v1317, 56
    %v2931 = vpop.permute.xlu0 %2930
    %2932 = vrot.lane.b32.xlu0 %v1318, 56
    %v2933 = vpop.permute.xlu0 %2932
    %2934 = vrot.lane.b32.xlu0 %v1319, 56
    %v2935 = vpop.permute.xlu0 %2934
    %2936 = vrot.lane.b32.xlu0 %v1320, 56
    %v2937 = vpop.permute.xlu0 %2936
    %2938 = vrot.lane.b32.xlu0 %v1321, 56
    %v2939 = vpop.permute.xlu0 %2938
    %2940 = vrot.lane.b32.xlu0 %v1322, 56
    %v2941 = vpop.permute.xlu0 %2940
    %2942 = vrot.lane.b32.xlu0 %v1323, 56
    %v2943 = vpop.permute.xlu0 %2942
    %2944 = vrot.lane.b32.xlu0 %v1324, 56
    %v2945 = vpop.permute.xlu0 %2944
    %2946 = vrot.lane.b32.xlu0 %v1325, 56
    %v2947 = vpop.permute.xlu0 %2946
    %2948 = vrot.lane.b32.xlu0 %v1326, 56
    %v2949 = vpop.permute.xlu0 %2948
    %2950 = vrot.lane.b32.xlu0 %v1327, 56
    %v2951 = vpop.permute.xlu0 %2950
    %2952 = vrot.lane.b32.xlu0 %v1328, 56
    %v2953 = vpop.permute.xlu0 %2952
    %2954 = vrot.lane.b32.xlu0 %v1329, 56
    %v2955 = vpop.permute.xlu0 %2954
    %2956 = vrot.lane.b32.xlu0 %v1330, 56
    %v2957 = vpop.permute.xlu0 %2956
    %2958 = vrot.lane.b32.xlu0 %v1331, 56
    %v2959 = vpop.permute.xlu0 %2958
    %2960 = vrot.lane.b32.xlu0 %v1332, 56
    %v2961 = vpop.permute.xlu0 %2960
    %2962 = vrot.lane.b32.xlu0 %v1333, 56
    %v2963 = vpop.permute.xlu0 %2962
    %2964 = vrot.lane.b32.xlu0 %v1334, 56
    %v2965 = vpop.permute.xlu0 %2964
    %2966 = vrot.lane.b32.xlu0 %v1335, 56
    %v2967 = vpop.permute.xlu0 %2966
    %2968 = vrot.lane.b32.xlu0 %v1336, 56
    %v2969 = vpop.permute.xlu0 %2968
    %2970 = vrot.lane.b32.xlu0 %v1337, 56
    %v2971 = vpop.permute.xlu0 %2970
    %2972 = vrot.lane.b32.xlu0 %v1338, 56
    %v2973 = vpop.permute.xlu0 %2972
    %2974 = vrot.lane.b32.xlu0 %v1339, 56
    %v2975 = vpop.permute.xlu0 %2974
    %2976 = vrot.lane.b32.xlu0 %v1340, 56
    %v2977 = vpop.permute.xlu0 %2976
    %2978 = vrot.lane.b32.xlu0 %v1341, 56
    %v2979 = vpop.permute.xlu0 %2978
    %2980 = vrot.lane.b32.xlu0 %v1343, 56
    %v2981 = vpop.permute.xlu0 %2980
    %2982 = vrot.lane.b32.xlu0 %v2763, 56
    %v2983 = vpop.permute.xlu0 %2982
    %2984 = vrot.lane.b32.xlu0 %v2764, 56
    %v2985 = vpop.permute.xlu0 %2984
    %2986 = vrot.lane.b32.xlu0 %v2765, 56
    %v2987 = vpop.permute.xlu0 %2986
    %v3097 = vadd.f32 %v2653, %v2771
    %v3098 = vadd.f32 %v2654, %v2773
    %v3099 = vadd.f32 %v2655, %v2775
    %v3100 = vadd.f32 %v2656, %v2777
    %v3101 = vadd.f32 %v2657, %v2779
    %v3102 = vadd.f32 %v2658, %v2781
    %v3103 = vadd.f32 %v2659, %v2783
    %v3104 = vadd.f32 %v2660, %v2785
    %v3105 = vadd.f32 %v2661, %v2787
    %v3106 = vadd.f32 %v2662, %v2789
    %v3107 = vadd.f32 %v2663, %v2791
    %v3108 = vadd.f32 %v2664, %v2793
    %v3109 = vadd.f32 %v2665, %v2795
    %v3110 = vadd.f32 %v2666, %v2797
    %v3111 = vadd.f32 %v2667, %v2799
    %v3112 = vadd.f32 %v2668, %v2801
    %v3113 = vadd.f32 %v2669, %v2803
    %v3114 = vadd.f32 %v2670, %v2805
    %v3115 = vadd.f32 %v2671, %v2807
    %v3116 = vadd.f32 %v2672, %v2809
    %v3117 = vadd.f32 %v2673, %v2811
    %v3118 = vadd.f32 %v2674, %v2813
    %v3119 = vadd.f32 %v2675, %v2815
    %v3120 = vadd.f32 %v2676, %v2817
    %v3121 = vadd.f32 %v2677, %v2819
    %v3122 = vadd.f32 %v2678, %v2821
    %v3123 = vadd.f32 %v2679, %v2823
    %v3124 = vadd.f32 %v2680, %v2825
    %v3125 = vadd.f32 %v2681, %v2827
    %v3126 = vadd.f32 %v2682, %v2829
    %v3127 = vadd.f32 %v2683, %v2831
    %v3128 = vadd.f32 %v2684, %v2833
    %v3129 = vadd.f32 %v2685, %v2835
    %v3130 = vadd.f32 %v2686, %v2837
    %v3131 = vadd.f32 %v2687, %v2839
    %v3132 = vadd.f32 %v2688, %v2841
    %v3133 = vadd.f32 %v2689, %v2843
    %v3134 = vadd.f32 %v2690, %v2845
    %v3135 = vadd.f32 %v2691, %v2847
    %v3136 = vadd.f32 %v2692, %v2849
    %v3137 = vadd.f32 %v2693, %v2851
    %v3138 = vadd.f32 %v2694, %v2853
    %v3139 = vadd.f32 %v2695, %v2855
    %v3140 = vadd.f32 %v2696, %v2857
    %v3141 = vadd.f32 %v2697, %v2859
    %v3142 = vadd.f32 %v2698, %v2861
    %v3143 = vadd.f32 %v2699, %v2863
    %v3144 = vadd.f32 %v2700, %v2865
    %v3145 = vadd.f32 %v2701, %v2867
    %v3146 = vadd.f32 %v2702, %v2869
    %v3147 = vadd.f32 %v2703, %v2871
    %v3148 = vadd.f32 %v2704, %v2873
    %v3149 = vadd.f32 %v2705, %v2875
    %v3150 = vadd.f32 %v2706, %v2877
    %v3151 = vadd.f32 %v2707, %v2879
    %v3152 = vadd.f32 %v2708, %v2881
    %v3153 = vadd.f32 %v2709, %v2883
    %v3154 = vadd.f32 %v2710, %v2885
    %v3155 = vadd.f32 %v2711, %v2887
    %v3156 = vadd.f32 %v2712, %v2889
    %v3157 = vadd.f32 %v2713, %v2891
    %v3158 = vadd.f32 %v2714, %v2893
    %v3159 = vadd.f32 %v2715, %v2895
    %v3160 = vadd.f32 %v2716, %v2897
    %v3161 = vadd.f32 %v2717, %v2899
    %v3162 = vadd.f32 %v2718, %v2901
    %v3163 = vadd.f32 %v2719, %v2903
    %v3164 = vadd.f32 %v2720, %v2905
    %v3165 = vadd.f32 %v2721, %v2907
    %v3166 = vadd.f32 %v2722, %v2909
    %v3167 = vadd.f32 %v2723, %v2911
    %v3168 = vadd.f32 %v2724, %v2913
    %v3169 = vadd.f32 %v2725, %v2915
    %v3170 = vadd.f32 %v2726, %v2917
    %v3171 = vadd.f32 %v2727, %v2919
    %v3172 = vadd.f32 %v2728, %v2921
    %v3173 = vadd.f32 %v2729, %v2923
    %v3174 = vadd.f32 %v2730, %v2925
    %v3175 = vadd.f32 %v2731, %v2927
    %v3176 = vadd.f32 %v2732, %v2929
    %v3177 = vadd.f32 %v2733, %v2931
    %v3178 = vadd.f32 %v2734, %v2933
    %v3179 = vadd.f32 %v2735, %v2935
    %v3180 = vadd.f32 %v2736, %v2937
    %v3181 = vadd.f32 %v2737, %v2939
    %v3182 = vadd.f32 %v2738, %v2941
    %v3183 = vadd.f32 %v2739, %v2943
    %v3184 = vadd.f32 %v2740, %v2945
    %v3185 = vadd.f32 %v2741, %v2947
    %v3186 = vadd.f32 %v2742, %v2949
    %v3187 = vadd.f32 %v2743, %v2951
    %v3188 = vadd.f32 %v2744, %v2953
    %v3189 = vadd.f32 %v2745, %v2955
    %v3190 = vadd.f32 %v2746, %v2957
    %v3191 = vadd.f32 %v2747, %v2959
    %v3192 = vadd.f32 %v2748, %v2961
    %v3193 = vadd.f32 %v2749, %v2963
    %v3194 = vadd.f32 %v2750, %v2965
    %v3195 = vadd.f32 %v2751, %v2967
    %v3196 = vadd.f32 %v2752, %v2969
    %v3197 = vadd.f32 %v2753, %v2971
    %v3198 = vadd.f32 %v2754, %v2973
    %v3199 = vadd.f32 %v2755, %v2975
    %v3200 = vadd.f32 %v2756, %v2977
    %v3201 = vadd.f32 %v2757, %v2979
    %v3202 = vadd.f32 %v2758, %v2981
    %v3203 = vadd.f32 %v2759, %v2983
    %v3204 = vadd.f32 %v2760, %v2985
    %v3205 = vadd.f32 %v2761, %v2987
    %v3206 = vld [vmem:[#allocation2 + $0x6f0] sm:$0xff]
    %v3208 = vrot.slane %v2763, 1
    %v3209 = vsel %vm1452, %v1666, %v3208
    %v3210 = vrot.slane %v2764, 1
    %v3211 = vsel %vm1452, %v3208, %v3210
    %v3212 = vrot.slane %v3206, 1
    %v3213 = vsel %vm1452, %v3210, %v3212
    %3214 = vrot.lane.b32.xlu0 %v1458, 32
    %v3215 = vpop.permute.xlu0 %3214
    %3216 = vrot.lane.b32.xlu0 %v1461, 32
    %v3217 = vpop.permute.xlu0 %3216
    %3218 = vrot.lane.b32.xlu0 %v1463, 32
    %v3219 = vpop.permute.xlu0 %3218
    %3220 = vrot.lane.b32.xlu0 %v1465, 32
    %v3221 = vpop.permute.xlu0 %3220
    %3222 = vrot.lane.b32.xlu0 %v1467, 32
    %v3223 = vpop.permute.xlu0 %3222
    %3224 = vrot.lane.b32.xlu0 %v1469, 32
    %v3225 = vpop.permute.xlu0 %3224
    %3226 = vrot.lane.b32.xlu0 %v1471, 32
    %v3227 = vpop.permute.xlu0 %3226
    %3228 = vrot.lane.b32.xlu0 %v1473, 32
    %v3229 = vpop.permute.xlu0 %3228
    %3230 = vrot.lane.b32.xlu0 %v1475, 32
    %v3231 = vpop.permute.xlu0 %3230
    %3232 = vrot.lane.b32.xlu0 %v1477, 32
    %v3233 = vpop.permute.xlu0 %3232
    %3234 = vrot.lane.b32.xlu0 %v1479, 32
    %v3235 = vpop.permute.xlu0 %3234
    %3236 = vrot.lane.b32.xlu0 %v1481, 32
    %v3237 = vpop.permute.xlu0 %3236
    %3238 = vrot.lane.b32.xlu0 %v1483, 32
    %v3239 = vpop.permute.xlu0 %3238
    %3240 = vrot.lane.b32.xlu0 %v1485, 32
    %v3241 = vpop.permute.xlu0 %3240
    %3242 = vrot.lane.b32.xlu0 %v1487, 32
    %v3243 = vpop.permute.xlu0 %3242
    %3244 = vrot.lane.b32.xlu0 %v1489, 32
    %v3245 = vpop.permute.xlu0 %3244
    %3246 = vrot.lane.b32.xlu0 %v1491, 32
    %v3247 = vpop.permute.xlu0 %3246
    %3248 = vrot.lane.b32.xlu0 %v1493, 32
    %v3249 = vpop.permute.xlu0 %3248
    %3250 = vrot.lane.b32.xlu0 %v1495, 32
    %v3251 = vpop.permute.xlu0 %3250
    %3252 = vrot.lane.b32.xlu0 %v1497, 32
    %v3253 = vpop.permute.xlu0 %3252
    %3254 = vrot.lane.b32.xlu0 %v1499, 32
    %v3255 = vpop.permute.xlu0 %3254
    %3256 = vrot.lane.b32.xlu0 %v1501, 32
    %v3257 = vpop.permute.xlu0 %3256
    %3258 = vrot.lane.b32.xlu0 %v1503, 32
    %v3259 = vpop.permute.xlu0 %3258
    %3260 = vrot.lane.b32.xlu0 %v1505, 32
    %v3261 = vpop.permute.xlu0 %3260
    %3262 = vrot.lane.b32.xlu0 %v1507, 32
    %v3263 = vpop.permute.xlu0 %3262
    %3264 = vrot.lane.b32.xlu0 %v1509, 32
    %v3265 = vpop.permute.xlu0 %3264
    %3266 = vrot.lane.b32.xlu0 %v1511, 32
    %v3267 = vpop.permute.xlu0 %3266
    %3268 = vrot.lane.b32.xlu0 %v1513, 32
    %v3269 = vpop.permute.xlu0 %3268
    %3270 = vrot.lane.b32.xlu0 %v1515, 32
    %v3271 = vpop.permute.xlu0 %3270
    %3272 = vrot.lane.b32.xlu0 %v1517, 32
    %v3273 = vpop.permute.xlu0 %3272
    %3274 = vrot.lane.b32.xlu0 %v1519, 32
    %v3275 = vpop.permute.xlu0 %3274
    %3276 = vrot.lane.b32.xlu0 %v1521, 32
    %v3277 = vpop.permute.xlu0 %3276
    %3278 = vrot.lane.b32.xlu0 %v1523, 32
    %v3279 = vpop.permute.xlu0 %3278
    %3280 = vrot.lane.b32.xlu0 %v1525, 32
    %v3281 = vpop.permute.xlu0 %3280
    %3282 = vrot.lane.b32.xlu0 %v1527, 32
    %v3283 = vpop.permute.xlu0 %3282
    %3284 = vrot.lane.b32.xlu0 %v1529, 32
    %v3285 = vpop.permute.xlu0 %3284
    %3286 = vrot.lane.b32.xlu0 %v1531, 32
    %v3287 = vpop.permute.xlu0 %3286
    %3288 = vrot.lane.b32.xlu0 %v1533, 32
    %v3289 = vpop.permute.xlu0 %3288
    %3290 = vrot.lane.b32.xlu0 %v1535, 32
    %v3291 = vpop.permute.xlu0 %3290
    %3292 = vrot.lane.b32.xlu0 %v1537, 32
    %v3293 = vpop.permute.xlu0 %3292
    %3294 = vrot.lane.b32.xlu0 %v1539, 32
    %v3295 = vpop.permute.xlu0 %3294
    %3296 = vrot.lane.b32.xlu0 %v1541, 32
    %v3297 = vpop.permute.xlu0 %3296
    %3298 = vrot.lane.b32.xlu0 %v1543, 32
    %v3299 = vpop.permute.xlu0 %3298
    %3300 = vrot.lane.b32.xlu0 %v1545, 32
    %v3301 = vpop.permute.xlu0 %3300
    %3302 = vrot.lane.b32.xlu0 %v1547, 32
    %v3303 = vpop.permute.xlu0 %3302
    %3304 = vrot.lane.b32.xlu0 %v1549, 32
    %v3305 = vpop.permute.xlu0 %3304
    %3306 = vrot.lane.b32.xlu0 %v1551, 32
    %v3307 = vpop.permute.xlu0 %3306
    %3308 = vrot.lane.b32.xlu0 %v1553, 32
    %v3309 = vpop.permute.xlu0 %3308
    %3310 = vrot.lane.b32.xlu0 %v1555, 32
    %v3311 = vpop.permute.xlu0 %3310
    %3312 = vrot.lane.b32.xlu0 %v1557, 32
    %v3313 = vpop.permute.xlu0 %3312
    %3314 = vrot.lane.b32.xlu0 %v1559, 32
    %v3315 = vpop.permute.xlu0 %3314
    %3316 = vrot.lane.b32.xlu0 %v1561, 32
    %v3317 = vpop.permute.xlu0 %3316
    %3318 = vrot.lane.b32.xlu0 %v1563, 32
    %v3319 = vpop.permute.xlu0 %3318
    %3320 = vrot.lane.b32.xlu0 %v1565, 32
    %v3321 = vpop.permute.xlu0 %3320
    %3322 = vrot.lane.b32.xlu0 %v1567, 32
    %v3323 = vpop.permute.xlu0 %3322
    %3324 = vrot.lane.b32.xlu0 %v1569, 32
    %v3325 = vpop.permute.xlu0 %3324
    %3326 = vrot.lane.b32.xlu0 %v1571, 32
    %v3327 = vpop.permute.xlu0 %3326
    %3328 = vrot.lane.b32.xlu0 %v1573, 32
    %v3329 = vpop.permute.xlu0 %3328
    %3330 = vrot.lane.b32.xlu0 %v1575, 32
    %v3331 = vpop.permute.xlu0 %3330
    %3332 = vrot.lane.b32.xlu0 %v1577, 32
    %v3333 = vpop.permute.xlu0 %3332
    %3334 = vrot.lane.b32.xlu0 %v1579, 32
    %v3335 = vpop.permute.xlu0 %3334
    %3336 = vrot.lane.b32.xlu0 %v1581, 32
    %v3337 = vpop.permute.xlu0 %3336
    %3338 = vrot.lane.b32.xlu0 %v1583, 32
    %v3339 = vpop.permute.xlu0 %3338
    %3340 = vrot.lane.b32.xlu0 %v1585, 32
    %v3341 = vpop.permute.xlu0 %3340
    %3342 = vrot.lane.b32.xlu0 %v1587, 32
    %v3343 = vpop.permute.xlu0 %3342
    %3344 = vrot.lane.b32.xlu0 %v1589, 32
    %v3345 = vpop.permute.xlu0 %3344
    %3346 = vrot.lane.b32.xlu0 %v1591, 32
    %v3347 = vpop.permute.xlu0 %3346
    %3348 = vrot.lane.b32.xlu0 %v1593, 32
    %v3349 = vpop.permute.xlu0 %3348
    %3350 = vrot.lane.b32.xlu0 %v1595, 32
    %v3351 = vpop.permute.xlu0 %3350
    %3352 = vrot.lane.b32.xlu0 %v1597, 32
    %v3353 = vpop.permute.xlu0 %3352
    %3354 = vrot.lane.b32.xlu0 %v1599, 32
    %v3355 = vpop.permute.xlu0 %3354
    %3356 = vrot.lane.b32.xlu0 %v1601, 32
    %v3357 = vpop.permute.xlu0 %3356
    %3358 = vrot.lane.b32.xlu0 %v1603, 32
    %v3359 = vpop.permute.xlu0 %3358
    %3360 = vrot.lane.b32.xlu0 %v1605, 32
    %v3361 = vpop.permute.xlu0 %3360
    %3362 = vrot.lane.b32.xlu0 %v1607, 32
    %v3363 = vpop.permute.xlu0 %3362
    %3364 = vrot.lane.b32.xlu0 %v1609, 32
    %v3365 = vpop.permute.xlu0 %3364
    %3366 = vrot.lane.b32.xlu0 %v1611, 32
    %v3367 = vpop.permute.xlu0 %3366
    %3368 = vrot.lane.b32.xlu0 %v1613, 32
    %v3369 = vpop.permute.xlu0 %3368
    %3370 = vrot.lane.b32.xlu0 %v1615, 32
    %v3371 = vpop.permute.xlu0 %3370
    %3372 = vrot.lane.b32.xlu0 %v1617, 32
    %v3373 = vpop.permute.xlu0 %3372
    %3374 = vrot.lane.b32.xlu0 %v1619, 32
    %v3375 = vpop.permute.xlu0 %3374
    %3376 = vrot.lane.b32.xlu0 %v1621, 32
    %v3377 = vpop.permute.xlu0 %3376
    %3378 = vrot.lane.b32.xlu0 %v1623, 32
    %v3379 = vpop.permute.xlu0 %3378
    %3380 = vrot.lane.b32.xlu0 %v1625, 32
    %v3381 = vpop.permute.xlu0 %3380
    %3382 = vrot.lane.b32.xlu0 %v1627, 32
    %v3383 = vpop.permute.xlu0 %3382
    %3384 = vrot.lane.b32.xlu0 %v1629, 32
    %v3385 = vpop.permute.xlu0 %3384
    %3386 = vrot.lane.b32.xlu0 %v1631, 32
    %v3387 = vpop.permute.xlu0 %3386
    %3388 = vrot.lane.b32.xlu0 %v1633, 32
    %v3389 = vpop.permute.xlu0 %3388
    %3390 = vrot.lane.b32.xlu0 %v1635, 32
    %v3391 = vpop.permute.xlu0 %3390
    %3392 = vrot.lane.b32.xlu0 %v1637, 32
    %v3393 = vpop.permute.xlu0 %3392
    %3394 = vrot.lane.b32.xlu0 %v1639, 32
    %v3395 = vpop.permute.xlu0 %3394
    %3396 = vrot.lane.b32.xlu0 %v1641, 32
    %v3397 = vpop.permute.xlu0 %3396
    %3398 = vrot.lane.b32.xlu0 %v1643, 32
    %v3399 = vpop.permute.xlu0 %3398
    %3400 = vrot.lane.b32.xlu0 %v1645, 32
    %v3401 = vpop.permute.xlu0 %3400
    %3402 = vrot.lane.b32.xlu0 %v1647, 32
    %v3403 = vpop.permute.xlu0 %3402
    %3404 = vrot.lane.b32.xlu0 %v1649, 32
    %v3405 = vpop.permute.xlu0 %3404
    %3406 = vrot.lane.b32.xlu0 %v1651, 32
    %v3407 = vpop.permute.xlu0 %3406
    %3408 = vrot.lane.b32.xlu0 %v1653, 32
    %v3409 = vpop.permute.xlu0 %3408
    %3410 = vrot.lane.b32.xlu0 %v1655, 32
    %v3411 = vpop.permute.xlu0 %3410
    %3412 = vrot.lane.b32.xlu0 %v1657, 32
    %v3413 = vpop.permute.xlu0 %3412
    %3414 = vrot.lane.b32.xlu0 %v1659, 32
    %v3415 = vpop.permute.xlu0 %3414
    %3416 = vrot.lane.b32.xlu0 %v1661, 32
    %v3417 = vpop.permute.xlu0 %3416
    %3418 = vrot.lane.b32.xlu0 %v1663, 32
    %v3419 = vpop.permute.xlu0 %3418
    %3420 = vrot.lane.b32.xlu0 %v1665, 32
    %v3421 = vpop.permute.xlu0 %3420
    %3422 = vrot.lane.b32.xlu0 %v1667, 32
    %v3423 = vpop.permute.xlu0 %3422
    %3424 = vrot.lane.b32.xlu0 %v3209, 32
    %v3425 = vpop.permute.xlu0 %3424
    %3426 = vrot.lane.b32.xlu0 %v3211, 32
    %v3427 = vpop.permute.xlu0 %3426
    %3428 = vrot.lane.b32.xlu0 %v3213, 32
    %v3429 = vpop.permute.xlu0 %3428
    %3430 = vrot.lane.b32.xlu0 %v3212, 32
    %v3431 = vpop.permute.xlu0 %3430
    %v3541 = vadd.f32 %v3097, %v3215
    %v3542 = vadd.f32 %v3098, %v3217
    %v3543 = vadd.f32 %v3099, %v3219
    %v3544 = vadd.f32 %v3100, %v3221
    %v3545 = vadd.f32 %v3101, %v3223
    %v3546 = vadd.f32 %v3102, %v3225
    %v3547 = vadd.f32 %v3103, %v3227
    %v3548 = vadd.f32 %v3104, %v3229
    %v3549 = vadd.f32 %v3105, %v3231
    %v3550 = vadd.f32 %v3106, %v3233
    %v3551 = vadd.f32 %v3107, %v3235
    %v3552 = vadd.f32 %v3108, %v3237
    %v3553 = vadd.f32 %v3109, %v3239
    %v3554 = vadd.f32 %v3110, %v3241
    %v3555 = vadd.f32 %v3111, %v3243
    %v3556 = vadd.f32 %v3112, %v3245
    %v3557 = vadd.f32 %v3113, %v3247
    %v3558 = vadd.f32 %v3114, %v3249
    %v3559 = vadd.f32 %v3115, %v3251
    %v3560 = vadd.f32 %v3116, %v3253
    %v3561 = vadd.f32 %v3117, %v3255
    %v3562 = vadd.f32 %v3118, %v3257
    %v3563 = vadd.f32 %v3119, %v3259
    %v3564 = vadd.f32 %v3120, %v3261
    %v3565 = vadd.f32 %v3121, %v3263
    %v3566 = vadd.f32 %v3122, %v3265
    %v3567 = vadd.f32 %v3123, %v3267
    %v3568 = vadd.f32 %v3124, %v3269
    %v3569 = vadd.f32 %v3125, %v3271
    %v3570 = vadd.f32 %v3126, %v3273
    %v3571 = vadd.f32 %v3127, %v3275
    %v3572 = vadd.f32 %v3128, %v3277
    %v3573 = vadd.f32 %v3129, %v3279
    %v3574 = vadd.f32 %v3130, %v3281
    %v3575 = vadd.f32 %v3131, %v3283
    %v3576 = vadd.f32 %v3132, %v3285
    %v3577 = vadd.f32 %v3133, %v3287
    %v3578 = vadd.f32 %v3134, %v3289
    %v3579 = vadd.f32 %v3135, %v3291
    %v3580 = vadd.f32 %v3136, %v3293
    %v3581 = vadd.f32 %v3137, %v3295
    %v3582 = vadd.f32 %v3138, %v3297
    %v3583 = vadd.f32 %v3139, %v3299
    %v3584 = vadd.f32 %v3140, %v3301
    %v3585 = vadd.f32 %v3141, %v3303
    %v3586 = vadd.f32 %v3142, %v3305
    %v3587 = vadd.f32 %v3143, %v3307
    %v3588 = vadd.f32 %v3144, %v3309
    %v3589 = vadd.f32 %v3145, %v3311
    %v3590 = vadd.f32 %v3146, %v3313
    %v3591 = vadd.f32 %v3147, %v3315
    %v3592 = vadd.f32 %v3148, %v3317
    %v3593 = vadd.f32 %v3149, %v3319
    %v3594 = vadd.f32 %v3150, %v3321
    %v3595 = vadd.f32 %v3151, %v3323
    %v3596 = vadd.f32 %v3152, %v3325
    %v3597 = vadd.f32 %v3153, %v3327
    %v3598 = vadd.f32 %v3154, %v3329
    %v3599 = vadd.f32 %v3155, %v3331
    %v3600 = vadd.f32 %v3156, %v3333
    %v3601 = vadd.f32 %v3157, %v3335
    %v3602 = vadd.f32 %v3158, %v3337
    %v3603 = vadd.f32 %v3159, %v3339
    %v3604 = vadd.f32 %v3160, %v3341
    %v3605 = vadd.f32 %v3161, %v3343
    %v3606 = vadd.f32 %v3162, %v3345
    %v3607 = vadd.f32 %v3163, %v3347
    %v3608 = vadd.f32 %v3164, %v3349
    %v3609 = vadd.f32 %v3165, %v3351
    %v3610 = vadd.f32 %v3166, %v3353
    %v3611 = vadd.f32 %v3167, %v3355
    %v3612 = vadd.f32 %v3168, %v3357
    %v3613 = vadd.f32 %v3169, %v3359
    %v3614 = vadd.f32 %v3170, %v3361
    %v3615 = vadd.f32 %v3171, %v3363
    %v3616 = vadd.f32 %v3172, %v3365
    %v3617 = vadd.f32 %v3173, %v3367
    %v3618 = vadd.f32 %v3174, %v3369
    %v3619 = vadd.f32 %v3175, %v3371
    %v3620 = vadd.f32 %v3176, %v3373
    %v3621 = vadd.f32 %v3177, %v3375
    %v3622 = vadd.f32 %v3178, %v3377
    %v3623 = vadd.f32 %v3179, %v3379
    %v3624 = vadd.f32 %v3180, %v3381
    %v3625 = vadd.f32 %v3181, %v3383
    %v3626 = vadd.f32 %v3182, %v3385
    %v3627 = vadd.f32 %v3183, %v3387
    %v3628 = vadd.f32 %v3184, %v3389
    %v3629 = vadd.f32 %v3185, %v3391
    %v3630 = vadd.f32 %v3186, %v3393
    %v3631 = vadd.f32 %v3187, %v3395
    %v3632 = vadd.f32 %v3188, %v3397
    %v3633 = vadd.f32 %v3189, %v3399
    %v3634 = vadd.f32 %v3190, %v3401
    %v3635 = vadd.f32 %v3191, %v3403
    %v3636 = vadd.f32 %v3192, %v3405
    %v3637 = vadd.f32 %v3193, %v3407
    %v3638 = vadd.f32 %v3194, %v3409
    %v3639 = vadd.f32 %v3195, %v3411
    %v3640 = vadd.f32 %v3196, %v3413
    %v3641 = vadd.f32 %v3197, %v3415
    %v3642 = vadd.f32 %v3198, %v3417
    %v3643 = vadd.f32 %v3199, %v3419
    %v3644 = vadd.f32 %v3200, %v3421
    %v3645 = vadd.f32 %v3201, %v3423
    %v3646 = vadd.f32 %v3202, %v3425
    %v3647 = vadd.f32 %v3203, %v3427
    %v3648 = vadd.f32 %v3204, %v3429
    %v3649 = vadd.f32 %v3205, %v3431
    %v3650 = vld [vmem:[#allocation2 + $0x40] sm:$0xfe]
    %v3651 = vld [vmem:[#allocation2 + $0x48] sm:$0xfe]
    %v3652 = vld [vmem:[#allocation2 + $0x58] sm:$0xff]
    %v3653 = vld [vmem:[#allocation2 + $0x68] sm:$0xff]
    %v3654 = vld [vmem:[#allocation2 + $0x78] sm:$0xff]
    %v3655 = vld [vmem:[#allocation2 + $0x88] sm:$0xff]
    %v3656 = vld [vmem:[#allocation2 + $0x98] sm:$0xff]
    %v3657 = vld [vmem:[#allocation2 + $0xa8] sm:$0xff]
    %v3658 = vld [vmem:[#allocation2 + $0xb8] sm:$0xff]
    %v3659 = vld [vmem:[#allocation2 + $0xc8] sm:$0xff]
    %v3660 = vld [vmem:[#allocation2 + $0xd8] sm:$0xff]
    %v3661 = vld [vmem:[#allocation2 + $0xe8] sm:$0xff]
    %v3662 = vld [vmem:[#allocation2 + $0xf8] sm:$0xff]
    %v3663 = vld [vmem:[#allocation2 + $0x108] sm:$0xff]
    %v3664 = vld [vmem:[#allocation2 + $0x118] sm:$0xff]
    %v3665 = vld [vmem:[#allocation2 + $0x128] sm:$0xff]
    %v3666 = vld [vmem:[#allocation2 + $0x138] sm:$0xff]
    %v3667 = vld [vmem:[#allocation2 + $0x148] sm:$0xff]
    %v3668 = vld [vmem:[#allocation2 + $0x158] sm:$0xff]
    %v3669 = vld [vmem:[#allocation2 + $0x168] sm:$0xff]
    %v3670 = vld [vmem:[#allocation2 + $0x178] sm:$0xff]
    %v3671 = vld [vmem:[#allocation2 + $0x188] sm:$0xff]
    %v3672 = vld [vmem:[#allocation2 + $0x198] sm:$0xff]
    %v3673 = vld [vmem:[#allocation2 + $0x1a8] sm:$0xff]
    %v3674 = vld [vmem:[#allocation2 + $0x1b8] sm:$0xff]
    %v3675 = vld [vmem:[#allocation2 + $0x1c8] sm:$0xff]
    %v3676 = vld [vmem:[#allocation2 + $0x1d8] sm:$0xff]
    %v3677 = vld [vmem:[#allocation2 + $0x1e8] sm:$0xff]
    %v3678 = vld [vmem:[#allocation2 + $0x1f8] sm:$0xff]
    %v3679 = vld [vmem:[#allocation2 + $0x208] sm:$0xff]
    %v3680 = vld [vmem:[#allocation2 + $0x218] sm:$0xff]
    %v3681 = vld [vmem:[#allocation2 + $0x228] sm:$0xff]
    %v3682 = vld [vmem:[#allocation2 + $0x238] sm:$0xff]
    %v3683 = vld [vmem:[#allocation2 + $0x248] sm:$0xff]
    %v3684 = vld [vmem:[#allocation2 + $0x258] sm:$0xff]
    %v3685 = vld [vmem:[#allocation2 + $0x268] sm:$0xff]
    %v3686 = vld [vmem:[#allocation2 + $0x278] sm:$0xff]
    %v3687 = vld [vmem:[#allocation2 + $0x288] sm:$0xff]
    %v3688 = vld [vmem:[#allocation2 + $0x298] sm:$0xff]
    %v3689 = vld [vmem:[#allocation2 + $0x2a8] sm:$0xff]
    %v3690 = vld [vmem:[#allocation2 + $0x2b8] sm:$0xff]
    %v3691 = vld [vmem:[#allocation2 + $0x2c8] sm:$0xff]
    %v3692 = vld [vmem:[#allocation2 + $0x2d8] sm:$0xff]
    %v3693 = vld [vmem:[#allocation2 + $0x2e8] sm:$0xff]
    %v3694 = vld [vmem:[#allocation2 + $0x2f8] sm:$0xff]
    %v3695 = vld [vmem:[#allocation2 + $0x308] sm:$0xff]
    %v3696 = vld [vmem:[#allocation2 + $0x318] sm:$0xff]
    %v3697 = vld [vmem:[#allocation2 + $0x328] sm:$0xff]
    %v3698 = vld [vmem:[#allocation2 + $0x338] sm:$0xff]
    %v3699 = vld [vmem:[#allocation2 + $0x348] sm:$0xff]
    %v3700 = vld [vmem:[#allocation2 + $0x358] sm:$0xff]
    %v3701 = vld [vmem:[#allocation2 + $0x368] sm:$0xff]
    %v3702 = vld [vmem:[#allocation2 + $0x378] sm:$0xff]
    %v3703 = vld [vmem:[#allocation2 + $0x388] sm:$0xff]
    %v3704 = vld [vmem:[#allocation2 + $0x398] sm:$0xff]
    %v3705 = vld [vmem:[#allocation2 + $0x3a8] sm:$0xff]
    %v3706 = vld [vmem:[#allocation2 + $0x3b8] sm:$0xff]
    %v3707 = vld [vmem:[#allocation2 + $0x3c8] sm:$0xff]
    %v3708 = vld [vmem:[#allocation2 + $0x3d8] sm:$0xff]
    %v3709 = vld [vmem:[#allocation2 + $0x3e8] sm:$0xff]
    %v3710 = vld [vmem:[#allocation2 + $0x3f8] sm:$0xff]
    %v3711 = vld [vmem:[#allocation2 + $0x408] sm:$0xff]
    %v3712 = vld [vmem:[#allocation2 + $0x418] sm:$0xff]
    %v3713 = vld [vmem:[#allocation2 + $0x428] sm:$0xff]
    %v3714 = vld [vmem:[#allocation2 + $0x438] sm:$0xff]
    %v3715 = vld [vmem:[#allocation2 + $0x448] sm:$0xff]
    %v3716 = vld [vmem:[#allocation2 + $0x458] sm:$0xff]
    %v3717 = vld [vmem:[#allocation2 + $0x468] sm:$0xff]
    %v3718 = vld [vmem:[#allocation2 + $0x478] sm:$0xff]
    %v3719 = vld [vmem:[#allocation2 + $0x488] sm:$0xff]
    %v3720 = vld [vmem:[#allocation2 + $0x498] sm:$0xff]
    %v3721 = vld [vmem:[#allocation2 + $0x4a8] sm:$0xff]
    %v3722 = vld [vmem:[#allocation2 + $0x4b8] sm:$0xff]
    %v3723 = vld [vmem:[#allocation2 + $0x4c8] sm:$0xff]
    %v3724 = vld [vmem:[#allocation2 + $0x4d8] sm:$0xff]
    %v3725 = vld [vmem:[#allocation2 + $0x4e8] sm:$0xff]
    %v3726 = vld [vmem:[#allocation2 + $0x4f8] sm:$0xff]
    %v3727 = vld [vmem:[#allocation2 + $0x508] sm:$0xff]
    %v3728 = vld [vmem:[#allocation2 + $0x518] sm:$0xff]
    %v3729 = vld [vmem:[#allocation2 + $0x528] sm:$0xff]
    %v3730 = vld [vmem:[#allocation2 + $0x538] sm:$0xff]
    %v3731 = vld [vmem:[#allocation2 + $0x548] sm:$0xff]
    %v3732 = vld [vmem:[#allocation2 + $0x558] sm:$0xff]
    %v3733 = vld [vmem:[#allocation2 + $0x568] sm:$0xff]
    %v3734 = vld [vmem:[#allocation2 + $0x578] sm:$0xff]
    %v3735 = vld [vmem:[#allocation2 + $0x588] sm:$0xff]
    %v3736 = vld [vmem:[#allocation2 + $0x598] sm:$0xff]
    %v3737 = vld [vmem:[#allocation2 + $0x5a8] sm:$0xff]
    %v3738 = vld [vmem:[#allocation2 + $0x5b8] sm:$0xff]
    %v3739 = vld [vmem:[#allocation2 + $0x5c8] sm:$0xff]
    %v3740 = vld [vmem:[#allocation2 + $0x5d8] sm:$0xff]
    %v3741 = vld [vmem:[#allocation2 + $0x5e8] sm:$0xff]
    %v3742 = vld [vmem:[#allocation2 + $0x5f8] sm:$0xff]
    %v3743 = vld [vmem:[#allocation2 + $0x608] sm:$0xff]
    %v3744 = vld [vmem:[#allocation2 + $0x618] sm:$0xff]
    %v3745 = vld [vmem:[#allocation2 + $0x628] sm:$0xff]
    %v3746 = vld [vmem:[#allocation2 + $0x638] sm:$0xff]
    %v3747 = vld [vmem:[#allocation2 + $0x648] sm:$0xff]
    %v3748 = vld [vmem:[#allocation2 + $0x658] sm:$0xff]
    %v3749 = vld [vmem:[#allocation2 + $0x668] sm:$0xff]
    %v3750 = vld [vmem:[#allocation2 + $0x678] sm:$0xff]
    %v3751 = vld [vmem:[#allocation2 + $0x688] sm:$0xff]
    %v3752 = vld [vmem:[#allocation2 + $0x698] sm:$0xff]
    %v3753 = vld [vmem:[#allocation2 + $0x6a8] sm:$0xff]
    %v3754 = vld [vmem:[#allocation2 + $0x6b8] sm:$0xff]
    %v3755 = vld [vmem:[#allocation2 + $0x6c8] sm:$0xff]
    %v3756 = vld [vmem:[#allocation2 + $0x6d8] sm:$0xff]
    %v3757 = vld [vmem:[#allocation2 + $0x6e8] sm:$0xff]
    %v3758 = vld [vmem:[#allocation2 + $0x6f8] sm:$0xff]
    %v3759 = vld [vmem:[#allocation2 + $0x700] sm:$0x1]
    %v3760 = vld [vmem:[#allocation2 + $0x708] sm:$0x1]
    %v3872 = vrot.slane %v3650, 2
    %v3873 = vrot.slane %v3651, 2
    %v3874 = vsel %vm2108, %v3872, %v2116
    %v3875 = vrot.slane %v3652, 2
    %v3876 = vsel %vm2108, %v3873, %v3875
    %v3877 = vrot.slane %v3653, 2
    %v3878 = vsel %vm2108, %v3875, %v3877
    %v3879 = vrot.slane %v3654, 2
    %v3880 = vsel %vm2108, %v3877, %v3879
    %v3881 = vrot.slane %v3655, 2
    %v3882 = vsel %vm2108, %v3879, %v3881
    %v3883 = vrot.slane %v3656, 2
    %v3884 = vsel %vm2108, %v3881, %v3883
    %v3885 = vrot.slane %v3657, 2
    %v3886 = vsel %vm2108, %v3883, %v3885
    %v3887 = vrot.slane %v3658, 2
    %v3888 = vsel %vm2108, %v3885, %v3887
    %v3889 = vrot.slane %v3659, 2
    %v3890 = vsel %vm2108, %v3887, %v3889
    %v3891 = vrot.slane %v3660, 2
    %v3892 = vsel %vm2108, %v3889, %v3891
    %v3893 = vrot.slane %v3661, 2
    %v3894 = vsel %vm2108, %v3891, %v3893
    %v3895 = vrot.slane %v3662, 2
    %v3896 = vsel %vm2108, %v3893, %v3895
    %v3897 = vrot.slane %v3663, 2
    %v3898 = vsel %vm2108, %v3895, %v3897
    %v3899 = vrot.slane %v3664, 2
    %v3900 = vsel %vm2108, %v3897, %v3899
    %v3901 = vrot.slane %v3665, 2
    %v3902 = vsel %vm2108, %v3899, %v3901
    %v3903 = vrot.slane %v3666, 2
    %v3904 = vsel %vm2108, %v3901, %v3903
    %v3905 = vrot.slane %v3667, 2
    %v3906 = vsel %vm2108, %v3903, %v3905
    %v3907 = vrot.slane %v3668, 2
    %v3908 = vsel %vm2108, %v3905, %v3907
    %v3909 = vrot.slane %v3669, 2
    %v3910 = vsel %vm2108, %v3907, %v3909
    %v3911 = vrot.slane %v3670, 2
    %v3912 = vsel %vm2108, %v3909, %v3911
    %v3913 = vrot.slane %v3671, 2
    %v3914 = vsel %vm2108, %v3911, %v3913
    %v3915 = vrot.slane %v3672, 2
    %v3916 = vsel %vm2108, %v3913, %v3915
    %v3917 = vrot.slane %v3673, 2
    %v3918 = vsel %vm2108, %v3915, %v3917
    %v3919 = vrot.slane %v3674, 2
    %v3920 = vsel %vm2108, %v3917, %v3919
    %v3921 = vrot.slane %v3675, 2
    %v3922 = vsel %vm2108, %v3919, %v3921
    %v3923 = vrot.slane %v3676, 2
    %v3924 = vsel %vm2108, %v3921, %v3923
    %v3925 = vrot.slane %v3677, 2
    %v3926 = vsel %vm2108, %v3923, %v3925
    %v3927 = vrot.slane %v3678, 2
    %v3928 = vsel %vm2108, %v3925, %v3927
    %v3929 = vrot.slane %v3679, 2
    %v3930 = vsel %vm2108, %v3927, %v3929
    %v3931 = vrot.slane %v3680, 2
    %v3932 = vsel %vm2108, %v3929, %v3931
    %v3933 = vrot.slane %v3681, 2
    %v3934 = vsel %vm2108, %v3931, %v3933
    %v3935 = vrot.slane %v3682, 2
    %v3936 = vsel %vm2108, %v3933, %v3935
    %v3937 = vrot.slane %v3683, 2
    %v3938 = vsel %vm2108, %v3935, %v3937
    %v3939 = vrot.slane %v3684, 2
    %v3940 = vsel %vm2108, %v3937, %v3939
    %v3941 = vrot.slane %v3685, 2
    %v3942 = vsel %vm2108, %v3939, %v3941
    %v3943 = vrot.slane %v3686, 2
    %v3944 = vsel %vm2108, %v3941, %v3943
    %v3945 = vrot.slane %v3687, 2
    %v3946 = vsel %vm2108, %v3943, %v3945
    %v3947 = vrot.slane %v3688, 2
    %v3948 = vsel %vm2108, %v3945, %v3947
    %v3949 = vrot.slane %v3689, 2
    %v3950 = vsel %vm2108, %v3947, %v3949
    %v3951 = vrot.slane %v3690, 2
    %v3952 = vsel %vm2108, %v3949, %v3951
    %v3953 = vrot.slane %v3691, 2
    %v3954 = vsel %vm2108, %v3951, %v3953
    %v3955 = vrot.slane %v3692, 2
    %v3956 = vsel %vm2108, %v3953, %v3955
    %v3957 = vrot.slane %v3693, 2
    %v3958 = vsel %vm2108, %v3955, %v3957
    %v3959 = vrot.slane %v3694, 2
    %v3960 = vsel %vm2108, %v3957, %v3959
    %v3961 = vrot.slane %v3695, 2
    %v3962 = vsel %vm2108, %v3959, %v3961
    %v3963 = vrot.slane %v3696, 2
    %v3964 = vsel %vm2108, %v3961, %v3963
    %v3965 = vrot.slane %v3697, 2
    %v3966 = vsel %vm2108, %v3963, %v3965
    %v3967 = vrot.slane %v3698, 2
    %v3968 = vsel %vm2108, %v3965, %v3967
    %v3969 = vrot.slane %v3699, 2
    %v3970 = vsel %vm2108, %v3967, %v3969
    %v3971 = vrot.slane %v3700, 2
    %v3972 = vsel %vm2108, %v3969, %v3971
    %v3973 = vrot.slane %v3701, 2
    %v3974 = vsel %vm2108, %v3971, %v3973
    %v3975 = vrot.slane %v3702, 2
    %v3976 = vsel %vm2108, %v3973, %v3975
    %v3977 = vrot.slane %v3703, 2
    %v3978 = vsel %vm2108, %v3975, %v3977
    %v3979 = vrot.slane %v3704, 2
    %v3980 = vsel %vm2108, %v3977, %v3979
    %v3981 = vrot.slane %v3705, 2
    %v3982 = vsel %vm2108, %v3979, %v3981
    %v3983 = vrot.slane %v3706, 2
    %v3984 = vsel %vm2108, %v3981, %v3983
    %v3985 = vrot.slane %v3707, 2
    %v3986 = vsel %vm2108, %v3983, %v3985
    %v3987 = vrot.slane %v3708, 2
    %v3988 = vsel %vm2108, %v3985, %v3987
    %v3989 = vrot.slane %v3709, 2
    %v3990 = vsel %vm2108, %v3987, %v3989
    %v3991 = vrot.slane %v3710, 2
    %v3992 = vsel %vm2108, %v3989, %v3991
    %v3993 = vrot.slane %v3711, 2
    %v3994 = vsel %vm2108, %v3991, %v3993
    %v3995 = vrot.slane %v3712, 2
    %v3996 = vsel %vm2108, %v3993, %v3995
    %v3997 = vrot.slane %v3713, 2
    %v3998 = vsel %vm2108, %v3995, %v3997
    %v3999 = vrot.slane %v3714, 2
    %v4000 = vsel %vm2108, %v3997, %v3999
    %v4001 = vrot.slane %v3715, 2
    %v4002 = vsel %vm2108, %v3999, %v4001
    %v4003 = vrot.slane %v3716, 2
    %v4004 = vsel %vm2108, %v4001, %v4003
    %v4005 = vrot.slane %v3717, 2
    %v4006 = vsel %vm2108, %v4003, %v4005
    %v4007 = vrot.slane %v3718, 2
    %v4008 = vsel %vm2108, %v4005, %v4007
    %v4009 = vrot.slane %v3719, 2
    %v4010 = vsel %vm2108, %v4007, %v4009
    %v4011 = vrot.slane %v3720, 2
    %v4012 = vsel %vm2108, %v4009, %v4011
    %v4013 = vrot.slane %v3721, 2
    %v4014 = vsel %vm2108, %v4011, %v4013
    %v4015 = vrot.slane %v3722, 2
    %v4016 = vsel %vm2108, %v4013, %v4015
    %v4017 = vrot.slane %v3723, 2
    %v4018 = vsel %vm2108, %v4015, %v4017
    %v4019 = vrot.slane %v3724, 2
    %v4020 = vsel %vm2108, %v4017, %v4019
    %v4021 = vrot.slane %v3725, 2
    %v4022 = vsel %vm2108, %v4019, %v4021
    %v4023 = vrot.slane %v3726, 2
    %v4024 = vsel %vm2108, %v4021, %v4023
    %v4025 = vrot.slane %v3727, 2
    %v4026 = vsel %vm2108, %v4023, %v4025
    %v4027 = vrot.slane %v3728, 2
    %v4028 = vsel %vm2108, %v4025, %v4027
    %v4029 = vrot.slane %v3729, 2
    %v4030 = vsel %vm2108, %v4027, %v4029
    %v4031 = vrot.slane %v3730, 2
    %v4032 = vsel %vm2108, %v4029, %v4031
    %v4033 = vrot.slane %v3731, 2
    %v4034 = vsel %vm2108, %v4031, %v4033
    %v4035 = vrot.slane %v3732, 2
    %v4036 = vsel %vm2108, %v4033, %v4035
    %v4037 = vrot.slane %v3733, 2
    %v4038 = vsel %vm2108, %v4035, %v4037
    %v4039 = vrot.slane %v3734, 2
    %v4040 = vsel %vm2108, %v4037, %v4039
    %v4041 = vrot.slane %v3735, 2
    %v4042 = vsel %vm2108, %v4039, %v4041
    %v4043 = vrot.slane %v3736, 2
    %v4044 = vsel %vm2108, %v4041, %v4043
    %v4045 = vrot.slane %v3737, 2
    %v4046 = vsel %vm2108, %v4043, %v4045
    %v4047 = vrot.slane %v3738, 2
    %v4048 = vsel %vm2108, %v4045, %v4047
    %v4049 = vrot.slane %v3739, 2
    %v4050 = vsel %vm2108, %v4047, %v4049
    %v4051 = vrot.slane %v3740, 2
    %v4052 = vsel %vm2108, %v4049, %v4051
    %v4053 = vrot.slane %v3741, 2
    %v4054 = vsel %vm2108, %v4051, %v4053
    %v4055 = vrot.slane %v3742, 2
    %v4056 = vsel %vm2108, %v4053, %v4055
    %v4057 = vrot.slane %v3743, 2
    %v4058 = vsel %vm2108, %v4055, %v4057
    %v4059 = vrot.slane %v3744, 2
    %v4060 = vsel %vm2108, %v4057, %v4059
    %v4061 = vrot.slane %v3745, 2
    %v4062 = vsel %vm2108, %v4059, %v4061
    %v4063 = vrot.slane %v3746, 2
    %v4064 = vsel %vm2108, %v4061, %v4063
    %v4065 = vrot.slane %v3747, 2
    %v4066 = vsel %vm2108, %v4063, %v4065
    %v4067 = vrot.slane %v3748, 2
    %v4068 = vsel %vm2108, %v4065, %v4067
    %v4069 = vrot.slane %v3749, 2
    %v4070 = vsel %vm2108, %v4067, %v4069
    %v4071 = vrot.slane %v3750, 2
    %v4072 = vsel %vm2108, %v4069, %v4071
    %v4073 = vrot.slane %v3751, 2
    %v4074 = vsel %vm2108, %v4071, %v4073
    %v4075 = vrot.slane %v3752, 2
    %v4076 = vsel %vm2108, %v4073, %v4075
    %v4077 = vrot.slane %v3753, 2
    %v4078 = vsel %vm2108, %v4075, %v4077
    %v4079 = vrot.slane %v3754, 2
    %v4080 = vsel %vm2108, %v4077, %v4079
    %v4081 = vrot.slane %v3755, 2
    %v4082 = vsel %vm2108, %v4079, %v4081
    %v4083 = vrot.slane %v2763, 2
    %v4084 = vsel %vm2108, %v2322, %v4083
    %v4085 = vrot.slane %v3756, 2
    %v4086 = vsel %vm2108, %v4081, %v4085
    %v4087 = vrot.slane %v2764, 2
    %v4088 = vsel %vm2108, %v4083, %v4087
    %v4089 = vrot.slane %v3757, 2
    %v4090 = vsel %vm2108, %v4085, %v4089
    %v4091 = vrot.slane %v3206, 2
    %v4092 = vsel %vm2108, %v4087, %v4091
    %v4093 = vrot.slane %v3758, 2
    %v4094 = vsel %vm2108, %v4089, %v4093
    %v4095 = vrot.slane %v3759, 2
    %v4096 = vsel %vm2108, %v4091, %v4095
    %v4097 = vrot.slane %v3760, 2
    %v4098 = vsel %vm2108, %v4093, %v4097
    %4099 = vrot.lane.b32.xlu0 %v3872, 8
    %v4100 = vpop.permute.xlu0 %4099
    %4101 = vrot.lane.b32.xlu0 %v3873, 8
    %v4102 = vpop.permute.xlu0 %4101
    %4103 = vrot.lane.b32.xlu0 %v3874, 8
    %v4104 = vpop.permute.xlu0 %4103
    %4105 = vrot.lane.b32.xlu0 %v3876, 8
    %v4106 = vpop.permute.xlu0 %4105
    %4107 = vrot.lane.b32.xlu0 %v2119, 8
    %v4108 = vpop.permute.xlu0 %4107
    %4109 = vrot.lane.b32.xlu0 %v3878, 8
    %v4110 = vpop.permute.xlu0 %4109
    %4111 = vrot.lane.b32.xlu0 %v2121, 8
    %v4112 = vpop.permute.xlu0 %4111
    %4113 = vrot.lane.b32.xlu0 %v3880, 8
    %v4114 = vpop.permute.xlu0 %4113
    %4115 = vrot.lane.b32.xlu0 %v2123, 8
    %v4116 = vpop.permute.xlu0 %4115
    %4117 = vrot.lane.b32.xlu0 %v3882, 8
    %v4118 = vpop.permute.xlu0 %4117
    %4119 = vrot.lane.b32.xlu0 %v2125, 8
    %v4120 = vpop.permute.xlu0 %4119
    %4121 = vrot.lane.b32.xlu0 %v3884, 8
    %v4122 = vpop.permute.xlu0 %4121
    %4123 = vrot.lane.b32.xlu0 %v2127, 8
    %v4124 = vpop.permute.xlu0 %4123
    %4125 = vrot.lane.b32.xlu0 %v3886, 8
    %v4126 = vpop.permute.xlu0 %4125
    %4127 = vrot.lane.b32.xlu0 %v2129, 8
    %v4128 = vpop.permute.xlu0 %4127
    %4129 = vrot.lane.b32.xlu0 %v3888, 8
    %v4130 = vpop.permute.xlu0 %4129
    %4131 = vrot.lane.b32.xlu0 %v2131, 8
    %v4132 = vpop.permute.xlu0 %4131
    %4133 = vrot.lane.b32.xlu0 %v3890, 8
    %v4134 = vpop.permute.xlu0 %4133
    %4135 = vrot.lane.b32.xlu0 %v2133, 8
    %v4136 = vpop.permute.xlu0 %4135
    %4137 = vrot.lane.b32.xlu0 %v3892, 8
    %v4138 = vpop.permute.xlu0 %4137
    %4139 = vrot.lane.b32.xlu0 %v2135, 8
    %v4140 = vpop.permute.xlu0 %4139
    %4141 = vrot.lane.b32.xlu0 %v3894, 8
    %v4142 = vpop.permute.xlu0 %4141
    %4143 = vrot.lane.b32.xlu0 %v2137, 8
    %v4144 = vpop.permute.xlu0 %4143
    %4145 = vrot.lane.b32.xlu0 %v3896, 8
    %v4146 = vpop.permute.xlu0 %4145
    %4147 = vrot.lane.b32.xlu0 %v2139, 8
    %v4148 = vpop.permute.xlu0 %4147
    %4149 = vrot.lane.b32.xlu0 %v3898, 8
    %v4150 = vpop.permute.xlu0 %4149
    %4151 = vrot.lane.b32.xlu0 %v2141, 8
    %v4152 = vpop.permute.xlu0 %4151
    %4153 = vrot.lane.b32.xlu0 %v3900, 8
    %v4154 = vpop.permute.xlu0 %4153
    %4155 = vrot.lane.b32.xlu0 %v2143, 8
    %v4156 = vpop.permute.xlu0 %4155
    %4157 = vrot.lane.b32.xlu0 %v3902, 8
    %v4158 = vpop.permute.xlu0 %4157
    %4159 = vrot.lane.b32.xlu0 %v2145, 8
    %v4160 = vpop.permute.xlu0 %4159
    %4161 = vrot.lane.b32.xlu0 %v3904, 8
    %v4162 = vpop.permute.xlu0 %4161
    %4163 = vrot.lane.b32.xlu0 %v2147, 8
    %v4164 = vpop.permute.xlu0 %4163
    %4165 = vrot.lane.b32.xlu0 %v3906, 8
    %v4166 = vpop.permute.xlu0 %4165
    %4167 = vrot.lane.b32.xlu0 %v2149, 8
    %v4168 = vpop.permute.xlu0 %4167
    %4169 = vrot.lane.b32.xlu0 %v3908, 8
    %v4170 = vpop.permute.xlu0 %4169
    %4171 = vrot.lane.b32.xlu0 %v2151, 8
    %v4172 = vpop.permute.xlu0 %4171
    %4173 = vrot.lane.b32.xlu0 %v3910, 8
    %v4174 = vpop.permute.xlu0 %4173
    %4175 = vrot.lane.b32.xlu0 %v2153, 8
    %v4176 = vpop.permute.xlu0 %4175
    %4177 = vrot.lane.b32.xlu0 %v3912, 8
    %v4178 = vpop.permute.xlu0 %4177
    %4179 = vrot.lane.b32.xlu0 %v2155, 8
    %v4180 = vpop.permute.xlu0 %4179
    %4181 = vrot.lane.b32.xlu0 %v3914, 8
    %v4182 = vpop.permute.xlu0 %4181
    %4183 = vrot.lane.b32.xlu0 %v2157, 8
    %v4184 = vpop.permute.xlu0 %4183
    %4185 = vrot.lane.b32.xlu0 %v3916, 8
    %v4186 = vpop.permute.xlu0 %4185
    %4187 = vrot.lane.b32.xlu0 %v2159, 8
    %v4188 = vpop.permute.xlu0 %4187
    %4189 = vrot.lane.b32.xlu0 %v3918, 8
    %v4190 = vpop.permute.xlu0 %4189
    %4191 = vrot.lane.b32.xlu0 %v2161, 8
    %v4192 = vpop.permute.xlu0 %4191
    %4193 = vrot.lane.b32.xlu0 %v3920, 8
    %v4194 = vpop.permute.xlu0 %4193
    %4195 = vrot.lane.b32.xlu0 %v2163, 8
    %v4196 = vpop.permute.xlu0 %4195
    %4197 = vrot.lane.b32.xlu0 %v3922, 8
    %v4198 = vpop.permute.xlu0 %4197
    %4199 = vrot.lane.b32.xlu0 %v2165, 8
    %v4200 = vpop.permute.xlu0 %4199
    %4201 = vrot.lane.b32.xlu0 %v3924, 8
    %v4202 = vpop.permute.xlu0 %4201
    %4203 = vrot.lane.b32.xlu0 %v2167, 8
    %v4204 = vpop.permute.xlu0 %4203
    %4205 = vrot.lane.b32.xlu0 %v3926, 8
    %v4206 = vpop.permute.xlu0 %4205
    %4207 = vrot.lane.b32.xlu0 %v2169, 8
    %v4208 = vpop.permute.xlu0 %4207
    %4209 = vrot.lane.b32.xlu0 %v3928, 8
    %v4210 = vpop.permute.xlu0 %4209
    %4211 = vrot.lane.b32.xlu0 %v2171, 8
    %v4212 = vpop.permute.xlu0 %4211
    %4213 = vrot.lane.b32.xlu0 %v3930, 8
    %v4214 = vpop.permute.xlu0 %4213
    %4215 = vrot.lane.b32.xlu0 %v2173, 8
    %v4216 = vpop.permute.xlu0 %4215
    %4217 = vrot.lane.b32.xlu0 %v3932, 8
    %v4218 = vpop.permute.xlu0 %4217
    %4219 = vrot.lane.b32.xlu0 %v2175, 8
    %v4220 = vpop.permute.xlu0 %4219
    %4221 = vrot.lane.b32.xlu0 %v3934, 8
    %v4222 = vpop.permute.xlu0 %4221
    %4223 = vrot.lane.b32.xlu0 %v2177, 8
    %v4224 = vpop.permute.xlu0 %4223
    %4225 = vrot.lane.b32.xlu0 %v3936, 8
    %v4226 = vpop.permute.xlu0 %4225
    %4227 = vrot.lane.b32.xlu0 %v2179, 8
    %v4228 = vpop.permute.xlu0 %4227
    %4229 = vrot.lane.b32.xlu0 %v3938, 8
    %v4230 = vpop.permute.xlu0 %4229
    %4231 = vrot.lane.b32.xlu0 %v2181, 8
    %v4232 = vpop.permute.xlu0 %4231
    %4233 = vrot.lane.b32.xlu0 %v3940, 8
    %v4234 = vpop.permute.xlu0 %4233
    %4235 = vrot.lane.b32.xlu0 %v2183, 8
    %v4236 = vpop.permute.xlu0 %4235
    %4237 = vrot.lane.b32.xlu0 %v3942, 8
    %v4238 = vpop.permute.xlu0 %4237
    %4239 = vrot.lane.b32.xlu0 %v2185, 8
    %v4240 = vpop.permute.xlu0 %4239
    %4241 = vrot.lane.b32.xlu0 %v3944, 8
    %v4242 = vpop.permute.xlu0 %4241
    %4243 = vrot.lane.b32.xlu0 %v2187, 8
    %v4244 = vpop.permute.xlu0 %4243
    %4245 = vrot.lane.b32.xlu0 %v3946, 8
    %v4246 = vpop.permute.xlu0 %4245
    %4247 = vrot.lane.b32.xlu0 %v2189, 8
    %v4248 = vpop.permute.xlu0 %4247
    %4249 = vrot.lane.b32.xlu0 %v3948, 8
    %v4250 = vpop.permute.xlu0 %4249
    %4251 = vrot.lane.b32.xlu0 %v2191, 8
    %v4252 = vpop.permute.xlu0 %4251
    %4253 = vrot.lane.b32.xlu0 %v3950, 8
    %v4254 = vpop.permute.xlu0 %4253
    %4255 = vrot.lane.b32.xlu0 %v2193, 8
    %v4256 = vpop.permute.xlu0 %4255
    %4257 = vrot.lane.b32.xlu0 %v3952, 8
    %v4258 = vpop.permute.xlu0 %4257
    %4259 = vrot.lane.b32.xlu0 %v2195, 8
    %v4260 = vpop.permute.xlu0 %4259
    %4261 = vrot.lane.b32.xlu0 %v3954, 8
    %v4262 = vpop.permute.xlu0 %4261
    %4263 = vrot.lane.b32.xlu0 %v2197, 8
    %v4264 = vpop.permute.xlu0 %4263
    %4265 = vrot.lane.b32.xlu0 %v3956, 8
    %v4266 = vpop.permute.xlu0 %4265
    %4267 = vrot.lane.b32.xlu0 %v2199, 8
    %v4268 = vpop.permute.xlu0 %4267
    %4269 = vrot.lane.b32.xlu0 %v3958, 8
    %v4270 = vpop.permute.xlu0 %4269
    %4271 = vrot.lane.b32.xlu0 %v2201, 8
    %v4272 = vpop.permute.xlu0 %4271
    %4273 = vrot.lane.b32.xlu0 %v3960, 8
    %v4274 = vpop.permute.xlu0 %4273
    %4275 = vrot.lane.b32.xlu0 %v2203, 8
    %v4276 = vpop.permute.xlu0 %4275
    %4277 = vrot.lane.b32.xlu0 %v3962, 8
    %v4278 = vpop.permute.xlu0 %4277
    %4279 = vrot.lane.b32.xlu0 %v2205, 8
    %v4280 = vpop.permute.xlu0 %4279
    %4281 = vrot.lane.b32.xlu0 %v3964, 8
    %v4282 = vpop.permute.xlu0 %4281
    %4283 = vrot.lane.b32.xlu0 %v2207, 8
    %v4284 = vpop.permute.xlu0 %4283
    %4285 = vrot.lane.b32.xlu0 %v3966, 8
    %v4286 = vpop.permute.xlu0 %4285
    %4287 = vrot.lane.b32.xlu0 %v2209, 8
    %v4288 = vpop.permute.xlu0 %4287
    %4289 = vrot.lane.b32.xlu0 %v3968, 8
    %v4290 = vpop.permute.xlu0 %4289
    %4291 = vrot.lane.b32.xlu0 %v2211, 8
    %v4292 = vpop.permute.xlu0 %4291
    %4293 = vrot.lane.b32.xlu0 %v3970, 8
    %v4294 = vpop.permute.xlu0 %4293
    %4295 = vrot.lane.b32.xlu0 %v2213, 8
    %v4296 = vpop.permute.xlu0 %4295
    %4297 = vrot.lane.b32.xlu0 %v3972, 8
    %v4298 = vpop.permute.xlu0 %4297
    %4299 = vrot.lane.b32.xlu0 %v2215, 8
    %v4300 = vpop.permute.xlu0 %4299
    %4301 = vrot.lane.b32.xlu0 %v3974, 8
    %v4302 = vpop.permute.xlu0 %4301
    %4303 = vrot.lane.b32.xlu0 %v2217, 8
    %v4304 = vpop.permute.xlu0 %4303
    %4305 = vrot.lane.b32.xlu0 %v3976, 8
    %v4306 = vpop.permute.xlu0 %4305
    %4307 = vrot.lane.b32.xlu0 %v2219, 8
    %v4308 = vpop.permute.xlu0 %4307
    %4309 = vrot.lane.b32.xlu0 %v3978, 8
    %v4310 = vpop.permute.xlu0 %4309
    %4311 = vrot.lane.b32.xlu0 %v2221, 8
    %v4312 = vpop.permute.xlu0 %4311
    %4313 = vrot.lane.b32.xlu0 %v3980, 8
    %v4314 = vpop.permute.xlu0 %4313
    %4315 = vrot.lane.b32.xlu0 %v2223, 8
    %v4316 = vpop.permute.xlu0 %4315
    %4317 = vrot.lane.b32.xlu0 %v3982, 8
    %v4318 = vpop.permute.xlu0 %4317
    %4319 = vrot.lane.b32.xlu0 %v2225, 8
    %v4320 = vpop.permute.xlu0 %4319
    %4321 = vrot.lane.b32.xlu0 %v3984, 8
    %v4322 = vpop.permute.xlu0 %4321
    %4323 = vrot.lane.b32.xlu0 %v2227, 8
    %v4324 = vpop.permute.xlu0 %4323
    %4325 = vrot.lane.b32.xlu0 %v3986, 8
    %v4326 = vpop.permute.xlu0 %4325
    %4327 = vrot.lane.b32.xlu0 %v2229, 8
    %v4328 = vpop.permute.xlu0 %4327
    %4329 = vrot.lane.b32.xlu0 %v3988, 8
    %v4330 = vpop.permute.xlu0 %4329
    %4331 = vrot.lane.b32.xlu0 %v2231, 8
    %v4332 = vpop.permute.xlu0 %4331
    %4333 = vrot.lane.b32.xlu0 %v3990, 8
    %v4334 = vpop.permute.xlu0 %4333
    %4335 = vrot.lane.b32.xlu0 %v2233, 8
    %v4336 = vpop.permute.xlu0 %4335
    %4337 = vrot.lane.b32.xlu0 %v3992, 8
    %v4338 = vpop.permute.xlu0 %4337
    %4339 = vrot.lane.b32.xlu0 %v2235, 8
    %v4340 = vpop.permute.xlu0 %4339
    %4341 = vrot.lane.b32.xlu0 %v3994, 8
    %v4342 = vpop.permute.xlu0 %4341
    %4343 = vrot.lane.b32.xlu0 %v2237, 8
    %v4344 = vpop.permute.xlu0 %4343
    %4345 = vrot.lane.b32.xlu0 %v3996, 8
    %v4346 = vpop.permute.xlu0 %4345
    %4347 = vrot.lane.b32.xlu0 %v2239, 8
    %v4348 = vpop.permute.xlu0 %4347
    %4349 = vrot.lane.b32.xlu0 %v3998, 8
    %v4350 = vpop.permute.xlu0 %4349
    %4351 = vrot.lane.b32.xlu0 %v2241, 8
    %v4352 = vpop.permute.xlu0 %4351
    %4353 = vrot.lane.b32.xlu0 %v4000, 8
    %v4354 = vpop.permute.xlu0 %4353
    %4355 = vrot.lane.b32.xlu0 %v2243, 8
    %v4356 = vpop.permute.xlu0 %4355
    %4357 = vrot.lane.b32.xlu0 %v4002, 8
    %v4358 = vpop.permute.xlu0 %4357
    %4359 = vrot.lane.b32.xlu0 %v2245, 8
    %v4360 = vpop.permute.xlu0 %4359
    %4361 = vrot.lane.b32.xlu0 %v4004, 8
    %v4362 = vpop.permute.xlu0 %4361
    %4363 = vrot.lane.b32.xlu0 %v2247, 8
    %v4364 = vpop.permute.xlu0 %4363
    %4365 = vrot.lane.b32.xlu0 %v4006, 8
    %v4366 = vpop.permute.xlu0 %4365
    %4367 = vrot.lane.b32.xlu0 %v2249, 8
    %v4368 = vpop.permute.xlu0 %4367
    %4369 = vrot.lane.b32.xlu0 %v4008, 8
    %v4370 = vpop.permute.xlu0 %4369
    %4371 = vrot.lane.b32.xlu0 %v2251, 8
    %v4372 = vpop.permute.xlu0 %4371
    %4373 = vrot.lane.b32.xlu0 %v4010, 8
    %v4374 = vpop.permute.xlu0 %4373
    %4375 = vrot.lane.b32.xlu0 %v2253, 8
    %v4376 = vpop.permute.xlu0 %4375
    %4377 = vrot.lane.b32.xlu0 %v4012, 8
    %v4378 = vpop.permute.xlu0 %4377
    %4379 = vrot.lane.b32.xlu0 %v2255, 8
    %v4380 = vpop.permute.xlu0 %4379
    %4381 = vrot.lane.b32.xlu0 %v4014, 8
    %v4382 = vpop.permute.xlu0 %4381
    %4383 = vrot.lane.b32.xlu0 %v2257, 8
    %v4384 = vpop.permute.xlu0 %4383
    %4385 = vrot.lane.b32.xlu0 %v4016, 8
    %v4386 = vpop.permute.xlu0 %4385
    %4387 = vrot.lane.b32.xlu0 %v2259, 8
    %v4388 = vpop.permute.xlu0 %4387
    %4389 = vrot.lane.b32.xlu0 %v4018, 8
    %v4390 = vpop.permute.xlu0 %4389
    %4391 = vrot.lane.b32.xlu0 %v2261, 8
    %v4392 = vpop.permute.xlu0 %4391
    %4393 = vrot.lane.b32.xlu0 %v4020, 8
    %v4394 = vpop.permute.xlu0 %4393
    %4395 = vrot.lane.b32.xlu0 %v2263, 8
    %v4396 = vpop.permute.xlu0 %4395
    %4397 = vrot.lane.b32.xlu0 %v4022, 8
    %v4398 = vpop.permute.xlu0 %4397
    %4399 = vrot.lane.b32.xlu0 %v2265, 8
    %v4400 = vpop.permute.xlu0 %4399
    %4401 = vrot.lane.b32.xlu0 %v4024, 8
    %v4402 = vpop.permute.xlu0 %4401
    %4403 = vrot.lane.b32.xlu0 %v2267, 8
    %v4404 = vpop.permute.xlu0 %4403
    %4405 = vrot.lane.b32.xlu0 %v4026, 8
    %v4406 = vpop.permute.xlu0 %4405
    %4407 = vrot.lane.b32.xlu0 %v2269, 8
    %v4408 = vpop.permute.xlu0 %4407
    %4409 = vrot.lane.b32.xlu0 %v4028, 8
    %v4410 = vpop.permute.xlu0 %4409
    %4411 = vrot.lane.b32.xlu0 %v2271, 8
    %v4412 = vpop.permute.xlu0 %4411
    %4413 = vrot.lane.b32.xlu0 %v4030, 8
    %v4414 = vpop.permute.xlu0 %4413
    %4415 = vrot.lane.b32.xlu0 %v2273, 8
    %v4416 = vpop.permute.xlu0 %4415
    %4417 = vrot.lane.b32.xlu0 %v4032, 8
    %v4418 = vpop.permute.xlu0 %4417
    %4419 = vrot.lane.b32.xlu0 %v2275, 8
    %v4420 = vpop.permute.xlu0 %4419
    %4421 = vrot.lane.b32.xlu0 %v4034, 8
    %v4422 = vpop.permute.xlu0 %4421
    %4423 = vrot.lane.b32.xlu0 %v2277, 8
    %v4424 = vpop.permute.xlu0 %4423
    %4425 = vrot.lane.b32.xlu0 %v4036, 8
    %v4426 = vpop.permute.xlu0 %4425
    %4427 = vrot.lane.b32.xlu0 %v2279, 8
    %v4428 = vpop.permute.xlu0 %4427
    %4429 = vrot.lane.b32.xlu0 %v4038, 8
    %v4430 = vpop.permute.xlu0 %4429
    %4431 = vrot.lane.b32.xlu0 %v2281, 8
    %v4432 = vpop.permute.xlu0 %4431
    %4433 = vrot.lane.b32.xlu0 %v4040, 8
    %v4434 = vpop.permute.xlu0 %4433
    %4435 = vrot.lane.b32.xlu0 %v2283, 8
    %v4436 = vpop.permute.xlu0 %4435
    %4437 = vrot.lane.b32.xlu0 %v4042, 8
    %v4438 = vpop.permute.xlu0 %4437
    %4439 = vrot.lane.b32.xlu0 %v2285, 8
    %v4440 = vpop.permute.xlu0 %4439
    %4441 = vrot.lane.b32.xlu0 %v4044, 8
    %v4442 = vpop.permute.xlu0 %4441
    %4443 = vrot.lane.b32.xlu0 %v2287, 8
    %v4444 = vpop.permute.xlu0 %4443
    %4445 = vrot.lane.b32.xlu0 %v4046, 8
    %v4446 = vpop.permute.xlu0 %4445
    %4447 = vrot.lane.b32.xlu0 %v2289, 8
    %v4448 = vpop.permute.xlu0 %4447
    %4449 = vrot.lane.b32.xlu0 %v4048, 8
    %v4450 = vpop.permute.xlu0 %4449
    %4451 = vrot.lane.b32.xlu0 %v2291, 8
    %v4452 = vpop.permute.xlu0 %4451
    %4453 = vrot.lane.b32.xlu0 %v4050, 8
    %v4454 = vpop.permute.xlu0 %4453
    %4455 = vrot.lane.b32.xlu0 %v2293, 8
    %v4456 = vpop.permute.xlu0 %4455
    %4457 = vrot.lane.b32.xlu0 %v4052, 8
    %v4458 = vpop.permute.xlu0 %4457
    %4459 = vrot.lane.b32.xlu0 %v2295, 8
    %v4460 = vpop.permute.xlu0 %4459
    %4461 = vrot.lane.b32.xlu0 %v4054, 8
    %v4462 = vpop.permute.xlu0 %4461
    %4463 = vrot.lane.b32.xlu0 %v2297, 8
    %v4464 = vpop.permute.xlu0 %4463
    %4465 = vrot.lane.b32.xlu0 %v4056, 8
    %v4466 = vpop.permute.xlu0 %4465
    %4467 = vrot.lane.b32.xlu0 %v2299, 8
    %v4468 = vpop.permute.xlu0 %4467
    %4469 = vrot.lane.b32.xlu0 %v4058, 8
    %v4470 = vpop.permute.xlu0 %4469
    %4471 = vrot.lane.b32.xlu0 %v2301, 8
    %v4472 = vpop.permute.xlu0 %4471
    %4473 = vrot.lane.b32.xlu0 %v4060, 8
    %v4474 = vpop.permute.xlu0 %4473
    %4475 = vrot.lane.b32.xlu0 %v2303, 8
    %v4476 = vpop.permute.xlu0 %4475
    %4477 = vrot.lane.b32.xlu0 %v4062, 8
    %v4478 = vpop.permute.xlu0 %4477
    %4479 = vrot.lane.b32.xlu0 %v2305, 8
    %v4480 = vpop.permute.xlu0 %4479
    %4481 = vrot.lane.b32.xlu0 %v4064, 8
    %v4482 = vpop.permute.xlu0 %4481
    %4483 = vrot.lane.b32.xlu0 %v2307, 8
    %v4484 = vpop.permute.xlu0 %4483
    %4485 = vrot.lane.b32.xlu0 %v4066, 8
    %v4486 = vpop.permute.xlu0 %4485
    %4487 = vrot.lane.b32.xlu0 %v2309, 8
    %v4488 = vpop.permute.xlu0 %4487
    %4489 = vrot.lane.b32.xlu0 %v4068, 8
    %v4490 = vpop.permute.xlu0 %4489
    %4491 = vrot.lane.b32.xlu0 %v2311, 8
    %v4492 = vpop.permute.xlu0 %4491
    %4493 = vrot.lane.b32.xlu0 %v4070, 8
    %v4494 = vpop.permute.xlu0 %4493
    %4495 = vrot.lane.b32.xlu0 %v2313, 8
    %v4496 = vpop.permute.xlu0 %4495
    %4497 = vrot.lane.b32.xlu0 %v4072, 8
    %v4498 = vpop.permute.xlu0 %4497
    %4499 = vrot.lane.b32.xlu0 %v2315, 8
    %v4500 = vpop.permute.xlu0 %4499
    %4501 = vrot.lane.b32.xlu0 %v4074, 8
    %v4502 = vpop.permute.xlu0 %4501
    %4503 = vrot.lane.b32.xlu0 %v2317, 8
    %v4504 = vpop.permute.xlu0 %4503
    %4505 = vrot.lane.b32.xlu0 %v4076, 8
    %v4506 = vpop.permute.xlu0 %4505
    %4507 = vrot.lane.b32.xlu0 %v2319, 8
    %v4508 = vpop.permute.xlu0 %4507
    %4509 = vrot.lane.b32.xlu0 %v4078, 8
    %v4510 = vpop.permute.xlu0 %4509
    %4511 = vrot.lane.b32.xlu0 %v2321, 8
    %v4512 = vpop.permute.xlu0 %4511
    %4513 = vrot.lane.b32.xlu0 %v4080, 8
    %v4514 = vpop.permute.xlu0 %4513
    %4515 = vrot.lane.b32.xlu0 %v2323, 8
    %v4516 = vpop.permute.xlu0 %4515
    %4517 = vrot.lane.b32.xlu0 %v4082, 8
    %v4518 = vpop.permute.xlu0 %4517
    %4519 = vrot.lane.b32.xlu0 %v4084, 8
    %v4520 = vpop.permute.xlu0 %4519
    %4521 = vrot.lane.b32.xlu0 %v4086, 8
    %v4522 = vpop.permute.xlu0 %4521
    %4523 = vrot.lane.b32.xlu0 %v4088, 8
    %v4524 = vpop.permute.xlu0 %4523
    %4525 = vrot.lane.b32.xlu0 %v4090, 8
    %v4526 = vpop.permute.xlu0 %4525
    %4527 = vrot.lane.b32.xlu0 %v4092, 8
    %v4528 = vpop.permute.xlu0 %4527
    %4529 = vrot.lane.b32.xlu0 %v4094, 8
    %v4530 = vpop.permute.xlu0 %4529
    %4531 = vrot.lane.b32.xlu0 %v4096, 8
    %v4532 = vpop.permute.xlu0 %4531
    %4533 = vrot.lane.b32.xlu0 %v4098, 8
    %v4534 = vpop.permute.xlu0 %4533
    %vm4535 = vcmask 64512
    %v4536 = vsel %vm4535, %v4100, %v4102
    %v4537 = vsel %vm4535, %v4104, %v4106
    %v4538 = vsel %vm4535, %v4108, %v4110
    %v4539 = vsel %vm4535, %v4112, %v4114
    %v4540 = vsel %vm4535, %v4116, %v4118
    %v4541 = vsel %vm4535, %v4120, %v4122
    %v4542 = vsel %vm4535, %v4124, %v4126
    %v4543 = vsel %vm4535, %v4128, %v4130
    %v4544 = vsel %vm4535, %v4132, %v4134
    %v4545 = vsel %vm4535, %v4136, %v4138
    %v4546 = vsel %vm4535, %v4140, %v4142
    %v4547 = vsel %vm4535, %v4144, %v4146
    %v4548 = vsel %vm4535, %v4148, %v4150
    %v4549 = vsel %vm4535, %v4152, %v4154
    %v4550 = vsel %vm4535, %v4156, %v4158
    %v4551 = vsel %vm4535, %v4160, %v4162
    %v4552 = vsel %vm4535, %v4164, %v4166
    %v4553 = vsel %vm4535, %v4168, %v4170
    %v4554 = vsel %vm4535, %v4172, %v4174
    %v4555 = vsel %vm4535, %v4176, %v4178
    %v4556 = vsel %vm4535, %v4180, %v4182
    %v4557 = vsel %vm4535, %v4184, %v4186
    %v4558 = vsel %vm4535, %v4188, %v4190
    %v4559 = vsel %vm4535, %v4192, %v4194
    %v4560 = vsel %vm4535, %v4196, %v4198
    %v4561 = vsel %vm4535, %v4200, %v4202
    %v4562 = vsel %vm4535, %v4204, %v4206
    %v4563 = vsel %vm4535, %v4208, %v4210
    %v4564 = vsel %vm4535, %v4212, %v4214
    %v4565 = vsel %vm4535, %v4216, %v4218
    %v4566 = vsel %vm4535, %v4220, %v4222
    %v4567 = vsel %vm4535, %v4224, %v4226
    %v4568 = vsel %vm4535, %v4228, %v4230
    %v4569 = vsel %vm4535, %v4232, %v4234
    %v4570 = vsel %vm4535, %v4236, %v4238
    %v4571 = vsel %vm4535, %v4240, %v4242
    %v4572 = vsel %vm4535, %v4244, %v4246
    %v4573 = vsel %vm4535, %v4248, %v4250
    %v4574 = vsel %vm4535, %v4252, %v4254
    %v4575 = vsel %vm4535, %v4256, %v4258
    %v4576 = vsel %vm4535, %v4260, %v4262
    %v4577 = vsel %vm4535, %v4264, %v4266
    %v4578 = vsel %vm4535, %v4268, %v4270
    %v4579 = vsel %vm4535, %v4272, %v4274
    %v4580 = vsel %vm4535, %v4276, %v4278
    %v4581 = vsel %vm4535, %v4280, %v4282
    %v4582 = vsel %vm4535, %v4284, %v4286
    %v4583 = vsel %vm4535, %v4288, %v4290
    %v4584 = vsel %vm4535, %v4292, %v4294
    %v4585 = vsel %vm4535, %v4296, %v4298
    %v4586 = vsel %vm4535, %v4300, %v4302
    %v4587 = vsel %vm4535, %v4304, %v4306
    %v4588 = vsel %vm4535, %v4308, %v4310
    %v4589 = vsel %vm4535, %v4312, %v4314
    %v4590 = vsel %vm4535, %v4316, %v4318
    %v4591 = vsel %vm4535, %v4320, %v4322
    %v4592 = vsel %vm4535, %v4324, %v4326
    %v4593 = vsel %vm4535, %v4328, %v4330
    %v4594 = vsel %vm4535, %v4332, %v4334
    %v4595 = vsel %vm4535, %v4336, %v4338
    %v4596 = vsel %vm4535, %v4340, %v4342
    %v4597 = vsel %vm4535, %v4344, %v4346
    %v4598 = vsel %vm4535, %v4348, %v4350
    %v4599 = vsel %vm4535, %v4352, %v4354
    %v4600 = vsel %vm4535, %v4356, %v4358
    %v4601 = vsel %vm4535, %v4360, %v4362
    %v4602 = vsel %vm4535, %v4364, %v4366
    %v4603 = vsel %vm4535, %v4368, %v4370
    %v4604 = vsel %vm4535, %v4372, %v4374
    %v4605 = vsel %vm4535, %v4376, %v4378
    %v4606 = vsel %vm4535, %v4380, %v4382
    %v4607 = vsel %vm4535, %v4384, %v4386
    %v4608 = vsel %vm4535, %v4388, %v4390
    %v4609 = vsel %vm4535, %v4392, %v4394
    %v4610 = vsel %vm4535, %v4396, %v4398
    %v4611 = vsel %vm4535, %v4400, %v4402
    %v4612 = vsel %vm4535, %v4404, %v4406
    %v4613 = vsel %vm4535, %v4408, %v4410
    %v4614 = vsel %vm4535, %v4412, %v4414
    %v4615 = vsel %vm4535, %v4416, %v4418
    %v4616 = vsel %vm4535, %v4420, %v4422
    %v4617 = vsel %vm4535, %v4424, %v4426
    %v4618 = vsel %vm4535, %v4428, %v4430
    %v4619 = vsel %vm4535, %v4432, %v4434
    %v4620 = vsel %vm4535, %v4436, %v4438
    %v4621 = vsel %vm4535, %v4440, %v4442
    %v4622 = vsel %vm4535, %v4444, %v4446
    %v4623 = vsel %vm4535, %v4448, %v4450
    %v4624 = vsel %vm4535, %v4452, %v4454
    %v4625 = vsel %vm4535, %v4456, %v4458
    %v4626 = vsel %vm4535, %v4460, %v4462
    %v4627 = vsel %vm4535, %v4464, %v4466
    %v4628 = vsel %vm4535, %v4468, %v4470
    %v4629 = vsel %vm4535, %v4472, %v4474
    %v4630 = vsel %vm4535, %v4476, %v4478
    %v4631 = vsel %vm4535, %v4480, %v4482
    %v4632 = vsel %vm4535, %v4484, %v4486
    %v4633 = vsel %vm4535, %v4488, %v4490
    %v4634 = vsel %vm4535, %v4492, %v4494
    %v4635 = vsel %vm4535, %v4496, %v4498
    %v4636 = vsel %vm4535, %v4500, %v4502
    %v4637 = vsel %vm4535, %v4504, %v4506
    %v4638 = vsel %vm4535, %v4508, %v4510
    %v4639 = vsel %vm4535, %v4512, %v4514
    %v4640 = vsel %vm4535, %v4516, %v4518
    %v4641 = vsel %vm4535, %v4520, %v4522
    %v4642 = vsel %vm4535, %v4524, %v4526
    %v4643 = vsel %vm4535, %v4528, %v4530
    %v4644 = vsel %vm4535, %v4532, %v4534
    %v4754 = vadd.f32 %v3541, %v4536
    %v4755 = vadd.f32 %v3542, %v4537
    %v4756 = vadd.f32 %v3543, %v4538
    %v4757 = vadd.f32 %v3544, %v4539
    %v4758 = vadd.f32 %v3545, %v4540
    %v4759 = vadd.f32 %v3546, %v4541
    %v4760 = vadd.f32 %v3547, %v4542
    %v4761 = vadd.f32 %v3548, %v4543
    %v4762 = vadd.f32 %v3549, %v4544
    %v4763 = vadd.f32 %v3550, %v4545
    %v4764 = vadd.f32 %v3551, %v4546
    %v4765 = vadd.f32 %v3552, %v4547
    %v4766 = vadd.f32 %v3553, %v4548
    %v4767 = vadd.f32 %v3554, %v4549
    %v4768 = vadd.f32 %v3555, %v4550
    %v4769 = vadd.f32 %v3556, %v4551
    %v4770 = vadd.f32 %v3557, %v4552
    %v4771 = vadd.f32 %v3558, %v4553
    %v4772 = vadd.f32 %v3559, %v4554
    %v4773 = vadd.f32 %v3560, %v4555
    %v4774 = vadd.f32 %v3561, %v4556
    %v4775 = vadd.f32 %v3562, %v4557
    %v4776 = vadd.f32 %v3563, %v4558
    %v4777 = vadd.f32 %v3564, %v4559
    %v4778 = vadd.f32 %v3565, %v4560
    %v4779 = vadd.f32 %v3566, %v4561
    %v4780 = vadd.f32 %v3567, %v4562
    %v4781 = vadd.f32 %v3568, %v4563
    %v4782 = vadd.f32 %v3569, %v4564
    %v4783 = vadd.f32 %v3570, %v4565
    %v4784 = vadd.f32 %v3571, %v4566
    %v4785 = vadd.f32 %v3572, %v4567
    %v4786 = vadd.f32 %v3573, %v4568
    %v4787 = vadd.f32 %v3574, %v4569
    %v4788 = vadd.f32 %v3575, %v4570
    %v4789 = vadd.f32 %v3576, %v4571
    %v4790 = vadd.f32 %v3577, %v4572
    %v4791 = vadd.f32 %v3578, %v4573
    %v4792 = vadd.f32 %v3579, %v4574
    %v4793 = vadd.f32 %v3580, %v4575
    %v4794 = vadd.f32 %v3581, %v4576
    %v4795 = vadd.f32 %v3582, %v4577
    %v4796 = vadd.f32 %v3583, %v4578
    %v4797 = vadd.f32 %v3584, %v4579
    %v4798 = vadd.f32 %v3585, %v4580
    %v4799 = vadd.f32 %v3586, %v4581
    %v4800 = vadd.f32 %v3587, %v4582
    %v4801 = vadd.f32 %v3588, %v4583
    %v4802 = vadd.f32 %v3589, %v4584
    %v4803 = vadd.f32 %v3590, %v4585
    %v4804 = vadd.f32 %v3591, %v4586
    %v4805 = vadd.f32 %v3592, %v4587
    %v4806 = vadd.f32 %v3593, %v4588
    %v4807 = vadd.f32 %v3594, %v4589
    %v4808 = vadd.f32 %v3595, %v4590
    %v4809 = vadd.f32 %v3596, %v4591
    %v4810 = vadd.f32 %v3597, %v4592
    %v4811 = vadd.f32 %v3598, %v4593
    %v4812 = vadd.f32 %v3599, %v4594
    %v4813 = vadd.f32 %v3600, %v4595
    %v4814 = vadd.f32 %v3601, %v4596
    %v4815 = vadd.f32 %v3602, %v4597
    %v4816 = vadd.f32 %v3603, %v4598
    %v4817 = vadd.f32 %v3604, %v4599
    %v4818 = vadd.f32 %v3605, %v4600
    %v4819 = vadd.f32 %v3606, %v4601
    %v4820 = vadd.f32 %v3607, %v4602
    %v4821 = vadd.f32 %v3608, %v4603
    %v4822 = vadd.f32 %v3609, %v4604
    %v4823 = vadd.f32 %v3610, %v4605
    %v4824 = vadd.f32 %v3611, %v4606
    %v4825 = vadd.f32 %v3612, %v4607
    %v4826 = vadd.f32 %v3613, %v4608
    %v4827 = vadd.f32 %v3614, %v4609
    %v4828 = vadd.f32 %v3615, %v4610
    %v4829 = vadd.f32 %v3616, %v4611
    %v4830 = vadd.f32 %v3617, %v4612
    %v4831 = vadd.f32 %v3618, %v4613
    %v4832 = vadd.f32 %v3619, %v4614
    %v4833 = vadd.f32 %v3620, %v4615
    %v4834 = vadd.f32 %v3621, %v4616
    %v4835 = vadd.f32 %v3622, %v4617
    %v4836 = vadd.f32 %v3623, %v4618
    %v4837 = vadd.f32 %v3624, %v4619
    %v4838 = vadd.f32 %v3625, %v4620
    %v4839 = vadd.f32 %v3626, %v4621
    %v4840 = vadd.f32 %v3627, %v4622
    %v4841 = vadd.f32 %v3628, %v4623
    %v4842 = vadd.f32 %v3629, %v4624
    %v4843 = vadd.f32 %v3630, %v4625
    %v4844 = vadd.f32 %v3631, %v4626
    %v4845 = vadd.f32 %v3632, %v4627
    %v4846 = vadd.f32 %v3633, %v4628
    %v4847 = vadd.f32 %v3634, %v4629
    %v4848 = vadd.f32 %v3635, %v4630
    %v4849 = vadd.f32 %v3636, %v4631
    %v4850 = vadd.f32 %v3637, %v4632
    %v4851 = vadd.f32 %v3638, %v4633
    %v4852 = vadd.f32 %v3639, %v4634
    %v4853 = vadd.f32 %v3640, %v4635
    %v4854 = vadd.f32 %v3641, %v4636
    %v4855 = vadd.f32 %v3642, %v4637
    %v4856 = vadd.f32 %v3643, %v4638
    %v4857 = vadd.f32 %v3644, %v4639
    %v4858 = vadd.f32 %v3645, %v4640
    %v4859 = vadd.f32 %v3646, %v4641
    %v4860 = vadd.f32 %v3647, %v4642
    %v4861 = vadd.f32 %v3648, %v4643
    %v4862 = vadd.f32 %v3649, %v4644
    %v4863 = vld [vmem:[#allocation2 + $0x68] sm:$0x80]
    %v4864 = vld [vmem:[#allocation2 + $0x708] sm:$0xff]
    %v4865 = vld [vmem:[#allocation2 + $0x718] sm:$0xff]
    %v4866 = vld [vmem:[#allocation2 + $0x728] sm:$0x7f]
    %4871 = vrot.lane.b32.xlu0 %v4863, 112
    %v4872 = vpop.permute.xlu0 %4871
    %4873 = vrot.lane.b32.xlu0 %v3654, 112
    %v4874 = vpop.permute.xlu0 %4873
    %4875 = vrot.lane.b32.xlu0 %v3655, 112
    %v4876 = vpop.permute.xlu0 %4875
    %4877 = vrot.lane.b32.xlu0 %v3656, 112
    %v4878 = vpop.permute.xlu0 %4877
    %4879 = vrot.lane.b32.xlu0 %v3657, 112
    %v4880 = vpop.permute.xlu0 %4879
    %4881 = vrot.lane.b32.xlu0 %v3658, 112
    %v4882 = vpop.permute.xlu0 %4881
    %4883 = vrot.lane.b32.xlu0 %v3659, 112
    %v4884 = vpop.permute.xlu0 %4883
    %4885 = vrot.lane.b32.xlu0 %v3660, 112
    %v4886 = vpop.permute.xlu0 %4885
    %4887 = vrot.lane.b32.xlu0 %v3661, 112
    %v4888 = vpop.permute.xlu0 %4887
    %4889 = vrot.lane.b32.xlu0 %v3662, 112
    %v4890 = vpop.permute.xlu0 %4889
    %4891 = vrot.lane.b32.xlu0 %v3663, 112
    %v4892 = vpop.permute.xlu0 %4891
    %4893 = vrot.lane.b32.xlu0 %v3664, 112
    %v4894 = vpop.permute.xlu0 %4893
    %4895 = vrot.lane.b32.xlu0 %v3665, 112
    %v4896 = vpop.permute.xlu0 %4895
    %4897 = vrot.lane.b32.xlu0 %v3666, 112
    %v4898 = vpop.permute.xlu0 %4897
    %4899 = vrot.lane.b32.xlu0 %v3667, 112
    %v4900 = vpop.permute.xlu0 %4899
    %4901 = vrot.lane.b32.xlu0 %v3668, 112
    %v4902 = vpop.permute.xlu0 %4901
    %4903 = vrot.lane.b32.xlu0 %v3669, 112
    %v4904 = vpop.permute.xlu0 %4903
    %4905 = vrot.lane.b32.xlu0 %v3670, 112
    %v4906 = vpop.permute.xlu0 %4905
    %4907 = vrot.lane.b32.xlu0 %v3671, 112
    %v4908 = vpop.permute.xlu0 %4907
    %4909 = vrot.lane.b32.xlu0 %v3672, 112
    %v4910 = vpop.permute.xlu0 %4909
    %4911 = vrot.lane.b32.xlu0 %v3673, 112
    %v4912 = vpop.permute.xlu0 %4911
    %4913 = vrot.lane.b32.xlu0 %v3674, 112
    %v4914 = vpop.permute.xlu0 %4913
    %4915 = vrot.lane.b32.xlu0 %v3675, 112
    %v4916 = vpop.permute.xlu0 %4915
    %4917 = vrot.lane.b32.xlu0 %v3676, 112
    %v4918 = vpop.permute.xlu0 %4917
    %4919 = vrot.lane.b32.xlu0 %v3677, 112
    %v4920 = vpop.permute.xlu0 %4919
    %4921 = vrot.lane.b32.xlu0 %v3678, 112
    %v4922 = vpop.permute.xlu0 %4921
    %4923 = vrot.lane.b32.xlu0 %v3679, 112
    %v4924 = vpop.permute.xlu0 %4923
    %4925 = vrot.lane.b32.xlu0 %v3680, 112
    %v4926 = vpop.permute.xlu0 %4925
    %4927 = vrot.lane.b32.xlu0 %v3681, 112
    %v4928 = vpop.permute.xlu0 %4927
    %4929 = vrot.lane.b32.xlu0 %v3682, 112
    %v4930 = vpop.permute.xlu0 %4929
    %4931 = vrot.lane.b32.xlu0 %v3683, 112
    %v4932 = vpop.permute.xlu0 %4931
    %4933 = vrot.lane.b32.xlu0 %v3684, 112
    %v4934 = vpop.permute.xlu0 %4933
    %4935 = vrot.lane.b32.xlu0 %v3685, 112
    %v4936 = vpop.permute.xlu0 %4935
    %4937 = vrot.lane.b32.xlu0 %v3686, 112
    %v4938 = vpop.permute.xlu0 %4937
    %4939 = vrot.lane.b32.xlu0 %v3687, 112
    %v4940 = vpop.permute.xlu0 %4939
    %4941 = vrot.lane.b32.xlu0 %v3688, 112
    %v4942 = vpop.permute.xlu0 %4941
    %4943 = vrot.lane.b32.xlu0 %v3689, 112
    %v4944 = vpop.permute.xlu0 %4943
    %4945 = vrot.lane.b32.xlu0 %v3690, 112
    %v4946 = vpop.permute.xlu0 %4945
    %4947 = vrot.lane.b32.xlu0 %v3691, 112
    %v4948 = vpop.permute.xlu0 %4947
    %4949 = vrot.lane.b32.xlu0 %v3692, 112
    %v4950 = vpop.permute.xlu0 %4949
    %4951 = vrot.lane.b32.xlu0 %v3693, 112
    %v4952 = vpop.permute.xlu0 %4951
    %4953 = vrot.lane.b32.xlu0 %v3694, 112
    %v4954 = vpop.permute.xlu0 %4953
    %4955 = vrot.lane.b32.xlu0 %v3695, 112
    %v4956 = vpop.permute.xlu0 %4955
    %4957 = vrot.lane.b32.xlu0 %v3696, 112
    %v4958 = vpop.permute.xlu0 %4957
    %4959 = vrot.lane.b32.xlu0 %v3697, 112
    %v4960 = vpop.permute.xlu0 %4959
    %4961 = vrot.lane.b32.xlu0 %v3698, 112
    %v4962 = vpop.permute.xlu0 %4961
    %4963 = vrot.lane.b32.xlu0 %v3699, 112
    %v4964 = vpop.permute.xlu0 %4963
    %4965 = vrot.lane.b32.xlu0 %v3700, 112
    %v4966 = vpop.permute.xlu0 %4965
    %4967 = vrot.lane.b32.xlu0 %v3701, 112
    %v4968 = vpop.permute.xlu0 %4967
    %4969 = vrot.lane.b32.xlu0 %v3702, 112
    %v4970 = vpop.permute.xlu0 %4969
    %4971 = vrot.lane.b32.xlu0 %v3703, 112
    %v4972 = vpop.permute.xlu0 %4971
    %4973 = vrot.lane.b32.xlu0 %v3704, 112
    %v4974 = vpop.permute.xlu0 %4973
    %4975 = vrot.lane.b32.xlu0 %v3705, 112
    %v4976 = vpop.permute.xlu0 %4975
    %4977 = vrot.lane.b32.xlu0 %v3706, 112
    %v4978 = vpop.permute.xlu0 %4977
    %4979 = vrot.lane.b32.xlu0 %v3707, 112
    %v4980 = vpop.permute.xlu0 %4979
    %4981 = vrot.lane.b32.xlu0 %v3708, 112
    %v4982 = vpop.permute.xlu0 %4981
    %4983 = vrot.lane.b32.xlu0 %v3709, 112
    %v4984 = vpop.permute.xlu0 %4983
    %4985 = vrot.lane.b32.xlu0 %v3710, 112
    %v4986 = vpop.permute.xlu0 %4985
    %4987 = vrot.lane.b32.xlu0 %v3711, 112
    %v4988 = vpop.permute.xlu0 %4987
    %4989 = vrot.lane.b32.xlu0 %v3712, 112
    %v4990 = vpop.permute.xlu0 %4989
    %4991 = vrot.lane.b32.xlu0 %v3713, 112
    %v4992 = vpop.permute.xlu0 %4991
    %4993 = vrot.lane.b32.xlu0 %v3714, 112
    %v4994 = vpop.permute.xlu0 %4993
    %4995 = vrot.lane.b32.xlu0 %v3715, 112
    %v4996 = vpop.permute.xlu0 %4995
    %4997 = vrot.lane.b32.xlu0 %v3716, 112
    %v4998 = vpop.permute.xlu0 %4997
    %4999 = vrot.lane.b32.xlu0 %v3717, 112
    %v5000 = vpop.permute.xlu0 %4999
    %5001 = vrot.lane.b32.xlu0 %v3718, 112
    %v5002 = vpop.permute.xlu0 %5001
    %5003 = vrot.lane.b32.xlu0 %v3719, 112
    %v5004 = vpop.permute.xlu0 %5003
    %5005 = vrot.lane.b32.xlu0 %v3720, 112
    %v5006 = vpop.permute.xlu0 %5005
    %5007 = vrot.lane.b32.xlu0 %v3721, 112
    %v5008 = vpop.permute.xlu0 %5007
    %5009 = vrot.lane.b32.xlu0 %v3722, 112
    %v5010 = vpop.permute.xlu0 %5009
    %5011 = vrot.lane.b32.xlu0 %v3723, 112
    %v5012 = vpop.permute.xlu0 %5011
    %5013 = vrot.lane.b32.xlu0 %v3724, 112
    %v5014 = vpop.permute.xlu0 %5013
    %5015 = vrot.lane.b32.xlu0 %v3725, 112
    %v5016 = vpop.permute.xlu0 %5015
    %5017 = vrot.lane.b32.xlu0 %v3726, 112
    %v5018 = vpop.permute.xlu0 %5017
    %5019 = vrot.lane.b32.xlu0 %v3727, 112
    %v5020 = vpop.permute.xlu0 %5019
    %5021 = vrot.lane.b32.xlu0 %v3728, 112
    %v5022 = vpop.permute.xlu0 %5021
    %5023 = vrot.lane.b32.xlu0 %v3729, 112
    %v5024 = vpop.permute.xlu0 %5023
    %5025 = vrot.lane.b32.xlu0 %v3730, 112
    %v5026 = vpop.permute.xlu0 %5025
    %5027 = vrot.lane.b32.xlu0 %v3731, 112
    %v5028 = vpop.permute.xlu0 %5027
    %5029 = vrot.lane.b32.xlu0 %v3732, 112
    %v5030 = vpop.permute.xlu0 %5029
    %5031 = vrot.lane.b32.xlu0 %v3733, 112
    %v5032 = vpop.permute.xlu0 %5031
    %5033 = vrot.lane.b32.xlu0 %v3734, 112
    %v5034 = vpop.permute.xlu0 %5033
    %5035 = vrot.lane.b32.xlu0 %v3735, 112
    %v5036 = vpop.permute.xlu0 %5035
    %5037 = vrot.lane.b32.xlu0 %v3736, 112
    %v5038 = vpop.permute.xlu0 %5037
    %5039 = vrot.lane.b32.xlu0 %v3737, 112
    %v5040 = vpop.permute.xlu0 %5039
    %5041 = vrot.lane.b32.xlu0 %v3738, 112
    %v5042 = vpop.permute.xlu0 %5041
    %5043 = vrot.lane.b32.xlu0 %v3739, 112
    %v5044 = vpop.permute.xlu0 %5043
    %5045 = vrot.lane.b32.xlu0 %v3740, 112
    %v5046 = vpop.permute.xlu0 %5045
    %5047 = vrot.lane.b32.xlu0 %v3741, 112
    %v5048 = vpop.permute.xlu0 %5047
    %5049 = vrot.lane.b32.xlu0 %v3742, 112
    %v5050 = vpop.permute.xlu0 %5049
    %5051 = vrot.lane.b32.xlu0 %v3743, 112
    %v5052 = vpop.permute.xlu0 %5051
    %5053 = vrot.lane.b32.xlu0 %v3744, 112
    %v5054 = vpop.permute.xlu0 %5053
    %5055 = vrot.lane.b32.xlu0 %v3745, 112
    %v5056 = vpop.permute.xlu0 %5055
    %5057 = vrot.lane.b32.xlu0 %v3746, 112
    %v5058 = vpop.permute.xlu0 %5057
    %5059 = vrot.lane.b32.xlu0 %v3747, 112
    %v5060 = vpop.permute.xlu0 %5059
    %5061 = vrot.lane.b32.xlu0 %v3748, 112
    %v5062 = vpop.permute.xlu0 %5061
    %5063 = vrot.lane.b32.xlu0 %v3749, 112
    %v5064 = vpop.permute.xlu0 %5063
    %5065 = vrot.lane.b32.xlu0 %v3750, 112
    %v5066 = vpop.permute.xlu0 %5065
    %5067 = vrot.lane.b32.xlu0 %v3751, 112
    %v5068 = vpop.permute.xlu0 %5067
    %5069 = vrot.lane.b32.xlu0 %v3752, 112
    %v5070 = vpop.permute.xlu0 %5069
    %5071 = vrot.lane.b32.xlu0 %v3753, 112
    %v5072 = vpop.permute.xlu0 %5071
    %5073 = vrot.lane.b32.xlu0 %v3754, 112
    %v5074 = vpop.permute.xlu0 %5073
    %5075 = vrot.lane.b32.xlu0 %v3755, 112
    %v5076 = vpop.permute.xlu0 %5075
    %5077 = vrot.lane.b32.xlu0 %v3756, 112
    %v5078 = vpop.permute.xlu0 %5077
    %5079 = vrot.lane.b32.xlu0 %v3757, 112
    %v5080 = vpop.permute.xlu0 %5079
    %5081 = vrot.lane.b32.xlu0 %v3758, 112
    %v5082 = vpop.permute.xlu0 %5081
    %5083 = vrot.lane.b32.xlu0 %v4864, 112
    %v5084 = vpop.permute.xlu0 %5083
    %5085 = vrot.lane.b32.xlu0 %v4865, 112
    %v5086 = vpop.permute.xlu0 %5085
    %5087 = vrot.lane.b32.xlu0 %v4866, 112
    %v5088 = vpop.permute.xlu0 %5087
    %v5198 = vadd.f32 %v4754, %v4872
    %v5199 = vadd.f32 %v4755, %v4874
    %v5200 = vadd.f32 %v4756, %v4876
    %v5201 = vadd.f32 %v4757, %v4878
    %v5202 = vadd.f32 %v4758, %v4880
    %v5203 = vadd.f32 %v4759, %v4882
    %v5204 = vadd.f32 %v4760, %v4884
    %v5205 = vadd.f32 %v4761, %v4886
    %v5206 = vadd.f32 %v4762, %v4888
    %v5207 = vadd.f32 %v4763, %v4890
    %v5208 = vadd.f32 %v4764, %v4892
    %v5209 = vadd.f32 %v4765, %v4894
    %v5210 = vadd.f32 %v4766, %v4896
    %v5211 = vadd.f32 %v4767, %v4898
    %v5212 = vadd.f32 %v4768, %v4900
    %v5213 = vadd.f32 %v4769, %v4902
    %v5214 = vadd.f32 %v4770, %v4904
    %v5215 = vadd.f32 %v4771, %v4906
    %v5216 = vadd.f32 %v4772, %v4908
    %v5217 = vadd.f32 %v4773, %v4910
    %v5218 = vadd.f32 %v4774, %v4912
    %v5219 = vadd.f32 %v4775, %v4914
    %v5220 = vadd.f32 %v4776, %v4916
    %v5221 = vadd.f32 %v4777, %v4918
    %v5222 = vadd.f32 %v4778, %v4920
    %v5223 = vadd.f32 %v4779, %v4922
    %v5224 = vadd.f32 %v4780, %v4924
    %v5225 = vadd.f32 %v4781, %v4926
    %v5226 = vadd.f32 %v4782, %v4928
    %v5227 = vadd.f32 %v4783, %v4930
    %v5228 = vadd.f32 %v4784, %v4932
    %v5229 = vadd.f32 %v4785, %v4934
    %v5230 = vadd.f32 %v4786, %v4936
    %v5231 = vadd.f32 %v4787, %v4938
    %v5232 = vadd.f32 %v4788, %v4940
    %v5233 = vadd.f32 %v4789, %v4942
    %v5234 = vadd.f32 %v4790, %v4944
    %v5235 = vadd.f32 %v4791, %v4946
    %v5236 = vadd.f32 %v4792, %v4948
    %v5237 = vadd.f32 %v4793, %v4950
    %v5238 = vadd.f32 %v4794, %v4952
    %v5239 = vadd.f32 %v4795, %v4954
    %v5240 = vadd.f32 %v4796, %v4956
    %v5241 = vadd.f32 %v4797, %v4958
    %v5242 = vadd.f32 %v4798, %v4960
    %v5243 = vadd.f32 %v4799, %v4962
    %v5244 = vadd.f32 %v4800, %v4964
    %v5245 = vadd.f32 %v4801, %v4966
    %v5246 = vadd.f32 %v4802, %v4968
    %v5247 = vadd.f32 %v4803, %v4970
    %v5248 = vadd.f32 %v4804, %v4972
    %v5249 = vadd.f32 %v4805, %v4974
    %v5250 = vadd.f32 %v4806, %v4976
    %v5251 = vadd.f32 %v4807, %v4978
    %v5252 = vadd.f32 %v4808, %v4980
    %v5253 = vadd.f32 %v4809, %v4982
    %v5254 = vadd.f32 %v4810, %v4984
    %v5255 = vadd.f32 %v4811, %v4986
    %v5256 = vadd.f32 %v4812, %v4988
    %v5257 = vadd.f32 %v4813, %v4990
    %v5258 = vadd.f32 %v4814, %v4992
    %v5259 = vadd.f32 %v4815, %v4994
    %v5260 = vadd.f32 %v4816, %v4996
    %v5261 = vadd.f32 %v4817, %v4998
    %v5262 = vadd.f32 %v4818, %v5000
    %v5263 = vadd.f32 %v4819, %v5002
    %v5264 = vadd.f32 %v4820, %v5004
    %v5265 = vadd.f32 %v4821, %v5006
    %v5266 = vadd.f32 %v4822, %v5008
    %v5267 = vadd.f32 %v4823, %v5010
    %v5268 = vadd.f32 %v4824, %v5012
    %v5269 = vadd.f32 %v4825, %v5014
    %v5270 = vadd.f32 %v4826, %v5016
    %v5271 = vadd.f32 %v4827, %v5018
    %v5272 = vadd.f32 %v4828, %v5020
    %v5273 = vadd.f32 %v4829, %v5022
    %v5274 = vadd.f32 %v4830, %v5024
    %v5275 = vadd.f32 %v4831, %v5026
    %v5276 = vadd.f32 %v4832, %v5028
    %v5277 = vadd.f32 %v4833, %v5030
    %v5278 = vadd.f32 %v4834, %v5032
    %v5279 = vadd.f32 %v4835, %v5034
    %v5280 = vadd.f32 %v4836, %v5036
    %v5281 = vadd.f32 %v4837, %v5038
    %v5282 = vadd.f32 %v4838, %v5040
    %v5283 = vadd.f32 %v4839, %v5042
    %v5284 = vadd.f32 %v4840, %v5044
    %v5285 = vadd.f32 %v4841, %v5046
    %v5286 = vadd.f32 %v4842, %v5048
    %v5287 = vadd.f32 %v4843, %v5050
    %v5288 = vadd.f32 %v4844, %v5052
    %v5289 = vadd.f32 %v4845, %v5054
    %v5290 = vadd.f32 %v4846, %v5056
    %v5291 = vadd.f32 %v4847, %v5058
    %v5292 = vadd.f32 %v4848, %v5060
    %v5293 = vadd.f32 %v4849, %v5062
    %v5294 = vadd.f32 %v4850, %v5064
    %v5295 = vadd.f32 %v4851, %v5066
    %v5296 = vadd.f32 %v4852, %v5068
    %v5297 = vadd.f32 %v4853, %v5070
    %v5298 = vadd.f32 %v4854, %v5072
    %v5299 = vadd.f32 %v4855, %v5074
    %v5300 = vadd.f32 %v4856, %v5076
    %v5301 = vadd.f32 %v4857, %v5078
    %v5302 = vadd.f32 %v4858, %v5080
    %v5303 = vadd.f32 %v4859, %v5082
    %v5304 = vadd.f32 %v4860, %v5084
    %v5305 = vadd.f32 %v4861, %v5086
    %v5306 = vadd.f32 %v4862, %v5088
    %v5307 = vld [vmem:[#allocation2 + $0x728] sm:$0xff]
    %v5309 = vrot.slane %v3654, 1
    %v5310 = vrot.slane %v3655, 1
    %v5311 = vsel %vm1452, %v5309, %v5310
    %v5312 = vrot.slane %v3656, 1
    %v5313 = vsel %vm1452, %v5310, %v5312
    %v5314 = vrot.slane %v3657, 1
    %v5315 = vsel %vm1452, %v5312, %v5314
    %v5316 = vrot.slane %v3658, 1
    %v5317 = vsel %vm1452, %v5314, %v5316
    %v5318 = vrot.slane %v3659, 1
    %v5319 = vsel %vm1452, %v5316, %v5318
    %v5320 = vrot.slane %v3660, 1
    %v5321 = vsel %vm1452, %v5318, %v5320
    %v5322 = vrot.slane %v3661, 1
    %v5323 = vsel %vm1452, %v5320, %v5322
    %v5324 = vrot.slane %v3662, 1
    %v5325 = vsel %vm1452, %v5322, %v5324
    %v5326 = vrot.slane %v3663, 1
    %v5327 = vsel %vm1452, %v5324, %v5326
    %v5328 = vrot.slane %v3664, 1
    %v5329 = vsel %vm1452, %v5326, %v5328
    %v5330 = vrot.slane %v3665, 1
    %v5331 = vsel %vm1452, %v5328, %v5330
    %v5332 = vrot.slane %v3666, 1
    %v5333 = vsel %vm1452, %v5330, %v5332
    %v5334 = vrot.slane %v3667, 1
    %v5335 = vsel %vm1452, %v5332, %v5334
    %v5336 = vrot.slane %v3668, 1
    %v5337 = vsel %vm1452, %v5334, %v5336
    %v5338 = vrot.slane %v3669, 1
    %v5339 = vsel %vm1452, %v5336, %v5338
    %v5340 = vrot.slane %v3670, 1
    %v5341 = vsel %vm1452, %v5338, %v5340
    %v5342 = vrot.slane %v3671, 1
    %v5343 = vsel %vm1452, %v5340, %v5342
    %v5344 = vrot.slane %v3672, 1
    %v5345 = vsel %vm1452, %v5342, %v5344
    %v5346 = vrot.slane %v3673, 1
    %v5347 = vsel %vm1452, %v5344, %v5346
    %v5348 = vrot.slane %v3674, 1
    %v5349 = vsel %vm1452, %v5346, %v5348
    %v5350 = vrot.slane %v3675, 1
    %v5351 = vsel %vm1452, %v5348, %v5350
    %v5352 = vrot.slane %v3676, 1
    %v5353 = vsel %vm1452, %v5350, %v5352
    %v5354 = vrot.slane %v3677, 1
    %v5355 = vsel %vm1452, %v5352, %v5354
    %v5356 = vrot.slane %v3678, 1
    %v5357 = vsel %vm1452, %v5354, %v5356
    %v5358 = vrot.slane %v3679, 1
    %v5359 = vsel %vm1452, %v5356, %v5358
    %v5360 = vrot.slane %v3680, 1
    %v5361 = vsel %vm1452, %v5358, %v5360
    %v5362 = vrot.slane %v3681, 1
    %v5363 = vsel %vm1452, %v5360, %v5362
    %v5364 = vrot.slane %v3682, 1
    %v5365 = vsel %vm1452, %v5362, %v5364
    %v5366 = vrot.slane %v3683, 1
    %v5367 = vsel %vm1452, %v5364, %v5366
    %v5368 = vrot.slane %v3684, 1
    %v5369 = vsel %vm1452, %v5366, %v5368
    %v5370 = vrot.slane %v3685, 1
    %v5371 = vsel %vm1452, %v5368, %v5370
    %v5372 = vrot.slane %v3686, 1
    %v5373 = vsel %vm1452, %v5370, %v5372
    %v5374 = vrot.slane %v3687, 1
    %v5375 = vsel %vm1452, %v5372, %v5374
    %v5376 = vrot.slane %v3688, 1
    %v5377 = vsel %vm1452, %v5374, %v5376
    %v5378 = vrot.slane %v3689, 1
    %v5379 = vsel %vm1452, %v5376, %v5378
    %v5380 = vrot.slane %v3690, 1
    %v5381 = vsel %vm1452, %v5378, %v5380
    %v5382 = vrot.slane %v3691, 1
    %v5383 = vsel %vm1452, %v5380, %v5382
    %v5384 = vrot.slane %v3692, 1
    %v5385 = vsel %vm1452, %v5382, %v5384
    %v5386 = vrot.slane %v3693, 1
    %v5387 = vsel %vm1452, %v5384, %v5386
    %v5388 = vrot.slane %v3694, 1
    %v5389 = vsel %vm1452, %v5386, %v5388
    %v5390 = vrot.slane %v3695, 1
    %v5391 = vsel %vm1452, %v5388, %v5390
    %v5392 = vrot.slane %v3696, 1
    %v5393 = vsel %vm1452, %v5390, %v5392
    %v5394 = vrot.slane %v3697, 1
    %v5395 = vsel %vm1452, %v5392, %v5394
    %v5396 = vrot.slane %v3698, 1
    %v5397 = vsel %vm1452, %v5394, %v5396
    %v5398 = vrot.slane %v3699, 1
    %v5399 = vsel %vm1452, %v5396, %v5398
    %v5400 = vrot.slane %v3700, 1
    %v5401 = vsel %vm1452, %v5398, %v5400
    %v5402 = vrot.slane %v3701, 1
    %v5403 = vsel %vm1452, %v5400, %v5402
    %v5404 = vrot.slane %v3702, 1
    %v5405 = vsel %vm1452, %v5402, %v5404
    %v5406 = vrot.slane %v3703, 1
    %v5407 = vsel %vm1452, %v5404, %v5406
    %v5408 = vrot.slane %v3704, 1
    %v5409 = vsel %vm1452, %v5406, %v5408
    %v5410 = vrot.slane %v3705, 1
    %v5411 = vsel %vm1452, %v5408, %v5410
    %v5412 = vrot.slane %v3706, 1
    %v5413 = vsel %vm1452, %v5410, %v5412
    %v5414 = vrot.slane %v3707, 1
    %v5415 = vsel %vm1452, %v5412, %v5414
    %v5416 = vrot.slane %v3708, 1
    %v5417 = vsel %vm1452, %v5414, %v5416
    %v5418 = vrot.slane %v3709, 1
    %v5419 = vsel %vm1452, %v5416, %v5418
    %v5420 = vrot.slane %v3710, 1
    %v5421 = vsel %vm1452, %v5418, %v5420
    %v5422 = vrot.slane %v3711, 1
    %v5423 = vsel %vm1452, %v5420, %v5422
    %v5424 = vrot.slane %v3712, 1
    %v5425 = vsel %vm1452, %v5422, %v5424
    %v5426 = vrot.slane %v3713, 1
    %v5427 = vsel %vm1452, %v5424, %v5426
    %v5428 = vrot.slane %v3714, 1
    %v5429 = vsel %vm1452, %v5426, %v5428
    %v5430 = vrot.slane %v3715, 1
    %v5431 = vsel %vm1452, %v5428, %v5430
    %v5432 = vrot.slane %v3716, 1
    %v5433 = vsel %vm1452, %v5430, %v5432
    %v5434 = vrot.slane %v3717, 1
    %v5435 = vsel %vm1452, %v5432, %v5434
    %v5436 = vrot.slane %v3718, 1
    %v5437 = vsel %vm1452, %v5434, %v5436
    %v5438 = vrot.slane %v3719, 1
    %v5439 = vsel %vm1452, %v5436, %v5438
    %v5440 = vrot.slane %v3720, 1
    %v5441 = vsel %vm1452, %v5438, %v5440
    %v5442 = vrot.slane %v3721, 1
    %v5443 = vsel %vm1452, %v5440, %v5442
    %v5444 = vrot.slane %v3722, 1
    %v5445 = vsel %vm1452, %v5442, %v5444
    %v5446 = vrot.slane %v3723, 1
    %v5447 = vsel %vm1452, %v5444, %v5446
    %v5448 = vrot.slane %v3724, 1
    %v5449 = vsel %vm1452, %v5446, %v5448
    %v5450 = vrot.slane %v3725, 1
    %v5451 = vsel %vm1452, %v5448, %v5450
    %v5452 = vrot.slane %v3726, 1
    %v5453 = vsel %vm1452, %v5450, %v5452
    %v5454 = vrot.slane %v3727, 1
    %v5455 = vsel %vm1452, %v5452, %v5454
    %v5456 = vrot.slane %v3728, 1
    %v5457 = vsel %vm1452, %v5454, %v5456
    %v5458 = vrot.slane %v3729, 1
    %v5459 = vsel %vm1452, %v5456, %v5458
    %v5460 = vrot.slane %v3730, 1
    %v5461 = vsel %vm1452, %v5458, %v5460
    %v5462 = vrot.slane %v3731, 1
    %v5463 = vsel %vm1452, %v5460, %v5462
    %v5464 = vrot.slane %v3732, 1
    %v5465 = vsel %vm1452, %v5462, %v5464
    %v5466 = vrot.slane %v3733, 1
    %v5467 = vsel %vm1452, %v5464, %v5466
    %v5468 = vrot.slane %v3734, 1
    %v5469 = vsel %vm1452, %v5466, %v5468
    %v5470 = vrot.slane %v3735, 1
    %v5471 = vsel %vm1452, %v5468, %v5470
    %v5472 = vrot.slane %v3736, 1
    %v5473 = vsel %vm1452, %v5470, %v5472
    %v5474 = vrot.slane %v3737, 1
    %v5475 = vsel %vm1452, %v5472, %v5474
    %v5476 = vrot.slane %v3738, 1
    %v5477 = vsel %vm1452, %v5474, %v5476
    %v5478 = vrot.slane %v3739, 1
    %v5479 = vsel %vm1452, %v5476, %v5478
    %v5480 = vrot.slane %v3740, 1
    %v5481 = vsel %vm1452, %v5478, %v5480
    %v5482 = vrot.slane %v3741, 1
    %v5483 = vsel %vm1452, %v5480, %v5482
    %v5484 = vrot.slane %v3742, 1
    %v5485 = vsel %vm1452, %v5482, %v5484
    %v5486 = vrot.slane %v3743, 1
    %v5487 = vsel %vm1452, %v5484, %v5486
    %v5488 = vrot.slane %v3744, 1
    %v5489 = vsel %vm1452, %v5486, %v5488
    %v5490 = vrot.slane %v3745, 1
    %v5491 = vsel %vm1452, %v5488, %v5490
    %v5492 = vrot.slane %v3746, 1
    %v5493 = vsel %vm1452, %v5490, %v5492
    %v5494 = vrot.slane %v3747, 1
    %v5495 = vsel %vm1452, %v5492, %v5494
    %v5496 = vrot.slane %v3748, 1
    %v5497 = vsel %vm1452, %v5494, %v5496
    %v5498 = vrot.slane %v3749, 1
    %v5499 = vsel %vm1452, %v5496, %v5498
    %v5500 = vrot.slane %v3750, 1
    %v5501 = vsel %vm1452, %v5498, %v5500
    %v5502 = vrot.slane %v3751, 1
    %v5503 = vsel %vm1452, %v5500, %v5502
    %v5504 = vrot.slane %v3752, 1
    %v5505 = vsel %vm1452, %v5502, %v5504
    %v5506 = vrot.slane %v3753, 1
    %v5507 = vsel %vm1452, %v5504, %v5506
    %v5508 = vrot.slane %v3754, 1
    %v5509 = vsel %vm1452, %v5506, %v5508
    %v5510 = vrot.slane %v3755, 1
    %v5511 = vsel %vm1452, %v5508, %v5510
    %v5512 = vrot.slane %v3756, 1
    %v5513 = vsel %vm1452, %v5510, %v5512
    %v5514 = vrot.slane %v3757, 1
    %v5515 = vsel %vm1452, %v5512, %v5514
    %v5516 = vrot.slane %v3758, 1
    %v5517 = vsel %vm1452, %v5514, %v5516
    %v5518 = vrot.slane %v4864, 1
    %v5519 = vsel %vm1452, %v5516, %v5518
    %v5520 = vrot.slane %v4865, 1
    %v5521 = vsel %vm1452, %v5518, %v5520
    %v5522 = vrot.slane %v5307, 1
    %v5523 = vsel %vm1452, %v5520, %v5522
    %5524 = vrot.lane.b32.xlu0 %v5309, 88
    %v5525 = vpop.permute.xlu0 %5524
    %5526 = vrot.lane.b32.xlu0 %v5311, 88
    %v5527 = vpop.permute.xlu0 %5526
    %5528 = vrot.lane.b32.xlu0 %v5313, 88
    %v5529 = vpop.permute.xlu0 %5528
    %5530 = vrot.lane.b32.xlu0 %v5315, 88
    %v5531 = vpop.permute.xlu0 %5530
    %5532 = vrot.lane.b32.xlu0 %v5317, 88
    %v5533 = vpop.permute.xlu0 %5532
    %5534 = vrot.lane.b32.xlu0 %v5319, 88
    %v5535 = vpop.permute.xlu0 %5534
    %5536 = vrot.lane.b32.xlu0 %v5321, 88
    %v5537 = vpop.permute.xlu0 %5536
    %5538 = vrot.lane.b32.xlu0 %v5323, 88
    %v5539 = vpop.permute.xlu0 %5538
    %5540 = vrot.lane.b32.xlu0 %v5325, 88
    %v5541 = vpop.permute.xlu0 %5540
    %5542 = vrot.lane.b32.xlu0 %v5327, 88
    %v5543 = vpop.permute.xlu0 %5542
    %5544 = vrot.lane.b32.xlu0 %v5329, 88
    %v5545 = vpop.permute.xlu0 %5544
    %5546 = vrot.lane.b32.xlu0 %v5331, 88
    %v5547 = vpop.permute.xlu0 %5546
    %5548 = vrot.lane.b32.xlu0 %v5333, 88
    %v5549 = vpop.permute.xlu0 %5548
    %5550 = vrot.lane.b32.xlu0 %v5335, 88
    %v5551 = vpop.permute.xlu0 %5550
    %5552 = vrot.lane.b32.xlu0 %v5337, 88
    %v5553 = vpop.permute.xlu0 %5552
    %5554 = vrot.lane.b32.xlu0 %v5339, 88
    %v5555 = vpop.permute.xlu0 %5554
    %5556 = vrot.lane.b32.xlu0 %v5341, 88
    %v5557 = vpop.permute.xlu0 %5556
    %5558 = vrot.lane.b32.xlu0 %v5343, 88
    %v5559 = vpop.permute.xlu0 %5558
    %5560 = vrot.lane.b32.xlu0 %v5345, 88
    %v5561 = vpop.permute.xlu0 %5560
    %5562 = vrot.lane.b32.xlu0 %v5347, 88
    %v5563 = vpop.permute.xlu0 %5562
    %5564 = vrot.lane.b32.xlu0 %v5349, 88
    %v5565 = vpop.permute.xlu0 %5564
    %5566 = vrot.lane.b32.xlu0 %v5351, 88
    %v5567 = vpop.permute.xlu0 %5566
    %5568 = vrot.lane.b32.xlu0 %v5353, 88
    %v5569 = vpop.permute.xlu0 %5568
    %5570 = vrot.lane.b32.xlu0 %v5355, 88
    %v5571 = vpop.permute.xlu0 %5570
    %5572 = vrot.lane.b32.xlu0 %v5357, 88
    %v5573 = vpop.permute.xlu0 %5572
    %5574 = vrot.lane.b32.xlu0 %v5359, 88
    %v5575 = vpop.permute.xlu0 %5574
    %5576 = vrot.lane.b32.xlu0 %v5361, 88
    %v5577 = vpop.permute.xlu0 %5576
    %5578 = vrot.lane.b32.xlu0 %v5363, 88
    %v5579 = vpop.permute.xlu0 %5578
    %5580 = vrot.lane.b32.xlu0 %v5365, 88
    %v5581 = vpop.permute.xlu0 %5580
    %5582 = vrot.lane.b32.xlu0 %v5367, 88
    %v5583 = vpop.permute.xlu0 %5582
    %5584 = vrot.lane.b32.xlu0 %v5369, 88
    %v5585 = vpop.permute.xlu0 %5584
    %5586 = vrot.lane.b32.xlu0 %v5371, 88
    %v5587 = vpop.permute.xlu0 %5586
    %5588 = vrot.lane.b32.xlu0 %v5373, 88
    %v5589 = vpop.permute.xlu0 %5588
    %5590 = vrot.lane.b32.xlu0 %v5375, 88
    %v5591 = vpop.permute.xlu0 %5590
    %5592 = vrot.lane.b32.xlu0 %v5377, 88
    %v5593 = vpop.permute.xlu0 %5592
    %5594 = vrot.lane.b32.xlu0 %v5379, 88
    %v5595 = vpop.permute.xlu0 %5594
    %5596 = vrot.lane.b32.xlu0 %v5381, 88
    %v5597 = vpop.permute.xlu0 %5596
    %5598 = vrot.lane.b32.xlu0 %v5383, 88
    %v5599 = vpop.permute.xlu0 %5598
    %5600 = vrot.lane.b32.xlu0 %v5385, 88
    %v5601 = vpop.permute.xlu0 %5600
    %5602 = vrot.lane.b32.xlu0 %v5387, 88
    %v5603 = vpop.permute.xlu0 %5602
    %5604 = vrot.lane.b32.xlu0 %v5389, 88
    %v5605 = vpop.permute.xlu0 %5604
    %5606 = vrot.lane.b32.xlu0 %v5391, 88
    %v5607 = vpop.permute.xlu0 %5606
    %5608 = vrot.lane.b32.xlu0 %v5393, 88
    %v5609 = vpop.permute.xlu0 %5608
    %5610 = vrot.lane.b32.xlu0 %v5395, 88
    %v5611 = vpop.permute.xlu0 %5610
    %5612 = vrot.lane.b32.xlu0 %v5397, 88
    %v5613 = vpop.permute.xlu0 %5612
    %5614 = vrot.lane.b32.xlu0 %v5399, 88
    %v5615 = vpop.permute.xlu0 %5614
    %5616 = vrot.lane.b32.xlu0 %v5401, 88
    %v5617 = vpop.permute.xlu0 %5616
    %5618 = vrot.lane.b32.xlu0 %v5403, 88
    %v5619 = vpop.permute.xlu0 %5618
    %5620 = vrot.lane.b32.xlu0 %v5405, 88
    %v5621 = vpop.permute.xlu0 %5620
    %5622 = vrot.lane.b32.xlu0 %v5407, 88
    %v5623 = vpop.permute.xlu0 %5622
    %5624 = vrot.lane.b32.xlu0 %v5409, 88
    %v5625 = vpop.permute.xlu0 %5624
    %5626 = vrot.lane.b32.xlu0 %v5411, 88
    %v5627 = vpop.permute.xlu0 %5626
    %5628 = vrot.lane.b32.xlu0 %v5413, 88
    %v5629 = vpop.permute.xlu0 %5628
    %5630 = vrot.lane.b32.xlu0 %v5415, 88
    %v5631 = vpop.permute.xlu0 %5630
    %5632 = vrot.lane.b32.xlu0 %v5417, 88
    %v5633 = vpop.permute.xlu0 %5632
    %5634 = vrot.lane.b32.xlu0 %v5419, 88
    %v5635 = vpop.permute.xlu0 %5634
    %5636 = vrot.lane.b32.xlu0 %v5421, 88
    %v5637 = vpop.permute.xlu0 %5636
    %5638 = vrot.lane.b32.xlu0 %v5423, 88
    %v5639 = vpop.permute.xlu0 %5638
    %5640 = vrot.lane.b32.xlu0 %v5425, 88
    %v5641 = vpop.permute.xlu0 %5640
    %5642 = vrot.lane.b32.xlu0 %v5427, 88
    %v5643 = vpop.permute.xlu0 %5642
    %5644 = vrot.lane.b32.xlu0 %v5429, 88
    %v5645 = vpop.permute.xlu0 %5644
    %5646 = vrot.lane.b32.xlu0 %v5431, 88
    %v5647 = vpop.permute.xlu0 %5646
    %5648 = vrot.lane.b32.xlu0 %v5433, 88
    %v5649 = vpop.permute.xlu0 %5648
    %5650 = vrot.lane.b32.xlu0 %v5435, 88
    %v5651 = vpop.permute.xlu0 %5650
    %5652 = vrot.lane.b32.xlu0 %v5437, 88
    %v5653 = vpop.permute.xlu0 %5652
    %5654 = vrot.lane.b32.xlu0 %v5439, 88
    %v5655 = vpop.permute.xlu0 %5654
    %5656 = vrot.lane.b32.xlu0 %v5441, 88
    %v5657 = vpop.permute.xlu0 %5656
    %5658 = vrot.lane.b32.xlu0 %v5443, 88
    %v5659 = vpop.permute.xlu0 %5658
    %5660 = vrot.lane.b32.xlu0 %v5445, 88
    %v5661 = vpop.permute.xlu0 %5660
    %5662 = vrot.lane.b32.xlu0 %v5447, 88
    %v5663 = vpop.permute.xlu0 %5662
    %5664 = vrot.lane.b32.xlu0 %v5449, 88
    %v5665 = vpop.permute.xlu0 %5664
    %5666 = vrot.lane.b32.xlu0 %v5451, 88
    %v5667 = vpop.permute.xlu0 %5666
    %5668 = vrot.lane.b32.xlu0 %v5453, 88
    %v5669 = vpop.permute.xlu0 %5668
    %5670 = vrot.lane.b32.xlu0 %v5455, 88
    %v5671 = vpop.permute.xlu0 %5670
    %5672 = vrot.lane.b32.xlu0 %v5457, 88
    %v5673 = vpop.permute.xlu0 %5672
    %5674 = vrot.lane.b32.xlu0 %v5459, 88
    %v5675 = vpop.permute.xlu0 %5674
    %5676 = vrot.lane.b32.xlu0 %v5461, 88
    %v5677 = vpop.permute.xlu0 %5676
    %5678 = vrot.lane.b32.xlu0 %v5463, 88
    %v5679 = vpop.permute.xlu0 %5678
    %5680 = vrot.lane.b32.xlu0 %v5465, 88
    %v5681 = vpop.permute.xlu0 %5680
    %5682 = vrot.lane.b32.xlu0 %v5467, 88
    %v5683 = vpop.permute.xlu0 %5682
    %5684 = vrot.lane.b32.xlu0 %v5469, 88
    %v5685 = vpop.permute.xlu0 %5684
    %5686 = vrot.lane.b32.xlu0 %v5471, 88
    %v5687 = vpop.permute.xlu0 %5686
    %5688 = vrot.lane.b32.xlu0 %v5473, 88
    %v5689 = vpop.permute.xlu0 %5688
    %5690 = vrot.lane.b32.xlu0 %v5475, 88
    %v5691 = vpop.permute.xlu0 %5690
    %5692 = vrot.lane.b32.xlu0 %v5477, 88
    %v5693 = vpop.permute.xlu0 %5692
    %5694 = vrot.lane.b32.xlu0 %v5479, 88
    %v5695 = vpop.permute.xlu0 %5694
    %5696 = vrot.lane.b32.xlu0 %v5481, 88
    %v5697 = vpop.permute.xlu0 %5696
    %5698 = vrot.lane.b32.xlu0 %v5483, 88
    %v5699 = vpop.permute.xlu0 %5698
    %5700 = vrot.lane.b32.xlu0 %v5485, 88
    %v5701 = vpop.permute.xlu0 %5700
    %5702 = vrot.lane.b32.xlu0 %v5487, 88
    %v5703 = vpop.permute.xlu0 %5702
    %5704 = vrot.lane.b32.xlu0 %v5489, 88
    %v5705 = vpop.permute.xlu0 %5704
    %5706 = vrot.lane.b32.xlu0 %v5491, 88
    %v5707 = vpop.permute.xlu0 %5706
    %5708 = vrot.lane.b32.xlu0 %v5493, 88
    %v5709 = vpop.permute.xlu0 %5708
    %5710 = vrot.lane.b32.xlu0 %v5495, 88
    %v5711 = vpop.permute.xlu0 %5710
    %5712 = vrot.lane.b32.xlu0 %v5497, 88
    %v5713 = vpop.permute.xlu0 %5712
    %5714 = vrot.lane.b32.xlu0 %v5499, 88
    %v5715 = vpop.permute.xlu0 %5714
    %5716 = vrot.lane.b32.xlu0 %v5501, 88
    %v5717 = vpop.permute.xlu0 %5716
    %5718 = vrot.lane.b32.xlu0 %v5503, 88
    %v5719 = vpop.permute.xlu0 %5718
    %5720 = vrot.lane.b32.xlu0 %v5505, 88
    %v5721 = vpop.permute.xlu0 %5720
    %5722 = vrot.lane.b32.xlu0 %v5507, 88
    %v5723 = vpop.permute.xlu0 %5722
    %5724 = vrot.lane.b32.xlu0 %v5509, 88
    %v5725 = vpop.permute.xlu0 %5724
    %5726 = vrot.lane.b32.xlu0 %v5511, 88
    %v5727 = vpop.permute.xlu0 %5726
    %5728 = vrot.lane.b32.xlu0 %v5513, 88
    %v5729 = vpop.permute.xlu0 %5728
    %5730 = vrot.lane.b32.xlu0 %v5515, 88
    %v5731 = vpop.permute.xlu0 %5730
    %5732 = vrot.lane.b32.xlu0 %v5517, 88
    %v5733 = vpop.permute.xlu0 %5732
    %5734 = vrot.lane.b32.xlu0 %v5519, 88
    %v5735 = vpop.permute.xlu0 %5734
    %5736 = vrot.lane.b32.xlu0 %v5521, 88
    %v5737 = vpop.permute.xlu0 %5736
    %5738 = vrot.lane.b32.xlu0 %v5523, 88
    %v5739 = vpop.permute.xlu0 %5738
    %5740 = vrot.lane.b32.xlu0 %v5522, 88
    %v5741 = vpop.permute.xlu0 %5740
    %v5851 = vadd.f32 %v5198, %v5525
    %v5852 = vadd.f32 %v5199, %v5527
    %v5853 = vadd.f32 %v5200, %v5529
    %v5854 = vadd.f32 %v5201, %v5531
    %v5855 = vadd.f32 %v5202, %v5533
    %v5856 = vadd.f32 %v5203, %v5535
    %v5857 = vadd.f32 %v5204, %v5537
    %v5858 = vadd.f32 %v5205, %v5539
    %v5859 = vadd.f32 %v5206, %v5541
    %v5860 = vadd.f32 %v5207, %v5543
    %v5861 = vadd.f32 %v5208, %v5545
    %v5862 = vadd.f32 %v5209, %v5547
    %v5863 = vadd.f32 %v5210, %v5549
    %v5864 = vadd.f32 %v5211, %v5551
    %v5865 = vadd.f32 %v5212, %v5553
    %v5866 = vadd.f32 %v5213, %v5555
    %v5867 = vadd.f32 %v5214, %v5557
    %v5868 = vadd.f32 %v5215, %v5559
    %v5869 = vadd.f32 %v5216, %v5561
    %v5870 = vadd.f32 %v5217, %v5563
    %v5871 = vadd.f32 %v5218, %v5565
    %v5872 = vadd.f32 %v5219, %v5567
    %v5873 = vadd.f32 %v5220, %v5569
    %v5874 = vadd.f32 %v5221, %v5571
    %v5875 = vadd.f32 %v5222, %v5573
    %v5876 = vadd.f32 %v5223, %v5575
    %v5877 = vadd.f32 %v5224, %v5577
    %v5878 = vadd.f32 %v5225, %v5579
    %v5879 = vadd.f32 %v5226, %v5581
    %v5880 = vadd.f32 %v5227, %v5583
    %v5881 = vadd.f32 %v5228, %v5585
    %v5882 = vadd.f32 %v5229, %v5587
    %v5883 = vadd.f32 %v5230, %v5589
    %v5884 = vadd.f32 %v5231, %v5591
    %v5885 = vadd.f32 %v5232, %v5593
    %v5886 = vadd.f32 %v5233, %v5595
    %v5887 = vadd.f32 %v5234, %v5597
    %v5888 = vadd.f32 %v5235, %v5599
    %v5889 = vadd.f32 %v5236, %v5601
    %v5890 = vadd.f32 %v5237, %v5603
    %v5891 = vadd.f32 %v5238, %v5605
    %v5892 = vadd.f32 %v5239, %v5607
    %v5893 = vadd.f32 %v5240, %v5609
    %v5894 = vadd.f32 %v5241, %v5611
    %v5895 = vadd.f32 %v5242, %v5613
    %v5896 = vadd.f32 %v5243, %v5615
    %v5897 = vadd.f32 %v5244, %v5617
    %v5898 = vadd.f32 %v5245, %v5619
    %v5899 = vadd.f32 %v5246, %v5621
    %v5900 = vadd.f32 %v5247, %v5623
    %v5901 = vadd.f32 %v5248, %v5625
    %v5902 = vadd.f32 %v5249, %v5627
    %v5903 = vadd.f32 %v5250, %v5629
    %v5904 = vadd.f32 %v5251, %v5631
    %v5905 = vadd.f32 %v5252, %v5633
    %v5906 = vadd.f32 %v5253, %v5635
    %v5907 = vadd.f32 %v5254, %v5637
    %v5908 = vadd.f32 %v5255, %v5639
    %v5909 = vadd.f32 %v5256, %v5641
    %v5910 = vadd.f32 %v5257, %v5643
    %v5911 = vadd.f32 %v5258, %v5645
    %v5912 = vadd.f32 %v5259, %v5647
    %v5913 = vadd.f32 %v5260, %v5649
    %v5914 = vadd.f32 %v5261, %v5651
    %v5915 = vadd.f32 %v5262, %v5653
    %v5916 = vadd.f32 %v5263, %v5655
    %v5917 = vadd.f32 %v5264, %v5657
    %v5918 = vadd.f32 %v5265, %v5659
    %v5919 = vadd.f32 %v5266, %v5661
    %v5920 = vadd.f32 %v5267, %v5663
    %v5921 = vadd.f32 %v5268, %v5665
    %v5922 = vadd.f32 %v5269, %v5667
    %v5923 = vadd.f32 %v5270, %v5669
    %v5924 = vadd.f32 %v5271, %v5671
    %v5925 = vadd.f32 %v5272, %v5673
    %v5926 = vadd.f32 %v5273, %v5675
    %v5927 = vadd.f32 %v5274, %v5677
    %v5928 = vadd.f32 %v5275, %v5679
    %v5929 = vadd.f32 %v5276, %v5681
    %v5930 = vadd.f32 %v5277, %v5683
    %v5931 = vadd.f32 %v5278, %v5685
    %v5932 = vadd.f32 %v5279, %v5687
    %v5933 = vadd.f32 %v5280, %v5689
    %v5934 = vadd.f32 %v5281, %v5691
    %v5935 = vadd.f32 %v5282, %v5693
    %v5936 = vadd.f32 %v5283, %v5695
    %v5937 = vadd.f32 %v5284, %v5697
    %v5938 = vadd.f32 %v5285, %v5699
    %v5939 = vadd.f32 %v5286, %v5701
    %v5940 = vadd.f32 %v5287, %v5703
    %v5941 = vadd.f32 %v5288, %v5705
    %v5942 = vadd.f32 %v5289, %v5707
    %v5943 = vadd.f32 %v5290, %v5709
    %v5944 = vadd.f32 %v5291, %v5711
    %v5945 = vadd.f32 %v5292, %v5713
    %v5946 = vadd.f32 %v5293, %v5715
    %v5947 = vadd.f32 %v5294, %v5717
    %v5948 = vadd.f32 %v5295, %v5719
    %v5949 = vadd.f32 %v5296, %v5721
    %v5950 = vadd.f32 %v5297, %v5723
    %v5951 = vadd.f32 %v5298, %v5725
    %v5952 = vadd.f32 %v5299, %v5727
    %v5953 = vadd.f32 %v5300, %v5729
    %v5954 = vadd.f32 %v5301, %v5731
    %v5955 = vadd.f32 %v5302, %v5733
    %v5956 = vadd.f32 %v5303, %v5735
    %v5957 = vadd.f32 %v5304, %v5737
    %v5958 = vadd.f32 %v5305, %v5739
    %v5959 = vadd.f32 %v5306, %v5741
    %v5960 = vld [vmem:[#allocation2 + $0x78] sm:$0xfe]
    %v5961 = vld [vmem:[#allocation2 + $0x738] sm:$0x1]
    %v5964 = vrot.slane %v5960, 2
    %v5965 = vsel %vm2108, %v5964, %v3881
    %v5966 = vrot.slane %v4864, 2
    %v5967 = vsel %vm2108, %v4093, %v5966
    %v5968 = vrot.slane %v4865, 2
    %v5969 = vsel %vm2108, %v5966, %v5968
    %v5970 = vrot.slane %v5307, 2
    %v5971 = vsel %vm2108, %v5968, %v5970
    %v5972 = vrot.slane %v5961, 2
    %v5973 = vsel %vm2108, %v5970, %v5972
    %5974 = vrot.lane.b32.xlu0 %v5964, 64
    %v5975 = vpop.permute.xlu0 %5974
    %5976 = vrot.lane.b32.xlu0 %v5965, 64
    %v5977 = vpop.permute.xlu0 %5976
    %5978 = vrot.lane.b32.xlu0 %v3884, 64
    %v5979 = vpop.permute.xlu0 %5978
    %5980 = vrot.lane.b32.xlu0 %v3886, 64
    %v5981 = vpop.permute.xlu0 %5980
    %5982 = vrot.lane.b32.xlu0 %v3888, 64
    %v5983 = vpop.permute.xlu0 %5982
    %5984 = vrot.lane.b32.xlu0 %v3890, 64
    %v5985 = vpop.permute.xlu0 %5984
    %5986 = vrot.lane.b32.xlu0 %v3892, 64
    %v5987 = vpop.permute.xlu0 %5986
    %5988 = vrot.lane.b32.xlu0 %v3894, 64
    %v5989 = vpop.permute.xlu0 %5988
    %5990 = vrot.lane.b32.xlu0 %v3896, 64
    %v5991 = vpop.permute.xlu0 %5990
    %5992 = vrot.lane.b32.xlu0 %v3898, 64
    %v5993 = vpop.permute.xlu0 %5992
    %5994 = vrot.lane.b32.xlu0 %v3900, 64
    %v5995 = vpop.permute.xlu0 %5994
    %5996 = vrot.lane.b32.xlu0 %v3902, 64
    %v5997 = vpop.permute.xlu0 %5996
    %5998 = vrot.lane.b32.xlu0 %v3904, 64
    %v5999 = vpop.permute.xlu0 %5998
    %6000 = vrot.lane.b32.xlu0 %v3906, 64
    %v6001 = vpop.permute.xlu0 %6000
    %6002 = vrot.lane.b32.xlu0 %v3908, 64
    %v6003 = vpop.permute.xlu0 %6002
    %6004 = vrot.lane.b32.xlu0 %v3910, 64
    %v6005 = vpop.permute.xlu0 %6004
    %6006 = vrot.lane.b32.xlu0 %v3912, 64
    %v6007 = vpop.permute.xlu0 %6006
    %6008 = vrot.lane.b32.xlu0 %v3914, 64
    %v6009 = vpop.permute.xlu0 %6008
    %6010 = vrot.lane.b32.xlu0 %v3916, 64
    %v6011 = vpop.permute.xlu0 %6010
    %6012 = vrot.lane.b32.xlu0 %v3918, 64
    %v6013 = vpop.permute.xlu0 %6012
    %6014 = vrot.lane.b32.xlu0 %v3920, 64
    %v6015 = vpop.permute.xlu0 %6014
    %6016 = vrot.lane.b32.xlu0 %v3922, 64
    %v6017 = vpop.permute.xlu0 %6016
    %6018 = vrot.lane.b32.xlu0 %v3924, 64
    %v6019 = vpop.permute.xlu0 %6018
    %6020 = vrot.lane.b32.xlu0 %v3926, 64
    %v6021 = vpop.permute.xlu0 %6020
    %6022 = vrot.lane.b32.xlu0 %v3928, 64
    %v6023 = vpop.permute.xlu0 %6022
    %6024 = vrot.lane.b32.xlu0 %v3930, 64
    %v6025 = vpop.permute.xlu0 %6024
    %6026 = vrot.lane.b32.xlu0 %v3932, 64
    %v6027 = vpop.permute.xlu0 %6026
    %6028 = vrot.lane.b32.xlu0 %v3934, 64
    %v6029 = vpop.permute.xlu0 %6028
    %6030 = vrot.lane.b32.xlu0 %v3936, 64
    %v6031 = vpop.permute.xlu0 %6030
    %6032 = vrot.lane.b32.xlu0 %v3938, 64
    %v6033 = vpop.permute.xlu0 %6032
    %6034 = vrot.lane.b32.xlu0 %v3940, 64
    %v6035 = vpop.permute.xlu0 %6034
    %6036 = vrot.lane.b32.xlu0 %v3942, 64
    %v6037 = vpop.permute.xlu0 %6036
    %6038 = vrot.lane.b32.xlu0 %v3944, 64
    %v6039 = vpop.permute.xlu0 %6038
    %6040 = vrot.lane.b32.xlu0 %v3946, 64
    %v6041 = vpop.permute.xlu0 %6040
    %6042 = vrot.lane.b32.xlu0 %v3948, 64
    %v6043 = vpop.permute.xlu0 %6042
    %6044 = vrot.lane.b32.xlu0 %v3950, 64
    %v6045 = vpop.permute.xlu0 %6044
    %6046 = vrot.lane.b32.xlu0 %v3952, 64
    %v6047 = vpop.permute.xlu0 %6046
    %6048 = vrot.lane.b32.xlu0 %v3954, 64
    %v6049 = vpop.permute.xlu0 %6048
    %6050 = vrot.lane.b32.xlu0 %v3956, 64
    %v6051 = vpop.permute.xlu0 %6050
    %6052 = vrot.lane.b32.xlu0 %v3958, 64
    %v6053 = vpop.permute.xlu0 %6052
    %6054 = vrot.lane.b32.xlu0 %v3960, 64
    %v6055 = vpop.permute.xlu0 %6054
    %6056 = vrot.lane.b32.xlu0 %v3962, 64
    %v6057 = vpop.permute.xlu0 %6056
    %6058 = vrot.lane.b32.xlu0 %v3964, 64
    %v6059 = vpop.permute.xlu0 %6058
    %6060 = vrot.lane.b32.xlu0 %v3966, 64
    %v6061 = vpop.permute.xlu0 %6060
    %6062 = vrot.lane.b32.xlu0 %v3968, 64
    %v6063 = vpop.permute.xlu0 %6062
    %6064 = vrot.lane.b32.xlu0 %v3970, 64
    %v6065 = vpop.permute.xlu0 %6064
    %6066 = vrot.lane.b32.xlu0 %v3972, 64
    %v6067 = vpop.permute.xlu0 %6066
    %6068 = vrot.lane.b32.xlu0 %v3974, 64
    %v6069 = vpop.permute.xlu0 %6068
    %6070 = vrot.lane.b32.xlu0 %v3976, 64
    %v6071 = vpop.permute.xlu0 %6070
    %6072 = vrot.lane.b32.xlu0 %v3978, 64
    %v6073 = vpop.permute.xlu0 %6072
    %6074 = vrot.lane.b32.xlu0 %v3980, 64
    %v6075 = vpop.permute.xlu0 %6074
    %6076 = vrot.lane.b32.xlu0 %v3982, 64
    %v6077 = vpop.permute.xlu0 %6076
    %6078 = vrot.lane.b32.xlu0 %v3984, 64
    %v6079 = vpop.permute.xlu0 %6078
    %6080 = vrot.lane.b32.xlu0 %v3986, 64
    %v6081 = vpop.permute.xlu0 %6080
    %6082 = vrot.lane.b32.xlu0 %v3988, 64
    %v6083 = vpop.permute.xlu0 %6082
    %6084 = vrot.lane.b32.xlu0 %v3990, 64
    %v6085 = vpop.permute.xlu0 %6084
    %6086 = vrot.lane.b32.xlu0 %v3992, 64
    %v6087 = vpop.permute.xlu0 %6086
    %6088 = vrot.lane.b32.xlu0 %v3994, 64
    %v6089 = vpop.permute.xlu0 %6088
    %6090 = vrot.lane.b32.xlu0 %v3996, 64
    %v6091 = vpop.permute.xlu0 %6090
    %6092 = vrot.lane.b32.xlu0 %v3998, 64
    %v6093 = vpop.permute.xlu0 %6092
    %6094 = vrot.lane.b32.xlu0 %v4000, 64
    %v6095 = vpop.permute.xlu0 %6094
    %6096 = vrot.lane.b32.xlu0 %v4002, 64
    %v6097 = vpop.permute.xlu0 %6096
    %6098 = vrot.lane.b32.xlu0 %v4004, 64
    %v6099 = vpop.permute.xlu0 %6098
    %6100 = vrot.lane.b32.xlu0 %v4006, 64
    %v6101 = vpop.permute.xlu0 %6100
    %6102 = vrot.lane.b32.xlu0 %v4008, 64
    %v6103 = vpop.permute.xlu0 %6102
    %6104 = vrot.lane.b32.xlu0 %v4010, 64
    %v6105 = vpop.permute.xlu0 %6104
    %6106 = vrot.lane.b32.xlu0 %v4012, 64
    %v6107 = vpop.permute.xlu0 %6106
    %6108 = vrot.lane.b32.xlu0 %v4014, 64
    %v6109 = vpop.permute.xlu0 %6108
    %6110 = vrot.lane.b32.xlu0 %v4016, 64
    %v6111 = vpop.permute.xlu0 %6110
    %6112 = vrot.lane.b32.xlu0 %v4018, 64
    %v6113 = vpop.permute.xlu0 %6112
    %6114 = vrot.lane.b32.xlu0 %v4020, 64
    %v6115 = vpop.permute.xlu0 %6114
    %6116 = vrot.lane.b32.xlu0 %v4022, 64
    %v6117 = vpop.permute.xlu0 %6116
    %6118 = vrot.lane.b32.xlu0 %v4024, 64
    %v6119 = vpop.permute.xlu0 %6118
    %6120 = vrot.lane.b32.xlu0 %v4026, 64
    %v6121 = vpop.permute.xlu0 %6120
    %6122 = vrot.lane.b32.xlu0 %v4028, 64
    %v6123 = vpop.permute.xlu0 %6122
    %6124 = vrot.lane.b32.xlu0 %v4030, 64
    %v6125 = vpop.permute.xlu0 %6124
    %6126 = vrot.lane.b32.xlu0 %v4032, 64
    %v6127 = vpop.permute.xlu0 %6126
    %6128 = vrot.lane.b32.xlu0 %v4034, 64
    %v6129 = vpop.permute.xlu0 %6128
    %6130 = vrot.lane.b32.xlu0 %v4036, 64
    %v6131 = vpop.permute.xlu0 %6130
    %6132 = vrot.lane.b32.xlu0 %v4038, 64
    %v6133 = vpop.permute.xlu0 %6132
    %6134 = vrot.lane.b32.xlu0 %v4040, 64
    %v6135 = vpop.permute.xlu0 %6134
    %6136 = vrot.lane.b32.xlu0 %v4042, 64
    %v6137 = vpop.permute.xlu0 %6136
    %6138 = vrot.lane.b32.xlu0 %v4044, 64
    %v6139 = vpop.permute.xlu0 %6138
    %6140 = vrot.lane.b32.xlu0 %v4046, 64
    %v6141 = vpop.permute.xlu0 %6140
    %6142 = vrot.lane.b32.xlu0 %v4048, 64
    %v6143 = vpop.permute.xlu0 %6142
    %6144 = vrot.lane.b32.xlu0 %v4050, 64
    %v6145 = vpop.permute.xlu0 %6144
    %6146 = vrot.lane.b32.xlu0 %v4052, 64
    %v6147 = vpop.permute.xlu0 %6146
    %6148 = vrot.lane.b32.xlu0 %v4054, 64
    %v6149 = vpop.permute.xlu0 %6148
    %6150 = vrot.lane.b32.xlu0 %v4056, 64
    %v6151 = vpop.permute.xlu0 %6150
    %6152 = vrot.lane.b32.xlu0 %v4058, 64
    %v6153 = vpop.permute.xlu0 %6152
    %6154 = vrot.lane.b32.xlu0 %v4060, 64
    %v6155 = vpop.permute.xlu0 %6154
    %6156 = vrot.lane.b32.xlu0 %v4062, 64
    %v6157 = vpop.permute.xlu0 %6156
    %6158 = vrot.lane.b32.xlu0 %v4064, 64
    %v6159 = vpop.permute.xlu0 %6158
    %6160 = vrot.lane.b32.xlu0 %v4066, 64
    %v6161 = vpop.permute.xlu0 %6160
    %6162 = vrot.lane.b32.xlu0 %v4068, 64
    %v6163 = vpop.permute.xlu0 %6162
    %6164 = vrot.lane.b32.xlu0 %v4070, 64
    %v6165 = vpop.permute.xlu0 %6164
    %6166 = vrot.lane.b32.xlu0 %v4072, 64
    %v6167 = vpop.permute.xlu0 %6166
    %6168 = vrot.lane.b32.xlu0 %v4074, 64
    %v6169 = vpop.permute.xlu0 %6168
    %6170 = vrot.lane.b32.xlu0 %v4076, 64
    %v6171 = vpop.permute.xlu0 %6170
    %6172 = vrot.lane.b32.xlu0 %v4078, 64
    %v6173 = vpop.permute.xlu0 %6172
    %6174 = vrot.lane.b32.xlu0 %v4080, 64
    %v6175 = vpop.permute.xlu0 %6174
    %6176 = vrot.lane.b32.xlu0 %v4082, 64
    %v6177 = vpop.permute.xlu0 %6176
    %6178 = vrot.lane.b32.xlu0 %v4086, 64
    %v6179 = vpop.permute.xlu0 %6178
    %6180 = vrot.lane.b32.xlu0 %v4090, 64
    %v6181 = vpop.permute.xlu0 %6180
    %6182 = vrot.lane.b32.xlu0 %v4094, 64
    %v6183 = vpop.permute.xlu0 %6182
    %6184 = vrot.lane.b32.xlu0 %v5967, 64
    %v6185 = vpop.permute.xlu0 %6184
    %6186 = vrot.lane.b32.xlu0 %v5969, 64
    %v6187 = vpop.permute.xlu0 %6186
    %6188 = vrot.lane.b32.xlu0 %v5971, 64
    %v6189 = vpop.permute.xlu0 %6188
    %6190 = vrot.lane.b32.xlu0 %v5973, 64
    %v6191 = vpop.permute.xlu0 %6190
    %v6301 = vadd.f32 %v5851, %v5975
    %v6302 = vadd.f32 %v5852, %v5977
    %v6303 = vadd.f32 %v5853, %v5979
    %v6304 = vadd.f32 %v5854, %v5981
    %v6305 = vadd.f32 %v5855, %v5983
    %v6306 = vadd.f32 %v5856, %v5985
    %v6307 = vadd.f32 %v5857, %v5987
    %v6308 = vadd.f32 %v5858, %v5989
    %v6309 = vadd.f32 %v5859, %v5991
    %v6310 = vadd.f32 %v5860, %v5993
    %v6311 = vadd.f32 %v5861, %v5995
    %v6312 = vadd.f32 %v5862, %v5997
    %v6313 = vadd.f32 %v5863, %v5999
    %v6314 = vadd.f32 %v5864, %v6001
    %v6315 = vadd.f32 %v5865, %v6003
    %v6316 = vadd.f32 %v5866, %v6005
    %v6317 = vadd.f32 %v5867, %v6007
    %v6318 = vadd.f32 %v5868, %v6009
    %v6319 = vadd.f32 %v5869, %v6011
    %v6320 = vadd.f32 %v5870, %v6013
    %v6321 = vadd.f32 %v5871, %v6015
    %v6322 = vadd.f32 %v5872, %v6017
    %v6323 = vadd.f32 %v5873, %v6019
    %v6324 = vadd.f32 %v5874, %v6021
    %v6325 = vadd.f32 %v5875, %v6023
    %v6326 = vadd.f32 %v5876, %v6025
    %v6327 = vadd.f32 %v5877, %v6027
    %v6328 = vadd.f32 %v5878, %v6029
    %v6329 = vadd.f32 %v5879, %v6031
    %v6330 = vadd.f32 %v5880, %v6033
    %v6331 = vadd.f32 %v5881, %v6035
    %v6332 = vadd.f32 %v5882, %v6037
    %v6333 = vadd.f32 %v5883, %v6039
    %v6334 = vadd.f32 %v5884, %v6041
    %v6335 = vadd.f32 %v5885, %v6043
    %v6336 = vadd.f32 %v5886, %v6045
    %v6337 = vadd.f32 %v5887, %v6047
    %v6338 = vadd.f32 %v5888, %v6049
    %v6339 = vadd.f32 %v5889, %v6051
    %v6340 = vadd.f32 %v5890, %v6053
    %v6341 = vadd.f32 %v5891, %v6055
    %v6342 = vadd.f32 %v5892, %v6057
    %v6343 = vadd.f32 %v5893, %v6059
    %v6344 = vadd.f32 %v5894, %v6061
    %v6345 = vadd.f32 %v5895, %v6063
    %v6346 = vadd.f32 %v5896, %v6065
    %v6347 = vadd.f32 %v5897, %v6067
    %v6348 = vadd.f32 %v5898, %v6069
    %v6349 = vadd.f32 %v5899, %v6071
    %v6350 = vadd.f32 %v5900, %v6073
    %v6351 = vadd.f32 %v5901, %v6075
    %v6352 = vadd.f32 %v5902, %v6077
    %v6353 = vadd.f32 %v5903, %v6079
    %v6354 = vadd.f32 %v5904, %v6081
    %v6355 = vadd.f32 %v5905, %v6083
    %v6356 = vadd.f32 %v5906, %v6085
    %v6357 = vadd.f32 %v5907, %v6087
    %v6358 = vadd.f32 %v5908, %v6089
    %v6359 = vadd.f32 %v5909, %v6091
    %v6360 = vadd.f32 %v5910, %v6093
    %v6361 = vadd.f32 %v5911, %v6095
    %v6362 = vadd.f32 %v5912, %v6097
    %v6363 = vadd.f32 %v5913, %v6099
    %v6364 = vadd.f32 %v5914, %v6101
    %v6365 = vadd.f32 %v5915, %v6103
    %v6366 = vadd.f32 %v5916, %v6105
    %v6367 = vadd.f32 %v5917, %v6107
    %v6368 = vadd.f32 %v5918, %v6109
    %v6369 = vadd.f32 %v5919, %v6111
    %v6370 = vadd.f32 %v5920, %v6113
    %v6371 = vadd.f32 %v5921, %v6115
    %v6372 = vadd.f32 %v5922, %v6117
    %v6373 = vadd.f32 %v5923, %v6119
    %v6374 = vadd.f32 %v5924, %v6121
    %v6375 = vadd.f32 %v5925, %v6123
    %v6376 = vadd.f32 %v5926, %v6125
    %v6377 = vadd.f32 %v5927, %v6127
    %v6378 = vadd.f32 %v5928, %v6129
    %v6379 = vadd.f32 %v5929, %v6131
    %v6380 = vadd.f32 %v5930, %v6133
    %v6381 = vadd.f32 %v5931, %v6135
    %v6382 = vadd.f32 %v5932, %v6137
    %v6383 = vadd.f32 %v5933, %v6139
    %v6384 = vadd.f32 %v5934, %v6141
    %v6385 = vadd.f32 %v5935, %v6143
    %v6386 = vadd.f32 %v5936, %v6145
    %v6387 = vadd.f32 %v5937, %v6147
    %v6388 = vadd.f32 %v5938, %v6149
    %v6389 = vadd.f32 %v5939, %v6151
    %v6390 = vadd.f32 %v5940, %v6153
    %v6391 = vadd.f32 %v5941, %v6155
    %v6392 = vadd.f32 %v5942, %v6157
    %v6393 = vadd.f32 %v5943, %v6159
    %v6394 = vadd.f32 %v5944, %v6161
    %v6395 = vadd.f32 %v5945, %v6163
    %v6396 = vadd.f32 %v5946, %v6165
    %v6397 = vadd.f32 %v5947, %v6167
    %v6398 = vadd.f32 %v5948, %v6169
    %v6399 = vadd.f32 %v5949, %v6171
    %v6400 = vadd.f32 %v5950, %v6173
    %v6401 = vadd.f32 %v5951, %v6175
    %v6402 = vadd.f32 %v5952, %v6177
    %v6403 = vadd.f32 %v5953, %v6179
    %v6404 = vadd.f32 %v5954, %v6181
    %v6405 = vadd.f32 %v5955, %v6183
    %v6406 = vadd.f32 %v5956, %v6185
    %v6407 = vadd.f32 %v5957, %v6187
    %v6408 = vadd.f32 %v5958, %v6189
    %v6409 = vadd.f32 %v5959, %v6191
    %6411 = vset.pattern.permute.xlu0 0
    %6412 = vperm.xlu0 %6411, %v17
    %v6413 = vpop.permute.xlu0 %6412
    %6415 = vset.pattern.permute.xlu0 0
    %6416 = vperm.xlu0 %6415, %v18
    %v6417 = vpop.permute.xlu0 %6416
    %6419 = vset.pattern.permute.xlu0 0
    %6420 = vperm.xlu0 %6419, %v19
    %v6421 = vpop.permute.xlu0 %6420
    %6423 = vset.pattern.permute.xlu0 0
    %6424 = vperm.xlu0 %6423, %v20
    %v6425 = vpop.permute.xlu0 %6424
    %6427 = vset.pattern.permute.xlu0 0
    %6428 = vperm.xlu0 %6427, %v21
    %v6429 = vpop.permute.xlu0 %6428
    %6431 = vset.pattern.permute.xlu0 0
    %6432 = vperm.xlu0 %6431, %v22
    %v6433 = vpop.permute.xlu0 %6432
    %6435 = vset.pattern.permute.xlu0 0
    %6436 = vperm.xlu0 %6435, %v23
    %v6437 = vpop.permute.xlu0 %6436
    %6439 = vset.pattern.permute.xlu0 0
    %6440 = vperm.xlu0 %6439, %v24
    %v6441 = vpop.permute.xlu0 %6440
    %6443 = vset.pattern.permute.xlu0 0
    %6444 = vperm.xlu0 %6443, %v25
    %v6445 = vpop.permute.xlu0 %6444
    %6447 = vset.pattern.permute.xlu0 0
    %6448 = vperm.xlu0 %6447, %v26
    %v6449 = vpop.permute.xlu0 %6448
    %6451 = vset.pattern.permute.xlu0 0
    %6452 = vperm.xlu0 %6451, %v27
    %v6453 = vpop.permute.xlu0 %6452
    %6455 = vset.pattern.permute.xlu0 0
    %6456 = vperm.xlu0 %6455, %v28
    %v6457 = vpop.permute.xlu0 %6456
    %6459 = vset.pattern.permute.xlu0 0
    %6460 = vperm.xlu0 %6459, %v29
    %v6461 = vpop.permute.xlu0 %6460
    %6463 = vset.pattern.permute.xlu0 0
    %6464 = vperm.xlu0 %6463, %v30
    %v6465 = vpop.permute.xlu0 %6464
    %6467 = vset.pattern.permute.xlu0 0
    %6468 = vperm.xlu0 %6467, %v31
    %v6469 = vpop.permute.xlu0 %6468
    %6471 = vset.pattern.permute.xlu0 0
    %6472 = vperm.xlu0 %6471, %v32
    %v6473 = vpop.permute.xlu0 %6472
    %6475 = vset.pattern.permute.xlu0 0
    %6476 = vperm.xlu0 %6475, %v33
    %v6477 = vpop.permute.xlu0 %6476
    %6479 = vset.pattern.permute.xlu0 0
    %6480 = vperm.xlu0 %6479, %v34
    %v6481 = vpop.permute.xlu0 %6480
    %6483 = vset.pattern.permute.xlu0 0
    %6484 = vperm.xlu0 %6483, %v35
    %v6485 = vpop.permute.xlu0 %6484
    %6487 = vset.pattern.permute.xlu0 0
    %6488 = vperm.xlu0 %6487, %v36
    %v6489 = vpop.permute.xlu0 %6488
    %6491 = vset.pattern.permute.xlu0 0
    %6492 = vperm.xlu0 %6491, %v37
    %v6493 = vpop.permute.xlu0 %6492
    %6495 = vset.pattern.permute.xlu0 0
    %6496 = vperm.xlu0 %6495, %v38
    %v6497 = vpop.permute.xlu0 %6496
    %6499 = vset.pattern.permute.xlu0 0
    %6500 = vperm.xlu0 %6499, %v39
    %v6501 = vpop.permute.xlu0 %6500
    %6503 = vset.pattern.permute.xlu0 0
    %6504 = vperm.xlu0 %6503, %v40
    %v6505 = vpop.permute.xlu0 %6504
    %6507 = vset.pattern.permute.xlu0 0
    %6508 = vperm.xlu0 %6507, %v41
    %v6509 = vpop.permute.xlu0 %6508
    %6511 = vset.pattern.permute.xlu0 0
    %6512 = vperm.xlu0 %6511, %v42
    %v6513 = vpop.permute.xlu0 %6512
    %6515 = vset.pattern.permute.xlu0 0
    %6516 = vperm.xlu0 %6515, %v43
    %v6517 = vpop.permute.xlu0 %6516
    %6519 = vset.pattern.permute.xlu0 0
    %6520 = vperm.xlu0 %6519, %v44
    %v6521 = vpop.permute.xlu0 %6520
    %6523 = vset.pattern.permute.xlu0 0
    %6524 = vperm.xlu0 %6523, %v45
    %v6525 = vpop.permute.xlu0 %6524
    %6527 = vset.pattern.permute.xlu0 0
    %6528 = vperm.xlu0 %6527, %v46
    %v6529 = vpop.permute.xlu0 %6528
    %6531 = vset.pattern.permute.xlu0 0
    %6532 = vperm.xlu0 %6531, %v47
    %v6533 = vpop.permute.xlu0 %6532
    %6535 = vset.pattern.permute.xlu0 0
    %6536 = vperm.xlu0 %6535, %v48
    %v6537 = vpop.permute.xlu0 %6536
    %6539 = vset.pattern.permute.xlu0 0
    %6540 = vperm.xlu0 %6539, %v49
    %v6541 = vpop.permute.xlu0 %6540
    %6543 = vset.pattern.permute.xlu0 0
    %6544 = vperm.xlu0 %6543, %v50
    %v6545 = vpop.permute.xlu0 %6544
    %6547 = vset.pattern.permute.xlu0 0
    %6548 = vperm.xlu0 %6547, %v51
    %v6549 = vpop.permute.xlu0 %6548
    %6551 = vset.pattern.permute.xlu0 0
    %6552 = vperm.xlu0 %6551, %v52
    %v6553 = vpop.permute.xlu0 %6552
    %6555 = vset.pattern.permute.xlu0 0
    %6556 = vperm.xlu0 %6555, %v53
    %v6557 = vpop.permute.xlu0 %6556
    %6559 = vset.pattern.permute.xlu0 0
    %6560 = vperm.xlu0 %6559, %v54
    %v6561 = vpop.permute.xlu0 %6560
    %6563 = vset.pattern.permute.xlu0 0
    %6564 = vperm.xlu0 %6563, %v55
    %v6565 = vpop.permute.xlu0 %6564
    %6567 = vset.pattern.permute.xlu0 0
    %6568 = vperm.xlu0 %6567, %v56
    %v6569 = vpop.permute.xlu0 %6568
    %6571 = vset.pattern.permute.xlu0 0
    %6572 = vperm.xlu0 %6571, %v57
    %v6573 = vpop.permute.xlu0 %6572
    %6575 = vset.pattern.permute.xlu0 0
    %6576 = vperm.xlu0 %6575, %v58
    %v6577 = vpop.permute.xlu0 %6576
    %6579 = vset.pattern.permute.xlu0 0
    %6580 = vperm.xlu0 %6579, %v59
    %v6581 = vpop.permute.xlu0 %6580
    %6583 = vset.pattern.permute.xlu0 0
    %6584 = vperm.xlu0 %6583, %v60
    %v6585 = vpop.permute.xlu0 %6584
    %6587 = vset.pattern.permute.xlu0 0
    %6588 = vperm.xlu0 %6587, %v61
    %v6589 = vpop.permute.xlu0 %6588
    %6591 = vset.pattern.permute.xlu0 0
    %6592 = vperm.xlu0 %6591, %v62
    %v6593 = vpop.permute.xlu0 %6592
    %6595 = vset.pattern.permute.xlu0 0
    %6596 = vperm.xlu0 %6595, %v63
    %v6597 = vpop.permute.xlu0 %6596
    %6599 = vset.pattern.permute.xlu0 0
    %6600 = vperm.xlu0 %6599, %v64
    %v6601 = vpop.permute.xlu0 %6600
    %6603 = vset.pattern.permute.xlu0 0
    %6604 = vperm.xlu0 %6603, %v65
    %v6605 = vpop.permute.xlu0 %6604
    %6607 = vset.pattern.permute.xlu0 0
    %6608 = vperm.xlu0 %6607, %v66
    %v6609 = vpop.permute.xlu0 %6608
    %6611 = vset.pattern.permute.xlu0 0
    %6612 = vperm.xlu0 %6611, %v67
    %v6613 = vpop.permute.xlu0 %6612
    %6615 = vset.pattern.permute.xlu0 0
    %6616 = vperm.xlu0 %6615, %v68
    %v6617 = vpop.permute.xlu0 %6616
    %6619 = vset.pattern.permute.xlu0 0
    %6620 = vperm.xlu0 %6619, %v69
    %v6621 = vpop.permute.xlu0 %6620
    %6623 = vset.pattern.permute.xlu0 0
    %6624 = vperm.xlu0 %6623, %v70
    %v6625 = vpop.permute.xlu0 %6624
    %6627 = vset.pattern.permute.xlu0 0
    %6628 = vperm.xlu0 %6627, %v71
    %v6629 = vpop.permute.xlu0 %6628
    %6631 = vset.pattern.permute.xlu0 0
    %6632 = vperm.xlu0 %6631, %v72
    %v6633 = vpop.permute.xlu0 %6632
    %6635 = vset.pattern.permute.xlu0 0
    %6636 = vperm.xlu0 %6635, %v73
    %v6637 = vpop.permute.xlu0 %6636
    %6639 = vset.pattern.permute.xlu0 0
    %6640 = vperm.xlu0 %6639, %v74
    %v6641 = vpop.permute.xlu0 %6640
    %6643 = vset.pattern.permute.xlu0 0
    %6644 = vperm.xlu0 %6643, %v75
    %v6645 = vpop.permute.xlu0 %6644
    %6647 = vset.pattern.permute.xlu0 0
    %6648 = vperm.xlu0 %6647, %v76
    %v6649 = vpop.permute.xlu0 %6648
    %6651 = vset.pattern.permute.xlu0 0
    %6652 = vperm.xlu0 %6651, %v77
    %v6653 = vpop.permute.xlu0 %6652
    %6655 = vset.pattern.permute.xlu0 0
    %6656 = vperm.xlu0 %6655, %v78
    %v6657 = vpop.permute.xlu0 %6656
    %6659 = vset.pattern.permute.xlu0 0
    %6660 = vperm.xlu0 %6659, %v79
    %v6661 = vpop.permute.xlu0 %6660
    %6663 = vset.pattern.permute.xlu0 0
    %6664 = vperm.xlu0 %6663, %v80
    %v6665 = vpop.permute.xlu0 %6664
    %6667 = vset.pattern.permute.xlu0 0
    %6668 = vperm.xlu0 %6667, %v81
    %v6669 = vpop.permute.xlu0 %6668
    %6671 = vset.pattern.permute.xlu0 0
    %6672 = vperm.xlu0 %6671, %v82
    %v6673 = vpop.permute.xlu0 %6672
    %6675 = vset.pattern.permute.xlu0 0
    %6676 = vperm.xlu0 %6675, %v83
    %v6677 = vpop.permute.xlu0 %6676
    %6679 = vset.pattern.permute.xlu0 0
    %6680 = vperm.xlu0 %6679, %v84
    %v6681 = vpop.permute.xlu0 %6680
    %6683 = vset.pattern.permute.xlu0 0
    %6684 = vperm.xlu0 %6683, %v85
    %v6685 = vpop.permute.xlu0 %6684
    %6687 = vset.pattern.permute.xlu0 0
    %6688 = vperm.xlu0 %6687, %v86
    %v6689 = vpop.permute.xlu0 %6688
    %6691 = vset.pattern.permute.xlu0 0
    %6692 = vperm.xlu0 %6691, %v87
    %v6693 = vpop.permute.xlu0 %6692
    %6695 = vset.pattern.permute.xlu0 0
    %6696 = vperm.xlu0 %6695, %v88
    %v6697 = vpop.permute.xlu0 %6696
    %6699 = vset.pattern.permute.xlu0 0
    %6700 = vperm.xlu0 %6699, %v89
    %v6701 = vpop.permute.xlu0 %6700
    %6703 = vset.pattern.permute.xlu0 0
    %6704 = vperm.xlu0 %6703, %v90
    %v6705 = vpop.permute.xlu0 %6704
    %6707 = vset.pattern.permute.xlu0 0
    %6708 = vperm.xlu0 %6707, %v91
    %v6709 = vpop.permute.xlu0 %6708
    %6711 = vset.pattern.permute.xlu0 0
    %6712 = vperm.xlu0 %6711, %v92
    %v6713 = vpop.permute.xlu0 %6712
    %6715 = vset.pattern.permute.xlu0 0
    %6716 = vperm.xlu0 %6715, %v93
    %v6717 = vpop.permute.xlu0 %6716
    %6719 = vset.pattern.permute.xlu0 0
    %6720 = vperm.xlu0 %6719, %v94
    %v6721 = vpop.permute.xlu0 %6720
    %6723 = vset.pattern.permute.xlu0 0
    %6724 = vperm.xlu0 %6723, %v95
    %v6725 = vpop.permute.xlu0 %6724
    %6727 = vset.pattern.permute.xlu0 0
    %6728 = vperm.xlu0 %6727, %v96
    %v6729 = vpop.permute.xlu0 %6728
    %6731 = vset.pattern.permute.xlu0 0
    %6732 = vperm.xlu0 %6731, %v97
    %v6733 = vpop.permute.xlu0 %6732
    %6735 = vset.pattern.permute.xlu0 0
    %6736 = vperm.xlu0 %6735, %v98
    %v6737 = vpop.permute.xlu0 %6736
    %6739 = vset.pattern.permute.xlu0 0
    %6740 = vperm.xlu0 %6739, %v99
    %v6741 = vpop.permute.xlu0 %6740
    %6743 = vset.pattern.permute.xlu0 0
    %6744 = vperm.xlu0 %6743, %v100
    %v6745 = vpop.permute.xlu0 %6744
    %6747 = vset.pattern.permute.xlu0 0
    %6748 = vperm.xlu0 %6747, %v101
    %v6749 = vpop.permute.xlu0 %6748
    %6751 = vset.pattern.permute.xlu0 0
    %6752 = vperm.xlu0 %6751, %v102
    %v6753 = vpop.permute.xlu0 %6752
    %6755 = vset.pattern.permute.xlu0 0
    %6756 = vperm.xlu0 %6755, %v103
    %v6757 = vpop.permute.xlu0 %6756
    %6759 = vset.pattern.permute.xlu0 0
    %6760 = vperm.xlu0 %6759, %v104
    %v6761 = vpop.permute.xlu0 %6760
    %6763 = vset.pattern.permute.xlu0 0
    %6764 = vperm.xlu0 %6763, %v105
    %v6765 = vpop.permute.xlu0 %6764
    %6767 = vset.pattern.permute.xlu0 0
    %6768 = vperm.xlu0 %6767, %v106
    %v6769 = vpop.permute.xlu0 %6768
    %6771 = vset.pattern.permute.xlu0 0
    %6772 = vperm.xlu0 %6771, %v107
    %v6773 = vpop.permute.xlu0 %6772
    %6775 = vset.pattern.permute.xlu0 0
    %6776 = vperm.xlu0 %6775, %v108
    %v6777 = vpop.permute.xlu0 %6776
    %6779 = vset.pattern.permute.xlu0 0
    %6780 = vperm.xlu0 %6779, %v109
    %v6781 = vpop.permute.xlu0 %6780
    %6783 = vset.pattern.permute.xlu0 0
    %6784 = vperm.xlu0 %6783, %v110
    %v6785 = vpop.permute.xlu0 %6784
    %6787 = vset.pattern.permute.xlu0 0
    %6788 = vperm.xlu0 %6787, %v111
    %v6789 = vpop.permute.xlu0 %6788
    %6791 = vset.pattern.permute.xlu0 0
    %6792 = vperm.xlu0 %6791, %v112
    %v6793 = vpop.permute.xlu0 %6792
    %6795 = vset.pattern.permute.xlu0 0
    %6796 = vperm.xlu0 %6795, %v113
    %v6797 = vpop.permute.xlu0 %6796
    %6799 = vset.pattern.permute.xlu0 0
    %6800 = vperm.xlu0 %6799, %v114
    %v6801 = vpop.permute.xlu0 %6800
    %6803 = vset.pattern.permute.xlu0 0
    %6804 = vperm.xlu0 %6803, %v115
    %v6805 = vpop.permute.xlu0 %6804
    %6807 = vset.pattern.permute.xlu0 0
    %6808 = vperm.xlu0 %6807, %v116
    %v6809 = vpop.permute.xlu0 %6808
    %6811 = vset.pattern.permute.xlu0 0
    %6812 = vperm.xlu0 %6811, %v117
    %v6813 = vpop.permute.xlu0 %6812
    %6815 = vset.pattern.permute.xlu0 0
    %6816 = vperm.xlu0 %6815, %v118
    %v6817 = vpop.permute.xlu0 %6816
    %6819 = vset.pattern.permute.xlu0 0
    %6820 = vperm.xlu0 %6819, %v119
    %v6821 = vpop.permute.xlu0 %6820
    %6823 = vset.pattern.permute.xlu0 0
    %6824 = vperm.xlu0 %6823, %v120
    %v6825 = vpop.permute.xlu0 %6824
    %6827 = vset.pattern.permute.xlu0 0
    %6828 = vperm.xlu0 %6827, %v121
    %v6829 = vpop.permute.xlu0 %6828
    %6831 = vset.pattern.permute.xlu0 0
    %6832 = vperm.xlu0 %6831, %v122
    %v6833 = vpop.permute.xlu0 %6832
    %6835 = vset.pattern.permute.xlu0 0
    %6836 = vperm.xlu0 %6835, %v123
    %v6837 = vpop.permute.xlu0 %6836
    %6839 = vset.pattern.permute.xlu0 0
    %6840 = vperm.xlu0 %6839, %v124
    %v6841 = vpop.permute.xlu0 %6840
    %v6842 = vrot.slane %v6413, 1
    %v6843 = vrot.slane %v6417, 1
    %v6844 = vsel %vm1452, %v6842, %v6843
    %v6845 = vrot.slane %v6421, 1
    %v6846 = vsel %vm1452, %v6843, %v6845
    %v6847 = vrot.slane %v6425, 1
    %v6848 = vsel %vm1452, %v6845, %v6847
    %v6849 = vrot.slane %v6429, 1
    %v6850 = vsel %vm1452, %v6847, %v6849
    %v6851 = vrot.slane %v6433, 1
    %v6852 = vsel %vm1452, %v6849, %v6851
    %v6853 = vrot.slane %v6437, 1
    %v6854 = vsel %vm1452, %v6851, %v6853
    %v6855 = vrot.slane %v6441, 1
    %v6856 = vsel %vm1452, %v6853, %v6855
    %v6857 = vrot.slane %v6445, 1
    %v6858 = vsel %vm1452, %v6855, %v6857
    %v6859 = vrot.slane %v6449, 1
    %v6860 = vsel %vm1452, %v6857, %v6859
    %v6861 = vrot.slane %v6453, 1
    %v6862 = vsel %vm1452, %v6859, %v6861
    %v6863 = vrot.slane %v6457, 1
    %v6864 = vsel %vm1452, %v6861, %v6863
    %v6865 = vrot.slane %v6461, 1
    %v6866 = vsel %vm1452, %v6863, %v6865
    %v6867 = vrot.slane %v6465, 1
    %v6868 = vsel %vm1452, %v6865, %v6867
    %v6869 = vrot.slane %v6469, 1
    %v6870 = vsel %vm1452, %v6867, %v6869
    %v6871 = vrot.slane %v6473, 1
    %v6872 = vsel %vm1452, %v6869, %v6871
    %v6873 = vrot.slane %v6477, 1
    %v6874 = vsel %vm1452, %v6871, %v6873
    %v6875 = vrot.slane %v6481, 1
    %v6876 = vsel %vm1452, %v6873, %v6875
    %v6877 = vrot.slane %v6485, 1
    %v6878 = vsel %vm1452, %v6875, %v6877
    %v6879 = vrot.slane %v6489, 1
    %v6880 = vsel %vm1452, %v6877, %v6879
    %v6881 = vrot.slane %v6493, 1
    %v6882 = vsel %vm1452, %v6879, %v6881
    %v6883 = vrot.slane %v6497, 1
    %v6884 = vsel %vm1452, %v6881, %v6883
    %v6885 = vrot.slane %v6501, 1
    %v6886 = vsel %vm1452, %v6883, %v6885
    %v6887 = vrot.slane %v6505, 1
    %v6888 = vsel %vm1452, %v6885, %v6887
    %v6889 = vrot.slane %v6509, 1
    %v6890 = vsel %vm1452, %v6887, %v6889
    %v6891 = vrot.slane %v6513, 1
    %v6892 = vsel %vm1452, %v6889, %v6891
    %v6893 = vrot.slane %v6517, 1
    %v6894 = vsel %vm1452, %v6891, %v6893
    %v6895 = vrot.slane %v6521, 1
    %v6896 = vsel %vm1452, %v6893, %v6895
    %v6897 = vrot.slane %v6525, 1
    %v6898 = vsel %vm1452, %v6895, %v6897
    %v6899 = vrot.slane %v6529, 1
    %v6900 = vsel %vm1452, %v6897, %v6899
    %v6901 = vrot.slane %v6533, 1
    %v6902 = vsel %vm1452, %v6899, %v6901
    %v6903 = vrot.slane %v6537, 1
    %v6904 = vsel %vm1452, %v6901, %v6903
    %v6905 = vrot.slane %v6541, 1
    %v6906 = vsel %vm1452, %v6903, %v6905
    %v6907 = vrot.slane %v6545, 1
    %v6908 = vsel %vm1452, %v6905, %v6907
    %v6909 = vrot.slane %v6549, 1
    %v6910 = vsel %vm1452, %v6907, %v6909
    %v6911 = vrot.slane %v6553, 1
    %v6912 = vsel %vm1452, %v6909, %v6911
    %v6913 = vrot.slane %v6557, 1
    %v6914 = vsel %vm1452, %v6911, %v6913
    %v6915 = vrot.slane %v6561, 1
    %v6916 = vsel %vm1452, %v6913, %v6915
    %v6917 = vrot.slane %v6565, 1
    %v6918 = vsel %vm1452, %v6915, %v6917
    %v6919 = vrot.slane %v6569, 1
    %v6920 = vsel %vm1452, %v6917, %v6919
    %v6921 = vrot.slane %v6573, 1
    %v6922 = vsel %vm1452, %v6919, %v6921
    %v6923 = vrot.slane %v6577, 1
    %v6924 = vsel %vm1452, %v6921, %v6923
    %v6925 = vrot.slane %v6581, 1
    %v6926 = vsel %vm1452, %v6923, %v6925
    %v6927 = vrot.slane %v6585, 1
    %v6928 = vsel %vm1452, %v6925, %v6927
    %v6929 = vrot.slane %v6589, 1
    %v6930 = vsel %vm1452, %v6927, %v6929
    %v6931 = vrot.slane %v6593, 1
    %v6932 = vsel %vm1452, %v6929, %v6931
    %v6933 = vrot.slane %v6597, 1
    %v6934 = vsel %vm1452, %v6931, %v6933
    %v6935 = vrot.slane %v6601, 1
    %v6936 = vsel %vm1452, %v6933, %v6935
    %v6937 = vrot.slane %v6605, 1
    %v6938 = vsel %vm1452, %v6935, %v6937
    %v6939 = vrot.slane %v6609, 1
    %v6940 = vsel %vm1452, %v6937, %v6939
    %v6941 = vrot.slane %v6613, 1
    %v6942 = vsel %vm1452, %v6939, %v6941
    %v6943 = vrot.slane %v6617, 1
    %v6944 = vsel %vm1452, %v6941, %v6943
    %v6945 = vrot.slane %v6621, 1
    %v6946 = vsel %vm1452, %v6943, %v6945
    %v6947 = vrot.slane %v6625, 1
    %v6948 = vsel %vm1452, %v6945, %v6947
    %v6949 = vrot.slane %v6629, 1
    %v6950 = vsel %vm1452, %v6947, %v6949
    %v6951 = vrot.slane %v6633, 1
    %v6952 = vsel %vm1452, %v6949, %v6951
    %v6953 = vrot.slane %v6637, 1
    %v6954 = vsel %vm1452, %v6951, %v6953
    %v6955 = vrot.slane %v6641, 1
    %v6956 = vsel %vm1452, %v6953, %v6955
    %v6957 = vrot.slane %v6645, 1
    %v6958 = vsel %vm1452, %v6955, %v6957
    %v6959 = vrot.slane %v6649, 1
    %v6960 = vsel %vm1452, %v6957, %v6959
    %v6961 = vrot.slane %v6653, 1
    %v6962 = vsel %vm1452, %v6959, %v6961
    %v6963 = vrot.slane %v6657, 1
    %v6964 = vsel %vm1452, %v6961, %v6963
    %v6965 = vrot.slane %v6661, 1
    %v6966 = vsel %vm1452, %v6963, %v6965
    %v6967 = vrot.slane %v6665, 1
    %v6968 = vsel %vm1452, %v6965, %v6967
    %v6969 = vrot.slane %v6669, 1
    %v6970 = vsel %vm1452, %v6967, %v6969
    %v6971 = vrot.slane %v6673, 1
    %v6972 = vsel %vm1452, %v6969, %v6971
    %v6973 = vrot.slane %v6677, 1
    %v6974 = vsel %vm1452, %v6971, %v6973
    %v6975 = vrot.slane %v6681, 1
    %v6976 = vsel %vm1452, %v6973, %v6975
    %v6977 = vrot.slane %v6685, 1
    %v6978 = vsel %vm1452, %v6975, %v6977
    %v6979 = vrot.slane %v6689, 1
    %v6980 = vsel %vm1452, %v6977, %v6979
    %v6981 = vrot.slane %v6693, 1
    %v6982 = vsel %vm1452, %v6979, %v6981
    %v6983 = vrot.slane %v6697, 1
    %v6984 = vsel %vm1452, %v6981, %v6983
    %v6985 = vrot.slane %v6701, 1
    %v6986 = vsel %vm1452, %v6983, %v6985
    %v6987 = vrot.slane %v6705, 1
    %v6988 = vsel %vm1452, %v6985, %v6987
    %v6989 = vrot.slane %v6709, 1
    %v6990 = vsel %vm1452, %v6987, %v6989
    %v6991 = vrot.slane %v6713, 1
    %v6992 = vsel %vm1452, %v6989, %v6991
    %v6993 = vrot.slane %v6717, 1
    %v6994 = vsel %vm1452, %v6991, %v6993
    %v6995 = vrot.slane %v6721, 1
    %v6996 = vsel %vm1452, %v6993, %v6995
    %v6997 = vrot.slane %v6725, 1
    %v6998 = vsel %vm1452, %v6995, %v6997
    %v6999 = vrot.slane %v6729, 1
    %v7000 = vsel %vm1452, %v6997, %v6999
    %v7001 = vrot.slane %v6733, 1
    %v7002 = vsel %vm1452, %v6999, %v7001
    %v7003 = vrot.slane %v6737, 1
    %v7004 = vsel %vm1452, %v7001, %v7003
    %v7005 = vrot.slane %v6741, 1
    %v7006 = vsel %vm1452, %v7003, %v7005
    %v7007 = vrot.slane %v6745, 1
    %v7008 = vsel %vm1452, %v7005, %v7007
    %v7009 = vrot.slane %v6749, 1
    %v7010 = vsel %vm1452, %v7007, %v7009
    %v7011 = vrot.slane %v6753, 1
    %v7012 = vsel %vm1452, %v7009, %v7011
    %v7013 = vrot.slane %v6757, 1
    %v7014 = vsel %vm1452, %v7011, %v7013
    %v7015 = vrot.slane %v6761, 1
    %v7016 = vsel %vm1452, %v7013, %v7015
    %v7017 = vrot.slane %v6765, 1
    %v7018 = vsel %vm1452, %v7015, %v7017
    %v7019 = vrot.slane %v6769, 1
    %v7020 = vsel %vm1452, %v7017, %v7019
    %v7021 = vrot.slane %v6773, 1
    %v7022 = vsel %vm1452, %v7019, %v7021
    %v7023 = vrot.slane %v6777, 1
    %v7024 = vsel %vm1452, %v7021, %v7023
    %v7025 = vrot.slane %v6781, 1
    %v7026 = vsel %vm1452, %v7023, %v7025
    %v7027 = vrot.slane %v6785, 1
    %v7028 = vsel %vm1452, %v7025, %v7027
    %v7029 = vrot.slane %v6789, 1
    %v7030 = vsel %vm1452, %v7027, %v7029
    %v7031 = vrot.slane %v6793, 1
    %v7032 = vsel %vm1452, %v7029, %v7031
    %v7033 = vrot.slane %v6797, 1
    %v7034 = vsel %vm1452, %v7031, %v7033
    %v7035 = vrot.slane %v6801, 1
    %v7036 = vsel %vm1452, %v7033, %v7035
    %v7037 = vrot.slane %v6805, 1
    %v7038 = vsel %vm1452, %v7035, %v7037
    %v7039 = vrot.slane %v6809, 1
    %v7040 = vsel %vm1452, %v7037, %v7039
    %v7041 = vrot.slane %v6813, 1
    %v7042 = vsel %vm1452, %v7039, %v7041
    %v7043 = vrot.slane %v6817, 1
    %v7044 = vsel %vm1452, %v7041, %v7043
    %v7045 = vrot.slane %v6821, 1
    %v7046 = vsel %vm1452, %v7043, %v7045
    %v7047 = vrot.slane %v6825, 1
    %v7048 = vsel %vm1452, %v7045, %v7047
    %v7049 = vrot.slane %v6829, 1
    %v7050 = vsel %vm1452, %v7047, %v7049
    %v7051 = vrot.slane %v6833, 1
    %v7052 = vsel %vm1452, %v7049, %v7051
    %v7053 = vrot.slane %v6837, 1
    %v7054 = vsel %vm1452, %v7051, %v7053
    %v7055 = vrot.slane %v6841, 1
    %v7056 = vsel %vm1452, %v7053, %v7055
    %v7166 = vmul.f32 %v6301, %v6842
    %v7167 = vmul.f32 %v6302, %v6844
    %v7168 = vmul.f32 %v6303, %v6846
    %v7169 = vmul.f32 %v6304, %v6848
    %v7170 = vmul.f32 %v6305, %v6850
    %v7171 = vmul.f32 %v6306, %v6852
    %v7172 = vmul.f32 %v6307, %v6854
    %v7173 = vmul.f32 %v6308, %v6856
    %v7174 = vmul.f32 %v6309, %v6858
    %v7175 = vmul.f32 %v6310, %v6860
    %v7176 = vmul.f32 %v6311, %v6862
    %v7177 = vmul.f32 %v6312, %v6864
    %v7178 = vmul.f32 %v6313, %v6866
    %v7179 = vmul.f32 %v6314, %v6868
    %v7180 = vmul.f32 %v6315, %v6870
    %v7181 = vmul.f32 %v6316, %v6872
    %v7182 = vmul.f32 %v6317, %v6874
    %v7183 = vmul.f32 %v6318, %v6876
    %v7184 = vmul.f32 %v6319, %v6878
    %v7185 = vmul.f32 %v6320, %v6880
    %v7186 = vmul.f32 %v6321, %v6882
    %v7187 = vmul.f32 %v6322, %v6884
    %v7188 = vmul.f32 %v6323, %v6886
    %v7189 = vmul.f32 %v6324, %v6888
    %v7190 = vmul.f32 %v6325, %v6890
    %v7191 = vmul.f32 %v6326, %v6892
    %v7192 = vmul.f32 %v6327, %v6894
    %v7193 = vmul.f32 %v6328, %v6896
    %v7194 = vmul.f32 %v6329, %v6898
    %v7195 = vmul.f32 %v6330, %v6900
    %v7196 = vmul.f32 %v6331, %v6902
    %v7197 = vmul.f32 %v6332, %v6904
    %v7198 = vmul.f32 %v6333, %v6906
    %v7199 = vmul.f32 %v6334, %v6908
    %v7200 = vmul.f32 %v6335, %v6910
    %v7201 = vmul.f32 %v6336, %v6912
    %v7202 = vmul.f32 %v6337, %v6914
    %v7203 = vmul.f32 %v6338, %v6916
    %v7204 = vmul.f32 %v6339, %v6918
    %v7205 = vmul.f32 %v6340, %v6920
    %v7206 = vmul.f32 %v6341, %v6922
    %v7207 = vmul.f32 %v6342, %v6924
    %v7208 = vmul.f32 %v6343, %v6926
    %v7209 = vmul.f32 %v6344, %v6928
    %v7210 = vmul.f32 %v6345, %v6930
    %v7211 = vmul.f32 %v6346, %v6932
    %v7212 = vmul.f32 %v6347, %v6934
    %v7213 = vmul.f32 %v6348, %v6936
    %v7214 = vmul.f32 %v6349, %v6938
    %v7215 = vmul.f32 %v6350, %v6940
    %v7216 = vmul.f32 %v6351, %v6942
    %v7217 = vmul.f32 %v6352, %v6944
    %v7218 = vmul.f32 %v6353, %v6946
    %v7219 = vmul.f32 %v6354, %v6948
    %v7220 = vmul.f32 %v6355, %v6950
    %v7221 = vmul.f32 %v6356, %v6952
    %v7222 = vmul.f32 %v6357, %v6954
    %v7223 = vmul.f32 %v6358, %v6956
    %v7224 = vmul.f32 %v6359, %v6958
    %v7225 = vmul.f32 %v6360, %v6960
    %v7226 = vmul.f32 %v6361, %v6962
    %v7227 = vmul.f32 %v6362, %v6964
    %v7228 = vmul.f32 %v6363, %v6966
    %v7229 = vmul.f32 %v6364, %v6968
    %v7230 = vmul.f32 %v6365, %v6970
    %v7231 = vmul.f32 %v6366, %v6972
    %v7232 = vmul.f32 %v6367, %v6974
    %v7233 = vmul.f32 %v6368, %v6976
    %v7234 = vmul.f32 %v6369, %v6978
    %v7235 = vmul.f32 %v6370, %v6980
    %v7236 = vmul.f32 %v6371, %v6982
    %v7237 = vmul.f32 %v6372, %v6984
    %v7238 = vmul.f32 %v6373, %v6986
    %v7239 = vmul.f32 %v6374, %v6988
    %v7240 = vmul.f32 %v6375, %v6990
    %v7241 = vmul.f32 %v6376, %v6992
    %v7242 = vmul.f32 %v6377, %v6994
    %v7243 = vmul.f32 %v6378, %v6996
    %v7244 = vmul.f32 %v6379, %v6998
    %v7245 = vmul.f32 %v6380, %v7000
    %v7246 = vmul.f32 %v6381, %v7002
    %v7247 = vmul.f32 %v6382, %v7004
    %v7248 = vmul.f32 %v6383, %v7006
    %v7249 = vmul.f32 %v6384, %v7008
    %v7250 = vmul.f32 %v6385, %v7010
    %v7251 = vmul.f32 %v6386, %v7012
    %v7252 = vmul.f32 %v6387, %v7014
    %v7253 = vmul.f32 %v6388, %v7016
    %v7254 = vmul.f32 %v6389, %v7018
    %v7255 = vmul.f32 %v6390, %v7020
    %v7256 = vmul.f32 %v6391, %v7022
    %v7257 = vmul.f32 %v6392, %v7024
    %v7258 = vmul.f32 %v6393, %v7026
    %v7259 = vmul.f32 %v6394, %v7028
    %v7260 = vmul.f32 %v6395, %v7030
    %v7261 = vmul.f32 %v6396, %v7032
    %v7262 = vmul.f32 %v6397, %v7034
    %v7263 = vmul.f32 %v6398, %v7036
    %v7264 = vmul.f32 %v6399, %v7038
    %v7265 = vmul.f32 %v6400, %v7040
    %v7266 = vmul.f32 %v6401, %v7042
    %v7267 = vmul.f32 %v6402, %v7044
    %v7268 = vmul.f32 %v6403, %v7046
    %v7269 = vmul.f32 %v6404, %v7048
    %v7270 = vmul.f32 %v6405, %v7050
    %v7271 = vmul.f32 %v6406, %v7052
    %v7272 = vmul.f32 %v6407, %v7054
    %v7273 = vmul.f32 %v6408, %v7056
    %v7274 = vmul.f32 %v6409, %v7055
    %v7275 = vpack.c.bf16 %v7167, %v7166
    %v7276 = vpack.c.bf16 %v7169, %v7168
    %v7277 = vpack.c.bf16 %v7171, %v7170
    %v7278 = vpack.c.bf16 %v7173, %v7172
    %v7279 = vpack.c.bf16 %v7175, %v7174
    %v7280 = vpack.c.bf16 %v7177, %v7176
    %v7281 = vpack.c.bf16 %v7179, %v7178
    %v7282 = vpack.c.bf16 %v7181, %v7180
    %v7283 = vpack.c.bf16 %v7183, %v7182
    %v7284 = vpack.c.bf16 %v7185, %v7184
    %v7285 = vpack.c.bf16 %v7187, %v7186
    %v7286 = vpack.c.bf16 %v7189, %v7188
    %v7287 = vpack.c.bf16 %v7191, %v7190
    %v7288 = vpack.c.bf16 %v7193, %v7192
    %v7289 = vpack.c.bf16 %v7195, %v7194
    %v7290 = vpack.c.bf16 %v7197, %v7196
    %v7291 = vpack.c.bf16 %v7199, %v7198
    %v7292 = vpack.c.bf16 %v7201, %v7200
    %v7293 = vpack.c.bf16 %v7203, %v7202
    %v7294 = vpack.c.bf16 %v7205, %v7204
    %v7295 = vpack.c.bf16 %v7207, %v7206
    %v7296 = vpack.c.bf16 %v7209, %v7208
    %v7297 = vpack.c.bf16 %v7211, %v7210
    %v7298 = vpack.c.bf16 %v7213, %v7212
    %v7299 = vpack.c.bf16 %v7215, %v7214
    %v7300 = vpack.c.bf16 %v7217, %v7216
    %v7301 = vpack.c.bf16 %v7219, %v7218
    %v7302 = vpack.c.bf16 %v7221, %v7220
    %v7303 = vpack.c.bf16 %v7223, %v7222
    %v7304 = vpack.c.bf16 %v7225, %v7224
    %v7305 = vpack.c.bf16 %v7227, %v7226
    %v7306 = vpack.c.bf16 %v7229, %v7228
    %v7307 = vpack.c.bf16 %v7231, %v7230
    %v7308 = vpack.c.bf16 %v7233, %v7232
    %v7309 = vpack.c.bf16 %v7235, %v7234
    %v7310 = vpack.c.bf16 %v7237, %v7236
    %v7311 = vpack.c.bf16 %v7239, %v7238
    %v7312 = vpack.c.bf16 %v7241, %v7240
    %v7313 = vpack.c.bf16 %v7243, %v7242
    %v7314 = vpack.c.bf16 %v7245, %v7244
    %v7315 = vpack.c.bf16 %v7247, %v7246
    %v7316 = vpack.c.bf16 %v7249, %v7248
    %v7317 = vpack.c.bf16 %v7251, %v7250
    %v7318 = vpack.c.bf16 %v7253, %v7252
    %v7319 = vpack.c.bf16 %v7255, %v7254
    %v7320 = vpack.c.bf16 %v7257, %v7256
    %v7321 = vpack.c.bf16 %v7259, %v7258
    %v7322 = vpack.c.bf16 %v7261, %v7260
    %v7323 = vpack.c.bf16 %v7263, %v7262
    %v7324 = vpack.c.bf16 %v7265, %v7264
    %v7325 = vpack.c.bf16 %v7267, %v7266
    %v7326 = vpack.c.bf16 %v7269, %v7268
    %v7327 = vpack.c.bf16 %v7271, %v7270
    %v7328 = vpack.c.bf16 %v7273, %v7272
    %v7329 = vpack.c.bf16 %v7274, %v7274
    %v7385 = vunpack.c.l.b16 %v7275
    %v7386 = vunpack.c.h.b16 %v7275
    %v7387 = vunpack.c.l.b16 %v7276
    %v7388 = vunpack.c.h.b16 %v7276
    %v7389 = vunpack.c.l.b16 %v7277
    %v7390 = vunpack.c.h.b16 %v7277
    %v7391 = vunpack.c.l.b16 %v7278
    %v7392 = vunpack.c.h.b16 %v7278
    %v7393 = vunpack.c.l.b16 %v7279
    %v7394 = vunpack.c.h.b16 %v7279
    %v7395 = vunpack.c.l.b16 %v7280
    %v7396 = vunpack.c.h.b16 %v7280
    %v7397 = vunpack.c.l.b16 %v7281
    %v7398 = vunpack.c.h.b16 %v7281
    %v7399 = vunpack.c.l.b16 %v7282
    %v7400 = vunpack.c.h.b16 %v7282
    %v7401 = vunpack.c.l.b16 %v7283
    %v7402 = vunpack.c.h.b16 %v7283
    %v7403 = vunpack.c.l.b16 %v7284
    %v7404 = vunpack.c.h.b16 %v7284
    %v7405 = vunpack.c.l.b16 %v7285
    %v7406 = vunpack.c.h.b16 %v7285
    %v7407 = vunpack.c.l.b16 %v7286
    %v7408 = vunpack.c.h.b16 %v7286
    %v7409 = vunpack.c.l.b16 %v7287
    %v7410 = vunpack.c.h.b16 %v7287
    %v7411 = vunpack.c.l.b16 %v7288
    %v7412 = vunpack.c.h.b16 %v7288
    %v7413 = vunpack.c.l.b16 %v7289
    %v7414 = vunpack.c.h.b16 %v7289
    %v7415 = vunpack.c.l.b16 %v7290
    %v7416 = vunpack.c.h.b16 %v7290
    %v7417 = vunpack.c.l.b16 %v7291
    %v7418 = vunpack.c.h.b16 %v7291
    %v7419 = vunpack.c.l.b16 %v7292
    %v7420 = vunpack.c.h.b16 %v7292
    %v7421 = vunpack.c.l.b16 %v7293
    %v7422 = vunpack.c.h.b16 %v7293
    %v7423 = vunpack.c.l.b16 %v7294
    %v7424 = vunpack.c.h.b16 %v7294
    %v7425 = vunpack.c.l.b16 %v7295
    %v7426 = vunpack.c.h.b16 %v7295
    %v7427 = vunpack.c.l.b16 %v7296
    %v7428 = vunpack.c.h.b16 %v7296
    %v7429 = vunpack.c.l.b16 %v7297
    %v7430 = vunpack.c.h.b16 %v7297
    %v7431 = vunpack.c.l.b16 %v7298
    %v7432 = vunpack.c.h.b16 %v7298
    %v7433 = vunpack.c.l.b16 %v7299
    %v7434 = vunpack.c.h.b16 %v7299
    %v7435 = vunpack.c.l.b16 %v7300
    %v7436 = vunpack.c.h.b16 %v7300
    %v7437 = vunpack.c.l.b16 %v7301
    %v7438 = vunpack.c.h.b16 %v7301
    %v7439 = vunpack.c.l.b16 %v7302
    %v7440 = vunpack.c.h.b16 %v7302
    %v7441 = vunpack.c.l.b16 %v7303
    %v7442 = vunpack.c.h.b16 %v7303
    %v7443 = vunpack.c.l.b16 %v7304
    %v7444 = vunpack.c.h.b16 %v7304
    %v7445 = vunpack.c.l.b16 %v7305
    %v7446 = vunpack.c.h.b16 %v7305
    %v7447 = vunpack.c.l.b16 %v7306
    %v7448 = vunpack.c.h.b16 %v7306
    %v7449 = vunpack.c.l.b16 %v7307
    %v7450 = vunpack.c.h.b16 %v7307
    %v7451 = vunpack.c.l.b16 %v7308
    %v7452 = vunpack.c.h.b16 %v7308
    %v7453 = vunpack.c.l.b16 %v7309
    %v7454 = vunpack.c.h.b16 %v7309
    %v7455 = vunpack.c.l.b16 %v7310
    %v7456 = vunpack.c.h.b16 %v7310
    %v7457 = vunpack.c.l.b16 %v7311
    %v7458 = vunpack.c.h.b16 %v7311
    %v7459 = vunpack.c.l.b16 %v7312
    %v7460 = vunpack.c.h.b16 %v7312
    %v7461 = vunpack.c.l.b16 %v7313
    %v7462 = vunpack.c.h.b16 %v7313
    %v7463 = vunpack.c.l.b16 %v7314
    %v7464 = vunpack.c.h.b16 %v7314
    %v7465 = vunpack.c.l.b16 %v7315
    %v7466 = vunpack.c.h.b16 %v7315
    %v7467 = vunpack.c.l.b16 %v7316
    %v7468 = vunpack.c.h.b16 %v7316
    %v7469 = vunpack.c.l.b16 %v7317
    %v7470 = vunpack.c.h.b16 %v7317
    %v7471 = vunpack.c.l.b16 %v7318
    %v7472 = vunpack.c.h.b16 %v7318
    %v7473 = vunpack.c.l.b16 %v7319
    %v7474 = vunpack.c.h.b16 %v7319
    %v7475 = vunpack.c.l.b16 %v7320
    %v7476 = vunpack.c.h.b16 %v7320
    %v7477 = vunpack.c.l.b16 %v7321
    %v7478 = vunpack.c.h.b16 %v7321
    %v7479 = vunpack.c.l.b16 %v7322
    %v7480 = vunpack.c.h.b16 %v7322
    %v7481 = vunpack.c.l.b16 %v7323
    %v7482 = vunpack.c.h.b16 %v7323
    %v7483 = vunpack.c.l.b16 %v7324
    %v7484 = vunpack.c.h.b16 %v7324
    %v7485 = vunpack.c.l.b16 %v7325
    %v7486 = vunpack.c.h.b16 %v7325
    %v7487 = vunpack.c.l.b16 %v7326
    %v7488 = vunpack.c.h.b16 %v7326
    %v7489 = vunpack.c.l.b16 %v7327
    %v7490 = vunpack.c.h.b16 %v7327
    %v7491 = vunpack.c.l.b16 %v7328
    %v7492 = vunpack.c.h.b16 %v7328
    %v7493 = vunpack.c.l.b16 %v7329
    %v7494 = vpack.c.b16 %v7385, %v7385
    %v7495 = vpack.c.b16 %v7386, %v7386
    %v7496 = vpack.c.b16 %v7387, %v7387
    %v7497 = vpack.c.b16 %v7388, %v7388
    %v7498 = vpack.c.b16 %v7389, %v7389
    %v7499 = vpack.c.b16 %v7390, %v7390
    %v7500 = vpack.c.b16 %v7391, %v7391
    %v7501 = vpack.c.b16 %v7392, %v7392
    %v7502 = vpack.c.b16 %v7393, %v7393
    %v7503 = vpack.c.b16 %v7394, %v7394
    %v7504 = vpack.c.b16 %v7395, %v7395
    %v7505 = vpack.c.b16 %v7396, %v7396
    %v7506 = vpack.c.b16 %v7397, %v7397
    %v7507 = vpack.c.b16 %v7398, %v7398
    %v7508 = vpack.c.b16 %v7399, %v7399
    %v7509 = vpack.c.b16 %v7400, %v7400
    %v7510 = vpack.c.b16 %v7401, %v7401
    %v7511 = vpack.c.b16 %v7402, %v7402
    %v7512 = vpack.c.b16 %v7403, %v7403
    %v7513 = vpack.c.b16 %v7404, %v7404
    %v7514 = vpack.c.b16 %v7405, %v7405
    %v7515 = vpack.c.b16 %v7406, %v7406
    %v7516 = vpack.c.b16 %v7407, %v7407
    %v7517 = vpack.c.b16 %v7408, %v7408
    %v7518 = vpack.c.b16 %v7409, %v7409
    %v7519 = vpack.c.b16 %v7410, %v7410
    %v7520 = vpack.c.b16 %v7411, %v7411
    %v7521 = vpack.c.b16 %v7412, %v7412
    %v7522 = vpack.c.b16 %v7413, %v7413
    %v7523 = vpack.c.b16 %v7414, %v7414
    %v7524 = vpack.c.b16 %v7415, %v7415
    %v7525 = vpack.c.b16 %v7416, %v7416
    %v7526 = vpack.c.b16 %v7417, %v7417
    %v7527 = vpack.c.b16 %v7418, %v7418
    %v7528 = vpack.c.b16 %v7419, %v7419
    %v7529 = vpack.c.b16 %v7420, %v7420
    %v7530 = vpack.c.b16 %v7421, %v7421
    %v7531 = vpack.c.b16 %v7422, %v7422
    %v7532 = vpack.c.b16 %v7423, %v7423
    %v7533 = vpack.c.b16 %v7424, %v7424
    %v7534 = vpack.c.b16 %v7425, %v7425
    %v7535 = vpack.c.b16 %v7426, %v7426
    %v7536 = vpack.c.b16 %v7427, %v7427
    %v7537 = vpack.c.b16 %v7428, %v7428
    %v7538 = vpack.c.b16 %v7429, %v7429
    %v7539 = vpack.c.b16 %v7430, %v7430
    %v7540 = vpack.c.b16 %v7431, %v7431
    %v7541 = vpack.c.b16 %v7432, %v7432
    %v7542 = vpack.c.b16 %v7433, %v7433
    %v7543 = vpack.c.b16 %v7434, %v7434
    %v7544 = vpack.c.b16 %v7435, %v7435
    %v7545 = vpack.c.b16 %v7436, %v7436
    %v7546 = vpack.c.b16 %v7437, %v7437
    %v7547 = vpack.c.b16 %v7438, %v7438
    %v7548 = vpack.c.b16 %v7439, %v7439
    %v7549 = vpack.c.b16 %v7440, %v7440
    %v7550 = vpack.c.b16 %v7441, %v7441
    %v7551 = vpack.c.b16 %v7442, %v7442
    %v7552 = vpack.c.b16 %v7443, %v7443
    %v7553 = vpack.c.b16 %v7444, %v7444
    %v7554 = vpack.c.b16 %v7445, %v7445
    %v7555 = vpack.c.b16 %v7446, %v7446
    %v7556 = vpack.c.b16 %v7447, %v7447
    %v7557 = vpack.c.b16 %v7448, %v7448
    %v7558 = vpack.c.b16 %v7449, %v7449
    %v7559 = vpack.c.b16 %v7450, %v7450
    %v7560 = vpack.c.b16 %v7451, %v7451
    %v7561 = vpack.c.b16 %v7452, %v7452
    %v7562 = vpack.c.b16 %v7453, %v7453
    %v7563 = vpack.c.b16 %v7454, %v7454
    %v7564 = vpack.c.b16 %v7455, %v7455
    %v7565 = vpack.c.b16 %v7456, %v7456
    %v7566 = vpack.c.b16 %v7457, %v7457
    %v7567 = vpack.c.b16 %v7458, %v7458
    %v7568 = vpack.c.b16 %v7459, %v7459
    %v7569 = vpack.c.b16 %v7460, %v7460
    %v7570 = vpack.c.b16 %v7461, %v7461
    %v7571 = vpack.c.b16 %v7462, %v7462
    %v7572 = vpack.c.b16 %v7463, %v7463
    %v7573 = vpack.c.b16 %v7464, %v7464
    %v7574 = vpack.c.b16 %v7465, %v7465
    %v7575 = vpack.c.b16 %v7466, %v7466
    %v7576 = vpack.c.b16 %v7467, %v7467
    %v7577 = vpack.c.b16 %v7468, %v7468
    %v7578 = vpack.c.b16 %v7469, %v7469
    %v7579 = vpack.c.b16 %v7470, %v7470
    %v7580 = vpack.c.b16 %v7471, %v7471
    %v7581 = vpack.c.b16 %v7472, %v7472
    %v7582 = vpack.c.b16 %v7473, %v7473
    %v7583 = vpack.c.b16 %v7474, %v7474
    %v7584 = vpack.c.b16 %v7475, %v7475
    %v7585 = vpack.c.b16 %v7476, %v7476
    %v7586 = vpack.c.b16 %v7477, %v7477
    %v7587 = vpack.c.b16 %v7478, %v7478
    %v7588 = vpack.c.b16 %v7479, %v7479
    %v7589 = vpack.c.b16 %v7480, %v7480
    %v7590 = vpack.c.b16 %v7481, %v7481
    %v7591 = vpack.c.b16 %v7482, %v7482
    %v7592 = vpack.c.b16 %v7483, %v7483
    %v7593 = vpack.c.b16 %v7484, %v7484
    %v7594 = vpack.c.b16 %v7485, %v7485
    %v7595 = vpack.c.b16 %v7486, %v7486
    %v7596 = vpack.c.b16 %v7487, %v7487
    %v7597 = vpack.c.b16 %v7488, %v7488
    %v7598 = vpack.c.b16 %v7489, %v7489
    %v7599 = vpack.c.b16 %v7490, %v7490
    %v7600 = vpack.c.b16 %v7491, %v7491
    %v7601 = vpack.c.b16 %v7492, %v7492
    %v7602 = vpack.c.b16 %v7493, %v7493
    %vm7603 = vsmask.f32 256
    %vm7604 = vsmask.f32 4368
    %vm7605 = vmor %vm7603, %vm7604
    %v7607 = vshrl.u32 %v7494, 16
    %v7609 = vrot.slane %v7607, 7
    %v7610 = vrot.slane %v7609, 4
    %v7612 = vshrl.u32 %v7495, 16
    %v7614 = vrot.slane %v7612, 7
    %v7615 = vshll.u32 %v7495, 16
    %v7617 = vor.u32 %v7614, %v7615
    %v7618 = vsel %vm7605, %v7610, %v7617
    %v7619 = vrot.slane %v7614, 4
    %v7621 = vshrl.u32 %v7496, 16
    %v7623 = vrot.slane %v7621, 7
    %v7624 = vshll.u32 %v7496, 16
    %v7626 = vor.u32 %v7623, %v7624
    %v7627 = vsel %vm7605, %v7619, %v7626
    %v7628 = vrot.slane %v7623, 4
    %v7630 = vshrl.u32 %v7497, 16
    %v7632 = vrot.slane %v7630, 7
    %v7633 = vshll.u32 %v7497, 16
    %v7635 = vor.u32 %v7632, %v7633
    %v7636 = vsel %vm7605, %v7628, %v7635
    %v7637 = vrot.slane %v7632, 4
    %v7639 = vshrl.u32 %v7498, 16
    %v7641 = vrot.slane %v7639, 7
    %v7642 = vshll.u32 %v7498, 16
    %v7644 = vor.u32 %v7641, %v7642
    %v7645 = vsel %vm7605, %v7637, %v7644
    %v7646 = vrot.slane %v7641, 4
    %v7648 = vshrl.u32 %v7499, 16
    %v7650 = vrot.slane %v7648, 7
    %v7651 = vshll.u32 %v7499, 16
    %v7653 = vor.u32 %v7650, %v7651
    %v7654 = vsel %vm7605, %v7646, %v7653
    %v7655 = vrot.slane %v7650, 4
    %v7657 = vshrl.u32 %v7500, 16
    %v7659 = vrot.slane %v7657, 7
    %v7660 = vshll.u32 %v7500, 16
    %v7662 = vor.u32 %v7659, %v7660
    %v7663 = vsel %vm7605, %v7655, %v7662
    %v7664 = vrot.slane %v7659, 4
    %v7666 = vshrl.u32 %v7501, 16
    %v7668 = vrot.slane %v7666, 7
    %v7669 = vshll.u32 %v7501, 16
    %v7671 = vor.u32 %v7668, %v7669
    %v7672 = vsel %vm7605, %v7664, %v7671
    %v7673 = vrot.slane %v7668, 4
    %v7675 = vshrl.u32 %v7502, 16
    %v7677 = vrot.slane %v7675, 7
    %v7678 = vshll.u32 %v7502, 16
    %v7680 = vor.u32 %v7677, %v7678
    %v7681 = vsel %vm7605, %v7673, %v7680
    %v7682 = vrot.slane %v7677, 4
    %v7684 = vshrl.u32 %v7503, 16
    %v7686 = vrot.slane %v7684, 7
    %v7687 = vshll.u32 %v7503, 16
    %v7689 = vor.u32 %v7686, %v7687
    %v7690 = vsel %vm7605, %v7682, %v7689
    %v7691 = vrot.slane %v7686, 4
    %v7693 = vshrl.u32 %v7504, 16
    %v7695 = vrot.slane %v7693, 7
    %v7696 = vshll.u32 %v7504, 16
    %v7698 = vor.u32 %v7695, %v7696
    %v7699 = vsel %vm7605, %v7691, %v7698
    %v7700 = vrot.slane %v7695, 4
    %v7702 = vshrl.u32 %v7505, 16
    %v7704 = vrot.slane %v7702, 7
    %v7705 = vshll.u32 %v7505, 16
    %v7707 = vor.u32 %v7704, %v7705
    %v7708 = vsel %vm7605, %v7700, %v7707
    %v7709 = vrot.slane %v7704, 4
    %v7711 = vshrl.u32 %v7506, 16
    %v7713 = vrot.slane %v7711, 7
    %v7714 = vshll.u32 %v7506, 16
    %v7716 = vor.u32 %v7713, %v7714
    %v7717 = vsel %vm7605, %v7709, %v7716
    %v7718 = vrot.slane %v7713, 4
    %v7720 = vshrl.u32 %v7507, 16
    %v7722 = vrot.slane %v7720, 7
    %v7723 = vshll.u32 %v7507, 16
    %v7725 = vor.u32 %v7722, %v7723
    %v7726 = vsel %vm7605, %v7718, %v7725
    %v7727 = vrot.slane %v7722, 4
    %v7729 = vshrl.u32 %v7508, 16
    %v7731 = vrot.slane %v7729, 7
    %v7732 = vshll.u32 %v7508, 16
    %v7734 = vor.u32 %v7731, %v7732
    %v7735 = vsel %vm7605, %v7727, %v7734
    %v7736 = vrot.slane %v7731, 4
    %v7738 = vshrl.u32 %v7509, 16
    %v7740 = vrot.slane %v7738, 7
    %v7741 = vshll.u32 %v7509, 16
    %v7743 = vor.u32 %v7740, %v7741
    %v7744 = vsel %vm7605, %v7736, %v7743
    %v7745 = vrot.slane %v7740, 4
    %v7747 = vshrl.u32 %v7510, 16
    %v7749 = vrot.slane %v7747, 7
    %v7750 = vshll.u32 %v7510, 16
    %v7752 = vor.u32 %v7749, %v7750
    %v7753 = vsel %vm7605, %v7745, %v7752
    %v7754 = vrot.slane %v7749, 4
    %v7756 = vshrl.u32 %v7511, 16
    %v7758 = vrot.slane %v7756, 7
    %v7759 = vshll.u32 %v7511, 16
    %v7761 = vor.u32 %v7758, %v7759
    %v7762 = vsel %vm7605, %v7754, %v7761
    %v7763 = vrot.slane %v7758, 4
    %v7765 = vshrl.u32 %v7512, 16
    %v7767 = vrot.slane %v7765, 7
    %v7768 = vshll.u32 %v7512, 16
    %v7770 = vor.u32 %v7767, %v7768
    %v7771 = vsel %vm7605, %v7763, %v7770
    %v7772 = vrot.slane %v7767, 4
    %v7774 = vshrl.u32 %v7513, 16
    %v7776 = vrot.slane %v7774, 7
    %v7777 = vshll.u32 %v7513, 16
    %v7779 = vor.u32 %v7776, %v7777
    %v7780 = vsel %vm7605, %v7772, %v7779
    %v7781 = vrot.slane %v7776, 4
    %v7783 = vshrl.u32 %v7514, 16
    %v7785 = vrot.slane %v7783, 7
    %v7786 = vshll.u32 %v7514, 16
    %v7788 = vor.u32 %v7785, %v7786
    %v7789 = vsel %vm7605, %v7781, %v7788
    %v7790 = vrot.slane %v7785, 4
    %v7792 = vshrl.u32 %v7515, 16
    %v7794 = vrot.slane %v7792, 7
    %v7795 = vshll.u32 %v7515, 16
    %v7797 = vor.u32 %v7794, %v7795
    %v7798 = vsel %vm7605, %v7790, %v7797
    %v7799 = vrot.slane %v7794, 4
    %v7801 = vshrl.u32 %v7516, 16
    %v7803 = vrot.slane %v7801, 7
    %v7804 = vshll.u32 %v7516, 16
    %v7806 = vor.u32 %v7803, %v7804
    %v7807 = vsel %vm7605, %v7799, %v7806
    %v7808 = vrot.slane %v7803, 4
    %v7810 = vshrl.u32 %v7517, 16
    %v7812 = vrot.slane %v7810, 7
    %v7813 = vshll.u32 %v7517, 16
    %v7815 = vor.u32 %v7812, %v7813
    %v7816 = vsel %vm7605, %v7808, %v7815
    %v7817 = vrot.slane %v7812, 4
    %v7819 = vshrl.u32 %v7518, 16
    %v7821 = vrot.slane %v7819, 7
    %v7822 = vshll.u32 %v7518, 16
    %v7824 = vor.u32 %v7821, %v7822
    %v7825 = vsel %vm7605, %v7817, %v7824
    %v7826 = vrot.slane %v7821, 4
    %v7828 = vshrl.u32 %v7519, 16
    %v7830 = vrot.slane %v7828, 7
    %v7831 = vshll.u32 %v7519, 16
    %v7833 = vor.u32 %v7830, %v7831
    %v7834 = vsel %vm7605, %v7826, %v7833
    %v7835 = vrot.slane %v7830, 4
    %v7837 = vshrl.u32 %v7520, 16
    %v7839 = vrot.slane %v7837, 7
    %v7840 = vshll.u32 %v7520, 16
    %v7842 = vor.u32 %v7839, %v7840
    %v7843 = vsel %vm7605, %v7835, %v7842
    %v7844 = vrot.slane %v7839, 4
    %v7846 = vshrl.u32 %v7521, 16
    %v7848 = vrot.slane %v7846, 7
    %v7849 = vshll.u32 %v7521, 16
    %v7851 = vor.u32 %v7848, %v7849
    %v7852 = vsel %vm7605, %v7844, %v7851
    %v7853 = vrot.slane %v7848, 4
    %v7855 = vshrl.u32 %v7522, 16
    %v7857 = vrot.slane %v7855, 7
    %v7858 = vshll.u32 %v7522, 16
    %v7860 = vor.u32 %v7857, %v7858
    %v7861 = vsel %vm7605, %v7853, %v7860
    %v7862 = vrot.slane %v7857, 4
    %v7864 = vshrl.u32 %v7523, 16
    %v7866 = vrot.slane %v7864, 7
    %v7867 = vshll.u32 %v7523, 16
    %v7869 = vor.u32 %v7866, %v7867
    %v7870 = vsel %vm7605, %v7862, %v7869
    %v7871 = vrot.slane %v7866, 4
    %v7873 = vshrl.u32 %v7524, 16
    %v7875 = vrot.slane %v7873, 7
    %v7876 = vshll.u32 %v7524, 16
    %v7878 = vor.u32 %v7875, %v7876
    %v7879 = vsel %vm7605, %v7871, %v7878
    %v7880 = vrot.slane %v7875, 4
    %v7882 = vshrl.u32 %v7525, 16
    %v7884 = vrot.slane %v7882, 7
    %v7885 = vshll.u32 %v7525, 16
    %v7887 = vor.u32 %v7884, %v7885
    %v7888 = vsel %vm7605, %v7880, %v7887
    %v7889 = vrot.slane %v7884, 4
    %v7891 = vshrl.u32 %v7526, 16
    %v7893 = vrot.slane %v7891, 7
    %v7894 = vshll.u32 %v7526, 16
    %v7896 = vor.u32 %v7893, %v7894
    %v7897 = vsel %vm7605, %v7889, %v7896
    %v7898 = vrot.slane %v7893, 4
    %v7900 = vshrl.u32 %v7527, 16
    %v7902 = vrot.slane %v7900, 7
    %v7903 = vshll.u32 %v7527, 16
    %v7905 = vor.u32 %v7902, %v7903
    %v7906 = vsel %vm7605, %v7898, %v7905
    %v7907 = vrot.slane %v7902, 4
    %v7909 = vshrl.u32 %v7528, 16
    %v7911 = vrot.slane %v7909, 7
    %v7912 = vshll.u32 %v7528, 16
    %v7914 = vor.u32 %v7911, %v7912
    %v7915 = vsel %vm7605, %v7907, %v7914
    %v7916 = vrot.slane %v7911, 4
    %v7918 = vshrl.u32 %v7529, 16
    %v7920 = vrot.slane %v7918, 7
    %v7921 = vshll.u32 %v7529, 16
    %v7923 = vor.u32 %v7920, %v7921
    %v7924 = vsel %vm7605, %v7916, %v7923
    %v7925 = vrot.slane %v7920, 4
    %v7927 = vshrl.u32 %v7530, 16
    %v7929 = vrot.slane %v7927, 7
    %v7930 = vshll.u32 %v7530, 16
    %v7932 = vor.u32 %v7929, %v7930
    %v7933 = vsel %vm7605, %v7925, %v7932
    %v7934 = vrot.slane %v7929, 4
    %v7936 = vshrl.u32 %v7531, 16
    %v7938 = vrot.slane %v7936, 7
    %v7939 = vshll.u32 %v7531, 16
    %v7941 = vor.u32 %v7938, %v7939
    %v7942 = vsel %vm7605, %v7934, %v7941
    %v7943 = vrot.slane %v7938, 4
    %v7945 = vshrl.u32 %v7532, 16
    %v7947 = vrot.slane %v7945, 7
    %v7948 = vshll.u32 %v7532, 16
    %v7950 = vor.u32 %v7947, %v7948
    %v7951 = vsel %vm7605, %v7943, %v7950
    %v7952 = vrot.slane %v7947, 4
    %v7954 = vshrl.u32 %v7533, 16
    %v7956 = vrot.slane %v7954, 7
    %v7957 = vshll.u32 %v7533, 16
    %v7959 = vor.u32 %v7956, %v7957
    %v7960 = vsel %vm7605, %v7952, %v7959
    %v7961 = vrot.slane %v7956, 4
    %v7963 = vshrl.u32 %v7534, 16
    %v7965 = vrot.slane %v7963, 7
    %v7966 = vshll.u32 %v7534, 16
    %v7968 = vor.u32 %v7965, %v7966
    %v7969 = vsel %vm7605, %v7961, %v7968
    %v7970 = vrot.slane %v7965, 4
    %v7972 = vshrl.u32 %v7535, 16
    %v7974 = vrot.slane %v7972, 7
    %v7975 = vshll.u32 %v7535, 16
    %v7977 = vor.u32 %v7974, %v7975
    %v7978 = vsel %vm7605, %v7970, %v7977
    %v7979 = vrot.slane %v7974, 4
    %v7981 = vshrl.u32 %v7536, 16
    %v7983 = vrot.slane %v7981, 7
    %v7984 = vshll.u32 %v7536, 16
    %v7986 = vor.u32 %v7983, %v7984
    %v7987 = vsel %vm7605, %v7979, %v7986
    %v7988 = vrot.slane %v7983, 4
    %v7990 = vshrl.u32 %v7537, 16
    %v7992 = vrot.slane %v7990, 7
    %v7993 = vshll.u32 %v7537, 16
    %v7995 = vor.u32 %v7992, %v7993
    %v7996 = vsel %vm7605, %v7988, %v7995
    %v7997 = vrot.slane %v7992, 4
    %v7999 = vshrl.u32 %v7538, 16
    %v8001 = vrot.slane %v7999, 7
    %v8002 = vshll.u32 %v7538, 16
    %v8004 = vor.u32 %v8001, %v8002
    %v8005 = vsel %vm7605, %v7997, %v8004
    %v8006 = vrot.slane %v8001, 4
    %v8008 = vshrl.u32 %v7539, 16
    %v8010 = vrot.slane %v8008, 7
    %v8011 = vshll.u32 %v7539, 16
    %v8013 = vor.u32 %v8010, %v8011
    %v8014 = vsel %vm7605, %v8006, %v8013
    %v8015 = vrot.slane %v8010, 4
    %v8017 = vshrl.u32 %v7540, 16
    %v8019 = vrot.slane %v8017, 7
    %v8020 = vshll.u32 %v7540, 16
    %v8022 = vor.u32 %v8019, %v8020
    %v8023 = vsel %vm7605, %v8015, %v8022
    %v8024 = vrot.slane %v8019, 4
    %v8026 = vshrl.u32 %v7541, 16
    %v8028 = vrot.slane %v8026, 7
    %v8029 = vshll.u32 %v7541, 16
    %v8031 = vor.u32 %v8028, %v8029
    %v8032 = vsel %vm7605, %v8024, %v8031
    %v8033 = vrot.slane %v8028, 4
    %v8035 = vshrl.u32 %v7542, 16
    %v8037 = vrot.slane %v8035, 7
    %v8038 = vshll.u32 %v7542, 16
    %v8040 = vor.u32 %v8037, %v8038
    %v8041 = vsel %vm7605, %v8033, %v8040
    %v8042 = vrot.slane %v8037, 4
    %v8044 = vshrl.u32 %v7543, 16
    %v8046 = vrot.slane %v8044, 7
    %v8047 = vshll.u32 %v7543, 16
    %v8049 = vor.u32 %v8046, %v8047
    %v8050 = vsel %vm7605, %v8042, %v8049
    %v8051 = vrot.slane %v8046, 4
    %v8053 = vshrl.u32 %v7544, 16
    %v8055 = vrot.slane %v8053, 7
    %v8056 = vshll.u32 %v7544, 16
    %v8058 = vor.u32 %v8055, %v8056
    %v8059 = vsel %vm7605, %v8051, %v8058
    %v8060 = vrot.slane %v8055, 4
    %v8062 = vshrl.u32 %v7545, 16
    %v8064 = vrot.slane %v8062, 7
    %v8065 = vshll.u32 %v7545, 16
    %v8067 = vor.u32 %v8064, %v8065
    %v8068 = vsel %vm7605, %v8060, %v8067
    %v8069 = vrot.slane %v8064, 4
    %v8071 = vshrl.u32 %v7546, 16
    %v8073 = vrot.slane %v8071, 7
    %v8074 = vshll.u32 %v7546, 16
    %v8076 = vor.u32 %v8073, %v8074
    %v8077 = vsel %vm7605, %v8069, %v8076
    %v8078 = vrot.slane %v8073, 4
    %v8080 = vshrl.u32 %v7547, 16
    %v8082 = vrot.slane %v8080, 7
    %v8083 = vshll.u32 %v7547, 16
    %v8085 = vor.u32 %v8082, %v8083
    %v8086 = vsel %vm7605, %v8078, %v8085
    %v8087 = vrot.slane %v8082, 4
    %v8089 = vshrl.u32 %v7548, 16
    %v8091 = vrot.slane %v8089, 7
    %v8092 = vshll.u32 %v7548, 16
    %v8094 = vor.u32 %v8091, %v8092
    %v8095 = vsel %vm7605, %v8087, %v8094
    %v8096 = vrot.slane %v8091, 4
    %v8098 = vshrl.u32 %v7549, 16
    %v8100 = vrot.slane %v8098, 7
    %v8101 = vshll.u32 %v7549, 16
    %v8103 = vor.u32 %v8100, %v8101
    %v8104 = vsel %vm7605, %v8096, %v8103
    %v8105 = vrot.slane %v8100, 4
    %v8107 = vshrl.u32 %v7550, 16
    %v8109 = vrot.slane %v8107, 7
    %v8110 = vshll.u32 %v7550, 16
    %v8112 = vor.u32 %v8109, %v8110
    %v8113 = vsel %vm7605, %v8105, %v8112
    %v8114 = vrot.slane %v8109, 4
    %v8116 = vshrl.u32 %v7551, 16
    %v8118 = vrot.slane %v8116, 7
    %v8119 = vshll.u32 %v7551, 16
    %v8121 = vor.u32 %v8118, %v8119
    %v8122 = vsel %vm7605, %v8114, %v8121
    %v8123 = vrot.slane %v8118, 4
    %v8125 = vshrl.u32 %v7552, 16
    %v8127 = vrot.slane %v8125, 7
    %v8128 = vshll.u32 %v7552, 16
    %v8130 = vor.u32 %v8127, %v8128
    %v8131 = vsel %vm7605, %v8123, %v8130
    %v8132 = vrot.slane %v8127, 4
    %v8134 = vshrl.u32 %v7553, 16
    %v8136 = vrot.slane %v8134, 7
    %v8137 = vshll.u32 %v7553, 16
    %v8139 = vor.u32 %v8136, %v8137
    %v8140 = vsel %vm7605, %v8132, %v8139
    %v8141 = vrot.slane %v8136, 4
    %v8143 = vshrl.u32 %v7554, 16
    %v8145 = vrot.slane %v8143, 7
    %v8146 = vshll.u32 %v7554, 16
    %v8148 = vor.u32 %v8145, %v8146
    %v8149 = vsel %vm7605, %v8141, %v8148
    %v8150 = vrot.slane %v8145, 4
    %v8152 = vshrl.u32 %v7555, 16
    %v8154 = vrot.slane %v8152, 7
    %v8155 = vshll.u32 %v7555, 16
    %v8157 = vor.u32 %v8154, %v8155
    %v8158 = vsel %vm7605, %v8150, %v8157
    %v8159 = vrot.slane %v8154, 4
    %v8161 = vshrl.u32 %v7556, 16
    %v8163 = vrot.slane %v8161, 7
    %v8164 = vshll.u32 %v7556, 16
    %v8166 = vor.u32 %v8163, %v8164
    %v8167 = vsel %vm7605, %v8159, %v8166
    %v8168 = vrot.slane %v8163, 4
    %v8170 = vshrl.u32 %v7557, 16
    %v8172 = vrot.slane %v8170, 7
    %v8173 = vshll.u32 %v7557, 16
    %v8175 = vor.u32 %v8172, %v8173
    %v8176 = vsel %vm7605, %v8168, %v8175
    %v8177 = vrot.slane %v8172, 4
    %v8179 = vshrl.u32 %v7558, 16
    %v8181 = vrot.slane %v8179, 7
    %v8182 = vshll.u32 %v7558, 16
    %v8184 = vor.u32 %v8181, %v8182
    %v8185 = vsel %vm7605, %v8177, %v8184
    %v8186 = vrot.slane %v8181, 4
    %v8188 = vshrl.u32 %v7559, 16
    %v8190 = vrot.slane %v8188, 7
    %v8191 = vshll.u32 %v7559, 16
    %v8193 = vor.u32 %v8190, %v8191
    %v8194 = vsel %vm7605, %v8186, %v8193
    %v8195 = vrot.slane %v8190, 4
    %v8197 = vshrl.u32 %v7560, 16
    %v8199 = vrot.slane %v8197, 7
    %v8200 = vshll.u32 %v7560, 16
    %v8202 = vor.u32 %v8199, %v8200
    %v8203 = vsel %vm7605, %v8195, %v8202
    %v8204 = vrot.slane %v8199, 4
    %v8206 = vshrl.u32 %v7561, 16
    %v8208 = vrot.slane %v8206, 7
    %v8209 = vshll.u32 %v7561, 16
    %v8211 = vor.u32 %v8208, %v8209
    %v8212 = vsel %vm7605, %v8204, %v8211
    %v8213 = vrot.slane %v8208, 4
    %v8215 = vshrl.u32 %v7562, 16
    %v8217 = vrot.slane %v8215, 7
    %v8218 = vshll.u32 %v7562, 16
    %v8220 = vor.u32 %v8217, %v8218
    %v8221 = vsel %vm7605, %v8213, %v8220
    %v8222 = vrot.slane %v8217, 4
    %v8224 = vshrl.u32 %v7563, 16
    %v8226 = vrot.slane %v8224, 7
    %v8227 = vshll.u32 %v7563, 16
    %v8229 = vor.u32 %v8226, %v8227
    %v8230 = vsel %vm7605, %v8222, %v8229
    %v8231 = vrot.slane %v8226, 4
    %v8233 = vshrl.u32 %v7564, 16
    %v8235 = vrot.slane %v8233, 7
    %v8236 = vshll.u32 %v7564, 16
    %v8238 = vor.u32 %v8235, %v8236
    %v8239 = vsel %vm7605, %v8231, %v8238
    %v8240 = vrot.slane %v8235, 4
    %v8242 = vshrl.u32 %v7565, 16
    %v8244 = vrot.slane %v8242, 7
    %v8245 = vshll.u32 %v7565, 16
    %v8247 = vor.u32 %v8244, %v8245
    %v8248 = vsel %vm7605, %v8240, %v8247
    %v8249 = vrot.slane %v8244, 4
    %v8251 = vshrl.u32 %v7566, 16
    %v8253 = vrot.slane %v8251, 7
    %v8254 = vshll.u32 %v7566, 16
    %v8256 = vor.u32 %v8253, %v8254
    %v8257 = vsel %vm7605, %v8249, %v8256
    %v8258 = vrot.slane %v8253, 4
    %v8260 = vshrl.u32 %v7567, 16
    %v8262 = vrot.slane %v8260, 7
    %v8263 = vshll.u32 %v7567, 16
    %v8265 = vor.u32 %v8262, %v8263
    %v8266 = vsel %vm7605, %v8258, %v8265
    %v8267 = vrot.slane %v8262, 4
    %v8269 = vshrl.u32 %v7568, 16
    %v8271 = vrot.slane %v8269, 7
    %v8272 = vshll.u32 %v7568, 16
    %v8274 = vor.u32 %v8271, %v8272
    %v8275 = vsel %vm7605, %v8267, %v8274
    %v8276 = vrot.slane %v8271, 4
    %v8278 = vshrl.u32 %v7569, 16
    %v8280 = vrot.slane %v8278, 7
    %v8281 = vshll.u32 %v7569, 16
    %v8283 = vor.u32 %v8280, %v8281
    %v8284 = vsel %vm7605, %v8276, %v8283
    %v8285 = vrot.slane %v8280, 4
    %v8287 = vshrl.u32 %v7570, 16
    %v8289 = vrot.slane %v8287, 7
    %v8290 = vshll.u32 %v7570, 16
    %v8292 = vor.u32 %v8289, %v8290
    %v8293 = vsel %vm7605, %v8285, %v8292
    %v8294 = vrot.slane %v8289, 4
    %v8296 = vshrl.u32 %v7571, 16
    %v8298 = vrot.slane %v8296, 7
    %v8299 = vshll.u32 %v7571, 16
    %v8301 = vor.u32 %v8298, %v8299
    %v8302 = vsel %vm7605, %v8294, %v8301
    %v8303 = vrot.slane %v8298, 4
    %v8305 = vshrl.u32 %v7572, 16
    %v8307 = vrot.slane %v8305, 7
    %v8308 = vshll.u32 %v7572, 16
    %v8310 = vor.u32 %v8307, %v8308
    %v8311 = vsel %vm7605, %v8303, %v8310
    %v8312 = vrot.slane %v8307, 4
    %v8314 = vshrl.u32 %v7573, 16
    %v8316 = vrot.slane %v8314, 7
    %v8317 = vshll.u32 %v7573, 16
    %v8319 = vor.u32 %v8316, %v8317
    %v8320 = vsel %vm7605, %v8312, %v8319
    %v8321 = vrot.slane %v8316, 4
    %v8323 = vshrl.u32 %v7574, 16
    %v8325 = vrot.slane %v8323, 7
    %v8326 = vshll.u32 %v7574, 16
    %v8328 = vor.u32 %v8325, %v8326
    %v8329 = vsel %vm7605, %v8321, %v8328
    %v8330 = vrot.slane %v8325, 4
    %v8332 = vshrl.u32 %v7575, 16
    %v8334 = vrot.slane %v8332, 7
    %v8335 = vshll.u32 %v7575, 16
    %v8337 = vor.u32 %v8334, %v8335
    %v8338 = vsel %vm7605, %v8330, %v8337
    %v8339 = vrot.slane %v8334, 4
    %v8341 = vshrl.u32 %v7576, 16
    %v8343 = vrot.slane %v8341, 7
    %v8344 = vshll.u32 %v7576, 16
    %v8346 = vor.u32 %v8343, %v8344
    %v8347 = vsel %vm7605, %v8339, %v8346
    %v8348 = vrot.slane %v8343, 4
    %v8350 = vshrl.u32 %v7577, 16
    %v8352 = vrot.slane %v8350, 7
    %v8353 = vshll.u32 %v7577, 16
    %v8355 = vor.u32 %v8352, %v8353
    %v8356 = vsel %vm7605, %v8348, %v8355
    %v8357 = vrot.slane %v8352, 4
    %v8359 = vshrl.u32 %v7578, 16
    %v8361 = vrot.slane %v8359, 7
    %v8362 = vshll.u32 %v7578, 16
    %v8364 = vor.u32 %v8361, %v8362
    %v8365 = vsel %vm7605, %v8357, %v8364
    %v8366 = vrot.slane %v8361, 4
    %v8368 = vshrl.u32 %v7579, 16
    %v8370 = vrot.slane %v8368, 7
    %v8371 = vshll.u32 %v7579, 16
    %v8373 = vor.u32 %v8370, %v8371
    %v8374 = vsel %vm7605, %v8366, %v8373
    %v8375 = vrot.slane %v8370, 4
    %v8377 = vshrl.u32 %v7580, 16
    %v8379 = vrot.slane %v8377, 7
    %v8380 = vshll.u32 %v7580, 16
    %v8382 = vor.u32 %v8379, %v8380
    %v8383 = vsel %vm7605, %v8375, %v8382
    %v8384 = vrot.slane %v8379, 4
    %v8386 = vshrl.u32 %v7581, 16
    %v8388 = vrot.slane %v8386, 7
    %v8389 = vshll.u32 %v7581, 16
    %v8391 = vor.u32 %v8388, %v8389
    %v8392 = vsel %vm7605, %v8384, %v8391
    %v8393 = vrot.slane %v8388, 4
    %v8395 = vshrl.u32 %v7582, 16
    %v8397 = vrot.slane %v8395, 7
    %v8398 = vshll.u32 %v7582, 16
    %v8400 = vor.u32 %v8397, %v8398
    %v8401 = vsel %vm7605, %v8393, %v8400
    %v8402 = vrot.slane %v8397, 4
    %v8404 = vshrl.u32 %v7583, 16
    %v8406 = vrot.slane %v8404, 7
    %v8407 = vshll.u32 %v7583, 16
    %v8409 = vor.u32 %v8406, %v8407
    %v8410 = vsel %vm7605, %v8402, %v8409
    %v8411 = vrot.slane %v8406, 4
    %v8413 = vshrl.u32 %v7584, 16
    %v8415 = vrot.slane %v8413, 7
    %v8416 = vshll.u32 %v7584, 16
    %v8418 = vor.u32 %v8415, %v8416
    %v8419 = vsel %vm7605, %v8411, %v8418
    %v8420 = vrot.slane %v8415, 4
    %v8422 = vshrl.u32 %v7585, 16
    %v8424 = vrot.slane %v8422, 7
    %v8425 = vshll.u32 %v7585, 16
    %v8427 = vor.u32 %v8424, %v8425
    %v8428 = vsel %vm7605, %v8420, %v8427
    %v8429 = vrot.slane %v8424, 4
    %v8431 = vshrl.u32 %v7586, 16
    %v8433 = vrot.slane %v8431, 7
    %v8434 = vshll.u32 %v7586, 16
    %v8436 = vor.u32 %v8433, %v8434
    %v8437 = vsel %vm7605, %v8429, %v8436
    %v8438 = vrot.slane %v8433, 4
    %v8440 = vshrl.u32 %v7587, 16
    %v8442 = vrot.slane %v8440, 7
    %v8443 = vshll.u32 %v7587, 16
    %v8445 = vor.u32 %v8442, %v8443
    %v8446 = vsel %vm7605, %v8438, %v8445
    %v8447 = vrot.slane %v8442, 4
    %v8449 = vshrl.u32 %v7588, 16
    %v8451 = vrot.slane %v8449, 7
    %v8452 = vshll.u32 %v7588, 16
    %v8454 = vor.u32 %v8451, %v8452
    %v8455 = vsel %vm7605, %v8447, %v8454
    %v8456 = vrot.slane %v8451, 4
    %v8458 = vshrl.u32 %v7589, 16
    %v8460 = vrot.slane %v8458, 7
    %v8461 = vshll.u32 %v7589, 16
    %v8463 = vor.u32 %v8460, %v8461
    %v8464 = vsel %vm7605, %v8456, %v8463
    %v8465 = vrot.slane %v8460, 4
    %v8467 = vshrl.u32 %v7590, 16
    %v8469 = vrot.slane %v8467, 7
    %v8470 = vshll.u32 %v7590, 16
    %v8472 = vor.u32 %v8469, %v8470
    %v8473 = vsel %vm7605, %v8465, %v8472
    %v8474 = vrot.slane %v8469, 4
    %v8476 = vshrl.u32 %v7591, 16
    %v8478 = vrot.slane %v8476, 7
    %v8479 = vshll.u32 %v7591, 16
    %v8481 = vor.u32 %v8478, %v8479
    %v8482 = vsel %vm7605, %v8474, %v8481
    %v8483 = vrot.slane %v8478, 4
    %v8485 = vshrl.u32 %v7592, 16
    %v8487 = vrot.slane %v8485, 7
    %v8488 = vshll.u32 %v7592, 16
    %v8490 = vor.u32 %v8487, %v8488
    %v8491 = vsel %vm7605, %v8483, %v8490
    %v8492 = vrot.slane %v8487, 4
    %v8494 = vshrl.u32 %v7593, 16
    %v8496 = vrot.slane %v8494, 7
    %v8497 = vshll.u32 %v7593, 16
    %v8499 = vor.u32 %v8496, %v8497
    %v8500 = vsel %vm7605, %v8492, %v8499
    %v8501 = vrot.slane %v8496, 4
    %v8503 = vshrl.u32 %v7594, 16
    %v8505 = vrot.slane %v8503, 7
    %v8506 = vshll.u32 %v7594, 16
    %v8508 = vor.u32 %v8505, %v8506
    %v8509 = vsel %vm7605, %v8501, %v8508
    %v8510 = vrot.slane %v8505, 4
    %v8512 = vshrl.u32 %v7595, 16
    %v8514 = vrot.slane %v8512, 7
    %v8515 = vshll.u32 %v7595, 16
    %v8517 = vor.u32 %v8514, %v8515
    %v8518 = vsel %vm7605, %v8510, %v8517
    %v8519 = vrot.slane %v8514, 4
    %v8521 = vshrl.u32 %v7596, 16
    %v8523 = vrot.slane %v8521, 7
    %v8524 = vshll.u32 %v7596, 16
    %v8526 = vor.u32 %v8523, %v8524
    %v8527 = vsel %vm7605, %v8519, %v8526
    %v8528 = vrot.slane %v8523, 4
    %v8530 = vshrl.u32 %v7597, 16
    %v8532 = vrot.slane %v8530, 7
    %v8533 = vshll.u32 %v7597, 16
    %v8535 = vor.u32 %v8532, %v8533
    %v8536 = vsel %vm7605, %v8528, %v8535
    %v8537 = vrot.slane %v8532, 4
    %v8539 = vshrl.u32 %v7598, 16
    %v8541 = vrot.slane %v8539, 7
    %v8542 = vshll.u32 %v7598, 16
    %v8544 = vor.u32 %v8541, %v8542
    %v8545 = vsel %vm7605, %v8537, %v8544
    %v8546 = vrot.slane %v8541, 4
    %v8548 = vshrl.u32 %v7599, 16
    %v8550 = vrot.slane %v8548, 7
    %v8551 = vshll.u32 %v7599, 16
    %v8553 = vor.u32 %v8550, %v8551
    %v8554 = vsel %vm7605, %v8546, %v8553
    %v8555 = vrot.slane %v8550, 4
    %v8557 = vshrl.u32 %v7600, 16
    %v8559 = vrot.slane %v8557, 7
    %v8560 = vshll.u32 %v7600, 16
    %v8562 = vor.u32 %v8559, %v8560
    %v8563 = vsel %vm7605, %v8555, %v8562
    %v8564 = vrot.slane %v8559, 4
    %v8566 = vshrl.u32 %v7601, 16
    %v8568 = vrot.slane %v8566, 7
    %v8569 = vshll.u32 %v7601, 16
    %v8571 = vor.u32 %v8568, %v8569
    %v8572 = vsel %vm7605, %v8564, %v8571
    %v8573 = vrot.slane %v8568, 4
    %v8575 = vshrl.u32 %v7602, 16
    %v8577 = vrot.slane %v8575, 7
    %v8578 = vshll.u32 %v7602, 16
    %v8580 = vor.u32 %v8577, %v8578
    %v8581 = vsel %vm7605, %v8573, %v8580
    %vm8690 = vcmask 191488
    %8691 = vst.msk [vmem:[%s3] sm:$0xf] %vm8690, %v7618
    %8692 = vst.msk [vmem:[%s3 + $0x4] sm:$0xf] %vm8690, %v7627
    %8693 = vst.msk [vmem:[%s3 + $0x8] sm:$0xf] %vm8690, %v7636
    %8694 = vst.msk [vmem:[%s3 + $0xc] sm:$0xf] %vm8690, %v7645
    %8695 = vst.msk [vmem:[%s3 + $0x10] sm:$0xf] %vm8690, %v7654
    %8696 = vst.msk [vmem:[%s3 + $0x14] sm:$0xf] %vm8690, %v7663
    %8697 = vst.msk [vmem:[%s3 + $0x18] sm:$0xf] %vm8690, %v7672
    %8698 = vst.msk [vmem:[%s3 + $0x1c] sm:$0xf] %vm8690, %v7681
    %8699 = vst.msk [vmem:[%s3 + $0x20] sm:$0xf] %vm8690, %v7690
    %8700 = vst.msk [vmem:[%s3 + $0x24] sm:$0xf] %vm8690, %v7699
    %8701 = vst.msk [vmem:[%s3 + $0x28] sm:$0xf] %vm8690, %v7708
    %8702 = vst.msk [vmem:[%s3 + $0x2c] sm:$0xf] %vm8690, %v7717
    %8703 = vst.msk [vmem:[%s3 + $0x30] sm:$0xf] %vm8690, %v7726
    %8704 = vst.msk [vmem:[%s3 + $0x34] sm:$0xf] %vm8690, %v7735
    %8705 = vst.msk [vmem:[%s3 + $0x38] sm:$0xf] %vm8690, %v7744
    %8706 = vst.msk [vmem:[%s3 + $0x3c] sm:$0xf] %vm8690, %v7753
    %8707 = vst.msk [vmem:[%s3 + $0x40] sm:$0xf] %vm8690, %v7762
    %8708 = vst.msk [vmem:[%s3 + $0x44] sm:$0xf] %vm8690, %v7771
    %8709 = vst.msk [vmem:[%s3 + $0x48] sm:$0xf] %vm8690, %v7780
    %8710 = vst.msk [vmem:[%s3 + $0x4c] sm:$0xf] %vm8690, %v7789
    %8711 = vst.msk [vmem:[%s3 + $0x50] sm:$0xf] %vm8690, %v7798
    %8712 = vst.msk [vmem:[%s3 + $0x54] sm:$0xf] %vm8690, %v7807
    %8713 = vst.msk [vmem:[%s3 + $0x58] sm:$0xf] %vm8690, %v7816
    %8714 = vst.msk [vmem:[%s3 + $0x5c] sm:$0xf] %vm8690, %v7825
    %8715 = vst.msk [vmem:[%s3 + $0x60] sm:$0xf] %vm8690, %v7834
    %8716 = vst.msk [vmem:[%s3 + $0x64] sm:$0xf] %vm8690, %v7843
    %8717 = vst.msk [vmem:[%s3 + $0x68] sm:$0xf] %vm8690, %v7852
    %8718 = vst.msk [vmem:[%s3 + $0x6c] sm:$0xf] %vm8690, %v7861
    %8719 = vst.msk [vmem:[%s3 + $0x70] sm:$0xf] %vm8690, %v7870
    %8720 = vst.msk [vmem:[%s3 + $0x74] sm:$0xf] %vm8690, %v7879
    %8721 = vst.msk [vmem:[%s3 + $0x78] sm:$0xf] %vm8690, %v7888
    %8722 = vst.msk [vmem:[%s3 + $0x7c] sm:$0xf] %vm8690, %v7897
    %8723 = vst.msk [vmem:[%s3 + $0x80] sm:$0xf] %vm8690, %v7906
    %8724 = vst.msk [vmem:[%s3 + $0x84] sm:$0xf] %vm8690, %v7915
    %8725 = vst.msk [vmem:[%s3 + $0x88] sm:$0xf] %vm8690, %v7924
    %8726 = vst.msk [vmem:[%s3 + $0x8c] sm:$0xf] %vm8690, %v7933
    %8727 = vst.msk [vmem:[%s3 + $0x90] sm:$0xf] %vm8690, %v7942
    %8728 = vst.msk [vmem:[%s3 + $0x94] sm:$0xf] %vm8690, %v7951
    %8729 = vst.msk [vmem:[%s3 + $0x98] sm:$0xf] %vm8690, %v7960
    %8730 = vst.msk [vmem:[%s3 + $0x9c] sm:$0xf] %vm8690, %v7969
    %8731 = vst.msk [vmem:[%s3 + $0xa0] sm:$0xf] %vm8690, %v7978
    %8732 = vst.msk [vmem:[%s3 + $0xa4] sm:$0xf] %vm8690, %v7987
    %8733 = vst.msk [vmem:[%s3 + $0xa8] sm:$0xf] %vm8690, %v7996
    %8734 = vst.msk [vmem:[%s3 + $0xac] sm:$0xf] %vm8690, %v8005
    %8735 = vst.msk [vmem:[%s3 + $0xb0] sm:$0xf] %vm8690, %v8014
    %8736 = vst.msk [vmem:[%s3 + $0xb4] sm:$0xf] %vm8690, %v8023
    %8737 = vst.msk [vmem:[%s3 + $0xb8] sm:$0xf] %vm8690, %v8032
    %8738 = vst.msk [vmem:[%s3 + $0xbc] sm:$0xf] %vm8690, %v8041
    %8739 = vst.msk [vmem:[%s3 + $0xc0] sm:$0xf] %vm8690, %v8050
    %8740 = vst.msk [vmem:[%s3 + $0xc4] sm:$0xf] %vm8690, %v8059
    %8741 = vst.msk [vmem:[%s3 + $0xc8] sm:$0xf] %vm8690, %v8068
    %8742 = vst.msk [vmem:[%s3 + $0xcc] sm:$0xf] %vm8690, %v8077
    %8743 = vst.msk [vmem:[%s3 + $0xd0] sm:$0xf] %vm8690, %v8086
    %8744 = vst.msk [vmem:[%s3 + $0xd4] sm:$0xf] %vm8690, %v8095
    %8745 = vst.msk [vmem:[%s3 + $0xd8] sm:$0xf] %vm8690, %v8104
    %8746 = vst.msk [vmem:[%s3 + $0xdc] sm:$0xf] %vm8690, %v8113
    %8747 = vst.msk [vmem:[%s3 + $0xe0] sm:$0xf] %vm8690, %v8122
    %8748 = vst.msk [vmem:[%s3 + $0xe4] sm:$0xf] %vm8690, %v8131
    %8749 = vst.msk [vmem:[%s3 + $0xe8] sm:$0xf] %vm8690, %v8140
    %8750 = vst.msk [vmem:[%s3 + $0xec] sm:$0xf] %vm8690, %v8149
    %8751 = vst.msk [vmem:[%s3 + $0xf0] sm:$0xf] %vm8690, %v8158
    %8752 = vst.msk [vmem:[%s3 + $0xf4] sm:$0xf] %vm8690, %v8167
    %8753 = vst.msk [vmem:[%s3 + $0xf8] sm:$0xf] %vm8690, %v8176
    %8754 = vst.msk [vmem:[%s3 + $0xfc] sm:$0xf] %vm8690, %v8185
    %8755 = vst.msk [vmem:[%s3 + $0x100] sm:$0xf] %vm8690, %v8194
    %8756 = vst.msk [vmem:[%s3 + $0x104] sm:$0xf] %vm8690, %v8203
    %8757 = vst.msk [vmem:[%s3 + $0x108] sm:$0xf] %vm8690, %v8212
    %8758 = vst.msk [vmem:[%s3 + $0x10c] sm:$0xf] %vm8690, %v8221
    %8759 = vst.msk [vmem:[%s3 + $0x110] sm:$0xf] %vm8690, %v8230
    %8760 = vst.msk [vmem:[%s3 + $0x114] sm:$0xf] %vm8690, %v8239
    %8761 = vst.msk [vmem:[%s3 + $0x118] sm:$0xf] %vm8690, %v8248
    %8762 = vst.msk [vmem:[%s3 + $0x11c] sm:$0xf] %vm8690, %v8257
    %8763 = vst.msk [vmem:[%s3 + $0x120] sm:$0xf] %vm8690, %v8266
    %8764 = vst.msk [vmem:[%s3 + $0x124] sm:$0xf] %vm8690, %v8275
    %8765 = vst.msk [vmem:[%s3 + $0x128] sm:$0xf] %vm8690, %v8284
    %8766 = vst.msk [vmem:[%s3 + $0x12c] sm:$0xf] %vm8690, %v8293
    %8767 = vst.msk [vmem:[%s3 + $0x130] sm:$0xf] %vm8690, %v8302
    %8768 = vst.msk [vmem:[%s3 + $0x134] sm:$0xf] %vm8690, %v8311
    %8769 = vst.msk [vmem:[%s3 + $0x138] sm:$0xf] %vm8690, %v8320
    %8770 = vst.msk [vmem:[%s3 + $0x13c] sm:$0xf] %vm8690, %v8329
    %8771 = vst.msk [vmem:[%s3 + $0x140] sm:$0xf] %vm8690, %v8338
    %8772 = vst.msk [vmem:[%s3 + $0x144] sm:$0xf] %vm8690, %v8347
    %8773 = vst.msk [vmem:[%s3 + $0x148] sm:$0xf] %vm8690, %v8356
    %8774 = vst.msk [vmem:[%s3 + $0x14c] sm:$0xf] %vm8690, %v8365
    %8775 = vst.msk [vmem:[%s3 + $0x150] sm:$0xf] %vm8690, %v8374
    %8776 = vst.msk [vmem:[%s3 + $0x154] sm:$0xf] %vm8690, %v8383
    %8777 = vst.msk [vmem:[%s3 + $0x158] sm:$0xf] %vm8690, %v8392
    %8778 = vst.msk [vmem:[%s3 + $0x15c] sm:$0xf] %vm8690, %v8401
    %8779 = vst.msk [vmem:[%s3 + $0x160] sm:$0xf] %vm8690, %v8410
    %8780 = vst.msk [vmem:[%s3 + $0x164] sm:$0xf] %vm8690, %v8419
    %8781 = vst.msk [vmem:[%s3 + $0x168] sm:$0xf] %vm8690, %v8428
    %8782 = vst.msk [vmem:[%s3 + $0x16c] sm:$0xf] %vm8690, %v8437
    %8783 = vst.msk [vmem:[%s3 + $0x170] sm:$0xf] %vm8690, %v8446
    %8784 = vst.msk [vmem:[%s3 + $0x174] sm:$0xf] %vm8690, %v8455
    %8785 = vst.msk [vmem:[%s3 + $0x178] sm:$0xf] %vm8690, %v8464
    %8786 = vst.msk [vmem:[%s3 + $0x17c] sm:$0xf] %vm8690, %v8473
    %8787 = vst.msk [vmem:[%s3 + $0x180] sm:$0xf] %vm8690, %v8482
    %8788 = vst.msk [vmem:[%s3 + $0x184] sm:$0xf] %vm8690, %v8491
    %8789 = vst.msk [vmem:[%s3 + $0x188] sm:$0xf] %vm8690, %v8500
    %8790 = vst.msk [vmem:[%s3 + $0x18c] sm:$0xf] %vm8690, %v8509
    %8791 = vst.msk [vmem:[%s3 + $0x190] sm:$0xf] %vm8690, %v8518
    %8792 = vst.msk [vmem:[%s3 + $0x194] sm:$0xf] %vm8690, %v8527
    %8793 = vst.msk [vmem:[%s3 + $0x198] sm:$0xf] %vm8690, %v8536
    %8794 = vst.msk [vmem:[%s3 + $0x19c] sm:$0xf] %vm8690, %v8545
    %8795 = vst.msk [vmem:[%s3 + $0x1a0] sm:$0xf] %vm8690, %v8554
    %8796 = vst.msk [vmem:[%s3 + $0x1a4] sm:$0xf] %vm8690, %v8563
    %8797 = vst.msk [vmem:[%s3 + $0x1a8] sm:$0xf] %vm8690, %v8572
    %8798 = vst.msk [vmem:[%s3 + $0x1ac] sm:$0xf] %vm8690, %v8581
    %v8799 = vunpack.c.l.bf16 %v7275
    %v8800 = vunpack.c.h.bf16 %v7275
    %v8801 = vunpack.c.l.bf16 %v7276
    %v8802 = vunpack.c.h.bf16 %v7276
    %v8803 = vunpack.c.l.bf16 %v7277
    %v8804 = vunpack.c.h.bf16 %v7277
    %v8805 = vunpack.c.l.bf16 %v7278
    %v8806 = vunpack.c.h.bf16 %v7278
    %v8807 = vunpack.c.l.bf16 %v7279
    %v8808 = vunpack.c.h.bf16 %v7279
    %v8809 = vunpack.c.l.bf16 %v7280
    %v8810 = vunpack.c.h.bf16 %v7280
    %v8811 = vunpack.c.l.bf16 %v7281
    %v8812 = vunpack.c.h.bf16 %v7281
    %v8813 = vunpack.c.l.bf16 %v7282
    %v8814 = vunpack.c.h.bf16 %v7282
    %v8815 = vunpack.c.l.bf16 %v7283
    %v8816 = vunpack.c.h.bf16 %v7283
    %v8817 = vunpack.c.l.bf16 %v7284
    %v8818 = vunpack.c.h.bf16 %v7284
    %v8819 = vunpack.c.l.bf16 %v7285
    %v8820 = vunpack.c.h.bf16 %v7285
    %v8821 = vunpack.c.l.bf16 %v7286
    %v8822 = vunpack.c.h.bf16 %v7286
    %v8823 = vunpack.c.l.bf16 %v7287
    %v8824 = vunpack.c.h.bf16 %v7287
    %v8825 = vunpack.c.l.bf16 %v7288
    %v8826 = vunpack.c.h.bf16 %v7288
    %v8827 = vunpack.c.l.bf16 %v7289
    %v8828 = vunpack.c.h.bf16 %v7289
    %v8829 = vunpack.c.l.bf16 %v7290
    %v8830 = vunpack.c.h.bf16 %v7290
    %v8831 = vunpack.c.l.bf16 %v7291
    %v8832 = vunpack.c.h.bf16 %v7291
    %v8833 = vunpack.c.l.bf16 %v7292
    %v8834 = vunpack.c.h.bf16 %v7292
    %v8835 = vunpack.c.l.bf16 %v7293
    %v8836 = vunpack.c.h.bf16 %v7293
    %v8837 = vunpack.c.l.bf16 %v7294
    %v8838 = vunpack.c.h.bf16 %v7294
    %v8839 = vunpack.c.l.bf16 %v7295
    %v8840 = vunpack.c.h.bf16 %v7295
    %v8841 = vunpack.c.l.bf16 %v7296
    %v8842 = vunpack.c.h.bf16 %v7296
    %v8843 = vunpack.c.l.bf16 %v7297
    %v8844 = vunpack.c.h.bf16 %v7297
    %v8845 = vunpack.c.l.bf16 %v7298
    %v8846 = vunpack.c.h.bf16 %v7298
    %v8847 = vunpack.c.l.bf16 %v7299
    %v8848 = vunpack.c.h.bf16 %v7299
    %v8849 = vunpack.c.l.bf16 %v7300
    %v8850 = vunpack.c.h.bf16 %v7300
    %v8851 = vunpack.c.l.bf16 %v7301
    %v8852 = vunpack.c.h.bf16 %v7301
    %v8853 = vunpack.c.l.bf16 %v7302
    %v8854 = vunpack.c.h.bf16 %v7302
    %v8855 = vunpack.c.l.bf16 %v7303
    %v8856 = vunpack.c.h.bf16 %v7303
    %v8857 = vunpack.c.l.bf16 %v7304
    %v8858 = vunpack.c.h.bf16 %v7304
    %v8859 = vunpack.c.l.bf16 %v7305
    %v8860 = vunpack.c.h.bf16 %v7305
    %v8861 = vunpack.c.l.bf16 %v7306
    %v8862 = vunpack.c.h.bf16 %v7306
    %v8863 = vunpack.c.l.bf16 %v7307
    %v8864 = vunpack.c.h.bf16 %v7307
    %v8865 = vunpack.c.l.bf16 %v7308
    %v8866 = vunpack.c.h.bf16 %v7308
    %v8867 = vunpack.c.l.bf16 %v7309
    %v8868 = vunpack.c.h.bf16 %v7309
    %v8869 = vunpack.c.l.bf16 %v7310
    %v8870 = vunpack.c.h.bf16 %v7310
    %v8871 = vunpack.c.l.bf16 %v7311
    %v8872 = vunpack.c.h.bf16 %v7311
    %v8873 = vunpack.c.l.bf16 %v7312
    %v8874 = vunpack.c.h.bf16 %v7312
    %v8875 = vunpack.c.l.bf16 %v7313
    %v8876 = vunpack.c.h.bf16 %v7313
    %v8877 = vunpack.c.l.bf16 %v7314
    %v8878 = vunpack.c.h.bf16 %v7314
    %v8879 = vunpack.c.l.bf16 %v7315
    %v8880 = vunpack.c.h.bf16 %v7315
    %v8881 = vunpack.c.l.bf16 %v7316
    %v8882 = vunpack.c.h.bf16 %v7316
    %v8883 = vunpack.c.l.bf16 %v7317
    %v8884 = vunpack.c.h.bf16 %v7317
    %v8885 = vunpack.c.l.bf16 %v7318
    %v8886 = vunpack.c.h.bf16 %v7318
    %v8887 = vunpack.c.l.bf16 %v7319
    %v8888 = vunpack.c.h.bf16 %v7319
    %v8889 = vunpack.c.l.bf16 %v7320
    %v8890 = vunpack.c.h.bf16 %v7320
    %v8891 = vunpack.c.l.bf16 %v7321
    %v8892 = vunpack.c.h.bf16 %v7321
    %v8893 = vunpack.c.l.bf16 %v7322
    %v8894 = vunpack.c.h.bf16 %v7322
    %v8895 = vunpack.c.l.bf16 %v7323
    %v8896 = vunpack.c.h.bf16 %v7323
    %v8897 = vunpack.c.l.bf16 %v7324
    %v8898 = vunpack.c.h.bf16 %v7324
    %v8899 = vunpack.c.l.bf16 %v7325
    %v8900 = vunpack.c.h.bf16 %v7325
    %v8901 = vunpack.c.l.bf16 %v7326
    %v8902 = vunpack.c.h.bf16 %v7326
    %v8903 = vunpack.c.l.bf16 %v7327
    %v8904 = vunpack.c.h.bf16 %v7327
    %v8905 = vunpack.c.l.bf16 %v7328
    %v8906 = vunpack.c.h.bf16 %v7328
    %v8907 = vunpack.c.l.bf16 %v7329
    %vm9017 = vcmask 1040384
    %v9018 = vrot.slane %v8799, 7
    %v9019 = vrot.slane %v8800, 7
    %v9020 = vsel %vm9017, %v9018, %v9019
    %v9021 = vrot.slane %v8801, 7
    %v9022 = vsel %vm9017, %v9019, %v9021
    %v9023 = vrot.slane %v8802, 7
    %v9024 = vsel %vm9017, %v9021, %v9023
    %v9025 = vrot.slane %v8803, 7
    %v9026 = vsel %vm9017, %v9023, %v9025
    %v9027 = vrot.slane %v8804, 7
    %v9028 = vsel %vm9017, %v9025, %v9027
    %v9029 = vrot.slane %v8805, 7
    %v9030 = vsel %vm9017, %v9027, %v9029
    %v9031 = vrot.slane %v8806, 7
    %v9032 = vsel %vm9017, %v9029, %v9031
    %v9033 = vrot.slane %v8807, 7
    %v9034 = vsel %vm9017, %v9031, %v9033
    %v9035 = vrot.slane %v8808, 7
    %v9036 = vsel %vm9017, %v9033, %v9035
    %v9037 = vrot.slane %v8809, 7
    %v9038 = vsel %vm9017, %v9035, %v9037
    %v9039 = vrot.slane %v8810, 7
    %v9040 = vsel %vm9017, %v9037, %v9039
    %v9041 = vrot.slane %v8811, 7
    %v9042 = vsel %vm9017, %v9039, %v9041
    %v9043 = vrot.slane %v8812, 7
    %v9044 = vsel %vm9017, %v9041, %v9043
    %v9045 = vrot.slane %v8813, 7
    %v9046 = vsel %vm9017, %v9043, %v9045
    %v9047 = vrot.slane %v8814, 7
    %v9048 = vsel %vm9017, %v9045, %v9047
    %v9049 = vrot.slane %v8815, 7
    %v9050 = vsel %vm9017, %v9047, %v9049
    %v9051 = vrot.slane %v8816, 7
    %v9052 = vsel %vm9017, %v9049, %v9051
    %v9053 = vrot.slane %v8817, 7
    %v9054 = vsel %vm9017, %v9051, %v9053
    %v9055 = vrot.slane %v8818, 7
    %v9056 = vsel %vm9017, %v9053, %v9055
    %v9057 = vrot.slane %v8819, 7
    %v9058 = vsel %vm9017, %v9055, %v9057
    %v9059 = vrot.slane %v8820, 7
    %v9060 = vsel %vm9017, %v9057, %v9059
    %v9061 = vrot.slane %v8821, 7
    %v9062 = vsel %vm9017, %v9059, %v9061
    %v9063 = vrot.slane %v8822, 7
    %v9064 = vsel %vm9017, %v9061, %v9063
    %v9065 = vrot.slane %v8823, 7
    %v9066 = vsel %vm9017, %v9063, %v9065
    %v9067 = vrot.slane %v8824, 7
    %v9068 = vsel %vm9017, %v9065, %v9067
    %v9069 = vrot.slane %v8825, 7
    %v9070 = vsel %vm9017, %v9067, %v9069
    %v9071 = vrot.slane %v8826, 7
    %v9072 = vsel %vm9017, %v9069, %v9071
    %v9073 = vrot.slane %v8827, 7
    %v9074 = vsel %vm9017, %v9071, %v9073
    %v9075 = vrot.slane %v8828, 7
    %v9076 = vsel %vm9017, %v9073, %v9075
    %v9077 = vrot.slane %v8829, 7
    %v9078 = vsel %vm9017, %v9075, %v9077
    %v9079 = vrot.slane %v8830, 7
    %v9080 = vsel %vm9017, %v9077, %v9079
    %v9081 = vrot.slane %v8831, 7
    %v9082 = vsel %vm9017, %v9079, %v9081
    %v9083 = vrot.slane %v8832, 7
    %v9084 = vsel %vm9017, %v9081, %v9083
    %v9085 = vrot.slane %v8833, 7
    %v9086 = vsel %vm9017, %v9083, %v9085
    %v9087 = vrot.slane %v8834, 7
    %v9088 = vsel %vm9017, %v9085, %v9087
    %v9089 = vrot.slane %v8835, 7
    %v9090 = vsel %vm9017, %v9087, %v9089
    %v9091 = vrot.slane %v8836, 7
    %v9092 = vsel %vm9017, %v9089, %v9091
    %v9093 = vrot.slane %v8837, 7
    %v9094 = vsel %vm9017, %v9091, %v9093
    %v9095 = vrot.slane %v8838, 7
    %v9096 = vsel %vm9017, %v9093, %v9095
    %v9097 = vrot.slane %v8839, 7
    %v9098 = vsel %vm9017, %v9095, %v9097
    %v9099 = vrot.slane %v8840, 7
    %v9100 = vsel %vm9017, %v9097, %v9099
    %v9101 = vrot.slane %v8841, 7
    %v9102 = vsel %vm9017, %v9099, %v9101
    %v9103 = vrot.slane %v8842, 7
    %v9104 = vsel %vm9017, %v9101, %v9103
    %v9105 = vrot.slane %v8843, 7
    %v9106 = vsel %vm9017, %v9103, %v9105
    %v9107 = vrot.slane %v8844, 7
    %v9108 = vsel %vm9017, %v9105, %v9107
    %v9109 = vrot.slane %v8845, 7
    %v9110 = vsel %vm9017, %v9107, %v9109
    %v9111 = vrot.slane %v8846, 7
    %v9112 = vsel %vm9017, %v9109, %v9111
    %v9113 = vrot.slane %v8847, 7
    %v9114 = vsel %vm9017, %v9111, %v9113
    %v9115 = vrot.slane %v8848, 7
    %v9116 = vsel %vm9017, %v9113, %v9115
    %v9117 = vrot.slane %v8849, 7
    %v9118 = vsel %vm9017, %v9115, %v9117
    %v9119 = vrot.slane %v8850, 7
    %v9120 = vsel %vm9017, %v9117, %v9119
    %v9121 = vrot.slane %v8851, 7
    %v9122 = vsel %vm9017, %v9119, %v9121
    %v9123 = vrot.slane %v8852, 7
    %v9124 = vsel %vm9017, %v9121, %v9123
    %v9125 = vrot.slane %v8853, 7
    %v9126 = vsel %vm9017, %v9123, %v9125
    %v9127 = vrot.slane %v8854, 7
    %v9128 = vsel %vm9017, %v9125, %v9127
    %v9129 = vrot.slane %v8855, 7
    %v9130 = vsel %vm9017, %v9127, %v9129
    %v9131 = vrot.slane %v8856, 7
    %v9132 = vsel %vm9017, %v9129, %v9131
    %v9133 = vrot.slane %v8857, 7
    %v9134 = vsel %vm9017, %v9131, %v9133
    %v9135 = vrot.slane %v8858, 7
    %v9136 = vsel %vm9017, %v9133, %v9135
    %v9137 = vrot.slane %v8859, 7
    %v9138 = vsel %vm9017, %v9135, %v9137
    %v9139 = vrot.slane %v8860, 7
    %v9140 = vsel %vm9017, %v9137, %v9139
    %v9141 = vrot.slane %v8861, 7
    %v9142 = vsel %vm9017, %v9139, %v9141
    %v9143 = vrot.slane %v8862, 7
    %v9144 = vsel %vm9017, %v9141, %v9143
    %v9145 = vrot.slane %v8863, 7
    %v9146 = vsel %vm9017, %v9143, %v9145
    %v9147 = vrot.slane %v8864, 7
    %v9148 = vsel %vm9017, %v9145, %v9147
    %v9149 = vrot.slane %v8865, 7
    %v9150 = vsel %vm9017, %v9147, %v9149
    %v9151 = vrot.slane %v8866, 7
    %v9152 = vsel %vm9017, %v9149, %v9151
    %v9153 = vrot.slane %v8867, 7
    %v9154 = vsel %vm9017, %v9151, %v9153
    %v9155 = vrot.slane %v8868, 7
    %v9156 = vsel %vm9017, %v9153, %v9155
    %v9157 = vrot.slane %v8869, 7
    %v9158 = vsel %vm9017, %v9155, %v9157
    %v9159 = vrot.slane %v8870, 7
    %v9160 = vsel %vm9017, %v9157, %v9159
    %v9161 = vrot.slane %v8871, 7
    %v9162 = vsel %vm9017, %v9159, %v9161
    %v9163 = vrot.slane %v8872, 7
    %v9164 = vsel %vm9017, %v9161, %v9163
    %v9165 = vrot.slane %v8873, 7
    %v9166 = vsel %vm9017, %v9163, %v9165
    %v9167 = vrot.slane %v8874, 7
    %v9168 = vsel %vm9017, %v9165, %v9167
    %v9169 = vrot.slane %v8875, 7
    %v9170 = vsel %vm9017, %v9167, %v9169
    %v9171 = vrot.slane %v8876, 7
    %v9172 = vsel %vm9017, %v9169, %v9171
    %v9173 = vrot.slane %v8877, 7
    %v9174 = vsel %vm9017, %v9171, %v9173
    %v9175 = vrot.slane %v8878, 7
    %v9176 = vsel %vm9017, %v9173, %v9175
    %v9177 = vrot.slane %v8879, 7
    %v9178 = vsel %vm9017, %v9175, %v9177
    %v9179 = vrot.slane %v8880, 7
    %v9180 = vsel %vm9017, %v9177, %v9179
    %v9181 = vrot.slane %v8881, 7
    %v9182 = vsel %vm9017, %v9179, %v9181
    %v9183 = vrot.slane %v8882, 7
    %v9184 = vsel %vm9017, %v9181, %v9183
    %v9185 = vrot.slane %v8883, 7
    %v9186 = vsel %vm9017, %v9183, %v9185
    %v9187 = vrot.slane %v8884, 7
    %v9188 = vsel %vm9017, %v9185, %v9187
    %v9189 = vrot.slane %v8885, 7
    %v9190 = vsel %vm9017, %v9187, %v9189
    %v9191 = vrot.slane %v8886, 7
    %v9192 = vsel %vm9017, %v9189, %v9191
    %v9193 = vrot.slane %v8887, 7
    %v9194 = vsel %vm9017, %v9191, %v9193
    %v9195 = vrot.slane %v8888, 7
    %v9196 = vsel %vm9017, %v9193, %v9195
    %v9197 = vrot.slane %v8889, 7
    %v9198 = vsel %vm9017, %v9195, %v9197
    %v9199 = vrot.slane %v8890, 7
    %v9200 = vsel %vm9017, %v9197, %v9199
    %v9201 = vrot.slane %v8891, 7
    %v9202 = vsel %vm9017, %v9199, %v9201
    %v9203 = vrot.slane %v8892, 7
    %v9204 = vsel %vm9017, %v9201, %v9203
    %v9205 = vrot.slane %v8893, 7
    %v9206 = vsel %vm9017, %v9203, %v9205
    %v9207 = vrot.slane %v8894, 7
    %v9208 = vsel %vm9017, %v9205, %v9207
    %v9209 = vrot.slane %v8895, 7
    %v9210 = vsel %vm9017, %v9207, %v9209
    %v9211 = vrot.slane %v8896, 7
    %v9212 = vsel %vm9017, %v9209, %v9211
    %v9213 = vrot.slane %v8897, 7
    %v9214 = vsel %vm9017, %v9211, %v9213
    %v9215 = vrot.slane %v8898, 7
    %v9216 = vsel %vm9017, %v9213, %v9215
    %v9217 = vrot.slane %v8899, 7
    %v9218 = vsel %vm9017, %v9215, %v9217
    %v9219 = vrot.slane %v8900, 7
    %v9220 = vsel %vm9017, %v9217, %v9219
    %v9221 = vrot.slane %v8901, 7
    %v9222 = vsel %vm9017, %v9219, %v9221
    %v9223 = vrot.slane %v8902, 7
    %v9224 = vsel %vm9017, %v9221, %v9223
    %v9225 = vrot.slane %v8903, 7
    %v9226 = vsel %vm9017, %v9223, %v9225
    %v9227 = vrot.slane %v8904, 7
    %v9228 = vsel %vm9017, %v9225, %v9227
    %v9229 = vrot.slane %v8905, 7
    %v9230 = vsel %vm9017, %v9227, %v9229
    %v9231 = vrot.slane %v8906, 7
    %v9232 = vsel %vm9017, %v9229, %v9231
    %v9233 = vrot.slane %v8907, 7
    %v9234 = vsel %vm9017, %v9231, %v9233
    %vm9343 = vcmask 195584
    %v9344 = vsel %vm9343, %v9020, 0.0
    %v9345 = vsel %vm9343, %v9022, 0.0
    %v9346 = vadd.f32 %v9344, %v9345
    %v9347 = vsel %vm9343, %v9024, 0.0
    %v9348 = vadd.f32 %v9346, %v9347
    %v9349 = vsel %vm9343, %v9026, 0.0
    %v9350 = vadd.f32 %v9348, %v9349
    %v9351 = vsel %vm9343, %v9028, 0.0
    %v9352 = vadd.f32 %v9350, %v9351
    %v9353 = vsel %vm9343, %v9030, 0.0
    %v9354 = vadd.f32 %v9352, %v9353
    %v9355 = vsel %vm9343, %v9032, 0.0
    %v9356 = vadd.f32 %v9354, %v9355
    %v9357 = vsel %vm9343, %v9034, 0.0
    %v9358 = vadd.f32 %v9356, %v9357
    %v9359 = vsel %vm9343, %v9036, 0.0
    %v9360 = vadd.f32 %v9358, %v9359
    %v9361 = vsel %vm9343, %v9038, 0.0
    %v9362 = vadd.f32 %v9360, %v9361
    %v9363 = vsel %vm9343, %v9040, 0.0
    %v9364 = vadd.f32 %v9362, %v9363
    %v9365 = vsel %vm9343, %v9042, 0.0
    %v9366 = vadd.f32 %v9364, %v9365
    %v9367 = vsel %vm9343, %v9044, 0.0
    %v9368 = vadd.f32 %v9366, %v9367
    %v9369 = vsel %vm9343, %v9046, 0.0
    %v9370 = vadd.f32 %v9368, %v9369
    %v9371 = vsel %vm9343, %v9048, 0.0
    %v9372 = vadd.f32 %v9370, %v9371
    %v9373 = vsel %vm9343, %v9050, 0.0
    %v9374 = vadd.f32 %v9372, %v9373
    %v9375 = vsel %vm9343, %v9052, 0.0
    %v9376 = vadd.f32 %v9374, %v9375
    %v9377 = vsel %vm9343, %v9054, 0.0
    %v9378 = vadd.f32 %v9376, %v9377
    %v9379 = vsel %vm9343, %v9056, 0.0
    %v9380 = vadd.f32 %v9378, %v9379
    %v9381 = vsel %vm9343, %v9058, 0.0
    %v9382 = vadd.f32 %v9380, %v9381
    %v9383 = vsel %vm9343, %v9060, 0.0
    %v9384 = vadd.f32 %v9382, %v9383
    %v9385 = vsel %vm9343, %v9062, 0.0
    %v9386 = vadd.f32 %v9384, %v9385
    %v9387 = vsel %vm9343, %v9064, 0.0
    %v9388 = vadd.f32 %v9386, %v9387
    %v9389 = vsel %vm9343, %v9066, 0.0
    %v9390 = vadd.f32 %v9388, %v9389
    %v9391 = vsel %vm9343, %v9068, 0.0
    %v9392 = vadd.f32 %v9390, %v9391
    %v9393 = vsel %vm9343, %v9070, 0.0
    %v9394 = vadd.f32 %v9392, %v9393
    %v9395 = vsel %vm9343, %v9072, 0.0
    %v9396 = vadd.f32 %v9394, %v9395
    %v9397 = vsel %vm9343, %v9074, 0.0
    %v9398 = vadd.f32 %v9396, %v9397
    %v9399 = vsel %vm9343, %v9076, 0.0
    %v9400 = vadd.f32 %v9398, %v9399
    %v9401 = vsel %vm9343, %v9078, 0.0
    %v9402 = vadd.f32 %v9400, %v9401
    %v9403 = vsel %vm9343, %v9080, 0.0
    %v9404 = vadd.f32 %v9402, %v9403
    %v9405 = vsel %vm9343, %v9082, 0.0
    %v9406 = vadd.f32 %v9404, %v9405
    %v9407 = vsel %vm9343, %v9084, 0.0
    %v9408 = vadd.f32 %v9406, %v9407
    %v9409 = vsel %vm9343, %v9086, 0.0
    %v9410 = vadd.f32 %v9408, %v9409
    %v9411 = vsel %vm9343, %v9088, 0.0
    %v9412 = vadd.f32 %v9410, %v9411
    %v9413 = vsel %vm9343, %v9090, 0.0
    %v9414 = vadd.f32 %v9412, %v9413
    %v9415 = vsel %vm9343, %v9092, 0.0
    %v9416 = vadd.f32 %v9414, %v9415
    %v9417 = vsel %vm9343, %v9094, 0.0
    %v9418 = vadd.f32 %v9416, %v9417
    %v9419 = vsel %vm9343, %v9096, 0.0
    %v9420 = vadd.f32 %v9418, %v9419
    %v9421 = vsel %vm9343, %v9098, 0.0
    %v9422 = vadd.f32 %v9420, %v9421
    %v9423 = vsel %vm9343, %v9100, 0.0
    %v9424 = vadd.f32 %v9422, %v9423
    %v9425 = vsel %vm9343, %v9102, 0.0
    %v9426 = vadd.f32 %v9424, %v9425
    %v9427 = vsel %vm9343, %v9104, 0.0
    %v9428 = vadd.f32 %v9426, %v9427
    %v9429 = vsel %vm9343, %v9106, 0.0
    %v9430 = vadd.f32 %v9428, %v9429
    %v9431 = vsel %vm9343, %v9108, 0.0
    %v9432 = vadd.f32 %v9430, %v9431
    %v9433 = vsel %vm9343, %v9110, 0.0
    %v9434 = vadd.f32 %v9432, %v9433
    %v9435 = vsel %vm9343, %v9112, 0.0
    %v9436 = vadd.f32 %v9434, %v9435
    %v9437 = vsel %vm9343, %v9114, 0.0
    %v9438 = vadd.f32 %v9436, %v9437
    %v9439 = vsel %vm9343, %v9116, 0.0
    %v9440 = vadd.f32 %v9438, %v9439
    %v9441 = vsel %vm9343, %v9118, 0.0
    %v9442 = vadd.f32 %v9440, %v9441
    %v9443 = vsel %vm9343, %v9120, 0.0
    %v9444 = vadd.f32 %v9442, %v9443
    %v9445 = vsel %vm9343, %v9122, 0.0
    %v9446 = vadd.f32 %v9444, %v9445
    %v9447 = vsel %vm9343, %v9124, 0.0
    %v9448 = vadd.f32 %v9446, %v9447
    %v9449 = vsel %vm9343, %v9126, 0.0
    %v9450 = vadd.f32 %v9448, %v9449
    %v9451 = vsel %vm9343, %v9128, 0.0
    %v9452 = vadd.f32 %v9450, %v9451
    %v9453 = vsel %vm9343, %v9130, 0.0
    %v9454 = vadd.f32 %v9452, %v9453
    %v9455 = vsel %vm9343, %v9132, 0.0
    %v9456 = vadd.f32 %v9454, %v9455
    %v9457 = vsel %vm9343, %v9134, 0.0
    %v9458 = vadd.f32 %v9456, %v9457
    %v9459 = vsel %vm9343, %v9136, 0.0
    %v9460 = vadd.f32 %v9458, %v9459
    %v9461 = vsel %vm9343, %v9138, 0.0
    %v9462 = vadd.f32 %v9460, %v9461
    %v9463 = vsel %vm9343, %v9140, 0.0
    %v9464 = vadd.f32 %v9462, %v9463
    %v9465 = vsel %vm9343, %v9142, 0.0
    %v9466 = vadd.f32 %v9464, %v9465
    %v9467 = vsel %vm9343, %v9144, 0.0
    %v9468 = vadd.f32 %v9466, %v9467
    %v9469 = vsel %vm9343, %v9146, 0.0
    %v9470 = vadd.f32 %v9468, %v9469
    %v9471 = vsel %vm9343, %v9148, 0.0
    %v9472 = vadd.f32 %v9470, %v9471
    %v9473 = vsel %vm9343, %v9150, 0.0
    %v9474 = vadd.f32 %v9472, %v9473
    %v9475 = vsel %vm9343, %v9152, 0.0
    %v9476 = vadd.f32 %v9474, %v9475
    %v9477 = vsel %vm9343, %v9154, 0.0
    %v9478 = vadd.f32 %v9476, %v9477
    %v9479 = vsel %vm9343, %v9156, 0.0
    %v9480 = vadd.f32 %v9478, %v9479
    %v9481 = vsel %vm9343, %v9158, 0.0
    %v9482 = vadd.f32 %v9480, %v9481
    %v9483 = vsel %vm9343, %v9160, 0.0
    %v9484 = vadd.f32 %v9482, %v9483
    %v9485 = vsel %vm9343, %v9162, 0.0
    %v9486 = vadd.f32 %v9484, %v9485
    %v9487 = vsel %vm9343, %v9164, 0.0
    %v9488 = vadd.f32 %v9486, %v9487
    %v9489 = vsel %vm9343, %v9166, 0.0
    %v9490 = vadd.f32 %v9488, %v9489
    %v9491 = vsel %vm9343, %v9168, 0.0
    %v9492 = vadd.f32 %v9490, %v9491
    %v9493 = vsel %vm9343, %v9170, 0.0
    %v9494 = vadd.f32 %v9492, %v9493
    %v9495 = vsel %vm9343, %v9172, 0.0
    %v9496 = vadd.f32 %v9494, %v9495
    %v9497 = vsel %vm9343, %v9174, 0.0
    %v9498 = vadd.f32 %v9496, %v9497
    %v9499 = vsel %vm9343, %v9176, 0.0
    %v9500 = vadd.f32 %v9498, %v9499
    %v9501 = vsel %vm9343, %v9178, 0.0
    %v9502 = vadd.f32 %v9500, %v9501
    %v9503 = vsel %vm9343, %v9180, 0.0
    %v9504 = vadd.f32 %v9502, %v9503
    %v9505 = vsel %vm9343, %v9182, 0.0
    %v9506 = vadd.f32 %v9504, %v9505
    %v9507 = vsel %vm9343, %v9184, 0.0
    %v9508 = vadd.f32 %v9506, %v9507
    %v9509 = vsel %vm9343, %v9186, 0.0
    %v9510 = vadd.f32 %v9508, %v9509
    %v9511 = vsel %vm9343, %v9188, 0.0
    %v9512 = vadd.f32 %v9510, %v9511
    %v9513 = vsel %vm9343, %v9190, 0.0
    %v9514 = vadd.f32 %v9512, %v9513
    %v9515 = vsel %vm9343, %v9192, 0.0
    %v9516 = vadd.f32 %v9514, %v9515
    %v9517 = vsel %vm9343, %v9194, 0.0
    %v9518 = vadd.f32 %v9516, %v9517
    %v9519 = vsel %vm9343, %v9196, 0.0
    %v9520 = vadd.f32 %v9518, %v9519
    %v9521 = vsel %vm9343, %v9198, 0.0
    %v9522 = vadd.f32 %v9520, %v9521
    %v9523 = vsel %vm9343, %v9200, 0.0
    %v9524 = vadd.f32 %v9522, %v9523
    %v9525 = vsel %vm9343, %v9202, 0.0
    %v9526 = vadd.f32 %v9524, %v9525
    %v9527 = vsel %vm9343, %v9204, 0.0
    %v9528 = vadd.f32 %v9526, %v9527
    %v9529 = vsel %vm9343, %v9206, 0.0
    %v9530 = vadd.f32 %v9528, %v9529
    %v9531 = vsel %vm9343, %v9208, 0.0
    %v9532 = vadd.f32 %v9530, %v9531
    %v9533 = vsel %vm9343, %v9210, 0.0
    %v9534 = vadd.f32 %v9532, %v9533
    %v9535 = vsel %vm9343, %v9212, 0.0
    %v9536 = vadd.f32 %v9534, %v9535
    %v9537 = vsel %vm9343, %v9214, 0.0
    %v9538 = vadd.f32 %v9536, %v9537
    %v9539 = vsel %vm9343, %v9216, 0.0
    %v9540 = vadd.f32 %v9538, %v9539
    %v9541 = vsel %vm9343, %v9218, 0.0
    %v9542 = vadd.f32 %v9540, %v9541
    %v9543 = vsel %vm9343, %v9220, 0.0
    %v9544 = vadd.f32 %v9542, %v9543
    %v9545 = vsel %vm9343, %v9222, 0.0
    %v9546 = vadd.f32 %v9544, %v9545
    %v9547 = vsel %vm9343, %v9224, 0.0
    %v9548 = vadd.f32 %v9546, %v9547
    %v9549 = vsel %vm9343, %v9226, 0.0
    %v9550 = vadd.f32 %v9548, %v9549
    %v9551 = vsel %vm9343, %v9228, 0.0
    %v9552 = vadd.f32 %v9550, %v9551
    %v9553 = vsel %vm9343, %v9230, 0.0
    %v9554 = vadd.f32 %v9552, %v9553
    %v9555 = vsel %vm9343, %v9232, 0.0
    %v9556 = vadd.f32 %v9554, %v9555
    %v9557 = vsel %vm9343, %v9234, 0.0
    %v9558 = vadd.f32 %v9556, %v9557
    %v9559 = vrot.slane %v9558, 4
    %v9560 = vadd.f32 %v9558, %v9559
    %v9561 = vrot.slane %v9560, 2
    %v9562 = vadd.f32 %v9560, %v9561
    %v9563 = vrot.slane %v9562, 1
    %v9564 = vadd.f32 %v9562, %v9563
    %v9565 = vmul.f32 %v8799, %v8799
    %v9566 = vmul.f32 %v8800, %v8800
    %v9567 = vmul.f32 %v8801, %v8801
    %v9568 = vmul.f32 %v8802, %v8802
    %v9569 = vmul.f32 %v8803, %v8803
    %v9570 = vmul.f32 %v8804, %v8804
    %v9571 = vmul.f32 %v8805, %v8805
    %v9572 = vmul.f32 %v8806, %v8806
    %v9573 = vmul.f32 %v8807, %v8807
    %v9574 = vmul.f32 %v8808, %v8808
    %v9575 = vmul.f32 %v8809, %v8809
    %v9576 = vmul.f32 %v8810, %v8810
    %v9577 = vmul.f32 %v8811, %v8811
    %v9578 = vmul.f32 %v8812, %v8812
    %v9579 = vmul.f32 %v8813, %v8813
    %v9580 = vmul.f32 %v8814, %v8814
    %v9581 = vmul.f32 %v8815, %v8815
    %v9582 = vmul.f32 %v8816, %v8816
    %v9583 = vmul.f32 %v8817, %v8817
    %v9584 = vmul.f32 %v8818, %v8818
    %v9585 = vmul.f32 %v8819, %v8819
    %v9586 = vmul.f32 %v8820, %v8820
    %v9587 = vmul.f32 %v8821, %v8821
    %v9588 = vmul.f32 %v8822, %v8822
    %v9589 = vmul.f32 %v8823, %v8823
    %v9590 = vmul.f32 %v8824, %v8824
    %v9591 = vmul.f32 %v8825, %v8825
    %v9592 = vmul.f32 %v8826, %v8826
    %v9593 = vmul.f32 %v8827, %v8827
    %v9594 = vmul.f32 %v8828, %v8828
    %v9595 = vmul.f32 %v8829, %v8829
    %v9596 = vmul.f32 %v8830, %v8830
    %v9597 = vmul.f32 %v8831, %v8831
    %v9598 = vmul.f32 %v8832, %v8832
    %v9599 = vmul.f32 %v8833, %v8833
    %v9600 = vmul.f32 %v8834, %v8834
    %v9601 = vmul.f32 %v8835, %v8835
    %v9602 = vmul.f32 %v8836, %v8836
    %v9603 = vmul.f32 %v8837, %v8837
    %v9604 = vmul.f32 %v8838, %v8838
    %v9605 = vmul.f32 %v8839, %v8839
    %v9606 = vmul.f32 %v8840, %v8840
    %v9607 = vmul.f32 %v8841, %v8841
    %v9608 = vmul.f32 %v8842, %v8842
    %v9609 = vmul.f32 %v8843, %v8843
    %v9610 = vmul.f32 %v8844, %v8844
    %v9611 = vmul.f32 %v8845, %v8845
    %v9612 = vmul.f32 %v8846, %v8846
    %v9613 = vmul.f32 %v8847, %v8847
    %v9614 = vmul.f32 %v8848, %v8848
    %v9615 = vmul.f32 %v8849, %v8849
    %v9616 = vmul.f32 %v8850, %v8850
    %v9617 = vmul.f32 %v8851, %v8851
    %v9618 = vmul.f32 %v8852, %v8852
    %v9619 = vmul.f32 %v8853, %v8853
    %v9620 = vmul.f32 %v8854, %v8854
    %v9621 = vmul.f32 %v8855, %v8855
    %v9622 = vmul.f32 %v8856, %v8856
    %v9623 = vmul.f32 %v8857, %v8857
    %v9624 = vmul.f32 %v8858, %v8858
    %v9625 = vmul.f32 %v8859, %v8859
    %v9626 = vmul.f32 %v8860, %v8860
    %v9627 = vmul.f32 %v8861, %v8861
    %v9628 = vmul.f32 %v8862, %v8862
    %v9629 = vmul.f32 %v8863, %v8863
    %v9630 = vmul.f32 %v8864, %v8864
    %v9631 = vmul.f32 %v8865, %v8865
    %v9632 = vmul.f32 %v8866, %v8866
    %v9633 = vmul.f32 %v8867, %v8867
    %v9634 = vmul.f32 %v8868, %v8868
    %v9635 = vmul.f32 %v8869, %v8869
    %v9636 = vmul.f32 %v8870, %v8870
    %v9637 = vmul.f32 %v8871, %v8871
    %v9638 = vmul.f32 %v8872, %v8872
    %v9639 = vmul.f32 %v8873, %v8873
    %v9640 = vmul.f32 %v8874, %v8874
    %v9641 = vmul.f32 %v8875, %v8875
    %v9642 = vmul.f32 %v8876, %v8876
    %v9643 = vmul.f32 %v8877, %v8877
    %v9644 = vmul.f32 %v8878, %v8878
    %v9645 = vmul.f32 %v8879, %v8879
    %v9646 = vmul.f32 %v8880, %v8880
    %v9647 = vmul.f32 %v8881, %v8881
    %v9648 = vmul.f32 %v8882, %v8882
    %v9649 = vmul.f32 %v8883, %v8883
    %v9650 = vmul.f32 %v8884, %v8884
    %v9651 = vmul.f32 %v8885, %v8885
    %v9652 = vmul.f32 %v8886, %v8886
    %v9653 = vmul.f32 %v8887, %v8887
    %v9654 = vmul.f32 %v8888, %v8888
    %v9655 = vmul.f32 %v8889, %v8889
    %v9656 = vmul.f32 %v8890, %v8890
    %v9657 = vmul.f32 %v8891, %v8891
    %v9658 = vmul.f32 %v8892, %v8892
    %v9659 = vmul.f32 %v8893, %v8893
    %v9660 = vmul.f32 %v8894, %v8894
    %v9661 = vmul.f32 %v8895, %v8895
    %v9662 = vmul.f32 %v8896, %v8896
    %v9663 = vmul.f32 %v8897, %v8897
    %v9664 = vmul.f32 %v8898, %v8898
    %v9665 = vmul.f32 %v8899, %v8899
    %v9666 = vmul.f32 %v8900, %v8900
    %v9667 = vmul.f32 %v8901, %v8901
    %v9668 = vmul.f32 %v8902, %v8902
    %v9669 = vmul.f32 %v8903, %v8903
    %v9670 = vmul.f32 %v8904, %v8904
    %v9671 = vmul.f32 %v8905, %v8905
    %v9672 = vmul.f32 %v8906, %v8906
    %v9673 = vmul.f32 %v8907, %v8907
    %v9783 = vrot.slane %v9565, 7
    %v9784 = vrot.slane %v9566, 7
    %v9785 = vsel %vm9017, %v9783, %v9784
    %v9786 = vrot.slane %v9567, 7
    %v9787 = vsel %vm9017, %v9784, %v9786
    %v9788 = vrot.slane %v9568, 7
    %v9789 = vsel %vm9017, %v9786, %v9788
    %v9790 = vrot.slane %v9569, 7
    %v9791 = vsel %vm9017, %v9788, %v9790
    %v9792 = vrot.slane %v9570, 7
    %v9793 = vsel %vm9017, %v9790, %v9792
    %v9794 = vrot.slane %v9571, 7
    %v9795 = vsel %vm9017, %v9792, %v9794
    %v9796 = vrot.slane %v9572, 7
    %v9797 = vsel %vm9017, %v9794, %v9796
    %v9798 = vrot.slane %v9573, 7
    %v9799 = vsel %vm9017, %v9796, %v9798
    %v9800 = vrot.slane %v9574, 7
    %v9801 = vsel %vm9017, %v9798, %v9800
    %v9802 = vrot.slane %v9575, 7
    %v9803 = vsel %vm9017, %v9800, %v9802
    %v9804 = vrot.slane %v9576, 7
    %v9805 = vsel %vm9017, %v9802, %v9804
    %v9806 = vrot.slane %v9577, 7
    %v9807 = vsel %vm9017, %v9804, %v9806
    %v9808 = vrot.slane %v9578, 7
    %v9809 = vsel %vm9017, %v9806, %v9808
    %v9810 = vrot.slane %v9579, 7
    %v9811 = vsel %vm9017, %v9808, %v9810
    %v9812 = vrot.slane %v9580, 7
    %v9813 = vsel %vm9017, %v9810, %v9812
    %v9814 = vrot.slane %v9581, 7
    %v9815 = vsel %vm9017, %v9812, %v9814
    %v9816 = vrot.slane %v9582, 7
    %v9817 = vsel %vm9017, %v9814, %v9816
    %v9818 = vrot.slane %v9583, 7
    %v9819 = vsel %vm9017, %v9816, %v9818
    %v9820 = vrot.slane %v9584, 7
    %v9821 = vsel %vm9017, %v9818, %v9820
    %v9822 = vrot.slane %v9585, 7
    %v9823 = vsel %vm9017, %v9820, %v9822
    %v9824 = vrot.slane %v9586, 7
    %v9825 = vsel %vm9017, %v9822, %v9824
    %v9826 = vrot.slane %v9587, 7
    %v9827 = vsel %vm9017, %v9824, %v9826
    %v9828 = vrot.slane %v9588, 7
    %v9829 = vsel %vm9017, %v9826, %v9828
    %v9830 = vrot.slane %v9589, 7
    %v9831 = vsel %vm9017, %v9828, %v9830
    %v9832 = vrot.slane %v9590, 7
    %v9833 = vsel %vm9017, %v9830, %v9832
    %v9834 = vrot.slane %v9591, 7
    %v9835 = vsel %vm9017, %v9832, %v9834
    %v9836 = vrot.slane %v9592, 7
    %v9837 = vsel %vm9017, %v9834, %v9836
    %v9838 = vrot.slane %v9593, 7
    %v9839 = vsel %vm9017, %v9836, %v9838
    %v9840 = vrot.slane %v9594, 7
    %v9841 = vsel %vm9017, %v9838, %v9840
    %v9842 = vrot.slane %v9595, 7
    %v9843 = vsel %vm9017, %v9840, %v9842
    %v9844 = vrot.slane %v9596, 7
    %v9845 = vsel %vm9017, %v9842, %v9844
    %v9846 = vrot.slane %v9597, 7
    %v9847 = vsel %vm9017, %v9844, %v9846
    %v9848 = vrot.slane %v9598, 7
    %v9849 = vsel %vm9017, %v9846, %v9848
    %v9850 = vrot.slane %v9599, 7
    %v9851 = vsel %vm9017, %v9848, %v9850
    %v9852 = vrot.slane %v9600, 7
    %v9853 = vsel %vm9017, %v9850, %v9852
    %v9854 = vrot.slane %v9601, 7
    %v9855 = vsel %vm9017, %v9852, %v9854
    %v9856 = vrot.slane %v9602, 7
    %v9857 = vsel %vm9017, %v9854, %v9856
    %v9858 = vrot.slane %v9603, 7
    %v9859 = vsel %vm9017, %v9856, %v9858
    %v9860 = vrot.slane %v9604, 7
    %v9861 = vsel %vm9017, %v9858, %v9860
    %v9862 = vrot.slane %v9605, 7
    %v9863 = vsel %vm9017, %v9860, %v9862
    %v9864 = vrot.slane %v9606, 7
    %v9865 = vsel %vm9017, %v9862, %v9864
    %v9866 = vrot.slane %v9607, 7
    %v9867 = vsel %vm9017, %v9864, %v9866
    %v9868 = vrot.slane %v9608, 7
    %v9869 = vsel %vm9017, %v9866, %v9868
    %v9870 = vrot.slane %v9609, 7
    %v9871 = vsel %vm9017, %v9868, %v9870
    %v9872 = vrot.slane %v9610, 7
    %v9873 = vsel %vm9017, %v9870, %v9872
    %v9874 = vrot.slane %v9611, 7
    %v9875 = vsel %vm9017, %v9872, %v9874
    %v9876 = vrot.slane %v9612, 7
    %v9877 = vsel %vm9017, %v9874, %v9876
    %v9878 = vrot.slane %v9613, 7
    %v9879 = vsel %vm9017, %v9876, %v9878
    %v9880 = vrot.slane %v9614, 7
    %v9881 = vsel %vm9017, %v9878, %v9880
    %v9882 = vrot.slane %v9615, 7
    %v9883 = vsel %vm9017, %v9880, %v9882
    %v9884 = vrot.slane %v9616, 7
    %v9885 = vsel %vm9017, %v9882, %v9884
    %v9886 = vrot.slane %v9617, 7
    %v9887 = vsel %vm9017, %v9884, %v9886
    %v9888 = vrot.slane %v9618, 7
    %v9889 = vsel %vm9017, %v9886, %v9888
    %v9890 = vrot.slane %v9619, 7
    %v9891 = vsel %vm9017, %v9888, %v9890
    %v9892 = vrot.slane %v9620, 7
    %v9893 = vsel %vm9017, %v9890, %v9892
    %v9894 = vrot.slane %v9621, 7
    %v9895 = vsel %vm9017, %v9892, %v9894
    %v9896 = vrot.slane %v9622, 7
    %v9897 = vsel %vm9017, %v9894, %v9896
    %v9898 = vrot.slane %v9623, 7
    %v9899 = vsel %vm9017, %v9896, %v9898
    %v9900 = vrot.slane %v9624, 7
    %v9901 = vsel %vm9017, %v9898, %v9900
    %v9902 = vrot.slane %v9625, 7
    %v9903 = vsel %vm9017, %v9900, %v9902
    %v9904 = vrot.slane %v9626, 7
    %v9905 = vsel %vm9017, %v9902, %v9904
    %v9906 = vrot.slane %v9627, 7
    %v9907 = vsel %vm9017, %v9904, %v9906
    %v9908 = vrot.slane %v9628, 7
    %v9909 = vsel %vm9017, %v9906, %v9908
    %v9910 = vrot.slane %v9629, 7
    %v9911 = vsel %vm9017, %v9908, %v9910
    %v9912 = vrot.slane %v9630, 7
    %v9913 = vsel %vm9017, %v9910, %v9912
    %v9914 = vrot.slane %v9631, 7
    %v9915 = vsel %vm9017, %v9912, %v9914
    %v9916 = vrot.slane %v9632, 7
    %v9917 = vsel %vm9017, %v9914, %v9916
    %v9918 = vrot.slane %v9633, 7
    %v9919 = vsel %vm9017, %v9916, %v9918
    %v9920 = vrot.slane %v9634, 7
    %v9921 = vsel %vm9017, %v9918, %v9920
    %v9922 = vrot.slane %v9635, 7
    %v9923 = vsel %vm9017, %v9920, %v9922
    %v9924 = vrot.slane %v9636, 7
    %v9925 = vsel %vm9017, %v9922, %v9924
    %v9926 = vrot.slane %v9637, 7
    %v9927 = vsel %vm9017, %v9924, %v9926
    %v9928 = vrot.slane %v9638, 7
    %v9929 = vsel %vm9017, %v9926, %v9928
    %v9930 = vrot.slane %v9639, 7
    %v9931 = vsel %vm9017, %v9928, %v9930
    %v9932 = vrot.slane %v9640, 7
    %v9933 = vsel %vm9017, %v9930, %v9932
    %v9934 = vrot.slane %v9641, 7
    %v9935 = vsel %vm9017, %v9932, %v9934
    %v9936 = vrot.slane %v9642, 7
    %v9937 = vsel %vm9017, %v9934, %v9936
    %v9938 = vrot.slane %v9643, 7
    %v9939 = vsel %vm9017, %v9936, %v9938
    %v9940 = vrot.slane %v9644, 7
    %v9941 = vsel %vm9017, %v9938, %v9940
    %v9942 = vrot.slane %v9645, 7
    %v9943 = vsel %vm9017, %v9940, %v9942
    %v9944 = vrot.slane %v9646, 7
    %v9945 = vsel %vm9017, %v9942, %v9944
    %v9946 = vrot.slane %v9647, 7
    %v9947 = vsel %vm9017, %v9944, %v9946
    %v9948 = vrot.slane %v9648, 7
    %v9949 = vsel %vm9017, %v9946, %v9948
    %v9950 = vrot.slane %v9649, 7
    %v9951 = vsel %vm9017, %v9948, %v9950
    %v9952 = vrot.slane %v9650, 7
    %v9953 = vsel %vm9017, %v9950, %v9952
    %v9954 = vrot.slane %v9651, 7
    %v9955 = vsel %vm9017, %v9952, %v9954
    %v9956 = vrot.slane %v9652, 7
    %v9957 = vsel %vm9017, %v9954, %v9956
    %v9958 = vrot.slane %v9653, 7
    %v9959 = vsel %vm9017, %v9956, %v9958
    %v9960 = vrot.slane %v9654, 7
    %v9961 = vsel %vm9017, %v9958, %v9960
    %v9962 = vrot.slane %v9655, 7
    %v9963 = vsel %vm9017, %v9960, %v9962
    %v9964 = vrot.slane %v9656, 7
    %v9965 = vsel %vm9017, %v9962, %v9964
    %v9966 = vrot.slane %v9657, 7
    %v9967 = vsel %vm9017, %v9964, %v9966
    %v9968 = vrot.slane %v9658, 7
    %v9969 = vsel %vm9017, %v9966, %v9968
    %v9970 = vrot.slane %v9659, 7
    %v9971 = vsel %vm9017, %v9968, %v9970
    %v9972 = vrot.slane %v9660, 7
    %v9973 = vsel %vm9017, %v9970, %v9972
    %v9974 = vrot.slane %v9661, 7
    %v9975 = vsel %vm9017, %v9972, %v9974
    %v9976 = vrot.slane %v9662, 7
    %v9977 = vsel %vm9017, %v9974, %v9976
    %v9978 = vrot.slane %v9663, 7
    %v9979 = vsel %vm9017, %v9976, %v9978
    %v9980 = vrot.slane %v9664, 7
    %v9981 = vsel %vm9017, %v9978, %v9980
    %v9982 = vrot.slane %v9665, 7
    %v9983 = vsel %vm9017, %v9980, %v9982
    %v9984 = vrot.slane %v9666, 7
    %v9985 = vsel %vm9017, %v9982, %v9984
    %v9986 = vrot.slane %v9667, 7
    %v9987 = vsel %vm9017, %v9984, %v9986
    %v9988 = vrot.slane %v9668, 7
    %v9989 = vsel %vm9017, %v9986, %v9988
    %v9990 = vrot.slane %v9669, 7
    %v9991 = vsel %vm9017, %v9988, %v9990
    %v9992 = vrot.slane %v9670, 7
    %v9993 = vsel %vm9017, %v9990, %v9992
    %v9994 = vrot.slane %v9671, 7
    %v9995 = vsel %vm9017, %v9992, %v9994
    %v9996 = vrot.slane %v9672, 7
    %v9997 = vsel %vm9017, %v9994, %v9996
    %v9998 = vrot.slane %v9673, 7
    %v9999 = vsel %vm9017, %v9996, %v9998
    %v10108 = vsel %vm9343, %v9785, 0.0
    %v10109 = vsel %vm9343, %v9787, 0.0
    %v10110 = vadd.f32 %v10108, %v10109
    %v10111 = vsel %vm9343, %v9789, 0.0
    %v10112 = vadd.f32 %v10110, %v10111
    %v10113 = vsel %vm9343, %v9791, 0.0
    %v10114 = vadd.f32 %v10112, %v10113
    %v10115 = vsel %vm9343, %v9793, 0.0
    %v10116 = vadd.f32 %v10114, %v10115
    %v10117 = vsel %vm9343, %v9795, 0.0
    %v10118 = vadd.f32 %v10116, %v10117
    %v10119 = vsel %vm9343, %v9797, 0.0
    %v10120 = vadd.f32 %v10118, %v10119
    %v10121 = vsel %vm9343, %v9799, 0.0
    %v10122 = vadd.f32 %v10120, %v10121
    %v10123 = vsel %vm9343, %v9801, 0.0
    %v10124 = vadd.f32 %v10122, %v10123
    %v10125 = vsel %vm9343, %v9803, 0.0
    %v10126 = vadd.f32 %v10124, %v10125
    %v10127 = vsel %vm9343, %v9805, 0.0
    %v10128 = vadd.f32 %v10126, %v10127
    %v10129 = vsel %vm9343, %v9807, 0.0
    %v10130 = vadd.f32 %v10128, %v10129
    %v10131 = vsel %vm9343, %v9809, 0.0
    %v10132 = vadd.f32 %v10130, %v10131
    %v10133 = vsel %vm9343, %v9811, 0.0
    %v10134 = vadd.f32 %v10132, %v10133
    %v10135 = vsel %vm9343, %v9813, 0.0
    %v10136 = vadd.f32 %v10134, %v10135
    %v10137 = vsel %vm9343, %v9815, 0.0
    %v10138 = vadd.f32 %v10136, %v10137
    %v10139 = vsel %vm9343, %v9817, 0.0
    %v10140 = vadd.f32 %v10138, %v10139
    %v10141 = vsel %vm9343, %v9819, 0.0
    %v10142 = vadd.f32 %v10140, %v10141
    %v10143 = vsel %vm9343, %v9821, 0.0
    %v10144 = vadd.f32 %v10142, %v10143
    %v10145 = vsel %vm9343, %v9823, 0.0
    %v10146 = vadd.f32 %v10144, %v10145
    %v10147 = vsel %vm9343, %v9825, 0.0
    %v10148 = vadd.f32 %v10146, %v10147
    %v10149 = vsel %vm9343, %v9827, 0.0
    %v10150 = vadd.f32 %v10148, %v10149
    %v10151 = vsel %vm9343, %v9829, 0.0
    %v10152 = vadd.f32 %v10150, %v10151
    %v10153 = vsel %vm9343, %v9831, 0.0
    %v10154 = vadd.f32 %v10152, %v10153
    %v10155 = vsel %vm9343, %v9833, 0.0
    %v10156 = vadd.f32 %v10154, %v10155
    %v10157 = vsel %vm9343, %v9835, 0.0
    %v10158 = vadd.f32 %v10156, %v10157
    %v10159 = vsel %vm9343, %v9837, 0.0
    %v10160 = vadd.f32 %v10158, %v10159
    %v10161 = vsel %vm9343, %v9839, 0.0
    %v10162 = vadd.f32 %v10160, %v10161
    %v10163 = vsel %vm9343, %v9841, 0.0
    %v10164 = vadd.f32 %v10162, %v10163
    %v10165 = vsel %vm9343, %v9843, 0.0
    %v10166 = vadd.f32 %v10164, %v10165
    %v10167 = vsel %vm9343, %v9845, 0.0
    %v10168 = vadd.f32 %v10166, %v10167
    %v10169 = vsel %vm9343, %v9847, 0.0
    %v10170 = vadd.f32 %v10168, %v10169
    %v10171 = vsel %vm9343, %v9849, 0.0
    %v10172 = vadd.f32 %v10170, %v10171
    %v10173 = vsel %vm9343, %v9851, 0.0
    %v10174 = vadd.f32 %v10172, %v10173
    %v10175 = vsel %vm9343, %v9853, 0.0
    %v10176 = vadd.f32 %v10174, %v10175
    %v10177 = vsel %vm9343, %v9855, 0.0
    %v10178 = vadd.f32 %v10176, %v10177
    %v10179 = vsel %vm9343, %v9857, 0.0
    %v10180 = vadd.f32 %v10178, %v10179
    %v10181 = vsel %vm9343, %v9859, 0.0
    %v10182 = vadd.f32 %v10180, %v10181
    %v10183 = vsel %vm9343, %v9861, 0.0
    %v10184 = vadd.f32 %v10182, %v10183
    %v10185 = vsel %vm9343, %v9863, 0.0
    %v10186 = vadd.f32 %v10184, %v10185
    %v10187 = vsel %vm9343, %v9865, 0.0
    %v10188 = vadd.f32 %v10186, %v10187
    %v10189 = vsel %vm9343, %v9867, 0.0
    %v10190 = vadd.f32 %v10188, %v10189
    %v10191 = vsel %vm9343, %v9869, 0.0
    %v10192 = vadd.f32 %v10190, %v10191
    %v10193 = vsel %vm9343, %v9871, 0.0
    %v10194 = vadd.f32 %v10192, %v10193
    %v10195 = vsel %vm9343, %v9873, 0.0
    %v10196 = vadd.f32 %v10194, %v10195
    %v10197 = vsel %vm9343, %v9875, 0.0
    %v10198 = vadd.f32 %v10196, %v10197
    %v10199 = vsel %vm9343, %v9877, 0.0
    %v10200 = vadd.f32 %v10198, %v10199
    %v10201 = vsel %vm9343, %v9879, 0.0
    %v10202 = vadd.f32 %v10200, %v10201
    %v10203 = vsel %vm9343, %v9881, 0.0
    %v10204 = vadd.f32 %v10202, %v10203
    %v10205 = vsel %vm9343, %v9883, 0.0
    %v10206 = vadd.f32 %v10204, %v10205
    %v10207 = vsel %vm9343, %v9885, 0.0
    %v10208 = vadd.f32 %v10206, %v10207
    %v10209 = vsel %vm9343, %v9887, 0.0
    %v10210 = vadd.f32 %v10208, %v10209
    %v10211 = vsel %vm9343, %v9889, 0.0
    %v10212 = vadd.f32 %v10210, %v10211
    %v10213 = vsel %vm9343, %v9891, 0.0
    %v10214 = vadd.f32 %v10212, %v10213
    %v10215 = vsel %vm9343, %v9893, 0.0
    %v10216 = vadd.f32 %v10214, %v10215
    %v10217 = vsel %vm9343, %v9895, 0.0
    %v10218 = vadd.f32 %v10216, %v10217
    %v10219 = vsel %vm9343, %v9897, 0.0
    %v10220 = vadd.f32 %v10218, %v10219
    %v10221 = vsel %vm9343, %v9899, 0.0
    %v10222 = vadd.f32 %v10220, %v10221
    %v10223 = vsel %vm9343, %v9901, 0.0
    %v10224 = vadd.f32 %v10222, %v10223
    %v10225 = vsel %vm9343, %v9903, 0.0
    %v10226 = vadd.f32 %v10224, %v10225
    %v10227 = vsel %vm9343, %v9905, 0.0
    %v10228 = vadd.f32 %v10226, %v10227
    %v10229 = vsel %vm9343, %v9907, 0.0
    %v10230 = vadd.f32 %v10228, %v10229
    %v10231 = vsel %vm9343, %v9909, 0.0
    %v10232 = vadd.f32 %v10230, %v10231
    %v10233 = vsel %vm9343, %v9911, 0.0
    %v10234 = vadd.f32 %v10232, %v10233
    %v10235 = vsel %vm9343, %v9913, 0.0
    %v10236 = vadd.f32 %v10234, %v10235
    %v10237 = vsel %vm9343, %v9915, 0.0
    %v10238 = vadd.f32 %v10236, %v10237
    %v10239 = vsel %vm9343, %v9917, 0.0
    %v10240 = vadd.f32 %v10238, %v10239
    %v10241 = vsel %vm9343, %v9919, 0.0
    %v10242 = vadd.f32 %v10240, %v10241
    %v10243 = vsel %vm9343, %v9921, 0.0
    %v10244 = vadd.f32 %v10242, %v10243
    %v10245 = vsel %vm9343, %v9923, 0.0
    %v10246 = vadd.f32 %v10244, %v10245
    %v10247 = vsel %vm9343, %v9925, 0.0
    %v10248 = vadd.f32 %v10246, %v10247
    %v10249 = vsel %vm9343, %v9927, 0.0
    %v10250 = vadd.f32 %v10248, %v10249
    %v10251 = vsel %vm9343, %v9929, 0.0
    %v10252 = vadd.f32 %v10250, %v10251
    %v10253 = vsel %vm9343, %v9931, 0.0
    %v10254 = vadd.f32 %v10252, %v10253
    %v10255 = vsel %vm9343, %v9933, 0.0
    %v10256 = vadd.f32 %v10254, %v10255
    %v10257 = vsel %vm9343, %v9935, 0.0
    %v10258 = vadd.f32 %v10256, %v10257
    %v10259 = vsel %vm9343, %v9937, 0.0
    %v10260 = vadd.f32 %v10258, %v10259
    %v10261 = vsel %vm9343, %v9939, 0.0
    %v10262 = vadd.f32 %v10260, %v10261
    %v10263 = vsel %vm9343, %v9941, 0.0
    %v10264 = vadd.f32 %v10262, %v10263
    %v10265 = vsel %vm9343, %v9943, 0.0
    %v10266 = vadd.f32 %v10264, %v10265
    %v10267 = vsel %vm9343, %v9945, 0.0
    %v10268 = vadd.f32 %v10266, %v10267
    %v10269 = vsel %vm9343, %v9947, 0.0
    %v10270 = vadd.f32 %v10268, %v10269
    %v10271 = vsel %vm9343, %v9949, 0.0
    %v10272 = vadd.f32 %v10270, %v10271
    %v10273 = vsel %vm9343, %v9951, 0.0
    %v10274 = vadd.f32 %v10272, %v10273
    %v10275 = vsel %vm9343, %v9953, 0.0
    %v10276 = vadd.f32 %v10274, %v10275
    %v10277 = vsel %vm9343, %v9955, 0.0
    %v10278 = vadd.f32 %v10276, %v10277
    %v10279 = vsel %vm9343, %v9957, 0.0
    %v10280 = vadd.f32 %v10278, %v10279
    %v10281 = vsel %vm9343, %v9959, 0.0
    %v10282 = vadd.f32 %v10280, %v10281
    %v10283 = vsel %vm9343, %v9961, 0.0
    %v10284 = vadd.f32 %v10282, %v10283
    %v10285 = vsel %vm9343, %v9963, 0.0
    %v10286 = vadd.f32 %v10284, %v10285
    %v10287 = vsel %vm9343, %v9965, 0.0
    %v10288 = vadd.f32 %v10286, %v10287
    %v10289 = vsel %vm9343, %v9967, 0.0
    %v10290 = vadd.f32 %v10288, %v10289
    %v10291 = vsel %vm9343, %v9969, 0.0
    %v10292 = vadd.f32 %v10290, %v10291
    %v10293 = vsel %vm9343, %v9971, 0.0
    %v10294 = vadd.f32 %v10292, %v10293
    %v10295 = vsel %vm9343, %v9973, 0.0
    %v10296 = vadd.f32 %v10294, %v10295
    %v10297 = vsel %vm9343, %v9975, 0.0
    %v10298 = vadd.f32 %v10296, %v10297
    %v10299 = vsel %vm9343, %v9977, 0.0
    %v10300 = vadd.f32 %v10298, %v10299
    %v10301 = vsel %vm9343, %v9979, 0.0
    %v10302 = vadd.f32 %v10300, %v10301
    %v10303 = vsel %vm9343, %v9981, 0.0
    %v10304 = vadd.f32 %v10302, %v10303
    %v10305 = vsel %vm9343, %v9983, 0.0
    %v10306 = vadd.f32 %v10304, %v10305
    %v10307 = vsel %vm9343, %v9985, 0.0
    %v10308 = vadd.f32 %v10306, %v10307
    %v10309 = vsel %vm9343, %v9987, 0.0
    %v10310 = vadd.f32 %v10308, %v10309
    %v10311 = vsel %vm9343, %v9989, 0.0
    %v10312 = vadd.f32 %v10310, %v10311
    %v10313 = vsel %vm9343, %v9991, 0.0
    %v10314 = vadd.f32 %v10312, %v10313
    %v10315 = vsel %vm9343, %v9993, 0.0
    %v10316 = vadd.f32 %v10314, %v10315
    %v10317 = vsel %vm9343, %v9995, 0.0
    %v10318 = vadd.f32 %v10316, %v10317
    %v10319 = vsel %vm9343, %v9997, 0.0
    %v10320 = vadd.f32 %v10318, %v10319
    %v10321 = vsel %vm9343, %v9999, 0.0
    %v10322 = vadd.f32 %v10320, %v10321
    %v10323 = vrot.slane %v10322, 4
    %v10324 = vadd.f32 %v10322, %v10323
    %v10325 = vrot.slane %v10324, 2
    %v10326 = vadd.f32 %v10324, %v10325
    %v10327 = vrot.slane %v10326, 1
    %v10328 = vadd.f32 %v10326, %v10327
    %v10329 = vsel %vm9017, %v9564, %v10328
    %vm10330 = vcmask 189440
    %10331 = vst.msk [vmem:[#allocation3] sm:$0x3] %vm10330, %v10329
    // Predicated region
    $region14: #{tpu_custom_call.1} parent=1 // pred_check
      _
    $region15: #{tpu_custom_call.1} parent=1 // pred_check_branch
      %10333 = sbr.rel (0) target = $region17
    $region16: #{tpu_custom_call.1} parent=1 // pred_region
      _
    $region17: #{tpu_custom_call.1} parent=1 // pred_fallthru
      _
    // Predicated region
    $region18: #{tpu_custom_call.1} parent=1 // pred_check
      _
    $region19: #{tpu_custom_call.1} parent=1 // pred_check_branch
      %10335 = sbr.rel (0) target = $region21
    $region20: #{tpu_custom_call.1} parent=1 // pred_region
      %s10337 = ssub.s32 32, 32
      %10338 = vsyncadd [#allocation4], %s10337
      %s10340 = sshll.u32 [#allocation3], 4
      %s10341 = int_to_ptr.vmem [resolvable:$true] %s10340
      %10343 = dma.vmem_to_hbm [thread:$0]  %s10341, 32, %s4, [#allocation4]
    $region21: #{tpu_custom_call.1} parent=1 // pred_fallthru
      _
    // Predicated region
    $region22: #{tpu_custom_call.1} parent=1 // pred_check
      _
    $region23: #{tpu_custom_call.1} parent=1 // pred_check_branch
      %10345 = sbr.rel (0) target = $region25
    $region24: #{tpu_custom_call.1} parent=1 // pred_region
      _
    $region25: #{tpu_custom_call.1} parent=1 // pred_fallthru
      _
    // Predicated region
    $region26: #{tpu_custom_call.1} parent=1 // pred_check
      _
    $region27: #{tpu_custom_call.1} parent=1 // pred_check_branch
      %10347 = sbr.rel (0) target = $region29
    $region28: #{tpu_custom_call.1} parent=1 // pred_region
      %10348 = dma.done [#allocation4], 32
    $region29: #{tpu_custom_call.1} parent=1 // pred_fallthru
      _
    %10349 = vsyncpa [#allocation4], 1

</llo_original>
